<compile_context>
chip_gen: v7x
topology: tpu7x:2x2x1
jax: 0.10.0
libtpu: 0.0.40
codegen_flags: <defaults>
</compile_context>

<pallas_src>
import jax
import jax.numpy as jnp
from jax.experimental import pallas as pl
from jax.experimental.pallas import tpu as pltpu

F32 = jnp.float32
BF16 = jnp.bfloat16

# ---- conv1 geometry (flat-row padded layout) --------------------------------
H1, W1 = 28, 28
WP1 = W1 + 4            # padded width  (pad 2 left / 2 right)
HP1 = H1 + 5            # padded height (pad 2 top / 2 bottom / +1 slack row)
NPOS1 = H1 * WP1        # 896 conv1 positions (cols >= 28 of each row = garbage)
# ---- conv2 geometry ----------------------------------------------------------
H2, W2 = 14, 14
WP2 = W2 + 4            # 18
HP2 = H2 + 5            # 19
NPOS2 = H2 * WP2        # 252
# Flat-row im2col reads go up to (H-1+4)*Wp + (Wp-1) + 4; the extra slack row
# (Hp = H+5) keeps every shifted slice in bounds.  (Review correctness note.)
assert (H1 - 1 + 4) * WP1 + (WP1 - 1) + 4 < HP1 * WP1
assert (H2 - 1 + 4) * WP2 + (WP2 - 1) + 4 < HP2 * WP2

K1_ROWS = NPOS1 - WP1 - 1       # 863: rows of the pool1 selection matrix
K2_ROWS = NPOS2 - WP2 - 1       # 233: rows of the pool2 selection matrix


# ------------------------------------------------------------------------------
# Fully fused per-image kernel
# ------------------------------------------------------------------------------
def _cnn_kernel(x_ref, w1_ref, b1_ref, w2_ref, b2_ref, s1_ref, s2_ref,
                wo_ref, bo_ref, o_ref, xp, a1, p2s, a2, pcs, act):
    # --- in-kernel zero padding: 28x28 image -> flat (33*32,) padded rows ----
    xp[...] = jnp.zeros_like(xp)
    for h in range(H1):
        xp[0, pl.ds(WP1 * (h + 2) + 2, W1)] = x_ref[0, 0, pl.ds(W1 * h, W1)]

    # --- conv1 as ONE matmul: im2col rows = 25 shifted contiguous slices ----
    for i in range(5):
        for j in range(5):
            a1[5 * i + j, :] = xp[0, pl.ds(WP1 * i + j, NPOS1)]
    y1 = jnp.dot(w1_ref[...], a1[...].astype(BF16),
                 preferred_element_type=F32)                        # (16, 896)
    y1 = jnp.maximum(y1 + b1_ref[...], 0.0)                         # bias+ReLU

    # --- 2x2 max-pool: vertical / horizontal shifted maxima, then a single
    #     exact 0/1 selection matmul that picks the stride-2 positions AND
    #     scatters them into conv2's zero-padded (16, 19*18) input layout ----
    vm = jnp.maximum(y1[:, 0:NPOS1 - WP1], y1[:, WP1:NPOS1])
    hm = jnp.maximum(vm[:, 0:K1_ROWS], vm[:, 1:K1_ROWS + 1])
    p2s[...] = jnp.dot(hm.astype(BF16), s1_ref[...],
                       preferred_element_type=F32)                  # (16, 342)

    # --- conv2 as ONE matmul: (400, 252) im2col from 25 lane-dense copies ---
    for i in range(5):
        for j in range(5):
            a2[pl.ds(16 * (5 * i + j), 16), :] = (
                p2s[:, pl.ds(WP2 * i + j, NPOS2)].astype(BF16))
    y2 = jnp.dot(w2_ref[...], a2[...], preferred_element_type=F32)  # (32, 252)
    y2 = jnp.maximum(y2 + b2_ref[...], 0.0)

    # --- pool2 + compaction (stride-2 selection) to (32, 64); cols 49..63 = 0
    vm2 = jnp.maximum(y2[:, 0:NPOS2 - WP2], y2[:, WP2:NPOS2])
    hm2 = jnp.maximum(vm2[:, 0:K2_ROWS], vm2[:, 1:K2_ROWS + 1])
    pcs[...] = jnp.dot(hm2.astype(BF16), s2_ref[...],
                       preferred_element_type=F32)                  # (32, 64)

    # --- flatten channels into lanes (order matches the packed Linear weight)
    for c in range(32):
        act[0, pl.ds(64 * c, 64)] = pcs[c, :]

    # --- Linear epilogue: one dot, bias fused, lane-dense (1,128) store -----
    logits = jnp.dot(act[...].astype(BF16), wo_ref[...],
                     preferred_element_type=F32)                    # (1, 128)
    o_ref[0] = logits + bo_ref[...]


def cnn_forward(x_nchw, prep):
    """x: (B, 1, 28, 28) f32  ->  logits (B, 10) f32."""
    B = x_nchw.shape[0]
    x = x_nchw.reshape(B, 1, H1 * W1).astype(F32)     # free reshape, C == 1

    flops = 2 * B * (16 * 25 * NPOS1 + 16 * K1_ROWS * HP2 * WP2
                     + 32 * 400 * NPOS2 + 32 * K2_ROWS * 64 + 2048 * 128)
    bytes_accessed = (B * H1 * W1 * 4 + B * 128 * 4
                      + 16 * 25 * 2 + 64 + 32 * 400 * 2 + 128
                      + K1_ROWS * HP2 * WP2 * 2 + K2_ROWS * 64 * 2
                      + 2048 * 128 * 2 + 512)

    out = pl.pallas_call(
        _cnn_kernel,
        out_shape=jax.ShapeDtypeStruct((B, 1, 128), F32),
        grid=(B,),
        in_specs=[
            pl.BlockSpec((1, 1, H1 * W1), lambda b: (b, 0, 0)),      # image
            pl.BlockSpec((16, 25), lambda b: (0, 0)),                # w1
            pl.BlockSpec((16, 1), lambda b: (0, 0)),                 # b1
            pl.BlockSpec((32, 400), lambda b: (0, 0)),               # w2
            pl.BlockSpec((32, 1), lambda b: (0, 0)),                 # b2
            pl.BlockSpec((K1_ROWS, HP2 * WP2), lambda b: (0, 0)),    # pool1 sel
            pl.BlockSpec((K2_ROWS, 64), lambda b: (0, 0)),           # pool2 sel
            pl.BlockSpec((2048, 128), lambda b: (0, 0)),             # w_out
            pl.BlockSpec((1, 128), lambda b: (0, 0)),                # b_out
        ],
        out_specs=pl.BlockSpec((1, 1, 128), lambda b: (b, 0, 0)),
        scratch_shapes=[
            pltpu.VMEM((1, HP1 * WP1), F32),   # zero-padded image, flat rows
            pltpu.VMEM((25, NPOS1), F32),      # conv1 im2col
            pltpu.VMEM((16, HP2 * WP2), F32),  # zero-padded conv2 input
            pltpu.VMEM((400, NPOS2), BF16),    # conv2 im2col
            pltpu.VMEM((32, 64), F32),         # pooled conv2 activation
            pltpu.VMEM((1, 2048), F32),        # flattened Linear activation
        ],
        compiler_params=pltpu.CompilerParams(dimension_semantics=("parallel",)),
        cost_estimate=pl.CostEstimate(flops=flops, transcendentals=0,
                                      bytes_accessed=bytes_accessed),
    )(x, prep["w1t"], prep["b1"], prep["w2t"], prep["b2"],
      prep["s1"], prep["s2"], prep["wout"], prep["bout"])
    return out.reshape(B, 128)[:, :10]


# ------------------------------------------------------------------------------
# One-time parameter repacking (outside the jitted forward)
# ------------------------------------------------------------------------------
def prepare_params(p):
    # conv1 weights: (16,1,5,5) -> (Cout, 25) in (i, j) tap order.
    w1t = p["w1"].reshape(16, 25).astype(BF16)
    b1 = p["b1"].reshape(16, 1).astype(F32)
    # conv2 weights: (32,16,5,5) -> (Cout, 400) in (i, j, cin) order.
    w2t = jnp.transpose(p["w2"], (0, 2, 3, 1)).reshape(32, 400).astype(BF16)
    b2 = p["b2"].reshape(32, 1).astype(F32)

    # pool1 selection/scatter: hm (16, 863) -> padded conv2 input (16, 19*18).
    r1, c1 = [], []
    for ho in range(14):
        for wo in range(14):
            r1.append(2 * WP1 * ho + 2 * wo)
            c1.append(WP2 * (ho + 2) + (wo + 2))
    s1 = jnp.zeros((K1_ROWS, HP2 * WP2), F32)
    s1 = s1.at[jnp.array(r1), jnp.array(c1)].set(1.0).astype(BF16)

    # pool2 selection/compaction: hm2 (32, 233) -> (32, 64) (cols 49..63 zero).
    r2, c2 = [], []
    for ho in range(7):
        for wo in range(7):
            r2.append(2 * WP2 * ho + 2 * wo)
            c2.append(7 * ho + wo)
    s2 = jnp.zeros((K2_ROWS, 64), F32)
    s2 = s2.at[jnp.array(r2), jnp.array(c2)].set(1.0).astype(BF16)

    # Linear: fold the PyTorch NCHW flatten (c, ho, wo) into the weight,
    # pad the per-channel segment 49 -> 64 and N 10 -> 128 (lane-dense store).
    w = p["w_out"].reshape(10, 32, 7, 7)            # (n, c, ho, wo)
    w = jnp.transpose(w, (1, 2, 3, 0)).reshape(32, 49, 10)
    wout = jnp.zeros((32, 64, 128), F32).at[:, :49, :10].set(w)
    wout = wout.reshape(2048, 128).astype(BF16)
    bout = jnp.zeros((1, 128), F32).at[0, :10].set(p["b_out"])

    return dict(w1t=w1t, b1=b1, w2t=w2t, b2=b2, s1=s1, s2=s2,
                wout=wout, bout=bout)


# ------------------------------------------------------------------------------
# Pure-JAX f32 reference (sanity check)
# ------------------------------------------------------------------------------
def reference_forward(x_nchw, p):
    hi = jax.lax.Precision.HIGHEST

    def conv(x, w, b):
        y = jax.lax.conv_general_dilated(
            x, w, window_strides=(1, 1), padding=((2, 2), (2, 2)),
            dimension_numbers=("NCHW", "OIHW", "NCHW"), precision=hi)
        return jax.nn.relu(y + b[None, :, None, None])

    def pool(x):
        return jax.lax.reduce_window(x, -jnp.inf, jax.lax.max,
                                     (1, 1, 2, 2), (1, 1, 2, 2), "VALID")

    x = pool(conv(x_nchw, p["w1"], p["b1"]))
    x = pool(conv(x, p["w2"], p["b2"]))
    x = x.reshape(x.shape[0], -1)
    return jnp.dot(x, p["w_out"].T, precision=hi) + p["b_out"]


# ------------------------------------------------------------------------------
if __name__ == "__main__":
    key = jax.random.PRNGKey(0)
    k1, k2, k3, kx = jax.random.split(key, 4)
    params = dict(
        w1=jax.random.normal(k1, (16, 1, 5, 5), jnp.float32) * 0.1,
        b1=jnp.linspace(-0.1, 0.1, 16).astype(jnp.float32),
        w2=jax.random.normal(k2, (32, 16, 5, 5), jnp.float32) * 0.05,
        b2=jnp.linspace(-0.1, 0.1, 32).astype(jnp.float32),
        w_out=jax.random.normal(k3, (10, 32 * 7 * 7), jnp.float32) * 0.02,
        b_out=jnp.linspace(-0.1, 0.1, 10).astype(jnp.float32),
    )
    # MNIST-style input implied by the module (Linear expects 32*7*7).
    x = jax.random.normal(kx, (2, 1, 28, 28), jnp.float32)

    prep = prepare_params(params)             # one-time repack, outside jit
    out = jax.jit(cnn_forward)(x, prep)
    out = jax.block_until_ready(out)
    assert out.shape == (2, 10), out.shape

    ref = reference_forward(x, params)
    err = float(jnp.max(jnp.abs(out - ref)))
    # bf16 matmul inputs with f32 accumulation -> slightly looser tolerance.
    assert jnp.allclose(out, ref, atol=3e-2, rtol=3e-2), err

    print("KERNEL_OK")
</pallas_src>

<mosaic_0001>
module attributes {stable_mosaic.version = 11 : i64} {
  func.func @_cnn_kernel(%arg0: i32, %arg1: memref<1x1x784xf32, #tpu.memory_space<vmem>>, %arg2: memref<16x25xbf16, #tpu.memory_space<vmem>>, %arg3: memref<16x1xf32, #tpu.memory_space<vmem>>, %arg4: memref<32x400xbf16, #tpu.memory_space<vmem>>, %arg5: memref<32x1xf32, #tpu.memory_space<vmem>>, %arg6: memref<863x342xbf16, #tpu.memory_space<vmem>>, %arg7: memref<233x64xbf16, #tpu.memory_space<vmem>>, %arg8: memref<2048x128xbf16, #tpu.memory_space<vmem>>, %arg9: memref<1x128xf32, #tpu.memory_space<vmem>>, %arg10: memref<1x1x128xf32, #tpu.memory_space<vmem>>, %arg11: memref<1x1056xf32, #tpu.memory_space<vmem>>, %arg12: memref<25x896xf32, #tpu.memory_space<vmem>>, %arg13: memref<16x342xf32, #tpu.memory_space<vmem>>, %arg14: memref<400x252xbf16, #tpu.memory_space<vmem>>, %arg15: memref<32x64xf32, #tpu.memory_space<vmem>>, %arg16: memref<1x2048xf32, #tpu.memory_space<vmem>>) attributes {dimension_semantics = [#tpu.dimension_semantics<parallel>], iteration_bounds = array<i64: 2>, scalar_prefetch = 0 : i64, scratch_operands = 6 : i64, tpu.core_type = #tpu.core_type<tc>, window_params = [{transform_indices = @transform_0, window_bounds = array<i64: 1, 1, 784>}, {pipeline_mode = #tpu.pipeline_mode<synchronous>, transform_indices = @transform_1, window_bounds = array<i64: 16, 25>}, {pipeline_mode = #tpu.pipeline_mode<synchronous>, transform_indices = @transform_2, window_bounds = array<i64: 16, 1>}, {pipeline_mode = #tpu.pipeline_mode<synchronous>, transform_indices = @transform_3, window_bounds = array<i64: 32, 400>}, {pipeline_mode = #tpu.pipeline_mode<synchronous>, transform_indices = @transform_4, window_bounds = array<i64: 32, 1>}, {pipeline_mode = #tpu.pipeline_mode<synchronous>, transform_indices = @transform_5, window_bounds = array<i64: 863, 342>}, {pipeline_mode = #tpu.pipeline_mode<synchronous>, transform_indices = @transform_6, window_bounds = array<i64: 233, 64>}, {pipeline_mode = #tpu.pipeline_mode<synchronous>, transform_indices = @transform_7, window_bounds = array<i64: 2048, 128>}, {pipeline_mode = #tpu.pipeline_mode<synchronous>, transform_indices = @transform_8, window_bounds = array<i64: 1, 128>}, {transform_indices = @transform_9, window_bounds = array<i64: 1, 1, 128>}]} {
    %cst = arith.constant 0.000000e+00 : f32
    %0 = vector.broadcast %cst : f32 to vector<1x1056xf32>
    %c0 = arith.constant 0 : index
    %c0_0 = arith.constant 0 : index
    %1 = vector.load %arg11[%c0, %c0_0] : memref<1x1056xf32, #tpu.memory_space<vmem>>, vector<1x1056xf32>
    tpu.vector_store %arg11[%c0, %c0_0], %0 {strides = array<i32>} : memref<1x1056xf32, #tpu.memory_space<vmem>>, vector<1x1056xf32>,
    %c0_1 = arith.constant 0 : index
    %c0_2 = arith.constant 0 : index
    %c0_3 = arith.constant 0 : index
    %2 = vector.load %arg1[%c0_1, %c0_2, %c0_3] : memref<1x1x784xf32, #tpu.memory_space<vmem>>, vector<1x1x28xf32>
    %3 = vector.shape_cast %2 : vector<1x1x28xf32> to vector<28xf32>
    %c0_4 = arith.constant 0 : index
    %c66 = arith.constant 66 : index
    %4 = vector.load %arg11[%c0_4, %c66] : memref<1x1056xf32, #tpu.memory_space<vmem>>, vector<1x28xf32>
    %5 = vector.shape_cast %4 : vector<1x28xf32> to vector<28xf32>
    %6 = vector.shape_cast %3 : vector<28xf32> to vector<1x28xf32>
    tpu.vector_store %arg11[%c0_4, %c66], %6 {strides = array<i32>} : memref<1x1056xf32, #tpu.memory_space<vmem>>, vector<1x28xf32>,
    %c0_5 = arith.constant 0 : index
    %c0_6 = arith.constant 0 : index
    %c28 = arith.constant 28 : index
    %7 = vector.load %arg1[%c0_5, %c0_6, %c28] : memref<1x1x784xf32, #tpu.memory_space<vmem>>, vector<1x1x28xf32>
    %8 = vector.shape_cast %7 : vector<1x1x28xf32> to vector<28xf32>
    %c0_7 = arith.constant 0 : index
    %c98 = arith.constant 98 : index
    %9 = vector.load %arg11[%c0_7, %c98] : memref<1x1056xf32, #tpu.memory_space<vmem>>, vector<1x28xf32>
    %10 = vector.shape_cast %9 : vector<1x28xf32> to vector<28xf32>
    %11 = vector.shape_cast %8 : vector<28xf32> to vector<1x28xf32>
    tpu.vector_store %arg11[%c0_7, %c98], %11 {strides = array<i32>} : memref<1x1056xf32, #tpu.memory_space<vmem>>, vector<1x28xf32>,
    %c0_8 = arith.constant 0 : index
    %c0_9 = arith.constant 0 : index
    %c56 = arith.constant 56 : index
    %12 = vector.load %arg1[%c0_8, %c0_9, %c56] : memref<1x1x784xf32, #tpu.memory_space<vmem>>, vector<1x1x28xf32>
    %13 = vector.shape_cast %12 : vector<1x1x28xf32> to vector<28xf32>
    %c0_10 = arith.constant 0 : index
    %c130 = arith.constant 130 : index
    %14 = vector.load %arg11[%c0_10, %c130] : memref<1x1056xf32, #tpu.memory_space<vmem>>, vector<1x28xf32>
    %15 = vector.shape_cast %14 : vector<1x28xf32> to vector<28xf32>
    %16 = vector.shape_cast %13 : vector<28xf32> to vector<1x28xf32>
    tpu.vector_store %arg11[%c0_10, %c130], %16 {strides = array<i32>} : memref<1x1056xf32, #tpu.memory_space<vmem>>, vector<1x28xf32>,
    %c0_11 = arith.constant 0 : index
    %c0_12 = arith.constant 0 : index
    %c84 = arith.constant 84 : index
    %17 = vector.load %arg1[%c0_11, %c0_12, %c84] : memref<1x1x784xf32, #tpu.memory_space<vmem>>, vector<1x1x28xf32>
    %18 = vector.shape_cast %17 : vector<1x1x28xf32> to vector<28xf32>
    %c0_13 = arith.constant 0 : index
    %c162 = arith.constant 162 : index
    %19 = vector.load %arg11[%c0_13, %c162] : memref<1x1056xf32, #tpu.memory_space<vmem>>, vector<1x28xf32>
    %20 = vector.shape_cast %19 : vector<1x28xf32> to vector<28xf32>
    %21 = vector.shape_cast %18 : vector<28xf32> to vector<1x28xf32>
    tpu.vector_store %arg11[%c0_13, %c162], %21 {strides = array<i32>} : memref<1x1056xf32, #tpu.memory_space<vmem>>, vector<1x28xf32>,
    %c0_14 = arith.constant 0 : index
    %c0_15 = arith.constant 0 : index
    %c112 = arith.constant 112 : index
    %22 = vector.load %arg1[%c0_14, %c0_15, %c112] : memref<1x1x784xf32, #tpu.memory_space<vmem>>, vector<1x1x28xf32>
    %23 = vector.shape_cast %22 : vector<1x1x28xf32> to vector<28xf32>
    %c0_16 = arith.constant 0 : index
    %c194 = arith.constant 194 : index
    %24 = vector.load %arg11[%c0_16, %c194] : memref<1x1056xf32, #tpu.memory_space<vmem>>, vector<1x28xf32>
    %25 = vector.shape_cast %24 : vector<1x28xf32> to vector<28xf32>
    %26 = vector.shape_cast %23 : vector<28xf32> to vector<1x28xf32>
    tpu.vector_store %arg11[%c0_16, %c194], %26 {strides = array<i32>} : memref<1x1056xf32, #tpu.memory_space<vmem>>, vector<1x28xf32>,
    %c0_17 = arith.constant 0 : index
    %c0_18 = arith.constant 0 : index
    %c140 = arith.constant 140 : index
    %27 = vector.load %arg1[%c0_17, %c0_18, %c140] : memref<1x1x784xf32, #tpu.memory_space<vmem>>, vector<1x1x28xf32>
    %28 = vector.shape_cast %27 : vector<1x1x28xf32> to vector<28xf32>
    %c0_19 = arith.constant 0 : index
    %c226 = arith.constant 226 : index
    %29 = vector.load %arg11[%c0_19, %c226] : memref<1x1056xf32, #tpu.memory_space<vmem>>, vector<1x28xf32>
    %30 = vector.shape_cast %29 : vector<1x28xf32> to vector<28xf32>
    %31 = vector.shape_cast %28 : vector<28xf32> to vector<1x28xf32>
    tpu.vector_store %arg11[%c0_19, %c226], %31 {strides = array<i32>} : memref<1x1056xf32, #tpu.memory_space<vmem>>, vector<1x28xf32>,
    %c0_20 = arith.constant 0 : index
    %c0_21 = arith.constant 0 : index
    %c168 = arith.constant 168 : index
    %32 = vector.load %arg1[%c0_20, %c0_21, %c168] : memref<1x1x784xf32, #tpu.memory_space<vmem>>, vector<1x1x28xf32>
    %33 = vector.shape_cast %32 : vector<1x1x28xf32> to vector<28xf32>
    %c0_22 = arith.constant 0 : index
    %c258 = arith.constant 258 : index
    %34 = vector.load %arg11[%c0_22, %c258] : memref<1x1056xf32, #tpu.memory_space<vmem>>, vector<1x28xf32>
    %35 = vector.shape_cast %34 : vector<1x28xf32> to vector<28xf32>
    %36 = vector.shape_cast %33 : vector<28xf32> to vector<1x28xf32>
    tpu.vector_store %arg11[%c0_22, %c258], %36 {strides = array<i32>} : memref<1x1056xf32, #tpu.memory_space<vmem>>, vector<1x28xf32>,
    %c0_23 = arith.constant 0 : index
    %c0_24 = arith.constant 0 : index
    %c196 = arith.constant 196 : index
    %37 = vector.load %arg1[%c0_23, %c0_24, %c196] : memref<1x1x784xf32, #tpu.memory_space<vmem>>, vector<1x1x28xf32>
    %38 = vector.shape_cast %37 : vector<1x1x28xf32> to vector<28xf32>
    %c0_25 = arith.constant 0 : index
    %c290 = arith.constant 290 : index
    %39 = vector.load %arg11[%c0_25, %c290] : memref<1x1056xf32, #tpu.memory_space<vmem>>, vector<1x28xf32>
    %40 = vector.shape_cast %39 : vector<1x28xf32> to vector<28xf32>
    %41 = vector.shape_cast %38 : vector<28xf32> to vector<1x28xf32>
    tpu.vector_store %arg11[%c0_25, %c290], %41 {strides = array<i32>} : memref<1x1056xf32, #tpu.memory_space<vmem>>, vector<1x28xf32>,
    %c0_26 = arith.constant 0 : index
    %c0_27 = arith.constant 0 : index
    %c224 = arith.constant 224 : index
    %42 = vector.load %arg1[%c0_26, %c0_27, %c224] : memref<1x1x784xf32, #tpu.memory_space<vmem>>, vector<1x1x28xf32>
    %43 = vector.shape_cast %42 : vector<1x1x28xf32> to vector<28xf32>
    %c0_28 = arith.constant 0 : index
    %c322 = arith.constant 322 : index
    %44 = vector.load %arg11[%c0_28, %c322] : memref<1x1056xf32, #tpu.memory_space<vmem>>, vector<1x28xf32>
    %45 = vector.shape_cast %44 : vector<1x28xf32> to vector<28xf32>
    %46 = vector.shape_cast %43 : vector<28xf32> to vector<1x28xf32>
    tpu.vector_store %arg11[%c0_28, %c322], %46 {strides = array<i32>} : memref<1x1056xf32, #tpu.memory_space<vmem>>, vector<1x28xf32>,
    %c0_29 = arith.constant 0 : index
    %c0_30 = arith.constant 0 : index
    %c252 = arith.constant 252 : index
    %47 = vector.load %arg1[%c0_29, %c0_30, %c252] : memref<1x1x784xf32, #tpu.memory_space<vmem>>, vector<1x1x28xf32>
    %48 = vector.shape_cast %47 : vector<1x1x28xf32> to vector<28xf32>
    %c0_31 = arith.constant 0 : index
    %c354 = arith.constant 354 : index
    %49 = vector.load %arg11[%c0_31, %c354] : memref<1x1056xf32, #tpu.memory_space<vmem>>, vector<1x28xf32>
    %50 = vector.shape_cast %49 : vector<1x28xf32> to vector<28xf32>
    %51 = vector.shape_cast %48 : vector<28xf32> to vector<1x28xf32>
    tpu.vector_store %arg11[%c0_31, %c354], %51 {strides = array<i32>} : memref<1x1056xf32, #tpu.memory_space<vmem>>, vector<1x28xf32>,
    %c0_32 = arith.constant 0 : index
    %c0_33 = arith.constant 0 : index
    %c280 = arith.constant 280 : index
    %52 = vector.load %arg1[%c0_32, %c0_33, %c280] : memref<1x1x784xf32, #tpu.memory_space<vmem>>, vector<1x1x28xf32>
    %53 = vector.shape_cast %52 : vector<1x1x28xf32> to vector<28xf32>
    %c0_34 = arith.constant 0 : index
    %c386 = arith.constant 386 : index
    %54 = vector.load %arg11[%c0_34, %c386] : memref<1x1056xf32, #tpu.memory_space<vmem>>, vector<1x28xf32>
    %55 = vector.shape_cast %54 : vector<1x28xf32> to vector<28xf32>
    %56 = vector.shape_cast %53 : vector<28xf32> to vector<1x28xf32>
    tpu.vector_store %arg11[%c0_34, %c386], %56 {strides = array<i32>} : memref<1x1056xf32, #tpu.memory_space<vmem>>, vector<1x28xf32>,
    %c0_35 = arith.constant 0 : index
    %c0_36 = arith.constant 0 : index
    %c308 = arith.constant 308 : index
    %57 = vector.load %arg1[%c0_35, %c0_36, %c308] : memref<1x1x784xf32, #tpu.memory_space<vmem>>, vector<1x1x28xf32>
    %58 = vector.shape_cast %57 : vector<1x1x28xf32> to vector<28xf32>
    %c0_37 = arith.constant 0 : index
    %c418 = arith.constant 418 : index
    %59 = vector.load %arg11[%c0_37, %c418] : memref<1x1056xf32, #tpu.memory_space<vmem>>, vector<1x28xf32>
    %60 = vector.shape_cast %59 : vector<1x28xf32> to vector<28xf32>
    %61 = vector.shape_cast %58 : vector<28xf32> to vector<1x28xf32>
    tpu.vector_store %arg11[%c0_37, %c418], %61 {strides = array<i32>} : memref<1x1056xf32, #tpu.memory_space<vmem>>, vector<1x28xf32>,
    %c0_38 = arith.constant 0 : index
    %c0_39 = arith.constant 0 : index
    %c336 = arith.constant 336 : index
    %62 = vector.load %arg1[%c0_38, %c0_39, %c336] : memref<1x1x784xf32, #tpu.memory_space<vmem>>, vector<1x1x28xf32>
    %63 = vector.shape_cast %62 : vector<1x1x28xf32> to vector<28xf32>
    %c0_40 = arith.constant 0 : index
    %c450 = arith.constant 450 : index
    %64 = vector.load %arg11[%c0_40, %c450] : memref<1x1056xf32, #tpu.memory_space<vmem>>, vector<1x28xf32>
    %65 = vector.shape_cast %64 : vector<1x28xf32> to vector<28xf32>
    %66 = vector.shape_cast %63 : vector<28xf32> to vector<1x28xf32>
    tpu.vector_store %arg11[%c0_40, %c450], %66 {strides = array<i32>} : memref<1x1056xf32, #tpu.memory_space<vmem>>, vector<1x28xf32>,
    %c0_41 = arith.constant 0 : index
    %c0_42 = arith.constant 0 : index
    %c364 = arith.constant 364 : index
    %67 = vector.load %arg1[%c0_41, %c0_42, %c364] : memref<1x1x784xf32, #tpu.memory_space<vmem>>, vector<1x1x28xf32>
    %68 = vector.shape_cast %67 : vector<1x1x28xf32> to vector<28xf32>
    %c0_43 = arith.constant 0 : index
    %c482 = arith.constant 482 : index
    %69 = vector.load %arg11[%c0_43, %c482] : memref<1x1056xf32, #tpu.memory_space<vmem>>, vector<1x28xf32>
    %70 = vector.shape_cast %69 : vector<1x28xf32> to vector<28xf32>
    %71 = vector.shape_cast %68 : vector<28xf32> to vector<1x28xf32>
    tpu.vector_store %arg11[%c0_43, %c482], %71 {strides = array<i32>} : memref<1x1056xf32, #tpu.memory_space<vmem>>, vector<1x28xf32>,
    %c0_44 = arith.constant 0 : index
    %c0_45 = arith.constant 0 : index
    %c392 = arith.constant 392 : index
    %72 = vector.load %arg1[%c0_44, %c0_45, %c392] : memref<1x1x784xf32, #tpu.memory_space<vmem>>, vector<1x1x28xf32>
    %73 = vector.shape_cast %72 : vector<1x1x28xf32> to vector<28xf32>
    %c0_46 = arith.constant 0 : index
    %c514 = arith.constant 514 : index
    %74 = vector.load %arg11[%c0_46, %c514] : memref<1x1056xf32, #tpu.memory_space<vmem>>, vector<1x28xf32>
    %75 = vector.shape_cast %74 : vector<1x28xf32> to vector<28xf32>
    %76 = vector.shape_cast %73 : vector<28xf32> to vector<1x28xf32>
    tpu.vector_store %arg11[%c0_46, %c514], %76 {strides = array<i32>} : memref<1x1056xf32, #tpu.memory_space<vmem>>, vector<1x28xf32>,
    %c0_47 = arith.constant 0 : index
    %c0_48 = arith.constant 0 : index
    %c420 = arith.constant 420 : index
    %77 = vector.load %arg1[%c0_47, %c0_48, %c420] : memref<1x1x784xf32, #tpu.memory_space<vmem>>, vector<1x1x28xf32>
    %78 = vector.shape_cast %77 : vector<1x1x28xf32> to vector<28xf32>
    %c0_49 = arith.constant 0 : index
    %c546 = arith.constant 546 : index
    %79 = vector.load %arg11[%c0_49, %c546] : memref<1x1056xf32, #tpu.memory_space<vmem>>, vector<1x28xf32>
    %80 = vector.shape_cast %79 : vector<1x28xf32> to vector<28xf32>
    %81 = vector.shape_cast %78 : vector<28xf32> to vector<1x28xf32>
    tpu.vector_store %arg11[%c0_49, %c546], %81 {strides = array<i32>} : memref<1x1056xf32, #tpu.memory_space<vmem>>, vector<1x28xf32>,
    %c0_50 = arith.constant 0 : index
    %c0_51 = arith.constant 0 : index
    %c448 = arith.constant 448 : index
    %82 = vector.load %arg1[%c0_50, %c0_51, %c448] : memref<1x1x784xf32, #tpu.memory_space<vmem>>, vector<1x1x28xf32>
    %83 = vector.shape_cast %82 : vector<1x1x28xf32> to vector<28xf32>
    %c0_52 = arith.constant 0 : index
    %c578 = arith.constant 578 : index
    %84 = vector.load %arg11[%c0_52, %c578] : memref<1x1056xf32, #tpu.memory_space<vmem>>, vector<1x28xf32>
    %85 = vector.shape_cast %84 : vector<1x28xf32> to vector<28xf32>
    %86 = vector.shape_cast %83 : vector<28xf32> to vector<1x28xf32>
    tpu.vector_store %arg11[%c0_52, %c578], %86 {strides = array<i32>} : memref<1x1056xf32, #tpu.memory_space<vmem>>, vector<1x28xf32>,
    %c0_53 = arith.constant 0 : index
    %c0_54 = arith.constant 0 : index
    %c476 = arith.constant 476 : index
    %87 = vector.load %arg1[%c0_53, %c0_54, %c476] : memref<1x1x784xf32, #tpu.memory_space<vmem>>, vector<1x1x28xf32>
    %88 = vector.shape_cast %87 : vector<1x1x28xf32> to vector<28xf32>
    %c0_55 = arith.constant 0 : index
    %c610 = arith.constant 610 : index
    %89 = vector.load %arg11[%c0_55, %c610] : memref<1x1056xf32, #tpu.memory_space<vmem>>, vector<1x28xf32>
    %90 = vector.shape_cast %89 : vector<1x28xf32> to vector<28xf32>
    %91 = vector.shape_cast %88 : vector<28xf32> to vector<1x28xf32>
    tpu.vector_store %arg11[%c0_55, %c610], %91 {strides = array<i32>} : memref<1x1056xf32, #tpu.memory_space<vmem>>, vector<1x28xf32>,
    %c0_56 = arith.constant 0 : index
    %c0_57 = arith.constant 0 : index
    %c504 = arith.constant 504 : index
    %92 = vector.load %arg1[%c0_56, %c0_57, %c504] : memref<1x1x784xf32, #tpu.memory_space<vmem>>, vector<1x1x28xf32>
    %93 = vector.shape_cast %92 : vector<1x1x28xf32> to vector<28xf32>
    %c0_58 = arith.constant 0 : index
    %c642 = arith.constant 642 : index
    %94 = vector.load %arg11[%c0_58, %c642] : memref<1x1056xf32, #tpu.memory_space<vmem>>, vector<1x28xf32>
    %95 = vector.shape_cast %94 : vector<1x28xf32> to vector<28xf32>
    %96 = vector.shape_cast %93 : vector<28xf32> to vector<1x28xf32>
    tpu.vector_store %arg11[%c0_58, %c642], %96 {strides = array<i32>} : memref<1x1056xf32, #tpu.memory_space<vmem>>, vector<1x28xf32>,
    %c0_59 = arith.constant 0 : index
    %c0_60 = arith.constant 0 : index
    %c532 = arith.constant 532 : index
    %97 = vector.load %arg1[%c0_59, %c0_60, %c532] : memref<1x1x784xf32, #tpu.memory_space<vmem>>, vector<1x1x28xf32>
    %98 = vector.shape_cast %97 : vector<1x1x28xf32> to vector<28xf32>
    %c0_61 = arith.constant 0 : index
    %c674 = arith.constant 674 : index
    %99 = vector.load %arg11[%c0_61, %c674] : memref<1x1056xf32, #tpu.memory_space<vmem>>, vector<1x28xf32>
    %100 = vector.shape_cast %99 : vector<1x28xf32> to vector<28xf32>
    %101 = vector.shape_cast %98 : vector<28xf32> to vector<1x28xf32>
    tpu.vector_store %arg11[%c0_61, %c674], %101 {strides = array<i32>} : memref<1x1056xf32, #tpu.memory_space<vmem>>, vector<1x28xf32>,
    %c0_62 = arith.constant 0 : index
    %c0_63 = arith.constant 0 : index
    %c560 = arith.constant 560 : index
    %102 = vector.load %arg1[%c0_62, %c0_63, %c560] : memref<1x1x784xf32, #tpu.memory_space<vmem>>, vector<1x1x28xf32>
    %103 = vector.shape_cast %102 : vector<1x1x28xf32> to vector<28xf32>
    %c0_64 = arith.constant 0 : index
    %c706 = arith.constant 706 : index
    %104 = vector.load %arg11[%c0_64, %c706] : memref<1x1056xf32, #tpu.memory_space<vmem>>, vector<1x28xf32>
    %105 = vector.shape_cast %104 : vector<1x28xf32> to vector<28xf32>
    %106 = vector.shape_cast %103 : vector<28xf32> to vector<1x28xf32>
    tpu.vector_store %arg11[%c0_64, %c706], %106 {strides = array<i32>} : memref<1x1056xf32, #tpu.memory_space<vmem>>, vector<1x28xf32>,
    %c0_65 = arith.constant 0 : index
    %c0_66 = arith.constant 0 : index
    %c588 = arith.constant 588 : index
    %107 = vector.load %arg1[%c0_65, %c0_66, %c588] : memref<1x1x784xf32, #tpu.memory_space<vmem>>, vector<1x1x28xf32>
    %108 = vector.shape_cast %107 : vector<1x1x28xf32> to vector<28xf32>
    %c0_67 = arith.constant 0 : index
    %c738 = arith.constant 738 : index
    %109 = vector.load %arg11[%c0_67, %c738] : memref<1x1056xf32, #tpu.memory_space<vmem>>, vector<1x28xf32>
    %110 = vector.shape_cast %109 : vector<1x28xf32> to vector<28xf32>
    %111 = vector.shape_cast %108 : vector<28xf32> to vector<1x28xf32>
    tpu.vector_store %arg11[%c0_67, %c738], %111 {strides = array<i32>} : memref<1x1056xf32, #tpu.memory_space<vmem>>, vector<1x28xf32>,
    %c0_68 = arith.constant 0 : index
    %c0_69 = arith.constant 0 : index
    %c616 = arith.constant 616 : index
    %112 = vector.load %arg1[%c0_68, %c0_69, %c616] : memref<1x1x784xf32, #tpu.memory_space<vmem>>, vector<1x1x28xf32>
    %113 = vector.shape_cast %112 : vector<1x1x28xf32> to vector<28xf32>
    %c0_70 = arith.constant 0 : index
    %c770 = arith.constant 770 : index
    %114 = vector.load %arg11[%c0_70, %c770] : memref<1x1056xf32, #tpu.memory_space<vmem>>, vector<1x28xf32>
    %115 = vector.shape_cast %114 : vector<1x28xf32> to vector<28xf32>
    %116 = vector.shape_cast %113 : vector<28xf32> to vector<1x28xf32>
    tpu.vector_store %arg11[%c0_70, %c770], %116 {strides = array<i32>} : memref<1x1056xf32, #tpu.memory_space<vmem>>, vector<1x28xf32>,
    %c0_71 = arith.constant 0 : index
    %c0_72 = arith.constant 0 : index
    %c644 = arith.constant 644 : index
    %117 = vector.load %arg1[%c0_71, %c0_72, %c644] : memref<1x1x784xf32, #tpu.memory_space<vmem>>, vector<1x1x28xf32>
    %118 = vector.shape_cast %117 : vector<1x1x28xf32> to vector<28xf32>
    %c0_73 = arith.constant 0 : index
    %c802 = arith.constant 802 : index
    %119 = vector.load %arg11[%c0_73, %c802] : memref<1x1056xf32, #tpu.memory_space<vmem>>, vector<1x28xf32>
    %120 = vector.shape_cast %119 : vector<1x28xf32> to vector<28xf32>
    %121 = vector.shape_cast %118 : vector<28xf32> to vector<1x28xf32>
    tpu.vector_store %arg11[%c0_73, %c802], %121 {strides = array<i32>} : memref<1x1056xf32, #tpu.memory_space<vmem>>, vector<1x28xf32>,
    %c0_74 = arith.constant 0 : index
    %c0_75 = arith.constant 0 : index
    %c672 = arith.constant 672 : index
    %122 = vector.load %arg1[%c0_74, %c0_75, %c672] : memref<1x1x784xf32, #tpu.memory_space<vmem>>, vector<1x1x28xf32>
    %123 = vector.shape_cast %122 : vector<1x1x28xf32> to vector<28xf32>
    %c0_76 = arith.constant 0 : index
    %c834 = arith.constant 834 : index
    %124 = vector.load %arg11[%c0_76, %c834] : memref<1x1056xf32, #tpu.memory_space<vmem>>, vector<1x28xf32>
    %125 = vector.shape_cast %124 : vector<1x28xf32> to vector<28xf32>
    %126 = vector.shape_cast %123 : vector<28xf32> to vector<1x28xf32>
    tpu.vector_store %arg11[%c0_76, %c834], %126 {strides = array<i32>} : memref<1x1056xf32, #tpu.memory_space<vmem>>, vector<1x28xf32>,
    %c0_77 = arith.constant 0 : index
    %c0_78 = arith.constant 0 : index
    %c700 = arith.constant 700 : index
    %127 = vector.load %arg1[%c0_77, %c0_78, %c700] : memref<1x1x784xf32, #tpu.memory_space<vmem>>, vector<1x1x28xf32>
    %128 = vector.shape_cast %127 : vector<1x1x28xf32> to vector<28xf32>
    %c0_79 = arith.constant 0 : index
    %c866 = arith.constant 866 : index
    %129 = vector.load %arg11[%c0_79, %c866] : memref<1x1056xf32, #tpu.memory_space<vmem>>, vector<1x28xf32>
    %130 = vector.shape_cast %129 : vector<1x28xf32> to vector<28xf32>
    %131 = vector.shape_cast %128 : vector<28xf32> to vector<1x28xf32>
    tpu.vector_store %arg11[%c0_79, %c866], %131 {strides = array<i32>} : memref<1x1056xf32, #tpu.memory_space<vmem>>, vector<1x28xf32>,
    %c0_80 = arith.constant 0 : index
    %c0_81 = arith.constant 0 : index
    %c728 = arith.constant 728 : index
    %132 = vector.load %arg1[%c0_80, %c0_81, %c728] : memref<1x1x784xf32, #tpu.memory_space<vmem>>, vector<1x1x28xf32>
    %133 = vector.shape_cast %132 : vector<1x1x28xf32> to vector<28xf32>
    %c0_82 = arith.constant 0 : index
    %c898 = arith.constant 898 : index
    %134 = vector.load %arg11[%c0_82, %c898] : memref<1x1056xf32, #tpu.memory_space<vmem>>, vector<1x28xf32>
    %135 = vector.shape_cast %134 : vector<1x28xf32> to vector<28xf32>
    %136 = vector.shape_cast %133 : vector<28xf32> to vector<1x28xf32>
    tpu.vector_store %arg11[%c0_82, %c898], %136 {strides = array<i32>} : memref<1x1056xf32, #tpu.memory_space<vmem>>, vector<1x28xf32>,
    %c0_83 = arith.constant 0 : index
    %c0_84 = arith.constant 0 : index
    %c756 = arith.constant 756 : index
    %137 = vector.load %arg1[%c0_83, %c0_84, %c756] : memref<1x1x784xf32, #tpu.memory_space<vmem>>, vector<1x1x28xf32>
    %138 = vector.shape_cast %137 : vector<1x1x28xf32> to vector<28xf32>
    %c0_85 = arith.constant 0 : index
    %c930 = arith.constant 930 : index
    %139 = vector.load %arg11[%c0_85, %c930] : memref<1x1056xf32, #tpu.memory_space<vmem>>, vector<1x28xf32>
    %140 = vector.shape_cast %139 : vector<1x28xf32> to vector<28xf32>
    %141 = vector.shape_cast %138 : vector<28xf32> to vector<1x28xf32>
    tpu.vector_store %arg11[%c0_85, %c930], %141 {strides = array<i32>} : memref<1x1056xf32, #tpu.memory_space<vmem>>, vector<1x28xf32>,
    %c0_86 = arith.constant 0 : index
    %c0_87 = arith.constant 0 : index
    %142 = vector.load %arg11[%c0_86, %c0_87] : memref<1x1056xf32, #tpu.memory_space<vmem>>, vector<1x896xf32>
    %143 = vector.shape_cast %142 : vector<1x896xf32> to vector<896xf32>
    %c0_88 = arith.constant 0 : index
    %c0_89 = arith.constant 0 : index
    %144 = vector.load %arg12[%c0_88, %c0_89] : memref<25x896xf32, #tpu.memory_space<vmem>>, vector<1x896xf32>
    %145 = vector.shape_cast %144 : vector<1x896xf32> to vector<896xf32>
    %146 = vector.shape_cast %143 : vector<896xf32> to vector<1x896xf32>
    tpu.vector_store %arg12[%c0_88, %c0_89], %146 {strides = array<i32>} : memref<25x896xf32, #tpu.memory_space<vmem>>, vector<1x896xf32>,
    %c0_90 = arith.constant 0 : index
    %c1 = arith.constant 1 : index
    %147 = vector.load %arg11[%c0_90, %c1] : memref<1x1056xf32, #tpu.memory_space<vmem>>, vector<1x896xf32>
    %148 = vector.shape_cast %147 : vector<1x896xf32> to vector<896xf32>
    %c1_91 = arith.constant 1 : index
    %c0_92 = arith.constant 0 : index
    %149 = vector.load %arg12[%c1_91, %c0_92] : memref<25x896xf32, #tpu.memory_space<vmem>>, vector<1x896xf32>
    %150 = vector.shape_cast %149 : vector<1x896xf32> to vector<896xf32>
    %151 = vector.shape_cast %148 : vector<896xf32> to vector<1x896xf32>
    tpu.vector_store %arg12[%c1_91, %c0_92], %151 {strides = array<i32>} : memref<25x896xf32, #tpu.memory_space<vmem>>, vector<1x896xf32>,
    %c0_93 = arith.constant 0 : index
    %c2 = arith.constant 2 : index
    %152 = vector.load %arg11[%c0_93, %c2] : memref<1x1056xf32, #tpu.memory_space<vmem>>, vector<1x896xf32>
    %153 = vector.shape_cast %152 : vector<1x896xf32> to vector<896xf32>
    %c2_94 = arith.constant 2 : index
    %c0_95 = arith.constant 0 : index
    %154 = vector.load %arg12[%c2_94, %c0_95] : memref<25x896xf32, #tpu.memory_space<vmem>>, vector<1x896xf32>
    %155 = vector.shape_cast %154 : vector<1x896xf32> to vector<896xf32>
    %156 = vector.shape_cast %153 : vector<896xf32> to vector<1x896xf32>
    tpu.vector_store %arg12[%c2_94, %c0_95], %156 {strides = array<i32>} : memref<25x896xf32, #tpu.memory_space<vmem>>, vector<1x896xf32>,
    %c0_96 = arith.constant 0 : index
    %c3 = arith.constant 3 : index
    %157 = vector.load %arg11[%c0_96, %c3] : memref<1x1056xf32, #tpu.memory_space<vmem>>, vector<1x896xf32>
    %158 = vector.shape_cast %157 : vector<1x896xf32> to vector<896xf32>
    %c3_97 = arith.constant 3 : index
    %c0_98 = arith.constant 0 : index
    %159 = vector.load %arg12[%c3_97, %c0_98] : memref<25x896xf32, #tpu.memory_space<vmem>>, vector<1x896xf32>
    %160 = vector.shape_cast %159 : vector<1x896xf32> to vector<896xf32>
    %161 = vector.shape_cast %158 : vector<896xf32> to vector<1x896xf32>
    tpu.vector_store %arg12[%c3_97, %c0_98], %161 {strides = array<i32>} : memref<25x896xf32, #tpu.memory_space<vmem>>, vector<1x896xf32>,
    %c0_99 = arith.constant 0 : index
    %c4 = arith.constant 4 : index
    %162 = vector.load %arg11[%c0_99, %c4] : memref<1x1056xf32, #tpu.memory_space<vmem>>, vector<1x896xf32>
    %163 = vector.shape_cast %162 : vector<1x896xf32> to vector<896xf32>
    %c4_100 = arith.constant 4 : index
    %c0_101 = arith.constant 0 : index
    %164 = vector.load %arg12[%c4_100, %c0_101] : memref<25x896xf32, #tpu.memory_space<vmem>>, vector<1x896xf32>
    %165 = vector.shape_cast %164 : vector<1x896xf32> to vector<896xf32>
    %166 = vector.shape_cast %163 : vector<896xf32> to vector<1x896xf32>
    tpu.vector_store %arg12[%c4_100, %c0_101], %166 {strides = array<i32>} : memref<25x896xf32, #tpu.memory_space<vmem>>, vector<1x896xf32>,
    %c0_102 = arith.constant 0 : index
    %c32 = arith.constant 32 : index
    %167 = vector.load %arg11[%c0_102, %c32] : memref<1x1056xf32, #tpu.memory_space<vmem>>, vector<1x896xf32>
    %168 = vector.shape_cast %167 : vector<1x896xf32> to vector<896xf32>
    %c5 = arith.constant 5 : index
    %c0_103 = arith.constant 0 : index
    %169 = vector.load %arg12[%c5, %c0_103] : memref<25x896xf32, #tpu.memory_space<vmem>>, vector<1x896xf32>
    %170 = vector.shape_cast %169 : vector<1x896xf32> to vector<896xf32>
    %171 = vector.shape_cast %168 : vector<896xf32> to vector<1x896xf32>
    tpu.vector_store %arg12[%c5, %c0_103], %171 {strides = array<i32>} : memref<25x896xf32, #tpu.memory_space<vmem>>, vector<1x896xf32>,
    %c0_104 = arith.constant 0 : index
    %c33 = arith.constant 33 : index
    %172 = vector.load %arg11[%c0_104, %c33] : memref<1x1056xf32, #tpu.memory_space<vmem>>, vector<1x896xf32>
    %173 = vector.shape_cast %172 : vector<1x896xf32> to vector<896xf32>
    %c6 = arith.constant 6 : index
    %c0_105 = arith.constant 0 : index
    %174 = vector.load %arg12[%c6, %c0_105] : memref<25x896xf32, #tpu.memory_space<vmem>>, vector<1x896xf32>
    %175 = vector.shape_cast %174 : vector<1x896xf32> to vector<896xf32>
    %176 = vector.shape_cast %173 : vector<896xf32> to vector<1x896xf32>
    tpu.vector_store %arg12[%c6, %c0_105], %176 {strides = array<i32>} : memref<25x896xf32, #tpu.memory_space<vmem>>, vector<1x896xf32>,
    %c0_106 = arith.constant 0 : index
    %c34 = arith.constant 34 : index
    %177 = vector.load %arg11[%c0_106, %c34] : memref<1x1056xf32, #tpu.memory_space<vmem>>, vector<1x896xf32>
    %178 = vector.shape_cast %177 : vector<1x896xf32> to vector<896xf32>
    %c7 = arith.constant 7 : index
    %c0_107 = arith.constant 0 : index
    %179 = vector.load %arg12[%c7, %c0_107] : memref<25x896xf32, #tpu.memory_space<vmem>>, vector<1x896xf32>
    %180 = vector.shape_cast %179 : vector<1x896xf32> to vector<896xf32>
    %181 = vector.shape_cast %178 : vector<896xf32> to vector<1x896xf32>
    tpu.vector_store %arg12[%c7, %c0_107], %181 {strides = array<i32>} : memref<25x896xf32, #tpu.memory_space<vmem>>, vector<1x896xf32>,
    %c0_108 = arith.constant 0 : index
    %c35 = arith.constant 35 : index
    %182 = vector.load %arg11[%c0_108, %c35] : memref<1x1056xf32, #tpu.memory_space<vmem>>, vector<1x896xf32>
    %183 = vector.shape_cast %182 : vector<1x896xf32> to vector<896xf32>
    %c8 = arith.constant 8 : index
    %c0_109 = arith.constant 0 : index
    %184 = vector.load %arg12[%c8, %c0_109] : memref<25x896xf32, #tpu.memory_space<vmem>>, vector<1x896xf32>
    %185 = vector.shape_cast %184 : vector<1x896xf32> to vector<896xf32>
    %186 = vector.shape_cast %183 : vector<896xf32> to vector<1x896xf32>
    tpu.vector_store %arg12[%c8, %c0_109], %186 {strides = array<i32>} : memref<25x896xf32, #tpu.memory_space<vmem>>, vector<1x896xf32>,
    %c0_110 = arith.constant 0 : index
    %c36 = arith.constant 36 : index
    %187 = vector.load %arg11[%c0_110, %c36] : memref<1x1056xf32, #tpu.memory_space<vmem>>, vector<1x896xf32>
    %188 = vector.shape_cast %187 : vector<1x896xf32> to vector<896xf32>
    %c9 = arith.constant 9 : index
    %c0_111 = arith.constant 0 : index
    %189 = vector.load %arg12[%c9, %c0_111] : memref<25x896xf32, #tpu.memory_space<vmem>>, vector<1x896xf32>
    %190 = vector.shape_cast %189 : vector<1x896xf32> to vector<896xf32>
    %191 = vector.shape_cast %188 : vector<896xf32> to vector<1x896xf32>
    tpu.vector_store %arg12[%c9, %c0_111], %191 {strides = array<i32>} : memref<25x896xf32, #tpu.memory_space<vmem>>, vector<1x896xf32>,
    %c0_112 = arith.constant 0 : index
    %c64 = arith.constant 64 : index
    %192 = vector.load %arg11[%c0_112, %c64] : memref<1x1056xf32, #tpu.memory_space<vmem>>, vector<1x896xf32>
    %193 = vector.shape_cast %192 : vector<1x896xf32> to vector<896xf32>
    %c10 = arith.constant 10 : index
    %c0_113 = arith.constant 0 : index
    %194 = vector.load %arg12[%c10, %c0_113] : memref<25x896xf32, #tpu.memory_space<vmem>>, vector<1x896xf32>
    %195 = vector.shape_cast %194 : vector<1x896xf32> to vector<896xf32>
    %196 = vector.shape_cast %193 : vector<896xf32> to vector<1x896xf32>
    tpu.vector_store %arg12[%c10, %c0_113], %196 {strides = array<i32>} : memref<25x896xf32, #tpu.memory_space<vmem>>, vector<1x896xf32>,
    %c0_114 = arith.constant 0 : index
    %c65 = arith.constant 65 : index
    %197 = vector.load %arg11[%c0_114, %c65] : memref<1x1056xf32, #tpu.memory_space<vmem>>, vector<1x896xf32>
    %198 = vector.shape_cast %197 : vector<1x896xf32> to vector<896xf32>
    %c11 = arith.constant 11 : index
    %c0_115 = arith.constant 0 : index
    %199 = vector.load %arg12[%c11, %c0_115] : memref<25x896xf32, #tpu.memory_space<vmem>>, vector<1x896xf32>
    %200 = vector.shape_cast %199 : vector<1x896xf32> to vector<896xf32>
    %201 = vector.shape_cast %198 : vector<896xf32> to vector<1x896xf32>
    tpu.vector_store %arg12[%c11, %c0_115], %201 {strides = array<i32>} : memref<25x896xf32, #tpu.memory_space<vmem>>, vector<1x896xf32>,
    %c0_116 = arith.constant 0 : index
    %c66_117 = arith.constant 66 : index
    %202 = vector.load %arg11[%c0_116, %c66_117] : memref<1x1056xf32, #tpu.memory_space<vmem>>, vector<1x896xf32>
    %203 = vector.shape_cast %202 : vector<1x896xf32> to vector<896xf32>
    %c12 = arith.constant 12 : index
    %c0_118 = arith.constant 0 : index
    %204 = vector.load %arg12[%c12, %c0_118] : memref<25x896xf32, #tpu.memory_space<vmem>>, vector<1x896xf32>
    %205 = vector.shape_cast %204 : vector<1x896xf32> to vector<896xf32>
    %206 = vector.shape_cast %203 : vector<896xf32> to vector<1x896xf32>
    tpu.vector_store %arg12[%c12, %c0_118], %206 {strides = array<i32>} : memref<25x896xf32, #tpu.memory_space<vmem>>, vector<1x896xf32>,
    %c0_119 = arith.constant 0 : index
    %c67 = arith.constant 67 : index
    %207 = vector.load %arg11[%c0_119, %c67] : memref<1x1056xf32, #tpu.memory_space<vmem>>, vector<1x896xf32>
    %208 = vector.shape_cast %207 : vector<1x896xf32> to vector<896xf32>
    %c13 = arith.constant 13 : index
    %c0_120 = arith.constant 0 : index
    %209 = vector.load %arg12[%c13, %c0_120] : memref<25x896xf32, #tpu.memory_space<vmem>>, vector<1x896xf32>
    %210 = vector.shape_cast %209 : vector<1x896xf32> to vector<896xf32>
    %211 = vector.shape_cast %208 : vector<896xf32> to vector<1x896xf32>
    tpu.vector_store %arg12[%c13, %c0_120], %211 {strides = array<i32>} : memref<25x896xf32, #tpu.memory_space<vmem>>, vector<1x896xf32>,
    %c0_121 = arith.constant 0 : index
    %c68 = arith.constant 68 : index
    %212 = vector.load %arg11[%c0_121, %c68] : memref<1x1056xf32, #tpu.memory_space<vmem>>, vector<1x896xf32>
    %213 = vector.shape_cast %212 : vector<1x896xf32> to vector<896xf32>
    %c14 = arith.constant 14 : index
    %c0_122 = arith.constant 0 : index
    %214 = vector.load %arg12[%c14, %c0_122] : memref<25x896xf32, #tpu.memory_space<vmem>>, vector<1x896xf32>
    %215 = vector.shape_cast %214 : vector<1x896xf32> to vector<896xf32>
    %216 = vector.shape_cast %213 : vector<896xf32> to vector<1x896xf32>
    tpu.vector_store %arg12[%c14, %c0_122], %216 {strides = array<i32>} : memref<25x896xf32, #tpu.memory_space<vmem>>, vector<1x896xf32>,
    %c0_123 = arith.constant 0 : index
    %c96 = arith.constant 96 : index
    %217 = vector.load %arg11[%c0_123, %c96] : memref<1x1056xf32, #tpu.memory_space<vmem>>, vector<1x896xf32>
    %218 = vector.shape_cast %217 : vector<1x896xf32> to vector<896xf32>
    %c15 = arith.constant 15 : index
    %c0_124 = arith.constant 0 : index
    %219 = vector.load %arg12[%c15, %c0_124] : memref<25x896xf32, #tpu.memory_space<vmem>>, vector<1x896xf32>
    %220 = vector.shape_cast %219 : vector<1x896xf32> to vector<896xf32>
    %221 = vector.shape_cast %218 : vector<896xf32> to vector<1x896xf32>
    tpu.vector_store %arg12[%c15, %c0_124], %221 {strides = array<i32>} : memref<25x896xf32, #tpu.memory_space<vmem>>, vector<1x896xf32>,
    %c0_125 = arith.constant 0 : index
    %c97 = arith.constant 97 : index
    %222 = vector.load %arg11[%c0_125, %c97] : memref<1x1056xf32, #tpu.memory_space<vmem>>, vector<1x896xf32>
    %223 = vector.shape_cast %222 : vector<1x896xf32> to vector<896xf32>
    %c16 = arith.constant 16 : index
    %c0_126 = arith.constant 0 : index
    %224 = vector.load %arg12[%c16, %c0_126] : memref<25x896xf32, #tpu.memory_space<vmem>>, vector<1x896xf32>
    %225 = vector.shape_cast %224 : vector<1x896xf32> to vector<896xf32>
    %226 = vector.shape_cast %223 : vector<896xf32> to vector<1x896xf32>
    tpu.vector_store %arg12[%c16, %c0_126], %226 {strides = array<i32>} : memref<25x896xf32, #tpu.memory_space<vmem>>, vector<1x896xf32>,
    %c0_127 = arith.constant 0 : index
    %c98_128 = arith.constant 98 : index
    %227 = vector.load %arg11[%c0_127, %c98_128] : memref<1x1056xf32, #tpu.memory_space<vmem>>, vector<1x896xf32>
    %228 = vector.shape_cast %227 : vector<1x896xf32> to vector<896xf32>
    %c17 = arith.constant 17 : index
    %c0_129 = arith.constant 0 : index
    %229 = vector.load %arg12[%c17, %c0_129] : memref<25x896xf32, #tpu.memory_space<vmem>>, vector<1x896xf32>
    %230 = vector.shape_cast %229 : vector<1x896xf32> to vector<896xf32>
    %231 = vector.shape_cast %228 : vector<896xf32> to vector<1x896xf32>
    tpu.vector_store %arg12[%c17, %c0_129], %231 {strides = array<i32>} : memref<25x896xf32, #tpu.memory_space<vmem>>, vector<1x896xf32>,
    %c0_130 = arith.constant 0 : index
    %c99 = arith.constant 99 : index
    %232 = vector.load %arg11[%c0_130, %c99] : memref<1x1056xf32, #tpu.memory_space<vmem>>, vector<1x896xf32>
    %233 = vector.shape_cast %232 : vector<1x896xf32> to vector<896xf32>
    %c18 = arith.constant 18 : index
    %c0_131 = arith.constant 0 : index
    %234 = vector.load %arg12[%c18, %c0_131] : memref<25x896xf32, #tpu.memory_space<vmem>>, vector<1x896xf32>
    %235 = vector.shape_cast %234 : vector<1x896xf32> to vector<896xf32>
    %236 = vector.shape_cast %233 : vector<896xf32> to vector<1x896xf32>
    tpu.vector_store %arg12[%c18, %c0_131], %236 {strides = array<i32>} : memref<25x896xf32, #tpu.memory_space<vmem>>, vector<1x896xf32>,
    %c0_132 = arith.constant 0 : index
    %c100 = arith.constant 100 : index
    %237 = vector.load %arg11[%c0_132, %c100] : memref<1x1056xf32, #tpu.memory_space<vmem>>, vector<1x896xf32>
    %238 = vector.shape_cast %237 : vector<1x896xf32> to vector<896xf32>
    %c19 = arith.constant 19 : index
    %c0_133 = arith.constant 0 : index
    %239 = vector.load %arg12[%c19, %c0_133] : memref<25x896xf32, #tpu.memory_space<vmem>>, vector<1x896xf32>
    %240 = vector.shape_cast %239 : vector<1x896xf32> to vector<896xf32>
    %241 = vector.shape_cast %238 : vector<896xf32> to vector<1x896xf32>
    tpu.vector_store %arg12[%c19, %c0_133], %241 {strides = array<i32>} : memref<25x896xf32, #tpu.memory_space<vmem>>, vector<1x896xf32>,
    %c0_134 = arith.constant 0 : index
    %c128 = arith.constant 128 : index
    %242 = vector.load %arg11[%c0_134, %c128] : memref<1x1056xf32, #tpu.memory_space<vmem>>, vector<1x896xf32>
    %243 = vector.shape_cast %242 : vector<1x896xf32> to vector<896xf32>
    %c20 = arith.constant 20 : index
    %c0_135 = arith.constant 0 : index
    %244 = vector.load %arg12[%c20, %c0_135] : memref<25x896xf32, #tpu.memory_space<vmem>>, vector<1x896xf32>
    %245 = vector.shape_cast %244 : vector<1x896xf32> to vector<896xf32>
    %246 = vector.shape_cast %243 : vector<896xf32> to vector<1x896xf32>
    tpu.vector_store %arg12[%c20, %c0_135], %246 {strides = array<i32>} : memref<25x896xf32, #tpu.memory_space<vmem>>, vector<1x896xf32>,
    %c0_136 = arith.constant 0 : index
    %c129 = arith.constant 129 : index
    %247 = vector.load %arg11[%c0_136, %c129] : memref<1x1056xf32, #tpu.memory_space<vmem>>, vector<1x896xf32>
    %248 = vector.shape_cast %247 : vector<1x896xf32> to vector<896xf32>
    %c21 = arith.constant 21 : index
    %c0_137 = arith.constant 0 : index
    %249 = vector.load %arg12[%c21, %c0_137] : memref<25x896xf32, #tpu.memory_space<vmem>>, vector<1x896xf32>
    %250 = vector.shape_cast %249 : vector<1x896xf32> to vector<896xf32>
    %251 = vector.shape_cast %248 : vector<896xf32> to vector<1x896xf32>
    tpu.vector_store %arg12[%c21, %c0_137], %251 {strides = array<i32>} : memref<25x896xf32, #tpu.memory_space<vmem>>, vector<1x896xf32>,
    %c0_138 = arith.constant 0 : index
    %c130_139 = arith.constant 130 : index
    %252 = vector.load %arg11[%c0_138, %c130_139] : memref<1x1056xf32, #tpu.memory_space<vmem>>, vector<1x896xf32>
    %253 = vector.shape_cast %252 : vector<1x896xf32> to vector<896xf32>
    %c22 = arith.constant 22 : index
    %c0_140 = arith.constant 0 : index
    %254 = vector.load %arg12[%c22, %c0_140] : memref<25x896xf32, #tpu.memory_space<vmem>>, vector<1x896xf32>
    %255 = vector.shape_cast %254 : vector<1x896xf32> to vector<896xf32>
    %256 = vector.shape_cast %253 : vector<896xf32> to vector<1x896xf32>
    tpu.vector_store %arg12[%c22, %c0_140], %256 {strides = array<i32>} : memref<25x896xf32, #tpu.memory_space<vmem>>, vector<1x896xf32>,
    %c0_141 = arith.constant 0 : index
    %c131 = arith.constant 131 : index
    %257 = vector.load %arg11[%c0_141, %c131] : memref<1x1056xf32, #tpu.memory_space<vmem>>, vector<1x896xf32>
    %258 = vector.shape_cast %257 : vector<1x896xf32> to vector<896xf32>
    %c23 = arith.constant 23 : index
    %c0_142 = arith.constant 0 : index
    %259 = vector.load %arg12[%c23, %c0_142] : memref<25x896xf32, #tpu.memory_space<vmem>>, vector<1x896xf32>
    %260 = vector.shape_cast %259 : vector<1x896xf32> to vector<896xf32>
    %261 = vector.shape_cast %258 : vector<896xf32> to vector<1x896xf32>
    tpu.vector_store %arg12[%c23, %c0_142], %261 {strides = array<i32>} : memref<25x896xf32, #tpu.memory_space<vmem>>, vector<1x896xf32>,
    %c0_143 = arith.constant 0 : index
    %c132 = arith.constant 132 : index
    %262 = vector.load %arg11[%c0_143, %c132] : memref<1x1056xf32, #tpu.memory_space<vmem>>, vector<1x896xf32>
    %263 = vector.shape_cast %262 : vector<1x896xf32> to vector<896xf32>
    %c24 = arith.constant 24 : index
    %c0_144 = arith.constant 0 : index
    %264 = vector.load %arg12[%c24, %c0_144] : memref<25x896xf32, #tpu.memory_space<vmem>>, vector<1x896xf32>
    %265 = vector.shape_cast %264 : vector<1x896xf32> to vector<896xf32>
    %266 = vector.shape_cast %263 : vector<896xf32> to vector<1x896xf32>
    tpu.vector_store %arg12[%c24, %c0_144], %266 {strides = array<i32>} : memref<25x896xf32, #tpu.memory_space<vmem>>, vector<1x896xf32>,
    %c0_145 = arith.constant 0 : index
    %c0_146 = arith.constant 0 : index
    %267 = vector.load %arg2[%c0_145, %c0_146] : memref<16x25xbf16, #tpu.memory_space<vmem>>, vector<16x25xbf16>
    %c0_147 = arith.constant 0 : index
    %c0_148 = arith.constant 0 : index
    %268 = vector.load %arg12[%c0_147, %c0_148] : memref<25x896xf32, #tpu.memory_space<vmem>>, vector<25x896xf32>
    %269 = arith.truncf %268 : vector<25x896xf32> to vector<25x896xbf16>
    %cst_149 = arith.constant dense<0.000000e+00> : vector<16x896xf32>
    %270 = tpu.matmul %267, %269, %cst_149 {dimension_numbers = #tpu.dot_dimension_numbers<[1], [0], [0], [1], [0, 0, 1, 1], [], []>} : vector<16x25xbf16>, vector<25x896xbf16>, vector<16x896xf32> -> vector<16x896xf32>
    %c0_150 = arith.constant 0 : index
    %c0_151 = arith.constant 0 : index
    %271 = vector.load %arg3[%c0_150, %c0_151] : memref<16x1xf32, #tpu.memory_space<vmem>>, vector<16x1xf32>
    %272 = vector.broadcast %271 : vector<16x1xf32> to vector<16x896xf32>
    %273 = arith.addf %270, %272 : vector<16x896xf32>
    %cst_152 = arith.constant 0.000000e+00 : f32
    %274 = vector.broadcast %cst_152 : f32 to vector<16x896xf32>
    %275 = arith.maximumf %273, %274 : vector<16x896xf32>
    %276 = vector.extract_strided_slice %275 {offsets = [0, 0], sizes = [16, 864], strides = [1, 1]} : vector<16x896xf32> to vector<16x864xf32>
    %277 = vector.extract_strided_slice %275 {offsets = [0, 32], sizes = [16, 864], strides = [1, 1]} : vector<16x896xf32> to vector<16x864xf32>
    %278 = arith.maximumf %276, %277 : vector<16x864xf32>
    %279 = vector.extract_strided_slice %278 {offsets = [0, 0], sizes = [16, 863], strides = [1, 1]} : vector<16x864xf32> to vector<16x863xf32>
    %280 = vector.extract_strided_slice %278 {offsets = [0, 1], sizes = [16, 863], strides = [1, 1]} : vector<16x864xf32> to vector<16x863xf32>
    %281 = arith.maximumf %279, %280 : vector<16x863xf32>
    %282 = arith.truncf %281 : vector<16x863xf32> to vector<16x863xbf16>
    %c0_153 = arith.constant 0 : index
    %c0_154 = arith.constant 0 : index
    %283 = vector.load %arg6[%c0_153, %c0_154] : memref<863x342xbf16, #tpu.memory_space<vmem>>, vector<863x342xbf16>
    %cst_155 = arith.constant dense<0.000000e+00> : vector<16x342xf32>
    %284 = tpu.matmul %282, %283, %cst_155 {dimension_numbers = #tpu.dot_dimension_numbers<[1], [0], [0], [1], [0, 0, 1, 1], [], []>} : vector<16x863xbf16>, vector<863x342xbf16>, vector<16x342xf32> -> vector<16x342xf32>
    %c0_156 = arith.constant 0 : index
    %c0_157 = arith.constant 0 : index
    %285 = vector.load %arg13[%c0_156, %c0_157] : memref<16x342xf32, #tpu.memory_space<vmem>>, vector<16x342xf32>
    tpu.vector_store %arg13[%c0_156, %c0_157], %284 {strides = array<i32>} : memref<16x342xf32, #tpu.memory_space<vmem>>, vector<16x342xf32>,
    %c0_158 = arith.constant 0 : index
    %c0_159 = arith.constant 0 : index
    %286 = vector.load %arg13[%c0_158, %c0_159] : memref<16x342xf32, #tpu.memory_space<vmem>>, vector<16x252xf32>
    %287 = arith.truncf %286 : vector<16x252xf32> to vector<16x252xbf16>
    %c0_160 = arith.constant 0 : index
    %c0_161 = arith.constant 0 : index
    %288 = vector.load %arg14[%c0_160, %c0_161] : memref<400x252xbf16, #tpu.memory_space<vmem>>, vector<16x252xbf16>
    tpu.vector_store %arg14[%c0_160, %c0_161], %287 {strides = array<i32>} : memref<400x252xbf16, #tpu.memory_space<vmem>>, vector<16x252xbf16>,
    %c0_162 = arith.constant 0 : index
    %c1_163 = arith.constant 1 : index
    %289 = vector.load %arg13[%c0_162, %c1_163] : memref<16x342xf32, #tpu.memory_space<vmem>>, vector<16x252xf32>
    %290 = arith.truncf %289 : vector<16x252xf32> to vector<16x252xbf16>
    %c16_164 = arith.constant 16 : index
    %c0_165 = arith.constant 0 : index
    %291 = vector.load %arg14[%c16_164, %c0_165] : memref<400x252xbf16, #tpu.memory_space<vmem>>, vector<16x252xbf16>
    tpu.vector_store %arg14[%c16_164, %c0_165], %290 {strides = array<i32>} : memref<400x252xbf16, #tpu.memory_space<vmem>>, vector<16x252xbf16>,
    %c0_166 = arith.constant 0 : index
    %c2_167 = arith.constant 2 : index
    %292 = vector.load %arg13[%c0_166, %c2_167] : memref<16x342xf32, #tpu.memory_space<vmem>>, vector<16x252xf32>
    %293 = arith.truncf %292 : vector<16x252xf32> to vector<16x252xbf16>
    %c32_168 = arith.constant 32 : index
    %c0_169 = arith.constant 0 : index
    %294 = vector.load %arg14[%c32_168, %c0_169] : memref<400x252xbf16, #tpu.memory_space<vmem>>, vector<16x252xbf16>
    tpu.vector_store %arg14[%c32_168, %c0_169], %293 {strides = array<i32>} : memref<400x252xbf16, #tpu.memory_space<vmem>>, vector<16x252xbf16>,
    %c0_170 = arith.constant 0 : index
    %c3_171 = arith.constant 3 : index
    %295 = vector.load %arg13[%c0_170, %c3_171] : memref<16x342xf32, #tpu.memory_space<vmem>>, vector<16x252xf32>
    %296 = arith.truncf %295 : vector<16x252xf32> to vector<16x252xbf16>
    %c48 = arith.constant 48 : index
    %c0_172 = arith.constant 0 : index
    %297 = vector.load %arg14[%c48, %c0_172] : memref<400x252xbf16, #tpu.memory_space<vmem>>, vector<16x252xbf16>
    tpu.vector_store %arg14[%c48, %c0_172], %296 {strides = array<i32>} : memref<400x252xbf16, #tpu.memory_space<vmem>>, vector<16x252xbf16>,
    %c0_173 = arith.constant 0 : index
    %c4_174 = arith.constant 4 : index
    %298 = vector.load %arg13[%c0_173, %c4_174] : memref<16x342xf32, #tpu.memory_space<vmem>>, vector<16x252xf32>
    %299 = arith.truncf %298 : vector<16x252xf32> to vector<16x252xbf16>
    %c64_175 = arith.constant 64 : index
    %c0_176 = arith.constant 0 : index
    %300 = vector.load %arg14[%c64_175, %c0_176] : memref<400x252xbf16, #tpu.memory_space<vmem>>, vector<16x252xbf16>
    tpu.vector_store %arg14[%c64_175, %c0_176], %299 {strides = array<i32>} : memref<400x252xbf16, #tpu.memory_space<vmem>>, vector<16x252xbf16>,
    %c0_177 = arith.constant 0 : index
    %c18_178 = arith.constant 18 : index
    %301 = vector.load %arg13[%c0_177, %c18_178] : memref<16x342xf32, #tpu.memory_space<vmem>>, vector<16x252xf32>
    %302 = arith.truncf %301 : vector<16x252xf32> to vector<16x252xbf16>
    %c80 = arith.constant 80 : index
    %c0_179 = arith.constant 0 : index
    %303 = vector.load %arg14[%c80, %c0_179] : memref<400x252xbf16, #tpu.memory_space<vmem>>, vector<16x252xbf16>
    tpu.vector_store %arg14[%c80, %c0_179], %302 {strides = array<i32>} : memref<400x252xbf16, #tpu.memory_space<vmem>>, vector<16x252xbf16>,
    %c0_180 = arith.constant 0 : index
    %c19_181 = arith.constant 19 : index
    %304 = vector.load %arg13[%c0_180, %c19_181] : memref<16x342xf32, #tpu.memory_space<vmem>>, vector<16x252xf32>
    %305 = arith.truncf %304 : vector<16x252xf32> to vector<16x252xbf16>
    %c96_182 = arith.constant 96 : index
    %c0_183 = arith.constant 0 : index
    %306 = vector.load %arg14[%c96_182, %c0_183] : memref<400x252xbf16, #tpu.memory_space<vmem>>, vector<16x252xbf16>
    tpu.vector_store %arg14[%c96_182, %c0_183], %305 {strides = array<i32>} : memref<400x252xbf16, #tpu.memory_space<vmem>>, vector<16x252xbf16>,
    %c0_184 = arith.constant 0 : index
    %c20_185 = arith.constant 20 : index
    %307 = vector.load %arg13[%c0_184, %c20_185] : memref<16x342xf32, #tpu.memory_space<vmem>>, vector<16x252xf32>
    %308 = arith.truncf %307 : vector<16x252xf32> to vector<16x252xbf16>
    %c112_186 = arith.constant 112 : index
    %c0_187 = arith.constant 0 : index
    %309 = vector.load %arg14[%c112_186, %c0_187] : memref<400x252xbf16, #tpu.memory_space<vmem>>, vector<16x252xbf16>
    tpu.vector_store %arg14[%c112_186, %c0_187], %308 {strides = array<i32>} : memref<400x252xbf16, #tpu.memory_space<vmem>>, vector<16x252xbf16>,
    %c0_188 = arith.constant 0 : index
    %c21_189 = arith.constant 21 : index
    %310 = vector.load %arg13[%c0_188, %c21_189] : memref<16x342xf32, #tpu.memory_space<vmem>>, vector<16x252xf32>
    %311 = arith.truncf %310 : vector<16x252xf32> to vector<16x252xbf16>
    %c128_190 = arith.constant 128 : index
    %c0_191 = arith.constant 0 : index
    %312 = vector.load %arg14[%c128_190, %c0_191] : memref<400x252xbf16, #tpu.memory_space<vmem>>, vector<16x252xbf16>
    tpu.vector_store %arg14[%c128_190, %c0_191], %311 {strides = array<i32>} : memref<400x252xbf16, #tpu.memory_space<vmem>>, vector<16x252xbf16>,
    %c0_192 = arith.constant 0 : index
    %c22_193 = arith.constant 22 : index
    %313 = vector.load %arg13[%c0_192, %c22_193] : memref<16x342xf32, #tpu.memory_space<vmem>>, vector<16x252xf32>
    %314 = arith.truncf %313 : vector<16x252xf32> to vector<16x252xbf16>
    %c144 = arith.constant 144 : index
    %c0_194 = arith.constant 0 : index
    %315 = vector.load %arg14[%c144, %c0_194] : memref<400x252xbf16, #tpu.memory_space<vmem>>, vector<16x252xbf16>
    tpu.vector_store %arg14[%c144, %c0_194], %314 {strides = array<i32>} : memref<400x252xbf16, #tpu.memory_space<vmem>>, vector<16x252xbf16>,
    %c0_195 = arith.constant 0 : index
    %c36_196 = arith.constant 36 : index
    %316 = vector.load %arg13[%c0_195, %c36_196] : memref<16x342xf32, #tpu.memory_space<vmem>>, vector<16x252xf32>
    %317 = arith.truncf %316 : vector<16x252xf32> to vector<16x252xbf16>
    %c160 = arith.constant 160 : index
    %c0_197 = arith.constant 0 : index
    %318 = vector.load %arg14[%c160, %c0_197] : memref<400x252xbf16, #tpu.memory_space<vmem>>, vector<16x252xbf16>
    tpu.vector_store %arg14[%c160, %c0_197], %317 {strides = array<i32>} : memref<400x252xbf16, #tpu.memory_space<vmem>>, vector<16x252xbf16>,
    %c0_198 = arith.constant 0 : index
    %c37 = arith.constant 37 : index
    %319 = vector.load %arg13[%c0_198, %c37] : memref<16x342xf32, #tpu.memory_space<vmem>>, vector<16x252xf32>
    %320 = arith.truncf %319 : vector<16x252xf32> to vector<16x252xbf16>
    %c176 = arith.constant 176 : index
    %c0_199 = arith.constant 0 : index
    %321 = vector.load %arg14[%c176, %c0_199] : memref<400x252xbf16, #tpu.memory_space<vmem>>, vector<16x252xbf16>
    tpu.vector_store %arg14[%c176, %c0_199], %320 {strides = array<i32>} : memref<400x252xbf16, #tpu.memory_space<vmem>>, vector<16x252xbf16>,
    %c0_200 = arith.constant 0 : index
    %c38 = arith.constant 38 : index
    %322 = vector.load %arg13[%c0_200, %c38] : memref<16x342xf32, #tpu.memory_space<vmem>>, vector<16x252xf32>
    %323 = arith.truncf %322 : vector<16x252xf32> to vector<16x252xbf16>
    %c192 = arith.constant 192 : index
    %c0_201 = arith.constant 0 : index
    %324 = vector.load %arg14[%c192, %c0_201] : memref<400x252xbf16, #tpu.memory_space<vmem>>, vector<16x252xbf16>
    tpu.vector_store %arg14[%c192, %c0_201], %323 {strides = array<i32>} : memref<400x252xbf16, #tpu.memory_space<vmem>>, vector<16x252xbf16>,
    %c0_202 = arith.constant 0 : index
    %c39 = arith.constant 39 : index
    %325 = vector.load %arg13[%c0_202, %c39] : memref<16x342xf32, #tpu.memory_space<vmem>>, vector<16x252xf32>
    %326 = arith.truncf %325 : vector<16x252xf32> to vector<16x252xbf16>
    %c208 = arith.constant 208 : index
    %c0_203 = arith.constant 0 : index
    %327 = vector.load %arg14[%c208, %c0_203] : memref<400x252xbf16, #tpu.memory_space<vmem>>, vector<16x252xbf16>
    tpu.vector_store %arg14[%c208, %c0_203], %326 {strides = array<i32>} : memref<400x252xbf16, #tpu.memory_space<vmem>>, vector<16x252xbf16>,
    %c0_204 = arith.constant 0 : index
    %c40 = arith.constant 40 : index
    %328 = vector.load %arg13[%c0_204, %c40] : memref<16x342xf32, #tpu.memory_space<vmem>>, vector<16x252xf32>
    %329 = arith.truncf %328 : vector<16x252xf32> to vector<16x252xbf16>
    %c224_205 = arith.constant 224 : index
    %c0_206 = arith.constant 0 : index
    %330 = vector.load %arg14[%c224_205, %c0_206] : memref<400x252xbf16, #tpu.memory_space<vmem>>, vector<16x252xbf16>
    tpu.vector_store %arg14[%c224_205, %c0_206], %329 {strides = array<i32>} : memref<400x252xbf16, #tpu.memory_space<vmem>>, vector<16x252xbf16>,
    %c0_207 = arith.constant 0 : index
    %c54 = arith.constant 54 : index
    %331 = vector.load %arg13[%c0_207, %c54] : memref<16x342xf32, #tpu.memory_space<vmem>>, vector<16x252xf32>
    %332 = arith.truncf %331 : vector<16x252xf32> to vector<16x252xbf16>
    %c240 = arith.constant 240 : index
    %c0_208 = arith.constant 0 : index
    %333 = vector.load %arg14[%c240, %c0_208] : memref<400x252xbf16, #tpu.memory_space<vmem>>, vector<16x252xbf16>
    tpu.vector_store %arg14[%c240, %c0_208], %332 {strides = array<i32>} : memref<400x252xbf16, #tpu.memory_space<vmem>>, vector<16x252xbf16>,
    %c0_209 = arith.constant 0 : index
    %c55 = arith.constant 55 : index
    %334 = vector.load %arg13[%c0_209, %c55] : memref<16x342xf32, #tpu.memory_space<vmem>>, vector<16x252xf32>
    %335 = arith.truncf %334 : vector<16x252xf32> to vector<16x252xbf16>
    %c256 = arith.constant 256 : index
    %c0_210 = arith.constant 0 : index
    %336 = vector.load %arg14[%c256, %c0_210] : memref<400x252xbf16, #tpu.memory_space<vmem>>, vector<16x252xbf16>
    tpu.vector_store %arg14[%c256, %c0_210], %335 {strides = array<i32>} : memref<400x252xbf16, #tpu.memory_space<vmem>>, vector<16x252xbf16>,
    %c0_211 = arith.constant 0 : index
    %c56_212 = arith.constant 56 : index
    %337 = vector.load %arg13[%c0_211, %c56_212] : memref<16x342xf32, #tpu.memory_space<vmem>>, vector<16x252xf32>
    %338 = arith.truncf %337 : vector<16x252xf32> to vector<16x252xbf16>
    %c272 = arith.constant 272 : index
    %c0_213 = arith.constant 0 : index
    %339 = vector.load %arg14[%c272, %c0_213] : memref<400x252xbf16, #tpu.memory_space<vmem>>, vector<16x252xbf16>
    tpu.vector_store %arg14[%c272, %c0_213], %338 {strides = array<i32>} : memref<400x252xbf16, #tpu.memory_space<vmem>>, vector<16x252xbf16>,
    %c0_214 = arith.constant 0 : index
    %c57 = arith.constant 57 : index
    %340 = vector.load %arg13[%c0_214, %c57] : memref<16x342xf32, #tpu.memory_space<vmem>>, vector<16x252xf32>
    %341 = arith.truncf %340 : vector<16x252xf32> to vector<16x252xbf16>
    %c288 = arith.constant 288 : index
    %c0_215 = arith.constant 0 : index
    %342 = vector.load %arg14[%c288, %c0_215] : memref<400x252xbf16, #tpu.memory_space<vmem>>, vector<16x252xbf16>
    tpu.vector_store %arg14[%c288, %c0_215], %341 {strides = array<i32>} : memref<400x252xbf16, #tpu.memory_space<vmem>>, vector<16x252xbf16>,
    %c0_216 = arith.constant 0 : index
    %c58 = arith.constant 58 : index
    %343 = vector.load %arg13[%c0_216, %c58] : memref<16x342xf32, #tpu.memory_space<vmem>>, vector<16x252xf32>
    %344 = arith.truncf %343 : vector<16x252xf32> to vector<16x252xbf16>
    %c304 = arith.constant 304 : index
    %c0_217 = arith.constant 0 : index
    %345 = vector.load %arg14[%c304, %c0_217] : memref<400x252xbf16, #tpu.memory_space<vmem>>, vector<16x252xbf16>
    tpu.vector_store %arg14[%c304, %c0_217], %344 {strides = array<i32>} : memref<400x252xbf16, #tpu.memory_space<vmem>>, vector<16x252xbf16>,
    %c0_218 = arith.constant 0 : index
    %c72 = arith.constant 72 : index
    %346 = vector.load %arg13[%c0_218, %c72] : memref<16x342xf32, #tpu.memory_space<vmem>>, vector<16x252xf32>
    %347 = arith.truncf %346 : vector<16x252xf32> to vector<16x252xbf16>
    %c320 = arith.constant 320 : index
    %c0_219 = arith.constant 0 : index
    %348 = vector.load %arg14[%c320, %c0_219] : memref<400x252xbf16, #tpu.memory_space<vmem>>, vector<16x252xbf16>
    tpu.vector_store %arg14[%c320, %c0_219], %347 {strides = array<i32>} : memref<400x252xbf16, #tpu.memory_space<vmem>>, vector<16x252xbf16>,
    %c0_220 = arith.constant 0 : index
    %c73 = arith.constant 73 : index
    %349 = vector.load %arg13[%c0_220, %c73] : memref<16x342xf32, #tpu.memory_space<vmem>>, vector<16x252xf32>
    %350 = arith.truncf %349 : vector<16x252xf32> to vector<16x252xbf16>
    %c336_221 = arith.constant 336 : index
    %c0_222 = arith.constant 0 : index
    %351 = vector.load %arg14[%c336_221, %c0_222] : memref<400x252xbf16, #tpu.memory_space<vmem>>, vector<16x252xbf16>
    tpu.vector_store %arg14[%c336_221, %c0_222], %350 {strides = array<i32>} : memref<400x252xbf16, #tpu.memory_space<vmem>>, vector<16x252xbf16>,
    %c0_223 = arith.constant 0 : index
    %c74 = arith.constant 74 : index
    %352 = vector.load %arg13[%c0_223, %c74] : memref<16x342xf32, #tpu.memory_space<vmem>>, vector<16x252xf32>
    %353 = arith.truncf %352 : vector<16x252xf32> to vector<16x252xbf16>
    %c352 = arith.constant 352 : index
    %c0_224 = arith.constant 0 : index
    %354 = vector.load %arg14[%c352, %c0_224] : memref<400x252xbf16, #tpu.memory_space<vmem>>, vector<16x252xbf16>
    tpu.vector_store %arg14[%c352, %c0_224], %353 {strides = array<i32>} : memref<400x252xbf16, #tpu.memory_space<vmem>>, vector<16x252xbf16>,
    %c0_225 = arith.constant 0 : index
    %c75 = arith.constant 75 : index
    %355 = vector.load %arg13[%c0_225, %c75] : memref<16x342xf32, #tpu.memory_space<vmem>>, vector<16x252xf32>
    %356 = arith.truncf %355 : vector<16x252xf32> to vector<16x252xbf16>
    %c368 = arith.constant 368 : index
    %c0_226 = arith.constant 0 : index
    %357 = vector.load %arg14[%c368, %c0_226] : memref<400x252xbf16, #tpu.memory_space<vmem>>, vector<16x252xbf16>
    tpu.vector_store %arg14[%c368, %c0_226], %356 {strides = array<i32>} : memref<400x252xbf16, #tpu.memory_space<vmem>>, vector<16x252xbf16>,
    %c0_227 = arith.constant 0 : index
    %c76 = arith.constant 76 : index
    %358 = vector.load %arg13[%c0_227, %c76] : memref<16x342xf32, #tpu.memory_space<vmem>>, vector<16x252xf32>
    %359 = arith.truncf %358 : vector<16x252xf32> to vector<16x252xbf16>
    %c384 = arith.constant 384 : index
    %c0_228 = arith.constant 0 : index
    %360 = vector.load %arg14[%c384, %c0_228] : memref<400x252xbf16, #tpu.memory_space<vmem>>, vector<16x252xbf16>
    tpu.vector_store %arg14[%c384, %c0_228], %359 {strides = array<i32>} : memref<400x252xbf16, #tpu.memory_space<vmem>>, vector<16x252xbf16>,
    %c0_229 = arith.constant 0 : index
    %c0_230 = arith.constant 0 : index
    %361 = vector.load %arg4[%c0_229, %c0_230] : memref<32x400xbf16, #tpu.memory_space<vmem>>, vector<32x400xbf16>
    %c0_231 = arith.constant 0 : index
    %c0_232 = arith.constant 0 : index
    %362 = vector.load %arg14[%c0_231, %c0_232] : memref<400x252xbf16, #tpu.memory_space<vmem>>, vector<400x252xbf16>
    %cst_233 = arith.constant dense<0.000000e+00> : vector<32x252xf32>
    %363 = tpu.matmul %361, %362, %cst_233 {dimension_numbers = #tpu.dot_dimension_numbers<[1], [0], [0], [1], [0, 0, 1, 1], [], []>} : vector<32x400xbf16>, vector<400x252xbf16>, vector<32x252xf32> -> vector<32x252xf32>
    %c0_234 = arith.constant 0 : index
    %c0_235 = arith.constant 0 : index
    %364 = vector.load %arg5[%c0_234, %c0_235] : memref<32x1xf32, #tpu.memory_space<vmem>>, vector<32x1xf32>
    %365 = vector.broadcast %364 : vector<32x1xf32> to vector<32x252xf32>
    %366 = arith.addf %363, %365 : vector<32x252xf32>
    %cst_236 = arith.constant 0.000000e+00 : f32
    %367 = vector.broadcast %cst_236 : f32 to vector<32x252xf32>
    %368 = arith.maximumf %366, %367 : vector<32x252xf32>
    %369 = vector.extract_strided_slice %368 {offsets = [0, 0], sizes = [32, 234], strides = [1, 1]} : vector<32x252xf32> to vector<32x234xf32>
    %370 = vector.extract_strided_slice %368 {offsets = [0, 18], sizes = [32, 234], strides = [1, 1]} : vector<32x252xf32> to vector<32x234xf32>
    %371 = arith.maximumf %369, %370 : vector<32x234xf32>
    %372 = vector.extract_strided_slice %371 {offsets = [0, 0], sizes = [32, 233], strides = [1, 1]} : vector<32x234xf32> to vector<32x233xf32>
    %373 = vector.extract_strided_slice %371 {offsets = [0, 1], sizes = [32, 233], strides = [1, 1]} : vector<32x234xf32> to vector<32x233xf32>
    %374 = arith.maximumf %372, %373 : vector<32x233xf32>
    %375 = arith.truncf %374 : vector<32x233xf32> to vector<32x233xbf16>
    %c0_237 = arith.constant 0 : index
    %c0_238 = arith.constant 0 : index
    %376 = vector.load %arg7[%c0_237, %c0_238] : memref<233x64xbf16, #tpu.memory_space<vmem>>, vector<233x64xbf16>
    %cst_239 = arith.constant dense<0.000000e+00> : vector<32x64xf32>
    %377 = tpu.matmul %375, %376, %cst_239 {dimension_numbers = #tpu.dot_dimension_numbers<[1], [0], [0], [1], [0, 0, 1, 1], [], []>} : vector<32x233xbf16>, vector<233x64xbf16>, vector<32x64xf32> -> vector<32x64xf32>
    %c0_240 = arith.constant 0 : index
    %c0_241 = arith.constant 0 : index
    %378 = vector.load %arg15[%c0_240, %c0_241] : memref<32x64xf32, #tpu.memory_space<vmem>>, vector<32x64xf32>
    tpu.vector_store %arg15[%c0_240, %c0_241], %377 {strides = array<i32>} : memref<32x64xf32, #tpu.memory_space<vmem>>, vector<32x64xf32>,
    %c0_242 = arith.constant 0 : index
    %c0_243 = arith.constant 0 : index
    %379 = vector.load %arg15[%c0_242, %c0_243] : memref<32x64xf32, #tpu.memory_space<vmem>>, vector<1x64xf32>
    %380 = vector.shape_cast %379 : vector<1x64xf32> to vector<64xf32>
    %c0_244 = arith.constant 0 : index
    %c0_245 = arith.constant 0 : index
    %381 = vector.load %arg16[%c0_244, %c0_245] : memref<1x2048xf32, #tpu.memory_space<vmem>>, vector<1x64xf32>
    %382 = vector.shape_cast %381 : vector<1x64xf32> to vector<64xf32>
    %383 = vector.shape_cast %380 : vector<64xf32> to vector<1x64xf32>
    tpu.vector_store %arg16[%c0_244, %c0_245], %383 {strides = array<i32>} : memref<1x2048xf32, #tpu.memory_space<vmem>>, vector<1x64xf32>,
    %c1_246 = arith.constant 1 : index
    %c0_247 = arith.constant 0 : index
    %384 = vector.load %arg15[%c1_246, %c0_247] : memref<32x64xf32, #tpu.memory_space<vmem>>, vector<1x64xf32>
    %385 = vector.shape_cast %384 : vector<1x64xf32> to vector<64xf32>
    %c0_248 = arith.constant 0 : index
    %c64_249 = arith.constant 64 : index
    %386 = vector.load %arg16[%c0_248, %c64_249] : memref<1x2048xf32, #tpu.memory_space<vmem>>, vector<1x64xf32>
    %387 = vector.shape_cast %386 : vector<1x64xf32> to vector<64xf32>
    %388 = vector.shape_cast %385 : vector<64xf32> to vector<1x64xf32>
    tpu.vector_store %arg16[%c0_248, %c64_249], %388 {strides = array<i32>} : memref<1x2048xf32, #tpu.memory_space<vmem>>, vector<1x64xf32>,
    %c2_250 = arith.constant 2 : index
    %c0_251 = arith.constant 0 : index
    %389 = vector.load %arg15[%c2_250, %c0_251] : memref<32x64xf32, #tpu.memory_space<vmem>>, vector<1x64xf32>
    %390 = vector.shape_cast %389 : vector<1x64xf32> to vector<64xf32>
    %c0_252 = arith.constant 0 : index
    %c128_253 = arith.constant 128 : index
    %391 = vector.load %arg16[%c0_252, %c128_253] : memref<1x2048xf32, #tpu.memory_space<vmem>>, vector<1x64xf32>
    %392 = vector.shape_cast %391 : vector<1x64xf32> to vector<64xf32>
    %393 = vector.shape_cast %390 : vector<64xf32> to vector<1x64xf32>
    tpu.vector_store %arg16[%c0_252, %c128_253], %393 {strides = array<i32>} : memref<1x2048xf32, #tpu.memory_space<vmem>>, vector<1x64xf32>,
    %c3_254 = arith.constant 3 : index
    %c0_255 = arith.constant 0 : index
    %394 = vector.load %arg15[%c3_254, %c0_255] : memref<32x64xf32, #tpu.memory_space<vmem>>, vector<1x64xf32>
    %395 = vector.shape_cast %394 : vector<1x64xf32> to vector<64xf32>
    %c0_256 = arith.constant 0 : index
    %c192_257 = arith.constant 192 : index
    %396 = vector.load %arg16[%c0_256, %c192_257] : memref<1x2048xf32, #tpu.memory_space<vmem>>, vector<1x64xf32>
    %397 = vector.shape_cast %396 : vector<1x64xf32> to vector<64xf32>
    %398 = vector.shape_cast %395 : vector<64xf32> to vector<1x64xf32>
    tpu.vector_store %arg16[%c0_256, %c192_257], %398 {strides = array<i32>} : memref<1x2048xf32, #tpu.memory_space<vmem>>, vector<1x64xf32>,
    %c4_258 = arith.constant 4 : index
    %c0_259 = arith.constant 0 : index
    %399 = vector.load %arg15[%c4_258, %c0_259] : memref<32x64xf32, #tpu.memory_space<vmem>>, vector<1x64xf32>
    %400 = vector.shape_cast %399 : vector<1x64xf32> to vector<64xf32>
    %c0_260 = arith.constant 0 : index
    %c256_261 = arith.constant 256 : index
    %401 = vector.load %arg16[%c0_260, %c256_261] : memref<1x2048xf32, #tpu.memory_space<vmem>>, vector<1x64xf32>
    %402 = vector.shape_cast %401 : vector<1x64xf32> to vector<64xf32>
    %403 = vector.shape_cast %400 : vector<64xf32> to vector<1x64xf32>
    tpu.vector_store %arg16[%c0_260, %c256_261], %403 {strides = array<i32>} : memref<1x2048xf32, #tpu.memory_space<vmem>>, vector<1x64xf32>,
    %c5_262 = arith.constant 5 : index
    %c0_263 = arith.constant 0 : index
    %404 = vector.load %arg15[%c5_262, %c0_263] : memref<32x64xf32, #tpu.memory_space<vmem>>, vector<1x64xf32>
    %405 = vector.shape_cast %404 : vector<1x64xf32> to vector<64xf32>
    %c0_264 = arith.constant 0 : index
    %c320_265 = arith.constant 320 : index
    %406 = vector.load %arg16[%c0_264, %c320_265] : memref<1x2048xf32, #tpu.memory_space<vmem>>, vector<1x64xf32>
    %407 = vector.shape_cast %406 : vector<1x64xf32> to vector<64xf32>
    %408 = vector.shape_cast %405 : vector<64xf32> to vector<1x64xf32>
    tpu.vector_store %arg16[%c0_264, %c320_265], %408 {strides = array<i32>} : memref<1x2048xf32, #tpu.memory_space<vmem>>, vector<1x64xf32>,
    %c6_266 = arith.constant 6 : index
    %c0_267 = arith.constant 0 : index
    %409 = vector.load %arg15[%c6_266, %c0_267] : memref<32x64xf32, #tpu.memory_space<vmem>>, vector<1x64xf32>
    %410 = vector.shape_cast %409 : vector<1x64xf32> to vector<64xf32>
    %c0_268 = arith.constant 0 : index
    %c384_269 = arith.constant 384 : index
    %411 = vector.load %arg16[%c0_268, %c384_269] : memref<1x2048xf32, #tpu.memory_space<vmem>>, vector<1x64xf32>
    %412 = vector.shape_cast %411 : vector<1x64xf32> to vector<64xf32>
    %413 = vector.shape_cast %410 : vector<64xf32> to vector<1x64xf32>
    tpu.vector_store %arg16[%c0_268, %c384_269], %413 {strides = array<i32>} : memref<1x2048xf32, #tpu.memory_space<vmem>>, vector<1x64xf32>,
    %c7_270 = arith.constant 7 : index
    %c0_271 = arith.constant 0 : index
    %414 = vector.load %arg15[%c7_270, %c0_271] : memref<32x64xf32, #tpu.memory_space<vmem>>, vector<1x64xf32>
    %415 = vector.shape_cast %414 : vector<1x64xf32> to vector<64xf32>
    %c0_272 = arith.constant 0 : index
    %c448_273 = arith.constant 448 : index
    %416 = vector.load %arg16[%c0_272, %c448_273] : memref<1x2048xf32, #tpu.memory_space<vmem>>, vector<1x64xf32>
    %417 = vector.shape_cast %416 : vector<1x64xf32> to vector<64xf32>
    %418 = vector.shape_cast %415 : vector<64xf32> to vector<1x64xf32>
    tpu.vector_store %arg16[%c0_272, %c448_273], %418 {strides = array<i32>} : memref<1x2048xf32, #tpu.memory_space<vmem>>, vector<1x64xf32>,
    %c8_274 = arith.constant 8 : index
    %c0_275 = arith.constant 0 : index
    %419 = vector.load %arg15[%c8_274, %c0_275] : memref<32x64xf32, #tpu.memory_space<vmem>>, vector<1x64xf32>
    %420 = vector.shape_cast %419 : vector<1x64xf32> to vector<64xf32>
    %c0_276 = arith.constant 0 : index
    %c512 = arith.constant 512 : index
    %421 = vector.load %arg16[%c0_276, %c512] : memref<1x2048xf32, #tpu.memory_space<vmem>>, vector<1x64xf32>
    %422 = vector.shape_cast %421 : vector<1x64xf32> to vector<64xf32>
    %423 = vector.shape_cast %420 : vector<64xf32> to vector<1x64xf32>
    tpu.vector_store %arg16[%c0_276, %c512], %423 {strides = array<i32>} : memref<1x2048xf32, #tpu.memory_space<vmem>>, vector<1x64xf32>,
    %c9_277 = arith.constant 9 : index
    %c0_278 = arith.constant 0 : index
    %424 = vector.load %arg15[%c9_277, %c0_278] : memref<32x64xf32, #tpu.memory_space<vmem>>, vector<1x64xf32>
    %425 = vector.shape_cast %424 : vector<1x64xf32> to vector<64xf32>
    %c0_279 = arith.constant 0 : index
    %c576 = arith.constant 576 : index
    %426 = vector.load %arg16[%c0_279, %c576] : memref<1x2048xf32, #tpu.memory_space<vmem>>, vector<1x64xf32>
    %427 = vector.shape_cast %426 : vector<1x64xf32> to vector<64xf32>
    %428 = vector.shape_cast %425 : vector<64xf32> to vector<1x64xf32>
    tpu.vector_store %arg16[%c0_279, %c576], %428 {strides = array<i32>} : memref<1x2048xf32, #tpu.memory_space<vmem>>, vector<1x64xf32>,
    %c10_280 = arith.constant 10 : index
    %c0_281 = arith.constant 0 : index
    %429 = vector.load %arg15[%c10_280, %c0_281] : memref<32x64xf32, #tpu.memory_space<vmem>>, vector<1x64xf32>
    %430 = vector.shape_cast %429 : vector<1x64xf32> to vector<64xf32>
    %c0_282 = arith.constant 0 : index
    %c640 = arith.constant 640 : index
    %431 = vector.load %arg16[%c0_282, %c640] : memref<1x2048xf32, #tpu.memory_space<vmem>>, vector<1x64xf32>
    %432 = vector.shape_cast %431 : vector<1x64xf32> to vector<64xf32>
    %433 = vector.shape_cast %430 : vector<64xf32> to vector<1x64xf32>
    tpu.vector_store %arg16[%c0_282, %c640], %433 {strides = array<i32>} : memref<1x2048xf32, #tpu.memory_space<vmem>>, vector<1x64xf32>,
    %c11_283 = arith.constant 11 : index
    %c0_284 = arith.constant 0 : index
    %434 = vector.load %arg15[%c11_283, %c0_284] : memref<32x64xf32, #tpu.memory_space<vmem>>, vector<1x64xf32>
    %435 = vector.shape_cast %434 : vector<1x64xf32> to vector<64xf32>
    %c0_285 = arith.constant 0 : index
    %c704 = arith.constant 704 : index
    %436 = vector.load %arg16[%c0_285, %c704] : memref<1x2048xf32, #tpu.memory_space<vmem>>, vector<1x64xf32>
    %437 = vector.shape_cast %436 : vector<1x64xf32> to vector<64xf32>
    %438 = vector.shape_cast %435 : vector<64xf32> to vector<1x64xf32>
    tpu.vector_store %arg16[%c0_285, %c704], %438 {strides = array<i32>} : memref<1x2048xf32, #tpu.memory_space<vmem>>, vector<1x64xf32>,
    %c12_286 = arith.constant 12 : index
    %c0_287 = arith.constant 0 : index
    %439 = vector.load %arg15[%c12_286, %c0_287] : memref<32x64xf32, #tpu.memory_space<vmem>>, vector<1x64xf32>
    %440 = vector.shape_cast %439 : vector<1x64xf32> to vector<64xf32>
    %c0_288 = arith.constant 0 : index
    %c768 = arith.constant 768 : index
    %441 = vector.load %arg16[%c0_288, %c768] : memref<1x2048xf32, #tpu.memory_space<vmem>>, vector<1x64xf32>
    %442 = vector.shape_cast %441 : vector<1x64xf32> to vector<64xf32>
    %443 = vector.shape_cast %440 : vector<64xf32> to vector<1x64xf32>
    tpu.vector_store %arg16[%c0_288, %c768], %443 {strides = array<i32>} : memref<1x2048xf32, #tpu.memory_space<vmem>>, vector<1x64xf32>,
    %c13_289 = arith.constant 13 : index
    %c0_290 = arith.constant 0 : index
    %444 = vector.load %arg15[%c13_289, %c0_290] : memref<32x64xf32, #tpu.memory_space<vmem>>, vector<1x64xf32>
    %445 = vector.shape_cast %444 : vector<1x64xf32> to vector<64xf32>
    %c0_291 = arith.constant 0 : index
    %c832 = arith.constant 832 : index
    %446 = vector.load %arg16[%c0_291, %c832] : memref<1x2048xf32, #tpu.memory_space<vmem>>, vector<1x64xf32>
    %447 = vector.shape_cast %446 : vector<1x64xf32> to vector<64xf32>
    %448 = vector.shape_cast %445 : vector<64xf32> to vector<1x64xf32>
    tpu.vector_store %arg16[%c0_291, %c832], %448 {strides = array<i32>} : memref<1x2048xf32, #tpu.memory_space<vmem>>, vector<1x64xf32>,
    %c14_292 = arith.constant 14 : index
    %c0_293 = arith.constant 0 : index
    %449 = vector.load %arg15[%c14_292, %c0_293] : memref<32x64xf32, #tpu.memory_space<vmem>>, vector<1x64xf32>
    %450 = vector.shape_cast %449 : vector<1x64xf32> to vector<64xf32>
    %c0_294 = arith.constant 0 : index
    %c896 = arith.constant 896 : index
    %451 = vector.load %arg16[%c0_294, %c896] : memref<1x2048xf32, #tpu.memory_space<vmem>>, vector<1x64xf32>
    %452 = vector.shape_cast %451 : vector<1x64xf32> to vector<64xf32>
    %453 = vector.shape_cast %450 : vector<64xf32> to vector<1x64xf32>
    tpu.vector_store %arg16[%c0_294, %c896], %453 {strides = array<i32>} : memref<1x2048xf32, #tpu.memory_space<vmem>>, vector<1x64xf32>,
    %c15_295 = arith.constant 15 : index
    %c0_296 = arith.constant 0 : index
    %454 = vector.load %arg15[%c15_295, %c0_296] : memref<32x64xf32, #tpu.memory_space<vmem>>, vector<1x64xf32>
    %455 = vector.shape_cast %454 : vector<1x64xf32> to vector<64xf32>
    %c0_297 = arith.constant 0 : index
    %c960 = arith.constant 960 : index
    %456 = vector.load %arg16[%c0_297, %c960] : memref<1x2048xf32, #tpu.memory_space<vmem>>, vector<1x64xf32>
    %457 = vector.shape_cast %456 : vector<1x64xf32> to vector<64xf32>
    %458 = vector.shape_cast %455 : vector<64xf32> to vector<1x64xf32>
    tpu.vector_store %arg16[%c0_297, %c960], %458 {strides = array<i32>} : memref<1x2048xf32, #tpu.memory_space<vmem>>, vector<1x64xf32>,
    %c16_298 = arith.constant 16 : index
    %c0_299 = arith.constant 0 : index
    %459 = vector.load %arg15[%c16_298, %c0_299] : memref<32x64xf32, #tpu.memory_space<vmem>>, vector<1x64xf32>
    %460 = vector.shape_cast %459 : vector<1x64xf32> to vector<64xf32>
    %c0_300 = arith.constant 0 : index
    %c1024 = arith.constant 1024 : index
    %461 = vector.load %arg16[%c0_300, %c1024] : memref<1x2048xf32, #tpu.memory_space<vmem>>, vector<1x64xf32>
    %462 = vector.shape_cast %461 : vector<1x64xf32> to vector<64xf32>
    %463 = vector.shape_cast %460 : vector<64xf32> to vector<1x64xf32>
    tpu.vector_store %arg16[%c0_300, %c1024], %463 {strides = array<i32>} : memref<1x2048xf32, #tpu.memory_space<vmem>>, vector<1x64xf32>,
    %c17_301 = arith.constant 17 : index
    %c0_302 = arith.constant 0 : index
    %464 = vector.load %arg15[%c17_301, %c0_302] : memref<32x64xf32, #tpu.memory_space<vmem>>, vector<1x64xf32>
    %465 = vector.shape_cast %464 : vector<1x64xf32> to vector<64xf32>
    %c0_303 = arith.constant 0 : index
    %c1088 = arith.constant 1088 : index
    %466 = vector.load %arg16[%c0_303, %c1088] : memref<1x2048xf32, #tpu.memory_space<vmem>>, vector<1x64xf32>
    %467 = vector.shape_cast %466 : vector<1x64xf32> to vector<64xf32>
    %468 = vector.shape_cast %465 : vector<64xf32> to vector<1x64xf32>
    tpu.vector_store %arg16[%c0_303, %c1088], %468 {strides = array<i32>} : memref<1x2048xf32, #tpu.memory_space<vmem>>, vector<1x64xf32>,
    %c18_304 = arith.constant 18 : index
    %c0_305 = arith.constant 0 : index
    %469 = vector.load %arg15[%c18_304, %c0_305] : memref<32x64xf32, #tpu.memory_space<vmem>>, vector<1x64xf32>
    %470 = vector.shape_cast %469 : vector<1x64xf32> to vector<64xf32>
    %c0_306 = arith.constant 0 : index
    %c1152 = arith.constant 1152 : index
    %471 = vector.load %arg16[%c0_306, %c1152] : memref<1x2048xf32, #tpu.memory_space<vmem>>, vector<1x64xf32>
    %472 = vector.shape_cast %471 : vector<1x64xf32> to vector<64xf32>
    %473 = vector.shape_cast %470 : vector<64xf32> to vector<1x64xf32>
    tpu.vector_store %arg16[%c0_306, %c1152], %473 {strides = array<i32>} : memref<1x2048xf32, #tpu.memory_space<vmem>>, vector<1x64xf32>,
    %c19_307 = arith.constant 19 : index
    %c0_308 = arith.constant 0 : index
    %474 = vector.load %arg15[%c19_307, %c0_308] : memref<32x64xf32, #tpu.memory_space<vmem>>, vector<1x64xf32>
    %475 = vector.shape_cast %474 : vector<1x64xf32> to vector<64xf32>
    %c0_309 = arith.constant 0 : index
    %c1216 = arith.constant 1216 : index
    %476 = vector.load %arg16[%c0_309, %c1216] : memref<1x2048xf32, #tpu.memory_space<vmem>>, vector<1x64xf32>
    %477 = vector.shape_cast %476 : vector<1x64xf32> to vector<64xf32>
    %478 = vector.shape_cast %475 : vector<64xf32> to vector<1x64xf32>
    tpu.vector_store %arg16[%c0_309, %c1216], %478 {strides = array<i32>} : memref<1x2048xf32, #tpu.memory_space<vmem>>, vector<1x64xf32>,
    %c20_310 = arith.constant 20 : index
    %c0_311 = arith.constant 0 : index
    %479 = vector.load %arg15[%c20_310, %c0_311] : memref<32x64xf32, #tpu.memory_space<vmem>>, vector<1x64xf32>
    %480 = vector.shape_cast %479 : vector<1x64xf32> to vector<64xf32>
    %c0_312 = arith.constant 0 : index
    %c1280 = arith.constant 1280 : index
    %481 = vector.load %arg16[%c0_312, %c1280] : memref<1x2048xf32, #tpu.memory_space<vmem>>, vector<1x64xf32>
    %482 = vector.shape_cast %481 : vector<1x64xf32> to vector<64xf32>
    %483 = vector.shape_cast %480 : vector<64xf32> to vector<1x64xf32>
    tpu.vector_store %arg16[%c0_312, %c1280], %483 {strides = array<i32>} : memref<1x2048xf32, #tpu.memory_space<vmem>>, vector<1x64xf32>,
    %c21_313 = arith.constant 21 : index
    %c0_314 = arith.constant 0 : index
    %484 = vector.load %arg15[%c21_313, %c0_314] : memref<32x64xf32, #tpu.memory_space<vmem>>, vector<1x64xf32>
    %485 = vector.shape_cast %484 : vector<1x64xf32> to vector<64xf32>
    %c0_315 = arith.constant 0 : index
    %c1344 = arith.constant 1344 : index
    %486 = vector.load %arg16[%c0_315, %c1344] : memref<1x2048xf32, #tpu.memory_space<vmem>>, vector<1x64xf32>
    %487 = vector.shape_cast %486 : vector<1x64xf32> to vector<64xf32>
    %488 = vector.shape_cast %485 : vector<64xf32> to vector<1x64xf32>
    tpu.vector_store %arg16[%c0_315, %c1344], %488 {strides = array<i32>} : memref<1x2048xf32, #tpu.memory_space<vmem>>, vector<1x64xf32>,
    %c22_316 = arith.constant 22 : index
    %c0_317 = arith.constant 0 : index
    %489 = vector.load %arg15[%c22_316, %c0_317] : memref<32x64xf32, #tpu.memory_space<vmem>>, vector<1x64xf32>
    %490 = vector.shape_cast %489 : vector<1x64xf32> to vector<64xf32>
    %c0_318 = arith.constant 0 : index
    %c1408 = arith.constant 1408 : index
    %491 = vector.load %arg16[%c0_318, %c1408] : memref<1x2048xf32, #tpu.memory_space<vmem>>, vector<1x64xf32>
    %492 = vector.shape_cast %491 : vector<1x64xf32> to vector<64xf32>
    %493 = vector.shape_cast %490 : vector<64xf32> to vector<1x64xf32>
    tpu.vector_store %arg16[%c0_318, %c1408], %493 {strides = array<i32>} : memref<1x2048xf32, #tpu.memory_space<vmem>>, vector<1x64xf32>,
    %c23_319 = arith.constant 23 : index
    %c0_320 = arith.constant 0 : index
    %494 = vector.load %arg15[%c23_319, %c0_320] : memref<32x64xf32, #tpu.memory_space<vmem>>, vector<1x64xf32>
    %495 = vector.shape_cast %494 : vector<1x64xf32> to vector<64xf32>
    %c0_321 = arith.constant 0 : index
    %c1472 = arith.constant 1472 : index
    %496 = vector.load %arg16[%c0_321, %c1472] : memref<1x2048xf32, #tpu.memory_space<vmem>>, vector<1x64xf32>
    %497 = vector.shape_cast %496 : vector<1x64xf32> to vector<64xf32>
    %498 = vector.shape_cast %495 : vector<64xf32> to vector<1x64xf32>
    tpu.vector_store %arg16[%c0_321, %c1472], %498 {strides = array<i32>} : memref<1x2048xf32, #tpu.memory_space<vmem>>, vector<1x64xf32>,
    %c24_322 = arith.constant 24 : index
    %c0_323 = arith.constant 0 : index
    %499 = vector.load %arg15[%c24_322, %c0_323] : memref<32x64xf32, #tpu.memory_space<vmem>>, vector<1x64xf32>
    %500 = vector.shape_cast %499 : vector<1x64xf32> to vector<64xf32>
    %c0_324 = arith.constant 0 : index
    %c1536 = arith.constant 1536 : index
    %501 = vector.load %arg16[%c0_324, %c1536] : memref<1x2048xf32, #tpu.memory_space<vmem>>, vector<1x64xf32>
    %502 = vector.shape_cast %501 : vector<1x64xf32> to vector<64xf32>
    %503 = vector.shape_cast %500 : vector<64xf32> to vector<1x64xf32>
    tpu.vector_store %arg16[%c0_324, %c1536], %503 {strides = array<i32>} : memref<1x2048xf32, #tpu.memory_space<vmem>>, vector<1x64xf32>,
    %c25 = arith.constant 25 : index
    %c0_325 = arith.constant 0 : index
    %504 = vector.load %arg15[%c25, %c0_325] : memref<32x64xf32, #tpu.memory_space<vmem>>, vector<1x64xf32>
    %505 = vector.shape_cast %504 : vector<1x64xf32> to vector<64xf32>
    %c0_326 = arith.constant 0 : index
    %c1600 = arith.constant 1600 : index
    %506 = vector.load %arg16[%c0_326, %c1600] : memref<1x2048xf32, #tpu.memory_space<vmem>>, vector<1x64xf32>
    %507 = vector.shape_cast %506 : vector<1x64xf32> to vector<64xf32>
    %508 = vector.shape_cast %505 : vector<64xf32> to vector<1x64xf32>
    tpu.vector_store %arg16[%c0_326, %c1600], %508 {strides = array<i32>} : memref<1x2048xf32, #tpu.memory_space<vmem>>, vector<1x64xf32>,
    %c26 = arith.constant 26 : index
    %c0_327 = arith.constant 0 : index
    %509 = vector.load %arg15[%c26, %c0_327] : memref<32x64xf32, #tpu.memory_space<vmem>>, vector<1x64xf32>
    %510 = vector.shape_cast %509 : vector<1x64xf32> to vector<64xf32>
    %c0_328 = arith.constant 0 : index
    %c1664 = arith.constant 1664 : index
    %511 = vector.load %arg16[%c0_328, %c1664] : memref<1x2048xf32, #tpu.memory_space<vmem>>, vector<1x64xf32>
    %512 = vector.shape_cast %511 : vector<1x64xf32> to vector<64xf32>
    %513 = vector.shape_cast %510 : vector<64xf32> to vector<1x64xf32>
    tpu.vector_store %arg16[%c0_328, %c1664], %513 {strides = array<i32>} : memref<1x2048xf32, #tpu.memory_space<vmem>>, vector<1x64xf32>,
    %c27 = arith.constant 27 : index
    %c0_329 = arith.constant 0 : index
    %514 = vector.load %arg15[%c27, %c0_329] : memref<32x64xf32, #tpu.memory_space<vmem>>, vector<1x64xf32>
    %515 = vector.shape_cast %514 : vector<1x64xf32> to vector<64xf32>
    %c0_330 = arith.constant 0 : index
    %c1728 = arith.constant 1728 : index
    %516 = vector.load %arg16[%c0_330, %c1728] : memref<1x2048xf32, #tpu.memory_space<vmem>>, vector<1x64xf32>
    %517 = vector.shape_cast %516 : vector<1x64xf32> to vector<64xf32>
    %518 = vector.shape_cast %515 : vector<64xf32> to vector<1x64xf32>
    tpu.vector_store %arg16[%c0_330, %c1728], %518 {strides = array<i32>} : memref<1x2048xf32, #tpu.memory_space<vmem>>, vector<1x64xf32>,
    %c28_331 = arith.constant 28 : index
    %c0_332 = arith.constant 0 : index
    %519 = vector.load %arg15[%c28_331, %c0_332] : memref<32x64xf32, #tpu.memory_space<vmem>>, vector<1x64xf32>
    %520 = vector.shape_cast %519 : vector<1x64xf32> to vector<64xf32>
    %c0_333 = arith.constant 0 : index
    %c1792 = arith.constant 1792 : index
    %521 = vector.load %arg16[%c0_333, %c1792] : memref<1x2048xf32, #tpu.memory_space<vmem>>, vector<1x64xf32>
    %522 = vector.shape_cast %521 : vector<1x64xf32> to vector<64xf32>
    %523 = vector.shape_cast %520 : vector<64xf32> to vector<1x64xf32>
    tpu.vector_store %arg16[%c0_333, %c1792], %523 {strides = array<i32>} : memref<1x2048xf32, #tpu.memory_space<vmem>>, vector<1x64xf32>,
    %c29 = arith.constant 29 : index
    %c0_334 = arith.constant 0 : index
    %524 = vector.load %arg15[%c29, %c0_334] : memref<32x64xf32, #tpu.memory_space<vmem>>, vector<1x64xf32>
    %525 = vector.shape_cast %524 : vector<1x64xf32> to vector<64xf32>
    %c0_335 = arith.constant 0 : index
    %c1856 = arith.constant 1856 : index
    %526 = vector.load %arg16[%c0_335, %c1856] : memref<1x2048xf32, #tpu.memory_space<vmem>>, vector<1x64xf32>
    %527 = vector.shape_cast %526 : vector<1x64xf32> to vector<64xf32>
    %528 = vector.shape_cast %525 : vector<64xf32> to vector<1x64xf32>
    tpu.vector_store %arg16[%c0_335, %c1856], %528 {strides = array<i32>} : memref<1x2048xf32, #tpu.memory_space<vmem>>, vector<1x64xf32>,
    %c30 = arith.constant 30 : index
    %c0_336 = arith.constant 0 : index
    %529 = vector.load %arg15[%c30, %c0_336] : memref<32x64xf32, #tpu.memory_space<vmem>>, vector<1x64xf32>
    %530 = vector.shape_cast %529 : vector<1x64xf32> to vector<64xf32>
    %c0_337 = arith.constant 0 : index
    %c1920 = arith.constant 1920 : index
    %531 = vector.load %arg16[%c0_337, %c1920] : memref<1x2048xf32, #tpu.memory_space<vmem>>, vector<1x64xf32>
    %532 = vector.shape_cast %531 : vector<1x64xf32> to vector<64xf32>
    %533 = vector.shape_cast %530 : vector<64xf32> to vector<1x64xf32>
    tpu.vector_store %arg16[%c0_337, %c1920], %533 {strides = array<i32>} : memref<1x2048xf32, #tpu.memory_space<vmem>>, vector<1x64xf32>,
    %c31 = arith.constant 31 : index
    %c0_338 = arith.constant 0 : index
    %534 = vector.load %arg15[%c31, %c0_338] : memref<32x64xf32, #tpu.memory_space<vmem>>, vector<1x64xf32>
    %535 = vector.shape_cast %534 : vector<1x64xf32> to vector<64xf32>
    %c0_339 = arith.constant 0 : index
    %c1984 = arith.constant 1984 : index
    %536 = vector.load %arg16[%c0_339, %c1984] : memref<1x2048xf32, #tpu.memory_space<vmem>>, vector<1x64xf32>
    %537 = vector.shape_cast %536 : vector<1x64xf32> to vector<64xf32>
    %538 = vector.shape_cast %535 : vector<64xf32> to vector<1x64xf32>
    tpu.vector_store %arg16[%c0_339, %c1984], %538 {strides = array<i32>} : memref<1x2048xf32, #tpu.memory_space<vmem>>, vector<1x64xf32>,
    %c0_340 = arith.constant 0 : index
    %c0_341 = arith.constant 0 : index
    %539 = vector.load %arg16[%c0_340, %c0_341] : memref<1x2048xf32, #tpu.memory_space<vmem>>, vector<1x2048xf32>
    %540 = arith.truncf %539 : vector<1x2048xf32> to vector<1x2048xbf16>
    %c0_342 = arith.constant 0 : index
    %c0_343 = arith.constant 0 : index
    %541 = vector.load %arg8[%c0_342, %c0_343] : memref<2048x128xbf16, #tpu.memory_space<vmem>>, vector<2048x128xbf16>
    %cst_344 = arith.constant dense<0.000000e+00> : vector<1x128xf32>
    %542 = tpu.matmul %540, %541, %cst_344 {dimension_numbers = #tpu.dot_dimension_numbers<[1], [0], [0], [1], [0, 0, 1, 1], [], []>} : vector<1x2048xbf16>, vector<2048x128xbf16>, vector<1x128xf32> -> vector<1x128xf32>
    %c0_345 = arith.constant 0 : index
    %c0_346 = arith.constant 0 : index
    %543 = vector.load %arg9[%c0_345, %c0_346] : memref<1x128xf32, #tpu.memory_space<vmem>>, vector<1x128xf32>
    %544 = arith.addf %542, %543 : vector<1x128xf32>
    %c0_347 = arith.constant 0 : index
    %c0_348 = arith.constant 0 : index
    %c0_349 = arith.constant 0 : index
    %545 = vector.load %arg10[%c0_347, %c0_348, %c0_349] : memref<1x1x128xf32, #tpu.memory_space<vmem>>, vector<1x1x128xf32>
    %546 = vector.shape_cast %545 : vector<1x1x128xf32> to vector<1x128xf32>
    %547 = vector.shape_cast %544 : vector<1x128xf32> to vector<1x1x128xf32>
    tpu.vector_store %arg10[%c0_347, %c0_348, %c0_349], %547 {strides = array<i32>} : memref<1x1x128xf32, #tpu.memory_space<vmem>>, vector<1x1x128xf32>,
    return
  }
  func.func @transform_0(%arg0: i32) -> (i32, i32, i32) {
    %c0_i32 = arith.constant 0 : i32
    %c0_i32_0 = arith.constant 0 : i32
    %c0_i32_1 = arith.constant 0 : i32
    return %arg0, %c0_i32, %c0_i32_0 : i32, i32, i32
  }
  func.func @transform_1(%arg0: i32) -> (i32, i32) {
    %c0_i32 = arith.constant 0 : i32
    %c0_i32_0 = arith.constant 0 : i32
    %c0_i32_1 = arith.constant 0 : i32
    return %c0_i32, %c0_i32_0 : i32, i32
  }
  func.func @transform_2(%arg0: i32) -> (i32, i32) {
    %c0_i32 = arith.constant 0 : i32
    %c0_i32_0 = arith.constant 0 : i32
    %c0_i32_1 = arith.constant 0 : i32
    return %c0_i32, %c0_i32_0 : i32, i32
  }
  func.func @transform_3(%arg0: i32) -> (i32, i32) {
    %c0_i32 = arith.constant 0 : i32
    %c0_i32_0 = arith.constant 0 : i32
    %c0_i32_1 = arith.constant 0 : i32
    return %c0_i32, %c0_i32_0 : i32, i32
  }
  func.func @transform_4(%arg0: i32) -> (i32, i32) {
    %c0_i32 = arith.constant 0 : i32
    %c0_i32_0 = arith.constant 0 : i32
    %c0_i32_1 = arith.constant 0 : i32
    return %c0_i32, %c0_i32_0 : i32, i32
  }
  func.func @transform_5(%arg0: i32) -> (i32, i32) {
    %c0_i32 = arith.constant 0 : i32
    %c0_i32_0 = arith.constant 0 : i32
    %c0_i32_1 = arith.constant 0 : i32
    return %c0_i32, %c0_i32_0 : i32, i32
  }
  func.func @transform_6(%arg0: i32) -> (i32, i32) {
    %c0_i32 = arith.constant 0 : i32
    %c0_i32_0 = arith.constant 0 : i32
    %c0_i32_1 = arith.constant 0 : i32
    return %c0_i32, %c0_i32_0 : i32, i32
  }
  func.func @transform_7(%arg0: i32) -> (i32, i32) {
    %c0_i32 = arith.constant 0 : i32
    %c0_i32_0 = arith.constant 0 : i32
    %c0_i32_1 = arith.constant 0 : i32
    return %c0_i32, %c0_i32_0 : i32, i32
  }
  func.func @transform_8(%arg0: i32) -> (i32, i32) {
    %c0_i32 = arith.constant 0 : i32
    %c0_i32_0 = arith.constant 0 : i32
    %c0_i32_1 = arith.constant 0 : i32
    return %c0_i32, %c0_i32_0 : i32, i32
  }
  func.func @transform_9(%arg0: i32) -> (i32, i32, i32) {
    %c0_i32 = arith.constant 0 : i32
    %c0_i32_0 = arith.constant 0 : i32
    %c0_i32_1 = arith.constant 0 : i32
    return %arg0, %c0_i32, %c0_i32_0 : i32, i32, i32
  }
}

</mosaic_0001>

<llo_original>
// kernel: cnn_forward.1
$region0: #{cnn_forward.1}
  #allocation0 [shape = 'u32[]', space=smem, size = 0x4, offset = 0x4, fixed_abs, tag = 'smem constant byte address 0x4 - core index']
  #allocation1 [shape = 'u32[144,128]{1,0:T(1,128)}', space=vmem, size = 0x12000, scoped, tag = 'internal scratch']
  #allocation2 [shape = 'f32[1,1056]{1,0:T(1,128)}', space=vmem, size = 0x1200, scoped, tag = 'scratch operand']
  #allocation3 [shape = 'f32[25,896]{1,0:T(8,128)}', space=vmem, size = 0x1c000, scoped, tag = 'scratch operand']
  #allocation4 [shape = 'f32[16,342]{1,0:T(8,128)}', space=vmem, size = 0x6000, scoped, tag = 'scratch operand']
  #allocation5 [shape = 'bf16[400,252]{1,0:T(16,128)(2,1)}', space=vmem, size = 0x32000, scoped, tag = 'scratch operand']
  #allocation6 [shape = 'f32[32,64]{1,0:T(8,128)}', space=vmem, size = 0x4000, scoped, tag = 'scratch operand']
  #allocation7 [shape = 'f32[1,2048]{1,0:T(1,128)}', space=vmem, size = 0x2000, scoped, tag = 'scratch operand']
  %s0 = inlined_call_operand.vmem [shape: f32[2,1,784], index: 0, kind: input, shape index: {}]
  %s1 = inlined_call_operand.vmem [shape: bf16[16,25], index: 1, kind: input, shape index: {}]
  %s2 = inlined_call_operand.vmem [shape: f32[16,1], index: 2, kind: input, shape index: {}]
  %s3 = inlined_call_operand.vmem [shape: bf16[32,400], index: 3, kind: input, shape index: {}]
  %s4 = inlined_call_operand.vmem [shape: f32[32,1], index: 4, kind: input, shape index: {}]
  %s5 = inlined_call_operand.vmem [shape: bf16[863,342], index: 5, kind: input, shape index: {}]
  %s6 = inlined_call_operand.vmem [shape: bf16[233,64], index: 6, kind: input, shape index: {}]
  %s7 = inlined_call_operand.vmem [shape: bf16[2048,128], index: 7, kind: input, shape index: {}]
  %s8 = inlined_call_operand.vmem [shape: f32[1,128], index: 8, kind: input, shape index: {}]
  %s9 = inlined_call_operand.hbm [shape: f32[2,1,128], index: 9, kind: output, shape index: {}]
  %s10 = sld [smem:[#allocation0]]
  $region69: #{cnn_forward.1} parent=0
    _
  %s12 = ssub.s32 1, %s10
  %s13 = scalar_select 0, %s12, %s10
  $region1: #{cnn_forward.1} parent=0
    #allocation8 [shape = 'u8[1024]{0}', space=vmem, size = 0x400, scoped, tag = 'output window, operand 0']
    #allocation9 [shape = 's32[2]{0}', space=sflag, size = 0x8, scoped, tag = 'scoped memory for cnn_forward.1']
    %14 = vsyncpa [#allocation9], 0
    %s15 = scalar_lea.sflag [#allocation9], 1
    %16 = vsyncpa %s15, 0
    loop: start=0, step=1, limit=4
    $region2: #{cnn_forward.1} parent=1 // loop_pre_header
      _
    $region3: #{cnn_forward.1} parent=1 // loop_header
      %s18 = sphi 0, %s22
      %p19 = scmp.ge.s32.totalorder %s18, 4
      %s28 = sphi 0, %s30
      %s31 = sphi 0, %s28
      %s32 = sphi 0, %s31
      %s48 = sphi 0, %s32
      %s52 = sphi 0, %s52
      %s54 = sphi 0, %s52
      %s55 = sphi 0, %s54
      %s69 = sphi 0, %s55
      %s73 = sphi 0, %s73
      %s75 = sphi 0, %s73
      %s76 = sphi 0, %s75
      %s90 = sphi 0, %s76
      %s94 = sphi 0, %s94
      %s96 = sphi 0, %s94
      %s97 = sphi 0, %s96
      %s111 = sphi 0, %s97
      %s115 = sphi 0, %s115
      %s117 = sphi 0, %s115
      %s118 = sphi 0, %s117
      %s132 = sphi 0, %s118
      %s136 = sphi 0, %s136
      %s138 = sphi 0, %s136
      %s139 = sphi 0, %s138
      %s153 = sphi 0, %s139
      %s157 = sphi 0, %s157
      %s159 = sphi 0, %s157
      %s160 = sphi 0, %s159
      %s174 = sphi 0, %s160
      %s178 = sphi 0, %s178
      %s180 = sphi 0, %s178
      %s181 = sphi 0, %s180
      %s195 = sphi 0, %s181
      %s199 = sphi 0, %s199
      %s201 = sphi 0, %s199
      %s202 = sphi 0, %s201
      %s216 = sphi 0, %s202
      %s222 = sphi 0, %s224
      %s225 = sphi 0, %s222
      %s226 = sphi 0, %s225
      %s242 = sphi 0, %s226
    $region4: #{cnn_forward.1} parent=1 // loop_header_branch
      %21 = sbr.rel (%p19) target = $region8
    $region5: #{cnn_forward.1} parent=1 // loop_body
      %s23 = ssub.s32 %s18, 1
      %s24 = ssub.s32 %s18, 2
      %s25 = sadd.s32 %s18, 1
      %s26 = ssub.s32 %s18, %s25
      %p27 = scmp.eq.s32.totalorder %s26, 0
      %s29 = sadd.s32 %s28, 1
      %s30 = scalar_select %p27, %s28, %s29
      %p33 = pneg %p27
      %p34 = scmp.eq.s32.totalorder %s18, 1
      %p35 = por %p33, %p34
      %p36 = scmp.ne.s32.totalorder %s28, %s31
      %p37 = scmp.eq.s32.totalorder %s18, 0
      %p38 = por %p36, %p37
      %p39 = scmp.ne.s32.totalorder %s28, %s31
      %p40 = scmp.eq.s32.totalorder %s23, 1
      %p41 = por %p39, %p40
      %p42 = scmp.ne.s32.totalorder %s31, %s32
      %p43 = scmp.eq.s32.totalorder %s23, 0
      %p44 = por %p42, %p43
      %p45 = scmp.ne.s32.totalorder %s31, %s32
      %p46 = scmp.eq.s32.totalorder %s24, 1
      %p47 = por %p45, %p46
      %p49 = scmp.ne.s32.totalorder %s32, %s48
      %p50 = scmp.eq.s32.totalorder %s24, 0
      %p51 = por %p49, %p50
      %s53 = sadd.s32 %s52, 1
      %p56 = scmp.eq.s32.totalorder %s18, 1
      %p57 = scmp.ne.s32.totalorder %s52, %s54
      %p58 = scmp.eq.s32.totalorder %s18, 0
      %p59 = por %p57, %p58
      %p60 = scmp.ne.s32.totalorder %s52, %s54
      %p61 = scmp.eq.s32.totalorder %s23, 1
      %p62 = por %p60, %p61
      %p63 = scmp.ne.s32.totalorder %s54, %s55
      %p64 = scmp.eq.s32.totalorder %s23, 0
      %p65 = por %p63, %p64
      %p66 = scmp.ne.s32.totalorder %s54, %s55
      %p67 = scmp.eq.s32.totalorder %s24, 1
      %p68 = por %p66, %p67
      %p70 = scmp.ne.s32.totalorder %s55, %s69
      %p71 = scmp.eq.s32.totalorder %s24, 0
      %p72 = por %p70, %p71
      %s74 = sadd.s32 %s73, 1
      %p77 = scmp.eq.s32.totalorder %s18, 1
      %p78 = scmp.ne.s32.totalorder %s73, %s75
      %p79 = scmp.eq.s32.totalorder %s18, 0
      %p80 = por %p78, %p79
      %p81 = scmp.ne.s32.totalorder %s73, %s75
      %p82 = scmp.eq.s32.totalorder %s23, 1
      %p83 = por %p81, %p82
      %p84 = scmp.ne.s32.totalorder %s75, %s76
      %p85 = scmp.eq.s32.totalorder %s23, 0
      %p86 = por %p84, %p85
      %p87 = scmp.ne.s32.totalorder %s75, %s76
      %p88 = scmp.eq.s32.totalorder %s24, 1
      %p89 = por %p87, %p88
      %p91 = scmp.ne.s32.totalorder %s76, %s90
      %p92 = scmp.eq.s32.totalorder %s24, 0
      %p93 = por %p91, %p92
      %s95 = sadd.s32 %s94, 1
      %p98 = scmp.eq.s32.totalorder %s18, 1
      %p99 = scmp.ne.s32.totalorder %s94, %s96
      %p100 = scmp.eq.s32.totalorder %s18, 0
      %p101 = por %p99, %p100
      %p102 = scmp.ne.s32.totalorder %s94, %s96
      %p103 = scmp.eq.s32.totalorder %s23, 1
      %p104 = por %p102, %p103
      %p105 = scmp.ne.s32.totalorder %s96, %s97
      %p106 = scmp.eq.s32.totalorder %s23, 0
      %p107 = por %p105, %p106
      %p108 = scmp.ne.s32.totalorder %s96, %s97
      %p109 = scmp.eq.s32.totalorder %s24, 1
      %p110 = por %p108, %p109
      %p112 = scmp.ne.s32.totalorder %s97, %s111
      %p113 = scmp.eq.s32.totalorder %s24, 0
      %p114 = por %p112, %p113
      %s116 = sadd.s32 %s115, 1
      %p119 = scmp.eq.s32.totalorder %s18, 1
      %p120 = scmp.ne.s32.totalorder %s115, %s117
      %p121 = scmp.eq.s32.totalorder %s18, 0
      %p122 = por %p120, %p121
      %p123 = scmp.ne.s32.totalorder %s115, %s117
      %p124 = scmp.eq.s32.totalorder %s23, 1
      %p125 = por %p123, %p124
      %p126 = scmp.ne.s32.totalorder %s117, %s118
      %p127 = scmp.eq.s32.totalorder %s23, 0
      %p128 = por %p126, %p127
      %p129 = scmp.ne.s32.totalorder %s117, %s118
      %p130 = scmp.eq.s32.totalorder %s24, 1
      %p131 = por %p129, %p130
      %p133 = scmp.ne.s32.totalorder %s118, %s132
      %p134 = scmp.eq.s32.totalorder %s24, 0
      %p135 = por %p133, %p134
      %s137 = sadd.s32 %s136, 1
      %p140 = scmp.eq.s32.totalorder %s18, 1
      %p141 = scmp.ne.s32.totalorder %s136, %s138
      %p142 = scmp.eq.s32.totalorder %s18, 0
      %p143 = por %p141, %p142
      %p144 = scmp.ne.s32.totalorder %s136, %s138
      %p145 = scmp.eq.s32.totalorder %s23, 1
      %p146 = por %p144, %p145
      %p147 = scmp.ne.s32.totalorder %s138, %s139
      %p148 = scmp.eq.s32.totalorder %s23, 0
      %p149 = por %p147, %p148
      %p150 = scmp.ne.s32.totalorder %s138, %s139
      %p151 = scmp.eq.s32.totalorder %s24, 1
      %p152 = por %p150, %p151
      %p154 = scmp.ne.s32.totalorder %s139, %s153
      %p155 = scmp.eq.s32.totalorder %s24, 0
      %p156 = por %p154, %p155
      %s158 = sadd.s32 %s157, 1
      %p161 = scmp.eq.s32.totalorder %s18, 1
      %p162 = scmp.ne.s32.totalorder %s157, %s159
      %p163 = scmp.eq.s32.totalorder %s18, 0
      %p164 = por %p162, %p163
      %p165 = scmp.ne.s32.totalorder %s157, %s159
      %p166 = scmp.eq.s32.totalorder %s23, 1
      %p167 = por %p165, %p166
      %p168 = scmp.ne.s32.totalorder %s159, %s160
      %p169 = scmp.eq.s32.totalorder %s23, 0
      %p170 = por %p168, %p169
      %p171 = scmp.ne.s32.totalorder %s159, %s160
      %p172 = scmp.eq.s32.totalorder %s24, 1
      %p173 = por %p171, %p172
      %p175 = scmp.ne.s32.totalorder %s160, %s174
      %p176 = scmp.eq.s32.totalorder %s24, 0
      %p177 = por %p175, %p176
      %s179 = sadd.s32 %s178, 1
      %p182 = scmp.eq.s32.totalorder %s18, 1
      %p183 = scmp.ne.s32.totalorder %s178, %s180
      %p184 = scmp.eq.s32.totalorder %s18, 0
      %p185 = por %p183, %p184
      %p186 = scmp.ne.s32.totalorder %s178, %s180
      %p187 = scmp.eq.s32.totalorder %s23, 1
      %p188 = por %p186, %p187
      %p189 = scmp.ne.s32.totalorder %s180, %s181
      %p190 = scmp.eq.s32.totalorder %s23, 0
      %p191 = por %p189, %p190
      %p192 = scmp.ne.s32.totalorder %s180, %s181
      %p193 = scmp.eq.s32.totalorder %s24, 1
      %p194 = por %p192, %p193
      %p196 = scmp.ne.s32.totalorder %s181, %s195
      %p197 = scmp.eq.s32.totalorder %s24, 0
      %p198 = por %p196, %p197
      %s200 = sadd.s32 %s199, 1
      %p203 = scmp.eq.s32.totalorder %s18, 1
      %p204 = scmp.ne.s32.totalorder %s199, %s201
      %p205 = scmp.eq.s32.totalorder %s18, 0
      %p206 = por %p204, %p205
      %p207 = scmp.ne.s32.totalorder %s199, %s201
      %p208 = scmp.eq.s32.totalorder %s23, 1
      %p209 = por %p207, %p208
      %p210 = scmp.ne.s32.totalorder %s201, %s202
      %p211 = scmp.eq.s32.totalorder %s23, 0
      %p212 = por %p210, %p211
      %p213 = scmp.ne.s32.totalorder %s201, %s202
      %p214 = scmp.eq.s32.totalorder %s24, 1
      %p215 = por %p213, %p214
      %p217 = scmp.ne.s32.totalorder %s202, %s216
      %p218 = scmp.eq.s32.totalorder %s24, 0
      %p219 = por %p217, %p218
      %s220 = ssub.s32 %s18, %s25
      %p221 = scmp.eq.s32.totalorder %s220, 0
      %s223 = sadd.s32 %s222, 1
      %s224 = scalar_select %p221, %s222, %s223
      %p227 = pneg %p221
      %p228 = scmp.eq.s32.totalorder %s18, 1
      %p229 = por %p227, %p228
      %p230 = scmp.ne.s32.totalorder %s222, %s225
      %p231 = scmp.eq.s32.totalorder %s18, 0
      %p232 = por %p230, %p231
      %p233 = scmp.ne.s32.totalorder %s222, %s225
      %p234 = scmp.eq.s32.totalorder %s23, 1
      %p235 = por %p233, %p234
      %p236 = scmp.ne.s32.totalorder %s225, %s226
      %p237 = scmp.eq.s32.totalorder %s23, 0
      %p238 = por %p236, %p237
      %p239 = scmp.ne.s32.totalorder %s225, %s226
      %p240 = scmp.eq.s32.totalorder %s24, 1
      %p241 = por %p239, %p240
      %p243 = scmp.ne.s32.totalorder %s226, %s242
      %p244 = scmp.eq.s32.totalorder %s24, 0
      %p245 = por %p243, %p244
      %p246 = scmp.le.s32.totalorder 1, %s18
      %p247 = scmp.lt.s32.totalorder %s18, 3
      %p248 = pnand %p246, %p247
      %p249 = pneg %p248
      // Predicated region
      $region9: #{cnn_forward.1} parent=5 // pred_check
        _
      $region10: #{cnn_forward.1} parent=5 // pred_check_branch
        %251 = sbr.rel (%p248) target = $region12
      $region11: #{cnn_forward.1} parent=5 // pred_region
        %s252 = ssub.s32 %s18, 1
        // Predicated region
        $region13: #{cnn_forward.1} parent=11 // pred_check
          %p253 = pneg %p65
        $region14: #{cnn_forward.1} parent=11 // pred_check_branch
          %255 = sbr.rel (%p253) target = $region16
        $region15: #{cnn_forward.1} parent=11 // pred_region
          _
        $region16: #{cnn_forward.1} parent=11 // pred_fallthru
          _
        // Predicated region
        $region17: #{cnn_forward.1} parent=11 // pred_check
          %p256 = pneg %p86
        $region18: #{cnn_forward.1} parent=11 // pred_check_branch
          %258 = sbr.rel (%p256) target = $region20
        $region19: #{cnn_forward.1} parent=11 // pred_region
          _
        $region20: #{cnn_forward.1} parent=11 // pred_fallthru
          _
        // Predicated region
        $region21: #{cnn_forward.1} parent=11 // pred_check
          %p259 = pneg %p107
        $region22: #{cnn_forward.1} parent=11 // pred_check_branch
          %261 = sbr.rel (%p259) target = $region24
        $region23: #{cnn_forward.1} parent=11 // pred_region
          _
        $region24: #{cnn_forward.1} parent=11 // pred_fallthru
          _
        // Predicated region
        $region25: #{cnn_forward.1} parent=11 // pred_check
          %p262 = pneg %p128
        $region26: #{cnn_forward.1} parent=11 // pred_check_branch
          %264 = sbr.rel (%p262) target = $region28
        $region27: #{cnn_forward.1} parent=11 // pred_region
          _
        $region28: #{cnn_forward.1} parent=11 // pred_fallthru
          _
        // Predicated region
        $region29: #{cnn_forward.1} parent=11 // pred_check
          %p265 = pneg %p149
        $region30: #{cnn_forward.1} parent=11 // pred_check_branch
          %267 = sbr.rel (%p265) target = $region32
        $region31: #{cnn_forward.1} parent=11 // pred_region
          _
        $region32: #{cnn_forward.1} parent=11 // pred_fallthru
          _
        // Predicated region
        $region33: #{cnn_forward.1} parent=11 // pred_check
          %p268 = pneg %p170
        $region34: #{cnn_forward.1} parent=11 // pred_check_branch
          %270 = sbr.rel (%p268) target = $region36
        $region35: #{cnn_forward.1} parent=11 // pred_region
          _
        $region36: #{cnn_forward.1} parent=11 // pred_fallthru
          _
        // Predicated region
        $region37: #{cnn_forward.1} parent=11 // pred_check
          %p271 = pneg %p191
        $region38: #{cnn_forward.1} parent=11 // pred_check_branch
          %273 = sbr.rel (%p271) target = $region40
        $region39: #{cnn_forward.1} parent=11 // pred_region
          _
        $region40: #{cnn_forward.1} parent=11 // pred_fallthru
          _
        // Predicated region
        $region41: #{cnn_forward.1} parent=11 // pred_check
          %p274 = pneg %p212
        $region42: #{cnn_forward.1} parent=11 // pred_check_branch
          %276 = sbr.rel (%p274) target = $region44
        $region43: #{cnn_forward.1} parent=11 // pred_region
          _
        $region44: #{cnn_forward.1} parent=11 // pred_fallthru
          _
      $region12: #{cnn_forward.1} parent=5 // pred_fallthru
        _
      %p277 = scmp.lt.s32.totalorder %s18, 2
      // Predicated region
      $region45: #{cnn_forward.1} parent=5 // pred_check
        %p278 = pneg %p277
      $region46: #{cnn_forward.1} parent=5 // pred_check_branch
        %280 = sbr.rel (%p278) target = $region48
      $region47: #{cnn_forward.1} parent=5 // pred_region
        // Predicated region
        $region49: #{cnn_forward.1} parent=47 // pred_check
          %p281 = pneg %p38
        $region50: #{cnn_forward.1} parent=47 // pred_check_branch
          %283 = sbr.rel (%p281) target = $region52
        $region51: #{cnn_forward.1} parent=47 // pred_region
          %p284 = scmp.lt.s32.totalorder %s18, 1
          %s285 = scalar_select %p284, %s18, 1
          %s286 = smul.addr %s285, 7
          %s287 = scalar_lea.vmem %s0, %s286
        $region52: #{cnn_forward.1} parent=47 // pred_fallthru
          _
      $region48: #{cnn_forward.1} parent=5 // pred_fallthru
        _
      %p288 = scmp.le.s32.totalorder 1, %s18
      %p289 = scmp.lt.s32.totalorder %s18, 3
      %p290 = pnand %p288, %p289
      %p291 = pneg %p290
      // Predicated region
      $region53: #{cnn_forward.1} parent=5 // pred_check
        _
      $region54: #{cnn_forward.1} parent=5 // pred_check_branch
        %293 = sbr.rel (%p290) target = $region56
      $region55: #{cnn_forward.1} parent=5 // pred_region
        %s294 = ssub.s32 %s18, 1
        %p295 = scmp.lt.s32.totalorder %s23, 1
        %s296 = scalar_select %p295, %s23, 1
        %s297 = smul.addr %s296, 7
        %s298 = scalar_lea.vmem %s0, %s297
        %p299 = pneg %p44
        %p300 = pneg %p41
        %p301 = pneg %p65
        %p302 = pneg %p62
        %p303 = pneg %p86
        %p304 = pneg %p83
        %p305 = pneg %p107
        %p306 = pneg %p104
        %p307 = pneg %p128
        %p308 = pneg %p125
        %p309 = pneg %p149
        %p310 = pneg %p146
        %p311 = pneg %p170
        %p312 = pneg %p167
        %p313 = pneg %p191
        %p314 = pneg %p188
        %p315 = pneg %p212
        %p316 = pneg %p209
        %p317 = pneg %p238
        %p318 = pneg %p235
        %s319 = sand.u32 %s225, 1
        %s320 = scalar_lea.sflag [#allocation9], %s319
        %s321 = sand.u32 %s225, 1
        %s322 = scalar_lea.vmem [#allocation8], %s321
        %p323 = scmp.lt.s32.totalorder %s23, 1
        %s324 = scalar_select %p323, %s23, 1
        %s325 = smul.addr %s324, 7
        %s326 = scalar_lea.vmem %s0, %s325
        %328 = vst [vmem:[#allocation2] sm:$0xff] 0.0
        %v329 = vlaneseq
        %vm330 = vcmp.ge.s32.totalorder %v329, 0
        %vm331 = vcmp.lt.s32.totalorder %v329, 32
        %vm332 = vmand %vm330, %vm331
        %333 = vst.msk [vmem:[#allocation2 + $0x8] sm:$0x1] %vm332, 0.0
        %v334 = vld [vmem:[%s326] sm:$0x1]
        %336 = vrot.lane.b32.xlu0 %v334, 66
        %v337 = vpop.permute.xlu0 %336
        %vm339 = vcmp.ge.s32.totalorder %v329, 66
        %vm340 = vcmp.lt.s32.totalorder %v329, 94
        %vm341 = vmand %vm339, %vm340
        %342 = vst.msk [vmem:[#allocation2] sm:$0x1] %vm341, %v337
        %v343 = vld [vmem:[%s326] sm:$0x1]
        %345 = vrot.lane.b32.xlu0 %v343, 70
        %v346 = vpop.permute.xlu0 %345
        %vm348 = vcmp.ge.s32.totalorder %v329, 98
        %vm349 = vcmp.lt.s32.totalorder %v329, 126
        %vm350 = vmand %vm348, %vm349
        %351 = vst.msk [vmem:[#allocation2] sm:$0x1] %vm350, %v346
        %v352 = vld [vmem:[%s326] sm:$0x1]
        %354 = vrot.lane.b32.xlu0 %v352, 74
        %v355 = vpop.permute.xlu0 %354
        %vm357 = vcmp.ge.s32.totalorder %v329, 2
        %vm358 = vcmp.lt.s32.totalorder %v329, 30
        %vm359 = vmand %vm357, %vm358
        %360 = vst.msk [vmem:[#allocation2 + $0x1] sm:$0x1] %vm359, %v355
        %v361 = vld [vmem:[%s326] sm:$0x1]
        %363 = vrot.lane.b32.xlu0 %v361, 78
        %v364 = vpop.permute.xlu0 %363
        %vm366 = vcmp.ge.s32.totalorder %v329, 34
        %vm367 = vcmp.lt.s32.totalorder %v329, 62
        %vm368 = vmand %vm366, %vm367
        %369 = vst.msk [vmem:[#allocation2 + $0x1] sm:$0x1] %vm368, %v364
        %v370 = vld [vmem:[%s326] sm:$0x3]
        %372 = vrot.lane.b32.xlu0 %v370, 82
        %v373 = vpop.permute.xlu0 %372
        %v374 = vrot.slane %v373, 1
        %vm375 = vcmask 670720
        %v376 = vsel %vm375, %v373, %v374
        %378 = vst.msk [vmem:[#allocation2 + $0x1] sm:$0x1] %vm341, %v376
        %v379 = vld [vmem:[%s326 + $0x1] sm:$0x1]
        %381 = vrot.lane.b32.xlu0 %v379, 86
        %v382 = vpop.permute.xlu0 %381
        %384 = vst.msk [vmem:[#allocation2 + $0x1] sm:$0x1] %vm350, %v382
        %v385 = vld [vmem:[%s326 + $0x1] sm:$0x1]
        %387 = vrot.lane.b32.xlu0 %v385, 90
        %v388 = vpop.permute.xlu0 %387
        %390 = vst.msk [vmem:[#allocation2 + $0x2] sm:$0x1] %vm359, %v388
        %v391 = vld [vmem:[%s326 + $0x1] sm:$0x1]
        %393 = vrot.lane.b32.xlu0 %v391, 94
        %v394 = vpop.permute.xlu0 %393
        %396 = vst.msk [vmem:[#allocation2 + $0x2] sm:$0x1] %vm368, %v394
        %v397 = vld [vmem:[%s326 + $0x1] sm:$0x1]
        %399 = vrot.lane.b32.xlu0 %v397, 98
        %v400 = vpop.permute.xlu0 %399
        %402 = vst.msk [vmem:[#allocation2 + $0x2] sm:$0x1] %vm341, %v400
        %v403 = vld [vmem:[%s326 + $0x1] sm:$0x3]
        %405 = vrot.lane.b32.xlu0 %v403, 102
        %v406 = vpop.permute.xlu0 %405
        %v407 = vrot.slane %v406, 1
        %vm408 = vcmask 834560
        %v409 = vsel %vm408, %v406, %v407
        %411 = vst.msk [vmem:[#allocation2 + $0x2] sm:$0x1] %vm350, %v409
        %v412 = vld [vmem:[%s326 + $0x2] sm:$0x1]
        %414 = vrot.lane.b32.xlu0 %v412, 106
        %v415 = vpop.permute.xlu0 %414
        %417 = vst.msk [vmem:[#allocation2 + $0x3] sm:$0x1] %vm359, %v415
        %v418 = vld [vmem:[%s326 + $0x2] sm:$0x1]
        %420 = vrot.lane.b32.xlu0 %v418, 110
        %v421 = vpop.permute.xlu0 %420
        %423 = vst.msk [vmem:[#allocation2 + $0x3] sm:$0x1] %vm368, %v421
        %v424 = vld [vmem:[%s326 + $0x2] sm:$0x1]
        %426 = vrot.lane.b32.xlu0 %v424, 114
        %v427 = vpop.permute.xlu0 %426
        %429 = vst.msk [vmem:[#allocation2 + $0x3] sm:$0x1] %vm341, %v427
        %v430 = vld [vmem:[%s326 + $0x2] sm:$0x3]
        %432 = vrot.lane.b32.xlu0 %v430, 118
        %v433 = vpop.permute.xlu0 %432
        %v434 = vrot.slane %v433, 1
        %vm435 = vcmask 965632
        %v436 = vsel %vm435, %v433, %v434
        %438 = vst.msk [vmem:[#allocation2 + $0x3] sm:$0x1] %vm350, %v436
        %v439 = vld [vmem:[%s326 + $0x3] sm:$0x1]
        %441 = vrot.lane.b32.xlu0 %v439, 122
        %v442 = vpop.permute.xlu0 %441
        %444 = vst.msk [vmem:[#allocation2 + $0x4] sm:$0x1] %vm359, %v442
        %v445 = vld [vmem:[%s326 + $0x3] sm:$0x1]
        %447 = vrot.lane.b32.xlu0 %v445, 126
        %v448 = vpop.permute.xlu0 %447
        %450 = vst.msk [vmem:[#allocation2 + $0x4] sm:$0x1] %vm368, %v448
        %v451 = vld [vmem:[%s326 + $0x3] sm:$0x1]
        %453 = vrot.lane.b32.xlu0 %v451, 2
        %v454 = vpop.permute.xlu0 %453
        %456 = vst.msk [vmem:[#allocation2 + $0x4] sm:$0x1] %vm341, %v454
        %v457 = vld [vmem:[%s326 + $0x3] sm:$0x1]
        %459 = vrot.lane.b32.xlu0 %v457, 6
        %v460 = vpop.permute.xlu0 %459
        %462 = vst.msk [vmem:[#allocation2 + $0x4] sm:$0x1] %vm350, %v460
        %v463 = vld [vmem:[%s326 + $0x3] sm:$0x3]
        %465 = vrot.lane.b32.xlu0 %v463, 10
        %v466 = vpop.permute.xlu0 %465
        %v467 = vrot.slane %v466, 1
        %vm468 = vcmask 80896
        %v469 = vsel %vm468, %v466, %v467
        %471 = vst.msk [vmem:[#allocation2 + $0x5] sm:$0x1] %vm359, %v469
        %v472 = vld [vmem:[%s326 + $0x4] sm:$0x1]
        %474 = vrot.lane.b32.xlu0 %v472, 14
        %v475 = vpop.permute.xlu0 %474
        %477 = vst.msk [vmem:[#allocation2 + $0x5] sm:$0x1] %vm368, %v475
        %v478 = vld [vmem:[%s326 + $0x4] sm:$0x1]
        %480 = vrot.lane.b32.xlu0 %v478, 18
        %v481 = vpop.permute.xlu0 %480
        %483 = vst.msk [vmem:[#allocation2 + $0x5] sm:$0x1] %vm341, %v481
        %v484 = vld [vmem:[%s326 + $0x4] sm:$0x1]
        %486 = vrot.lane.b32.xlu0 %v484, 22
        %v487 = vpop.permute.xlu0 %486
        %489 = vst.msk [vmem:[#allocation2 + $0x5] sm:$0x1] %vm350, %v487
        %v490 = vld [vmem:[%s326 + $0x4] sm:$0x3]
        %492 = vrot.lane.b32.xlu0 %v490, 26
        %v493 = vpop.permute.xlu0 %492
        %v494 = vrot.slane %v493, 1
        %vm495 = vcmask 211968
        %v496 = vsel %vm495, %v493, %v494
        %498 = vst.msk [vmem:[#allocation2 + $0x6] sm:$0x1] %vm359, %v496
        %v499 = vld [vmem:[%s326 + $0x5] sm:$0x1]
        %501 = vrot.lane.b32.xlu0 %v499, 30
        %v502 = vpop.permute.xlu0 %501
        %504 = vst.msk [vmem:[#allocation2 + $0x6] sm:$0x1] %vm368, %v502
        %v505 = vld [vmem:[%s326 + $0x5] sm:$0x1]
        %507 = vrot.lane.b32.xlu0 %v505, 34
        %v508 = vpop.permute.xlu0 %507
        %510 = vst.msk [vmem:[#allocation2 + $0x6] sm:$0x1] %vm341, %v508
        %v511 = vld [vmem:[%s326 + $0x5] sm:$0x1]
        %513 = vrot.lane.b32.xlu0 %v511, 38
        %v514 = vpop.permute.xlu0 %513
        %516 = vst.msk [vmem:[#allocation2 + $0x6] sm:$0x1] %vm350, %v514
        %v517 = vld [vmem:[%s326 + $0x5] sm:$0x1]
        %519 = vrot.lane.b32.xlu0 %v517, 42
        %v520 = vpop.permute.xlu0 %519
        %522 = vst.msk [vmem:[#allocation2 + $0x7] sm:$0x1] %vm359, %v520
        %v523 = vld [vmem:[%s326 + $0x5] sm:$0x3]
        %525 = vrot.lane.b32.xlu0 %v523, 46
        %v526 = vpop.permute.xlu0 %525
        %v527 = vrot.slane %v526, 1
        %vm528 = vcmask 375808
        %v529 = vsel %vm528, %v526, %v527
        %531 = vst.msk [vmem:[#allocation2 + $0x7] sm:$0x1] %vm368, %v529
        %v532 = vld [vmem:[#allocation2] sm:$0xff]
        %vm533 = vcmp.lt.s32.totalorder %v329, 896
        %vm534 = vmand %vm330, %vm533
        %535 = vst.msk [vmem:[#allocation3] ss:$8 sm:$0xf] %vm534, %v532
        %536 = vst.msk [vmem:[#allocation3] ss:$8 sm:$0x70] %vm534, %v532
        %v537 = vld [vmem:[#allocation2] sm:$0xff]
        %539 = vrot.lane.b32.xlu0 %v537, 127
        %v540 = vpop.permute.xlu0 %539
        %v541 = vrot.slane %v540, 1
        %vm542 = vcmask 1039360
        %v543 = vsel %vm542, %v540, %v541
        %s545 = scalar_lea.vmem [#allocation3], 1
        %546 = vst.msk [vmem:[%s545] ss:$8 sm:$0xf] %vm534, %v543
        %547 = vst.msk [vmem:[%s545] ss:$8 sm:$0x70] %vm534, %v543
        %v548 = vld [vmem:[#allocation2] sm:$0xff]
        %550 = vrot.lane.b32.xlu0 %v548, 126
        %v551 = vpop.permute.xlu0 %550
        %v552 = vrot.slane %v551, 1
        %vm553 = vcmask 1031168
        %v554 = vsel %vm553, %v551, %v552
        %s556 = scalar_lea.vmem [#allocation3], 2
        %557 = vst.msk [vmem:[%s556] ss:$8 sm:$0xf] %vm534, %v554
        %558 = vst.msk [vmem:[%s556] ss:$8 sm:$0x70] %vm534, %v554
        %v559 = vld [vmem:[#allocation2] sm:$0xff]
        %561 = vrot.lane.b32.xlu0 %v559, 125
        %v562 = vpop.permute.xlu0 %561
        %v563 = vrot.slane %v562, 1
        %vm564 = vcmask 1022976
        %v565 = vsel %vm564, %v562, %v563
        %s567 = scalar_lea.vmem [#allocation3], 3
        %568 = vst.msk [vmem:[%s567] ss:$8 sm:$0xf] %vm534, %v565
        %569 = vst.msk [vmem:[%s567] ss:$8 sm:$0x70] %vm534, %v565
        %v570 = vld [vmem:[#allocation2] sm:$0xff]
        %572 = vrot.lane.b32.xlu0 %v570, 124
        %v573 = vpop.permute.xlu0 %572
        %v574 = vrot.slane %v573, 1
        %vm575 = vcmask 1014784
        %v576 = vsel %vm575, %v573, %v574
        %s578 = scalar_lea.vmem [#allocation3], 4
        %579 = vst.msk [vmem:[%s578] ss:$8 sm:$0xf] %vm534, %v576
        %580 = vst.msk [vmem:[%s578] ss:$8 sm:$0x70] %vm534, %v576
        %v581 = vld [vmem:[#allocation2] sm:$0xff]
        %583 = vrot.lane.b32.xlu0 %v581, 96
        %v584 = vpop.permute.xlu0 %583
        %v585 = vrot.slane %v584, 1
        %vm586 = vcmask 785408
        %v587 = vsel %vm586, %v584, %v585
        %s589 = scalar_lea.vmem [#allocation3], 5
        %590 = vst.msk [vmem:[%s589] ss:$8 sm:$0xf] %vm534, %v587
        %591 = vst.msk [vmem:[%s589] ss:$8 sm:$0x70] %vm534, %v587
        %v592 = vld [vmem:[#allocation2] sm:$0xff]
        %594 = vrot.lane.b32.xlu0 %v592, 95
        %v595 = vpop.permute.xlu0 %594
        %v596 = vrot.slane %v595, 1
        %vm597 = vcmask 777216
        %v598 = vsel %vm597, %v595, %v596
        %s600 = scalar_lea.vmem [#allocation3], 6
        %601 = vst.msk [vmem:[%s600] ss:$8 sm:$0xf] %vm534, %v598
        %602 = vst.msk [vmem:[%s600] ss:$8 sm:$0x70] %vm534, %v598
        %v603 = vld [vmem:[#allocation2] sm:$0xff]
        %605 = vrot.lane.b32.xlu0 %v603, 94
        %v606 = vpop.permute.xlu0 %605
        %v607 = vrot.slane %v606, 1
        %vm608 = vcmask 769024
        %v609 = vsel %vm608, %v606, %v607
        %s611 = scalar_lea.vmem [#allocation3], 7
        %612 = vst.msk [vmem:[%s611] ss:$8 sm:$0xf] %vm534, %v609
        %613 = vst.msk [vmem:[%s611] ss:$8 sm:$0x70] %vm534, %v609
        %v614 = vld [vmem:[#allocation2] sm:$0xff]
        %616 = vrot.lane.b32.xlu0 %v614, 93
        %v617 = vpop.permute.xlu0 %616
        %v618 = vrot.slane %v617, 1
        %vm619 = vcmask 760832
        %v620 = vsel %vm619, %v617, %v618
        %s622 = scalar_lea.vmem [#allocation3], 56
        %623 = vst.msk [vmem:[%s622] ss:$8 sm:$0xf] %vm534, %v620
        %624 = vst.msk [vmem:[%s622] ss:$8 sm:$0x70] %vm534, %v620
        %v625 = vld [vmem:[#allocation2] sm:$0xff]
        %627 = vrot.lane.b32.xlu0 %v625, 92
        %v628 = vpop.permute.xlu0 %627
        %v629 = vrot.slane %v628, 1
        %vm630 = vcmask 752640
        %v631 = vsel %vm630, %v628, %v629
        %s633 = scalar_lea.vmem [#allocation3], 57
        %634 = vst.msk [vmem:[%s633] ss:$8 sm:$0xf] %vm534, %v631
        %635 = vst.msk [vmem:[%s633] ss:$8 sm:$0x70] %vm534, %v631
        %v636 = vld [vmem:[#allocation2] sm:$0xff]
        %638 = vrot.lane.b32.xlu0 %v636, 64
        %v639 = vpop.permute.xlu0 %638
        %v640 = vrot.slane %v639, 1
        %vm641 = vcmask 523264
        %v642 = vsel %vm641, %v639, %v640
        %s644 = scalar_lea.vmem [#allocation3], 58
        %645 = vst.msk [vmem:[%s644] ss:$8 sm:$0xf] %vm534, %v642
        %646 = vst.msk [vmem:[%s644] ss:$8 sm:$0x70] %vm534, %v642
        %v647 = vld [vmem:[#allocation2] sm:$0xff]
        %649 = vrot.lane.b32.xlu0 %v647, 63
        %v650 = vpop.permute.xlu0 %649
        %v651 = vrot.slane %v650, 1
        %vm652 = vcmask 515072
        %v653 = vsel %vm652, %v650, %v651
        %s655 = scalar_lea.vmem [#allocation3], 59
        %656 = vst.msk [vmem:[%s655] ss:$8 sm:$0xf] %vm534, %v653
        %657 = vst.msk [vmem:[%s655] ss:$8 sm:$0x70] %vm534, %v653
        %v658 = vld [vmem:[#allocation2] sm:$0xff]
        %660 = vrot.lane.b32.xlu0 %v658, 62
        %v661 = vpop.permute.xlu0 %660
        %v662 = vrot.slane %v661, 1
        %vm663 = vcmask 506880
        %v664 = vsel %vm663, %v661, %v662
        %s666 = scalar_lea.vmem [#allocation3], 60
        %667 = vst.msk [vmem:[%s666] ss:$8 sm:$0xf] %vm534, %v664
        %668 = vst.msk [vmem:[%s666] ss:$8 sm:$0x70] %vm534, %v664
        %v669 = vld [vmem:[#allocation2] sm:$0xff]
        %671 = vrot.lane.b32.xlu0 %v669, 61
        %v672 = vpop.permute.xlu0 %671
        %v673 = vrot.slane %v672, 1
        %vm674 = vcmask 498688
        %v675 = vsel %vm674, %v672, %v673
        %s677 = scalar_lea.vmem [#allocation3], 61
        %678 = vst.msk [vmem:[%s677] ss:$8 sm:$0xf] %vm534, %v675
        %679 = vst.msk [vmem:[%s677] ss:$8 sm:$0x70] %vm534, %v675
        %v680 = vld [vmem:[#allocation2] sm:$0xff]
        %682 = vrot.lane.b32.xlu0 %v680, 60
        %v683 = vpop.permute.xlu0 %682
        %v684 = vrot.slane %v683, 1
        %vm685 = vcmask 490496
        %v686 = vsel %vm685, %v683, %v684
        %s688 = scalar_lea.vmem [#allocation3], 62
        %689 = vst.msk [vmem:[%s688] ss:$8 sm:$0xf] %vm534, %v686
        %690 = vst.msk [vmem:[%s688] ss:$8 sm:$0x70] %vm534, %v686
        %v691 = vld [vmem:[#allocation2] sm:$0xff]
        %693 = vrot.lane.b32.xlu0 %v691, 32
        %v694 = vpop.permute.xlu0 %693
        %v695 = vrot.slane %v694, 1
        %vm696 = vcmask 261120
        %v697 = vsel %vm696, %v694, %v695
        %s699 = scalar_lea.vmem [#allocation3], 63
        %700 = vst.msk [vmem:[%s699] ss:$8 sm:$0xf] %vm534, %v697
        %701 = vst.msk [vmem:[%s699] ss:$8 sm:$0x70] %vm534, %v697
        %v702 = vld [vmem:[#allocation2] sm:$0xff]
        %704 = vrot.lane.b32.xlu0 %v702, 31
        %v705 = vpop.permute.xlu0 %704
        %v706 = vrot.slane %v705, 1
        %vm707 = vcmask 252928
        %v708 = vsel %vm707, %v705, %v706
        %s710 = scalar_lea.vmem [#allocation3], 112
        %711 = vst.msk [vmem:[%s710] ss:$8 sm:$0xf] %vm534, %v708
        %712 = vst.msk [vmem:[%s710] ss:$8 sm:$0x70] %vm534, %v708
        %v713 = vld [vmem:[#allocation2] sm:$0xff]
        %715 = vrot.lane.b32.xlu0 %v713, 30
        %v716 = vpop.permute.xlu0 %715
        %v717 = vrot.slane %v716, 1
        %vm718 = vcmask 244736
        %v719 = vsel %vm718, %v716, %v717
        %s721 = scalar_lea.vmem [#allocation3], 113
        %722 = vst.msk [vmem:[%s721] ss:$8 sm:$0xf] %vm534, %v719
        %723 = vst.msk [vmem:[%s721] ss:$8 sm:$0x70] %vm534, %v719
        %v724 = vld [vmem:[#allocation2] sm:$0xff]
        %726 = vrot.lane.b32.xlu0 %v724, 29
        %v727 = vpop.permute.xlu0 %726
        %v728 = vrot.slane %v727, 1
        %vm729 = vcmask 236544
        %v730 = vsel %vm729, %v727, %v728
        %s732 = scalar_lea.vmem [#allocation3], 114
        %733 = vst.msk [vmem:[%s732] ss:$8 sm:$0xf] %vm534, %v730
        %734 = vst.msk [vmem:[%s732] ss:$8 sm:$0x70] %vm534, %v730
        %v735 = vld [vmem:[#allocation2] sm:$0xff]
        %737 = vrot.lane.b32.xlu0 %v735, 28
        %v738 = vpop.permute.xlu0 %737
        %v739 = vrot.slane %v738, 1
        %vm740 = vcmask 228352
        %v741 = vsel %vm740, %v738, %v739
        %s743 = scalar_lea.vmem [#allocation3], 115
        %744 = vst.msk [vmem:[%s743] ss:$8 sm:$0xf] %vm534, %v741
        %745 = vst.msk [vmem:[%s743] ss:$8 sm:$0x70] %vm534, %v741
        %v746 = vld [vmem:[#allocation2 + $0x1] sm:$0xff]
        %s747 = scalar_lea.vmem [#allocation3], 116
        %748 = vst.msk [vmem:[%s747] ss:$8 sm:$0xf] %vm534, %v746
        %749 = vst.msk [vmem:[%s747] ss:$8 sm:$0x70] %vm534, %v746
        %v750 = vld [vmem:[#allocation2 + $0x1] sm:$0xff]
        %752 = vrot.lane.b32.xlu0 %v750, 127
        %v753 = vpop.permute.xlu0 %752
        %v754 = vrot.slane %v753, 1
        %v755 = vsel %vm542, %v753, %v754
        %s757 = scalar_lea.vmem [#allocation3], 117
        %758 = vst.msk [vmem:[%s757] ss:$8 sm:$0xf] %vm534, %v755
        %759 = vst.msk [vmem:[%s757] ss:$8 sm:$0x70] %vm534, %v755
        %v760 = vld [vmem:[#allocation2 + $0x1] sm:$0xff]
        %762 = vrot.lane.b32.xlu0 %v760, 126
        %v763 = vpop.permute.xlu0 %762
        %v764 = vrot.slane %v763, 1
        %v765 = vsel %vm553, %v763, %v764
        %s767 = scalar_lea.vmem [#allocation3], 118
        %768 = vst.msk [vmem:[%s767] ss:$8 sm:$0xf] %vm534, %v765
        %769 = vst.msk [vmem:[%s767] ss:$8 sm:$0x70] %vm534, %v765
        %v770 = vld [vmem:[#allocation2 + $0x1] sm:$0xff]
        %772 = vrot.lane.b32.xlu0 %v770, 125
        %v773 = vpop.permute.xlu0 %772
        %v774 = vrot.slane %v773, 1
        %v775 = vsel %vm564, %v773, %v774
        %s777 = scalar_lea.vmem [#allocation3], 119
        %778 = vst.msk [vmem:[%s777] ss:$8 sm:$0xf] %vm534, %v775
        %779 = vst.msk [vmem:[%s777] ss:$8 sm:$0x70] %vm534, %v775
        %v780 = vld [vmem:[#allocation2 + $0x1] sm:$0xff]
        %782 = vrot.lane.b32.xlu0 %v780, 124
        %v783 = vpop.permute.xlu0 %782
        %v784 = vrot.slane %v783, 1
        %v785 = vsel %vm575, %v783, %v784
        %s787 = scalar_lea.vmem [#allocation3], 168
        %788 = vst.msk [vmem:[%s787] ss:$8 sm:$0xf] %vm534, %v785
        %789 = vst.msk [vmem:[%s787] ss:$8 sm:$0x70] %vm534, %v785
        %v790 = vld [vmem:[%s1] sm:$0xf]
        %v791 = vld [vmem:[%s1 + $0x4] sm:$0xf]
        %v792 = vld [vmem:[#allocation3] sm:$0xff]
        %v793 = vld [vmem:[#allocation3 + $0x8] sm:$0xff]
        %v794 = vld [vmem:[#allocation3 + $0x10] sm:$0xff]
        %v795 = vld [vmem:[#allocation3 + $0x18] sm:$0xff]
        %v796 = vld [vmem:[#allocation3 + $0x20] sm:$0xff]
        %v797 = vld [vmem:[#allocation3 + $0x28] sm:$0xff]
        %v798 = vld [vmem:[#allocation3 + $0x30] sm:$0xff]
        %v799 = vld [vmem:[#allocation3 + $0x38] sm:$0xff]
        %v800 = vld [vmem:[#allocation3 + $0x40] sm:$0xff]
        %v801 = vld [vmem:[#allocation3 + $0x48] sm:$0xff]
        %v802 = vld [vmem:[#allocation3 + $0x50] sm:$0xff]
        %v803 = vld [vmem:[#allocation3 + $0x58] sm:$0xff]
        %v804 = vld [vmem:[#allocation3 + $0x60] sm:$0xff]
        %v805 = vld [vmem:[#allocation3 + $0x68] sm:$0xff]
        %v806 = vld [vmem:[#allocation3 + $0x70] sm:$0xff]
        %v807 = vld [vmem:[#allocation3 + $0x78] sm:$0xff]
        %v808 = vld [vmem:[#allocation3 + $0x80] sm:$0xff]
        %v809 = vld [vmem:[#allocation3 + $0x88] sm:$0xff]
        %v810 = vld [vmem:[#allocation3 + $0x90] sm:$0xff]
        %v811 = vld [vmem:[#allocation3 + $0x98] sm:$0xff]
        %v812 = vld [vmem:[#allocation3 + $0xa0] sm:$0xff]
        %v813 = vld [vmem:[#allocation3 + $0xa8] sm:$0x1]
        %v814 = vld [vmem:[#allocation3 + $0xb0] sm:$0x1]
        %v815 = vld [vmem:[#allocation3 + $0xb8] sm:$0x1]
        %v816 = vld [vmem:[#allocation3 + $0xc0] sm:$0x1]
        %v817 = vld [vmem:[#allocation3 + $0xc8] sm:$0x1]
        %v818 = vld [vmem:[#allocation3 + $0xd0] sm:$0x1]
        %v819 = vld [vmem:[#allocation3 + $0xd8] sm:$0x1]
        %v820 = vpack.c.bf16 %v799, %v792
        %v821 = vpack.c.bf16 %v800, %v793
        %v822 = vpack.c.bf16 %v801, %v794
        %v823 = vpack.c.bf16 %v802, %v795
        %v824 = vpack.c.bf16 %v803, %v796
        %v825 = vpack.c.bf16 %v804, %v797
        %v826 = vpack.c.bf16 %v805, %v798
        %v827 = vpack.c.bf16 %v813, %v806
        %v828 = vpack.c.bf16 %v814, %v807
        %v829 = vpack.c.bf16 %v815, %v808
        %v830 = vpack.c.bf16 %v816, %v809
        %v831 = vpack.c.bf16 %v817, %v810
        %v832 = vpack.c.bf16 %v818, %v811
        %v833 = vpack.c.bf16 %v819, %v812
        %v834 = vld [vmem:[%s2] sm:$0xff]
        %v835 = vld [vmem:[%s2 + $0x8] sm:$0xff]
        %837 = vset.pattern.permute.xlu0 0
        %838 = vperm.xlu0 %837, %v834
        %v839 = vpop.permute.xlu0 %838
        %842 = vset.pattern.permute.xlu0 0
        %843 = vperm.xlu0 %842, %v835
        %v844 = vpop.permute.xlu0 %843
        %v848 = vunpack.c.l.b16 %v790
        %v849 = vunpack.c.l.b16 %v791
        %v850 = vpack.c.b16 %v849, %v848
        %vm851 = vcmask 203776
        %v853 = vsel %vm851, %v850, 0
        %vm855 = vcmask 1043456
        %vm856 = vcmask 1044480
        %v857 = vsel %vm855, 4294967295, 65535
        %v858 = vsel %vm856, %v857, 0
        %v860 = vand.u32 %v827, %v858
        %v863 = vand.u32 %v828, %v858
        %v866 = vand.u32 %v829, %v858
        %v869 = vand.u32 %v830, %v858
        %v872 = vand.u32 %v831, %v858
        %v875 = vand.u32 %v832, %v858
        %v878 = vand.u32 %v833, %v858
        %880 = vmatprep.subr.bf16.mxu0 %v821
        %881 = vmatpush1.bf16.msra.mxu0 %v820
        %882 = vmatprep.subr.bf16.mxu0 %v863
        %883 = vmatpush1.bf16.msra.mxu0 %v860
        %884 = vmatprep.subr.bf16.mxu0 0
        %885 = vmatpush1.bf16.msra.mxu0 0
        %886 = vmatprep.subr.bf16.mxu0 0
        %887 = vmatpush1.bf16.msra.mxu0 0
        %888 = vmatprep.subr.bf16.mxu0 0
        %889 = vmatpush1.bf16.msra.mxu0 0
        %890 = vmatprep.subr.bf16.mxu0 0
        %891 = vmatpush1.bf16.msra.mxu0 0
        %892 = vmatprep.subr.bf16.mxu0 0
        %893 = vmatpush1.bf16.msra.mxu0 0
        %894 = vmatprep.subr.bf16.mxu0 0
        %895 = vmatpush1.bf16.msra.mxu0 0
        %896 = vmatprep.subr.bf16.mxu0 0
        %897 = vmatpush1.bf16.msra.mxu0 0
        %898 = vmatprep.subr.bf16.mxu0 0
        %899 = vmatpush1.bf16.msra.mxu0 0
        %900 = vmatprep.subr.bf16.mxu0 0
        %901 = vmatpush1.bf16.msra.mxu0 0
        %902 = vmatprep.subr.bf16.mxu0 0
        %903 = vmatpush1.bf16.msra.mxu0 0
        %904 = vmatprep.subr.bf16.mxu0 0
        %905 = vmatpush1.bf16.msra.mxu0 0
        %906 = vmatprep.subr.bf16.mxu0 0
        %907 = vmatpush1.bf16.msra.mxu0 0
        %908 = vmatprep.subr.bf16.mxu0 0
        %909 = vmatpush1.bf16.msra.mxu0 0
        %910 = vmatprep.subr.bf16.mxu0 0
        %911 = vmatpush1.bf16.msra.mxu0 0
        %912 = vmatprep.mubr.bf16.mxu0 0
        %913 = vmatmul.mubr.bf16.gmra.mrb[0].mxu0 %v853
        %v914 = vpop.f32.mrb[0].mxu0
        %v915 = vadd.f32 %v839, %v914
        %v916 = vpop.f32.mrb[0].mxu0
        %v917 = vadd.f32 %v839, %v916
        %v918 = vpop.f32.mrb[0].mxu0
        %v919 = vadd.f32 %v844, %v918
        %v920 = vpop.f32.mrb[0].mxu0
        %v921 = vadd.f32 %v844, %v920
        %922 = vdwg.mxu0
        %923 = vmatprep.subr.bf16.mxu0 %v823
        %924 = vmatpush1.bf16.msra.mxu0 %v822
        %925 = vmatprep.subr.bf16.mxu0 %v869
        %926 = vmatpush1.bf16.msra.mxu0 %v866
        %927 = vmatprep.subr.bf16.mxu0 0
        %928 = vmatpush1.bf16.msra.mxu0 0
        %929 = vmatprep.subr.bf16.mxu0 0
        %930 = vmatpush1.bf16.msra.mxu0 0
        %931 = vmatprep.subr.bf16.mxu0 0
        %932 = vmatpush1.bf16.msra.mxu0 0
        %933 = vmatprep.subr.bf16.mxu0 0
        %934 = vmatpush1.bf16.msra.mxu0 0
        %935 = vmatprep.subr.bf16.mxu0 0
        %936 = vmatpush1.bf16.msra.mxu0 0
        %937 = vmatprep.subr.bf16.mxu0 0
        %938 = vmatpush1.bf16.msra.mxu0 0
        %939 = vmatprep.subr.bf16.mxu0 0
        %940 = vmatpush1.bf16.msra.mxu0 0
        %941 = vmatprep.subr.bf16.mxu0 0
        %942 = vmatpush1.bf16.msra.mxu0 0
        %943 = vmatprep.subr.bf16.mxu0 0
        %944 = vmatpush1.bf16.msra.mxu0 0
        %945 = vmatprep.subr.bf16.mxu0 0
        %946 = vmatpush1.bf16.msra.mxu0 0
        %947 = vmatprep.subr.bf16.mxu0 0
        %948 = vmatpush1.bf16.msra.mxu0 0
        %949 = vmatprep.subr.bf16.mxu0 0
        %950 = vmatpush1.bf16.msra.mxu0 0
        %951 = vmatprep.subr.bf16.mxu0 0
        %952 = vmatpush1.bf16.msra.mxu0 0
        %953 = vmatprep.subr.bf16.mxu0 0
        %954 = vmatpush1.bf16.msra.mxu0 0
        %955 = vmatprep.mubr.bf16.mxu0 0
        %956 = vmatmul.mubr.bf16.gmra.mrb[0].mxu0 %v853
        %v957 = vpop.f32.mrb[0].mxu0
        %v958 = vadd.f32 %v839, %v957
        %v959 = vpop.f32.mrb[0].mxu0
        %v960 = vadd.f32 %v839, %v959
        %v961 = vpop.f32.mrb[0].mxu0
        %v962 = vadd.f32 %v844, %v961
        %v963 = vpop.f32.mrb[0].mxu0
        %v964 = vadd.f32 %v844, %v963
        %965 = vdwg.mxu0
        %966 = vmatprep.subr.bf16.mxu0 %v825
        %967 = vmatpush1.bf16.msra.mxu0 %v824
        %968 = vmatprep.subr.bf16.mxu0 %v875
        %969 = vmatpush1.bf16.msra.mxu0 %v872
        %970 = vmatprep.subr.bf16.mxu0 0
        %971 = vmatpush1.bf16.msra.mxu0 0
        %972 = vmatprep.subr.bf16.mxu0 0
        %973 = vmatpush1.bf16.msra.mxu0 0
        %974 = vmatprep.subr.bf16.mxu0 0
        %975 = vmatpush1.bf16.msra.mxu0 0
        %976 = vmatprep.subr.bf16.mxu0 0
        %977 = vmatpush1.bf16.msra.mxu0 0
        %978 = vmatprep.subr.bf16.mxu0 0
        %979 = vmatpush1.bf16.msra.mxu0 0
        %980 = vmatprep.subr.bf16.mxu0 0
        %981 = vmatpush1.bf16.msra.mxu0 0
        %982 = vmatprep.subr.bf16.mxu0 0
        %983 = vmatpush1.bf16.msra.mxu0 0
        %984 = vmatprep.subr.bf16.mxu0 0
        %985 = vmatpush1.bf16.msra.mxu0 0
        %986 = vmatprep.subr.bf16.mxu0 0
        %987 = vmatpush1.bf16.msra.mxu0 0
        %988 = vmatprep.subr.bf16.mxu0 0
        %989 = vmatpush1.bf16.msra.mxu0 0
        %990 = vmatprep.subr.bf16.mxu0 0
        %991 = vmatpush1.bf16.msra.mxu0 0
        %992 = vmatprep.subr.bf16.mxu0 0
        %993 = vmatpush1.bf16.msra.mxu0 0
        %994 = vmatprep.subr.bf16.mxu0 0
        %995 = vmatpush1.bf16.msra.mxu0 0
        %996 = vmatprep.subr.bf16.mxu0 0
        %997 = vmatpush1.bf16.msra.mxu0 0
        %998 = vmatprep.mubr.bf16.mxu0 0
        %999 = vmatmul.mubr.bf16.gmra.mrb[0].mxu0 %v853
        %v1000 = vpop.f32.mrb[0].mxu0
        %v1001 = vadd.f32 %v839, %v1000
        %v1002 = vpop.f32.mrb[0].mxu0
        %v1003 = vadd.f32 %v839, %v1002
        %v1004 = vpop.f32.mrb[0].mxu0
        %v1005 = vadd.f32 %v844, %v1004
        %v1006 = vpop.f32.mrb[0].mxu0
        %v1007 = vadd.f32 %v844, %v1006
        %1008 = vdwg.mxu0
        %1009 = vmatprep.subr.bf16.mxu0 0
        %1010 = vmatpush1.bf16.msra.mxu0 %v826
        %1011 = vmatprep.subr.bf16.mxu0 0
        %1012 = vmatpush1.bf16.msra.mxu0 %v878
        %1013 = vmatprep.subr.bf16.mxu0 0
        %1014 = vmatpush1.bf16.msra.mxu0 0
        %1015 = vmatprep.subr.bf16.mxu0 0
        %1016 = vmatpush1.bf16.msra.mxu0 0
        %1017 = vmatprep.subr.bf16.mxu0 0
        %1018 = vmatpush1.bf16.msra.mxu0 0
        %1019 = vmatprep.subr.bf16.mxu0 0
        %1020 = vmatpush1.bf16.msra.mxu0 0
        %1021 = vmatprep.subr.bf16.mxu0 0
        %1022 = vmatpush1.bf16.msra.mxu0 0
        %1023 = vmatprep.subr.bf16.mxu0 0
        %1024 = vmatpush1.bf16.msra.mxu0 0
        %1025 = vmatprep.subr.bf16.mxu0 0
        %1026 = vmatpush1.bf16.msra.mxu0 0
        %1027 = vmatprep.subr.bf16.mxu0 0
        %1028 = vmatpush1.bf16.msra.mxu0 0
        %1029 = vmatprep.subr.bf16.mxu0 0
        %1030 = vmatpush1.bf16.msra.mxu0 0
        %1031 = vmatprep.subr.bf16.mxu0 0
        %1032 = vmatpush1.bf16.msra.mxu0 0
        %1033 = vmatprep.subr.bf16.mxu0 0
        %1034 = vmatpush1.bf16.msra.mxu0 0
        %1035 = vmatprep.subr.bf16.mxu0 0
        %1036 = vmatpush1.bf16.msra.mxu0 0
        %1037 = vmatprep.subr.bf16.mxu0 0
        %1038 = vmatpush1.bf16.msra.mxu0 0
        %1039 = vmatprep.subr.bf16.mxu0 0
        %1040 = vmatpush1.bf16.msra.mxu0 0
        %1041 = vmatprep.mubr.bf16.mxu0 0
        %1042 = vmatmul.mubr.bf16.gmra.mrb[0].mxu0 %v853
        %v1043 = vpop.f32.mrb[0].mxu0
        %v1044 = vadd.f32 %v839, %v1043
        %v1045 = vpop.f32.mrb[0].mxu0
        %v1046 = vpop.f32.mrb[0].mxu0
        %v1047 = vadd.f32 %v844, %v1046
        %v1048 = vpop.f32.mrb[0].mxu0
        %1049 = vdwg.mxu0
        %v1050 = vmax.f32 %v915, 0.0
        %v1051 = vmax.f32 %v917, 0.0
        %v1052 = vmax.f32 %v958, 0.0
        %v1053 = vmax.f32 %v960, 0.0
        %v1054 = vmax.f32 %v1001, 0.0
        %v1055 = vmax.f32 %v1003, 0.0
        %v1056 = vmax.f32 %v1044, 0.0
        %v1057 = vmax.f32 %v919, 0.0
        %v1058 = vmax.f32 %v921, 0.0
        %v1059 = vmax.f32 %v962, 0.0
        %v1060 = vmax.f32 %v964, 0.0
        %v1061 = vmax.f32 %v1005, 0.0
        %v1062 = vmax.f32 %v1007, 0.0
        %v1063 = vmax.f32 %v1047, 0.0
        %1078 = vrot.lane.b32.xlu0 %v1050, 96
        %v1079 = vpop.permute.xlu0 %1078
        %1080 = vrot.lane.b32.xlu0 %v1051, 96
        %v1081 = vpop.permute.xlu0 %1080
        %1082 = vrot.lane.b32.xlu0 %v1052, 96
        %v1083 = vpop.permute.xlu0 %1082
        %1084 = vrot.lane.b32.xlu0 %v1053, 96
        %v1085 = vpop.permute.xlu0 %1084
        %1086 = vrot.lane.b32.xlu0 %v1054, 96
        %v1087 = vpop.permute.xlu0 %1086
        %1088 = vrot.lane.b32.xlu0 %v1055, 96
        %v1089 = vpop.permute.xlu0 %1088
        %1090 = vrot.lane.b32.xlu0 %v1056, 96
        %v1091 = vpop.permute.xlu0 %1090
        %1092 = vrot.lane.b32.xlu0 %v1057, 96
        %v1093 = vpop.permute.xlu0 %1092
        %1094 = vrot.lane.b32.xlu0 %v1058, 96
        %v1095 = vpop.permute.xlu0 %1094
        %1096 = vrot.lane.b32.xlu0 %v1059, 96
        %v1097 = vpop.permute.xlu0 %1096
        %1098 = vrot.lane.b32.xlu0 %v1060, 96
        %v1099 = vpop.permute.xlu0 %1098
        %1100 = vrot.lane.b32.xlu0 %v1061, 96
        %v1101 = vpop.permute.xlu0 %1100
        %1102 = vrot.lane.b32.xlu0 %v1062, 96
        %v1103 = vpop.permute.xlu0 %1102
        %1104 = vrot.lane.b32.xlu0 %v1063, 96
        %v1105 = vpop.permute.xlu0 %1104
        %v1106 = vsel %vm586, %v1079, %v1081
        %v1107 = vsel %vm586, %v1081, %v1083
        %v1108 = vsel %vm586, %v1083, %v1085
        %v1109 = vsel %vm586, %v1085, %v1087
        %v1110 = vsel %vm586, %v1087, %v1089
        %v1111 = vsel %vm586, %v1089, %v1091
        %v1112 = vsel %vm586, %v1093, %v1095
        %v1113 = vsel %vm586, %v1095, %v1097
        %v1114 = vsel %vm586, %v1097, %v1099
        %v1115 = vsel %vm586, %v1099, %v1101
        %v1116 = vsel %vm586, %v1101, %v1103
        %v1117 = vsel %vm586, %v1103, %v1105
        %v1132 = vmax.f32 %v1050, %v1106
        %v1133 = vmax.f32 %v1051, %v1107
        %v1134 = vmax.f32 %v1052, %v1108
        %v1135 = vmax.f32 %v1053, %v1109
        %v1136 = vmax.f32 %v1054, %v1110
        %v1137 = vmax.f32 %v1055, %v1111
        %v1138 = vmax.f32 %v1056, %v1091
        %v1139 = vmax.f32 %v1057, %v1112
        %v1140 = vmax.f32 %v1058, %v1113
        %v1141 = vmax.f32 %v1059, %v1114
        %v1142 = vmax.f32 %v1060, %v1115
        %v1143 = vmax.f32 %v1061, %v1116
        %v1144 = vmax.f32 %v1062, %v1117
        %v1145 = vmax.f32 %v1063, %v1105
        %1160 = vrot.lane.b32.xlu0 %v1132, 127
        %v1161 = vpop.permute.xlu0 %1160
        %1162 = vrot.lane.b32.xlu0 %v1133, 127
        %v1163 = vpop.permute.xlu0 %1162
        %1164 = vrot.lane.b32.xlu0 %v1134, 127
        %v1165 = vpop.permute.xlu0 %1164
        %1166 = vrot.lane.b32.xlu0 %v1135, 127
        %v1167 = vpop.permute.xlu0 %1166
        %1168 = vrot.lane.b32.xlu0 %v1136, 127
        %v1169 = vpop.permute.xlu0 %1168
        %1170 = vrot.lane.b32.xlu0 %v1137, 127
        %v1171 = vpop.permute.xlu0 %1170
        %1172 = vrot.lane.b32.xlu0 %v1138, 127
        %v1173 = vpop.permute.xlu0 %1172
        %1174 = vrot.lane.b32.xlu0 %v1139, 127
        %v1175 = vpop.permute.xlu0 %1174
        %1176 = vrot.lane.b32.xlu0 %v1140, 127
        %v1177 = vpop.permute.xlu0 %1176
        %1178 = vrot.lane.b32.xlu0 %v1141, 127
        %v1179 = vpop.permute.xlu0 %1178
        %1180 = vrot.lane.b32.xlu0 %v1142, 127
        %v1181 = vpop.permute.xlu0 %1180
        %1182 = vrot.lane.b32.xlu0 %v1143, 127
        %v1183 = vpop.permute.xlu0 %1182
        %1184 = vrot.lane.b32.xlu0 %v1144, 127
        %v1185 = vpop.permute.xlu0 %1184
        %1186 = vrot.lane.b32.xlu0 %v1145, 127
        %v1187 = vpop.permute.xlu0 %1186
        %v1188 = vsel %vm542, %v1161, %v1163
        %v1189 = vsel %vm542, %v1163, %v1165
        %v1190 = vsel %vm542, %v1165, %v1167
        %v1191 = vsel %vm542, %v1167, %v1169
        %v1192 = vsel %vm542, %v1169, %v1171
        %v1193 = vsel %vm542, %v1171, %v1173
        %v1194 = vsel %vm542, %v1175, %v1177
        %v1195 = vsel %vm542, %v1177, %v1179
        %v1196 = vsel %vm542, %v1179, %v1181
        %v1197 = vsel %vm542, %v1181, %v1183
        %v1198 = vsel %vm542, %v1183, %v1185
        %v1199 = vsel %vm542, %v1185, %v1187
        %v1214 = vmax.f32 %v1132, %v1188
        %v1215 = vmax.f32 %v1133, %v1189
        %v1216 = vmax.f32 %v1134, %v1190
        %v1217 = vmax.f32 %v1135, %v1191
        %v1218 = vmax.f32 %v1136, %v1192
        %v1219 = vmax.f32 %v1137, %v1193
        %v1220 = vmax.f32 %v1138, %v1173
        %v1221 = vmax.f32 %v1139, %v1194
        %v1222 = vmax.f32 %v1140, %v1195
        %v1223 = vmax.f32 %v1141, %v1196
        %v1224 = vmax.f32 %v1142, %v1197
        %v1225 = vmax.f32 %v1143, %v1198
        %v1226 = vmax.f32 %v1144, %v1199
        %v1227 = vmax.f32 %v1145, %v1187
        %v1228 = vpack.c.bf16 %v1221, %v1214
        %v1229 = vpack.c.bf16 %v1222, %v1215
        %v1230 = vpack.c.bf16 %v1223, %v1216
        %v1231 = vpack.c.bf16 %v1224, %v1217
        %v1232 = vpack.c.bf16 %v1225, %v1218
        %v1233 = vpack.c.bf16 %v1226, %v1219
        %v1234 = vpack.c.bf16 %v1227, %v1220
        %v1235 = vld [vmem:[%s5] sm:$0xff]
        %v1236 = vld [vmem:[%s5 + $0x8] sm:$0xf]
        %v1237 = vld [vmem:[%s5 + $0xc] sm:$0xff]
        %v1238 = vld [vmem:[%s5 + $0x14] sm:$0xf]
        %v1239 = vld [vmem:[%s5 + $0x18] sm:$0xff]
        %v1240 = vld [vmem:[%s5 + $0x20] sm:$0xf]
        %v1241 = vld [vmem:[%s5 + $0x24] sm:$0xff]
        %v1242 = vld [vmem:[%s5 + $0x2c] sm:$0xf]
        %v1243 = vld [vmem:[%s5 + $0x30] sm:$0xff]
        %v1244 = vld [vmem:[%s5 + $0x38] sm:$0xf]
        %v1245 = vld [vmem:[%s5 + $0x3c] sm:$0xff]
        %v1246 = vld [vmem:[%s5 + $0x44] sm:$0xf]
        %v1247 = vld [vmem:[%s5 + $0x48] sm:$0xff]
        %v1248 = vld [vmem:[%s5 + $0x50] sm:$0xf]
        %v1249 = vld [vmem:[%s5 + $0x54] sm:$0xff]
        %v1250 = vld [vmem:[%s5 + $0x5c] sm:$0xf]
        %v1251 = vld [vmem:[%s5 + $0x60] sm:$0xff]
        %v1252 = vld [vmem:[%s5 + $0x68] sm:$0xf]
        %v1253 = vld [vmem:[%s5 + $0x6c] sm:$0xff]
        %v1254 = vld [vmem:[%s5 + $0x74] sm:$0xf]
        %v1255 = vld [vmem:[%s5 + $0x78] sm:$0xff]
        %v1256 = vld [vmem:[%s5 + $0x80] sm:$0xf]
        %v1257 = vld [vmem:[%s5 + $0x84] sm:$0xff]
        %v1258 = vld [vmem:[%s5 + $0x8c] sm:$0xf]
        %v1259 = vld [vmem:[%s5 + $0x90] sm:$0xff]
        %v1260 = vld [vmem:[%s5 + $0x98] sm:$0xf]
        %v1261 = vld [vmem:[%s5 + $0x9c] sm:$0xff]
        %v1262 = vld [vmem:[%s5 + $0xa4] sm:$0xf]
        %v1263 = vld [vmem:[%s5 + $0xa8] sm:$0xff]
        %v1264 = vld [vmem:[%s5 + $0xb0] sm:$0xf]
        %v1265 = vld [vmem:[%s5 + $0xb4] sm:$0xff]
        %v1266 = vld [vmem:[%s5 + $0xbc] sm:$0xf]
        %v1267 = vld [vmem:[%s5 + $0xc0] sm:$0xff]
        %v1268 = vld [vmem:[%s5 + $0xc8] sm:$0xf]
        %v1269 = vld [vmem:[%s5 + $0xcc] sm:$0xff]
        %v1270 = vld [vmem:[%s5 + $0xd4] sm:$0xf]
        %v1271 = vld [vmem:[%s5 + $0xd8] sm:$0xff]
        %v1272 = vld [vmem:[%s5 + $0xe0] sm:$0xf]
        %v1273 = vld [vmem:[%s5 + $0xe4] sm:$0xff]
        %v1274 = vld [vmem:[%s5 + $0xec] sm:$0xf]
        %v1275 = vld [vmem:[%s5 + $0xf0] sm:$0xff]
        %v1276 = vld [vmem:[%s5 + $0xf8] sm:$0xf]
        %v1277 = vld [vmem:[%s5 + $0xfc] sm:$0xff]
        %v1278 = vld [vmem:[%s5 + $0x104] sm:$0xf]
        %v1279 = vld [vmem:[%s5 + $0x108] sm:$0xff]
        %v1280 = vld [vmem:[%s5 + $0x110] sm:$0xf]
        %v1281 = vld [vmem:[%s5 + $0x114] sm:$0xff]
        %v1282 = vld [vmem:[%s5 + $0x11c] sm:$0xf]
        %v1283 = vld [vmem:[%s5 + $0x120] sm:$0xff]
        %v1284 = vld [vmem:[%s5 + $0x128] sm:$0xf]
        %v1285 = vld [vmem:[%s5 + $0x12c] sm:$0xff]
        %v1286 = vld [vmem:[%s5 + $0x134] sm:$0xf]
        %v1287 = vld [vmem:[%s5 + $0x138] sm:$0xff]
        %v1288 = vld [vmem:[%s5 + $0x140] sm:$0xf]
        %v1289 = vld [vmem:[%s5 + $0x144] sm:$0xff]
        %v1290 = vld [vmem:[%s5 + $0x14c] sm:$0xf]
        %v1291 = vld [vmem:[%s5 + $0x150] sm:$0xff]
        %v1292 = vld [vmem:[%s5 + $0x158] sm:$0xf]
        %v1293 = vld [vmem:[%s5 + $0x15c] sm:$0xff]
        %v1294 = vld [vmem:[%s5 + $0x164] sm:$0xf]
        %v1295 = vld [vmem:[%s5 + $0x168] sm:$0xff]
        %v1296 = vld [vmem:[%s5 + $0x170] sm:$0xf]
        %v1297 = vld [vmem:[%s5 + $0x174] sm:$0xff]
        %v1298 = vld [vmem:[%s5 + $0x17c] sm:$0xf]
        %v1299 = vld [vmem:[%s5 + $0x180] sm:$0xff]
        %v1300 = vld [vmem:[%s5 + $0x188] sm:$0xf]
        %v1301 = vld [vmem:[%s5 + $0x18c] sm:$0xff]
        %v1302 = vld [vmem:[%s5 + $0x194] sm:$0xf]
        %v1303 = vld [vmem:[%s5 + $0x198] sm:$0xff]
        %v1304 = vld [vmem:[%s5 + $0x1a0] sm:$0xf]
        %v1305 = vld [vmem:[%s5 + $0x1a4] sm:$0xff]
        %v1306 = vld [vmem:[%s5 + $0x1ac] sm:$0xf]
        %v1307 = vld [vmem:[%s5 + $0x1b0] sm:$0xff]
        %v1308 = vld [vmem:[%s5 + $0x1b8] sm:$0xf]
        %v1309 = vld [vmem:[%s5 + $0x1bc] sm:$0xff]
        %v1310 = vld [vmem:[%s5 + $0x1c4] sm:$0xf]
        %v1311 = vld [vmem:[%s5 + $0x1c8] sm:$0xff]
        %v1312 = vld [vmem:[%s5 + $0x1d0] sm:$0xf]
        %v1313 = vld [vmem:[%s5 + $0x1d4] sm:$0xff]
        %v1314 = vld [vmem:[%s5 + $0x1dc] sm:$0xf]
        %v1315 = vld [vmem:[%s5 + $0x1e0] sm:$0xff]
        %v1316 = vld [vmem:[%s5 + $0x1e8] sm:$0xf]
        %v1317 = vld [vmem:[%s5 + $0x1ec] sm:$0xff]
        %v1318 = vld [vmem:[%s5 + $0x1f4] sm:$0xf]
        %v1319 = vld [vmem:[%s5 + $0x1f8] sm:$0xff]
        %v1320 = vld [vmem:[%s5 + $0x200] sm:$0xf]
        %v1321 = vld [vmem:[%s5 + $0x204] sm:$0xff]
        %v1322 = vld [vmem:[%s5 + $0x20c] sm:$0xf]
        %v1323 = vld [vmem:[%s5 + $0x210] sm:$0xff]
        %v1324 = vld [vmem:[%s5 + $0x218] sm:$0xf]
        %v1325 = vld [vmem:[%s5 + $0x21c] sm:$0xff]
        %v1326 = vld [vmem:[%s5 + $0x224] sm:$0xf]
        %v1327 = vld [vmem:[%s5 + $0x228] sm:$0xff]
        %v1328 = vld [vmem:[%s5 + $0x230] sm:$0xf]
        %v1329 = vld [vmem:[%s5 + $0x234] sm:$0xff]
        %v1330 = vld [vmem:[%s5 + $0x23c] sm:$0xf]
        %v1331 = vld [vmem:[%s5 + $0x240] sm:$0xff]
        %v1332 = vld [vmem:[%s5 + $0x248] sm:$0xf]
        %v1333 = vld [vmem:[%s5 + $0x24c] sm:$0xff]
        %v1334 = vld [vmem:[%s5 + $0x254] sm:$0xf]
        %v1335 = vld [vmem:[%s5 + $0x258] sm:$0xff]
        %v1336 = vld [vmem:[%s5 + $0x260] sm:$0xf]
        %v1337 = vld [vmem:[%s5 + $0x264] sm:$0xff]
        %v1338 = vld [vmem:[%s5 + $0x26c] sm:$0xf]
        %v1339 = vld [vmem:[%s5 + $0x270] sm:$0xff]
        %v1340 = vld [vmem:[%s5 + $0x278] sm:$0xf]
        %v1341 = vld [vmem:[%s5 + $0x27c] sm:$0xff]
        %v1342 = vld [vmem:[%s5 + $0x284] sm:$0xf]
        %v1343 = vld [vmem:[%s5 + $0x288] sm:$0xff]
        %v1344 = vld [vmem:[%s5 + $0x290] sm:$0xf]
        %v1345 = vld [vmem:[%s5 + $0x294] sm:$0xff]
        %v1346 = vld [vmem:[%s5 + $0x29c] sm:$0xf]
        %v1347 = vld [vmem:[%s5 + $0x2a0] sm:$0xff]
        %v1348 = vld [vmem:[%s5 + $0x2a8] sm:$0xf]
        %v1349 = vld [vmem:[%s5 + $0x2ac] sm:$0xff]
        %v1350 = vld [vmem:[%s5 + $0x2b4] sm:$0xf]
        %v1351 = vld [vmem:[%s5 + $0x2b8] sm:$0xff]
        %v1352 = vld [vmem:[%s5 + $0x2c0] sm:$0xf]
        %v1353 = vld [vmem:[%s5 + $0x2c4] sm:$0xff]
        %v1354 = vld [vmem:[%s5 + $0x2cc] sm:$0xf]
        %v1355 = vld [vmem:[%s5 + $0x2d0] sm:$0xff]
        %v1356 = vld [vmem:[%s5 + $0x2d8] sm:$0xf]
        %v1357 = vld [vmem:[%s5 + $0x2dc] sm:$0xff]
        %v1358 = vld [vmem:[%s5 + $0x2e4] sm:$0xf]
        %v1359 = vld [vmem:[%s5 + $0x2e8] sm:$0xff]
        %v1360 = vld [vmem:[%s5 + $0x2f0] sm:$0xf]
        %v1361 = vld [vmem:[%s5 + $0x2f4] sm:$0xff]
        %v1362 = vld [vmem:[%s5 + $0x2fc] sm:$0xf]
        %v1363 = vld [vmem:[%s5 + $0x300] sm:$0xff]
        %v1364 = vld [vmem:[%s5 + $0x308] sm:$0xf]
        %v1365 = vld [vmem:[%s5 + $0x30c] sm:$0xff]
        %v1366 = vld [vmem:[%s5 + $0x314] sm:$0xf]
        %v1367 = vld [vmem:[%s5 + $0x318] sm:$0xff]
        %v1368 = vld [vmem:[%s5 + $0x320] sm:$0xf]
        %v1369 = vld [vmem:[%s5 + $0x324] sm:$0xff]
        %v1370 = vld [vmem:[%s5 + $0x32c] sm:$0xf]
        %v1371 = vld [vmem:[%s5 + $0x330] sm:$0xff]
        %v1372 = vld [vmem:[%s5 + $0x338] sm:$0xf]
        %v1373 = vld [vmem:[%s5 + $0x33c] sm:$0xff]
        %v1374 = vld [vmem:[%s5 + $0x344] sm:$0xf]
        %v1375 = vld [vmem:[%s5 + $0x348] sm:$0xff]
        %v1376 = vld [vmem:[%s5 + $0x350] sm:$0xf]
        %v1377 = vld [vmem:[%s5 + $0x354] sm:$0xff]
        %v1378 = vld [vmem:[%s5 + $0x35c] sm:$0xf]
        %v1379 = vld [vmem:[%s5 + $0x360] sm:$0xff]
        %v1380 = vld [vmem:[%s5 + $0x368] sm:$0xf]
        %v1381 = vld [vmem:[%s5 + $0x36c] sm:$0xff]
        %v1382 = vld [vmem:[%s5 + $0x374] sm:$0xf]
        %v1383 = vld [vmem:[%s5 + $0x378] sm:$0xff]
        %v1384 = vld [vmem:[%s5 + $0x380] sm:$0xf]
        %v1385 = vld [vmem:[%s5 + $0x384] sm:$0xff]
        %v1386 = vld [vmem:[%s5 + $0x38c] sm:$0xf]
        %v1387 = vld [vmem:[%s5 + $0x390] sm:$0xff]
        %v1388 = vld [vmem:[%s5 + $0x398] sm:$0xf]
        %v1389 = vld [vmem:[%s5 + $0x39c] sm:$0xff]
        %v1390 = vld [vmem:[%s5 + $0x3a4] sm:$0xf]
        %v1391 = vld [vmem:[%s5 + $0x3a8] sm:$0xff]
        %v1392 = vld [vmem:[%s5 + $0x3b0] sm:$0xf]
        %v1393 = vld [vmem:[%s5 + $0x3b4] sm:$0xff]
        %v1394 = vld [vmem:[%s5 + $0x3bc] sm:$0xf]
        %v1395 = vld [vmem:[%s5 + $0x3c0] sm:$0xff]
        %v1396 = vld [vmem:[%s5 + $0x3c8] sm:$0xf]
        %v1397 = vld [vmem:[%s5 + $0x3cc] sm:$0xff]
        %v1398 = vld [vmem:[%s5 + $0x3d4] sm:$0xf]
        %v1399 = vld [vmem:[%s5 + $0x3d8] sm:$0xff]
        %v1400 = vld [vmem:[%s5 + $0x3e0] sm:$0xf]
        %v1401 = vld [vmem:[%s5 + $0x3e4] sm:$0xff]
        %v1402 = vld [vmem:[%s5 + $0x3ec] sm:$0xf]
        %v1403 = vld [vmem:[%s5 + $0x3f0] sm:$0xff]
        %v1404 = vld [vmem:[%s5 + $0x3f8] sm:$0xf]
        %v1405 = vld [vmem:[%s5 + $0x3fc] sm:$0xff]
        %v1406 = vld [vmem:[%s5 + $0x404] sm:$0xf]
        %v1407 = vld [vmem:[%s5 + $0x408] sm:$0xff]
        %v1408 = vld [vmem:[%s5 + $0x410] sm:$0xf]
        %v1409 = vld [vmem:[%s5 + $0x414] sm:$0xff]
        %v1410 = vld [vmem:[%s5 + $0x41c] sm:$0xf]
        %v1411 = vld [vmem:[%s5 + $0x420] sm:$0xff]
        %v1412 = vld [vmem:[%s5 + $0x428] sm:$0xf]
        %v1413 = vld [vmem:[%s5 + $0x42c] sm:$0xff]
        %v1414 = vld [vmem:[%s5 + $0x434] sm:$0xf]
        %v1415 = vld [vmem:[%s5 + $0x438] sm:$0xff]
        %v1416 = vld [vmem:[%s5 + $0x440] sm:$0xf]
        %v1417 = vld [vmem:[%s5 + $0x444] sm:$0xff]
        %v1418 = vld [vmem:[%s5 + $0x44c] sm:$0xf]
        %v1419 = vld [vmem:[%s5 + $0x450] sm:$0xff]
        %v1420 = vld [vmem:[%s5 + $0x458] sm:$0xf]
        %v1421 = vld [vmem:[%s5 + $0x45c] sm:$0xff]
        %v1422 = vld [vmem:[%s5 + $0x464] sm:$0xf]
        %v1423 = vld [vmem:[%s5 + $0x468] sm:$0xff]
        %v1424 = vld [vmem:[%s5 + $0x470] sm:$0xf]
        %v1425 = vld [vmem:[%s5 + $0x474] sm:$0xff]
        %v1426 = vld [vmem:[%s5 + $0x47c] sm:$0xf]
        %v1427 = vld [vmem:[%s5 + $0x480] sm:$0xff]
        %v1428 = vld [vmem:[%s5 + $0x488] sm:$0xf]
        %v1429 = vld [vmem:[%s5 + $0x48c] sm:$0xff]
        %v1430 = vld [vmem:[%s5 + $0x494] sm:$0xf]
        %v1431 = vld [vmem:[%s5 + $0x498] sm:$0xff]
        %v1432 = vld [vmem:[%s5 + $0x4a0] sm:$0xf]
        %v1433 = vld [vmem:[%s5 + $0x4a4] sm:$0xff]
        %v1434 = vld [vmem:[%s5 + $0x4ac] sm:$0xf]
        %v1435 = vld [vmem:[%s5 + $0x4b0] sm:$0xff]
        %v1436 = vld [vmem:[%s5 + $0x4b8] sm:$0xf]
        %v1437 = vld [vmem:[%s5 + $0x4bc] sm:$0xff]
        %v1438 = vld [vmem:[%s5 + $0x4c4] sm:$0xf]
        %v1439 = vld [vmem:[%s5 + $0x4c8] sm:$0xff]
        %v1440 = vld [vmem:[%s5 + $0x4d0] sm:$0xf]
        %v1441 = vld [vmem:[%s5 + $0x4d4] sm:$0xff]
        %v1442 = vld [vmem:[%s5 + $0x4dc] sm:$0xf]
        %v1443 = vld [vmem:[%s5 + $0x4e0] sm:$0xff]
        %v1444 = vld [vmem:[%s5 + $0x4e8] sm:$0xf]
        %v1445 = vld [vmem:[%s5 + $0x4ec] sm:$0xff]
        %v1446 = vld [vmem:[%s5 + $0x4f4] sm:$0xf]
        %v1447 = vld [vmem:[%s5 + $0x4f8] sm:$0xff]
        %v1448 = vld [vmem:[%s5 + $0x500] sm:$0xf]
        %v1449 = vld [vmem:[%s5 + $0x504] sm:$0xff]
        %v1450 = vld [vmem:[%s5 + $0x50c] sm:$0xf]
        %v1667 = vunpack.c.l.b16 %v1235
        %v1668 = vunpack.c.h.b16 %v1235
        %v1669 = vunpack.c.l.b16 %v1236
        %v1670 = vunpack.c.l.b16 %v1237
        %v1671 = vunpack.c.h.b16 %v1237
        %v1672 = vunpack.c.l.b16 %v1238
        %v1673 = vunpack.c.l.b16 %v1239
        %v1674 = vunpack.c.h.b16 %v1239
        %v1675 = vunpack.c.l.b16 %v1240
        %v1676 = vunpack.c.l.b16 %v1241
        %v1677 = vunpack.c.h.b16 %v1241
        %v1678 = vunpack.c.l.b16 %v1242
        %v1679 = vunpack.c.l.b16 %v1243
        %v1680 = vunpack.c.h.b16 %v1243
        %v1681 = vunpack.c.l.b16 %v1244
        %v1682 = vunpack.c.l.b16 %v1245
        %v1683 = vunpack.c.h.b16 %v1245
        %v1684 = vunpack.c.l.b16 %v1246
        %v1685 = vunpack.c.l.b16 %v1247
        %v1686 = vunpack.c.h.b16 %v1247
        %v1687 = vunpack.c.l.b16 %v1248
        %v1688 = vunpack.c.l.b16 %v1249
        %v1689 = vunpack.c.h.b16 %v1249
        %v1690 = vunpack.c.l.b16 %v1250
        %v1691 = vunpack.c.l.b16 %v1251
        %v1692 = vunpack.c.h.b16 %v1251
        %v1693 = vunpack.c.l.b16 %v1252
        %v1694 = vunpack.c.l.b16 %v1253
        %v1695 = vunpack.c.h.b16 %v1253
        %v1696 = vunpack.c.l.b16 %v1254
        %v1697 = vunpack.c.l.b16 %v1255
        %v1698 = vunpack.c.h.b16 %v1255
        %v1699 = vunpack.c.l.b16 %v1256
        %v1700 = vunpack.c.l.b16 %v1257
        %v1701 = vunpack.c.h.b16 %v1257
        %v1702 = vunpack.c.l.b16 %v1258
        %v1703 = vunpack.c.l.b16 %v1259
        %v1704 = vunpack.c.h.b16 %v1259
        %v1705 = vunpack.c.l.b16 %v1260
        %v1706 = vunpack.c.l.b16 %v1261
        %v1707 = vunpack.c.h.b16 %v1261
        %v1708 = vunpack.c.l.b16 %v1262
        %v1709 = vunpack.c.l.b16 %v1263
        %v1710 = vunpack.c.h.b16 %v1263
        %v1711 = vunpack.c.l.b16 %v1264
        %v1712 = vunpack.c.l.b16 %v1265
        %v1713 = vunpack.c.h.b16 %v1265
        %v1714 = vunpack.c.l.b16 %v1266
        %v1715 = vunpack.c.l.b16 %v1267
        %v1716 = vunpack.c.h.b16 %v1267
        %v1717 = vunpack.c.l.b16 %v1268
        %v1718 = vunpack.c.l.b16 %v1269
        %v1719 = vunpack.c.h.b16 %v1269
        %v1720 = vunpack.c.l.b16 %v1270
        %v1721 = vunpack.c.l.b16 %v1271
        %v1722 = vunpack.c.h.b16 %v1271
        %v1723 = vunpack.c.l.b16 %v1272
        %v1724 = vunpack.c.l.b16 %v1273
        %v1725 = vunpack.c.h.b16 %v1273
        %v1726 = vunpack.c.l.b16 %v1274
        %v1727 = vunpack.c.l.b16 %v1275
        %v1728 = vunpack.c.h.b16 %v1275
        %v1729 = vunpack.c.l.b16 %v1276
        %v1730 = vunpack.c.l.b16 %v1277
        %v1731 = vunpack.c.h.b16 %v1277
        %v1732 = vunpack.c.l.b16 %v1278
        %v1733 = vunpack.c.l.b16 %v1279
        %v1734 = vunpack.c.h.b16 %v1279
        %v1735 = vunpack.c.l.b16 %v1280
        %v1736 = vunpack.c.l.b16 %v1281
        %v1737 = vunpack.c.h.b16 %v1281
        %v1738 = vunpack.c.l.b16 %v1282
        %v1739 = vunpack.c.l.b16 %v1283
        %v1740 = vunpack.c.h.b16 %v1283
        %v1741 = vunpack.c.l.b16 %v1284
        %v1742 = vunpack.c.l.b16 %v1285
        %v1743 = vunpack.c.h.b16 %v1285
        %v1744 = vunpack.c.l.b16 %v1286
        %v1745 = vunpack.c.l.b16 %v1287
        %v1746 = vunpack.c.h.b16 %v1287
        %v1747 = vunpack.c.l.b16 %v1288
        %v1748 = vunpack.c.l.b16 %v1289
        %v1749 = vunpack.c.h.b16 %v1289
        %v1750 = vunpack.c.l.b16 %v1290
        %v1751 = vunpack.c.l.b16 %v1291
        %v1752 = vunpack.c.h.b16 %v1291
        %v1753 = vunpack.c.l.b16 %v1292
        %v1754 = vunpack.c.l.b16 %v1293
        %v1755 = vunpack.c.h.b16 %v1293
        %v1756 = vunpack.c.l.b16 %v1294
        %v1757 = vunpack.c.l.b16 %v1295
        %v1758 = vunpack.c.h.b16 %v1295
        %v1759 = vunpack.c.l.b16 %v1296
        %v1760 = vunpack.c.l.b16 %v1297
        %v1761 = vunpack.c.h.b16 %v1297
        %v1762 = vunpack.c.l.b16 %v1298
        %v1763 = vunpack.c.l.b16 %v1299
        %v1764 = vunpack.c.h.b16 %v1299
        %v1765 = vunpack.c.l.b16 %v1300
        %v1766 = vunpack.c.l.b16 %v1301
        %v1767 = vunpack.c.h.b16 %v1301
        %v1768 = vunpack.c.l.b16 %v1302
        %v1769 = vunpack.c.l.b16 %v1303
        %v1770 = vunpack.c.h.b16 %v1303
        %v1771 = vunpack.c.l.b16 %v1304
        %v1772 = vunpack.c.l.b16 %v1305
        %v1773 = vunpack.c.h.b16 %v1305
        %v1774 = vunpack.c.l.b16 %v1306
        %v1775 = vunpack.c.l.b16 %v1307
        %v1776 = vunpack.c.h.b16 %v1307
        %v1777 = vunpack.c.l.b16 %v1308
        %v1778 = vunpack.c.l.b16 %v1309
        %v1779 = vunpack.c.h.b16 %v1309
        %v1780 = vunpack.c.l.b16 %v1310
        %v1781 = vunpack.c.l.b16 %v1311
        %v1782 = vunpack.c.h.b16 %v1311
        %v1783 = vunpack.c.l.b16 %v1312
        %v1784 = vunpack.c.l.b16 %v1313
        %v1785 = vunpack.c.h.b16 %v1313
        %v1786 = vunpack.c.l.b16 %v1314
        %v1787 = vunpack.c.l.b16 %v1315
        %v1788 = vunpack.c.h.b16 %v1315
        %v1789 = vunpack.c.l.b16 %v1316
        %v1790 = vunpack.c.l.b16 %v1317
        %v1791 = vunpack.c.h.b16 %v1317
        %v1792 = vunpack.c.l.b16 %v1318
        %v1793 = vunpack.c.l.b16 %v1319
        %v1794 = vunpack.c.h.b16 %v1319
        %v1795 = vunpack.c.l.b16 %v1320
        %v1796 = vunpack.c.l.b16 %v1321
        %v1797 = vunpack.c.h.b16 %v1321
        %v1798 = vunpack.c.l.b16 %v1322
        %v1799 = vunpack.c.l.b16 %v1323
        %v1800 = vunpack.c.h.b16 %v1323
        %v1801 = vunpack.c.l.b16 %v1324
        %v1802 = vunpack.c.l.b16 %v1325
        %v1803 = vunpack.c.h.b16 %v1325
        %v1804 = vunpack.c.l.b16 %v1326
        %v1805 = vunpack.c.l.b16 %v1327
        %v1806 = vunpack.c.h.b16 %v1327
        %v1807 = vunpack.c.l.b16 %v1328
        %v1808 = vunpack.c.l.b16 %v1329
        %v1809 = vunpack.c.h.b16 %v1329
        %v1810 = vunpack.c.l.b16 %v1330
        %v1811 = vunpack.c.l.b16 %v1331
        %v1812 = vunpack.c.h.b16 %v1331
        %v1813 = vunpack.c.l.b16 %v1332
        %v1814 = vunpack.c.l.b16 %v1333
        %v1815 = vunpack.c.h.b16 %v1333
        %v1816 = vunpack.c.l.b16 %v1334
        %v1817 = vunpack.c.l.b16 %v1335
        %v1818 = vunpack.c.h.b16 %v1335
        %v1819 = vunpack.c.l.b16 %v1336
        %v1820 = vunpack.c.l.b16 %v1337
        %v1821 = vunpack.c.h.b16 %v1337
        %v1822 = vunpack.c.l.b16 %v1338
        %v1823 = vunpack.c.l.b16 %v1339
        %v1824 = vunpack.c.h.b16 %v1339
        %v1825 = vunpack.c.l.b16 %v1340
        %v1826 = vunpack.c.l.b16 %v1341
        %v1827 = vunpack.c.h.b16 %v1341
        %v1828 = vunpack.c.l.b16 %v1342
        %v1829 = vunpack.c.l.b16 %v1343
        %v1830 = vunpack.c.h.b16 %v1343
        %v1831 = vunpack.c.l.b16 %v1344
        %v1832 = vunpack.c.l.b16 %v1345
        %v1833 = vunpack.c.h.b16 %v1345
        %v1834 = vunpack.c.l.b16 %v1346
        %v1835 = vunpack.c.l.b16 %v1347
        %v1836 = vunpack.c.h.b16 %v1347
        %v1837 = vunpack.c.l.b16 %v1348
        %v1838 = vunpack.c.l.b16 %v1349
        %v1839 = vunpack.c.h.b16 %v1349
        %v1840 = vunpack.c.l.b16 %v1350
        %v1841 = vunpack.c.l.b16 %v1351
        %v1842 = vunpack.c.h.b16 %v1351
        %v1843 = vunpack.c.l.b16 %v1352
        %v1844 = vunpack.c.l.b16 %v1353
        %v1845 = vunpack.c.h.b16 %v1353
        %v1846 = vunpack.c.l.b16 %v1354
        %v1847 = vunpack.c.l.b16 %v1355
        %v1848 = vunpack.c.h.b16 %v1355
        %v1849 = vunpack.c.l.b16 %v1356
        %v1850 = vunpack.c.l.b16 %v1357
        %v1851 = vunpack.c.h.b16 %v1357
        %v1852 = vunpack.c.l.b16 %v1358
        %v1853 = vunpack.c.l.b16 %v1359
        %v1854 = vunpack.c.h.b16 %v1359
        %v1855 = vunpack.c.l.b16 %v1360
        %v1856 = vunpack.c.l.b16 %v1361
        %v1857 = vunpack.c.h.b16 %v1361
        %v1858 = vunpack.c.l.b16 %v1362
        %v1859 = vunpack.c.l.b16 %v1363
        %v1860 = vunpack.c.h.b16 %v1363
        %v1861 = vunpack.c.l.b16 %v1364
        %v1862 = vunpack.c.l.b16 %v1365
        %v1863 = vunpack.c.h.b16 %v1365
        %v1864 = vunpack.c.l.b16 %v1366
        %v1865 = vunpack.c.l.b16 %v1367
        %v1866 = vunpack.c.h.b16 %v1367
        %v1867 = vunpack.c.l.b16 %v1368
        %v1868 = vunpack.c.l.b16 %v1369
        %v1869 = vunpack.c.h.b16 %v1369
        %v1870 = vunpack.c.l.b16 %v1370
        %v1871 = vunpack.c.l.b16 %v1371
        %v1872 = vunpack.c.h.b16 %v1371
        %v1873 = vunpack.c.l.b16 %v1372
        %v1874 = vunpack.c.l.b16 %v1373
        %v1875 = vunpack.c.h.b16 %v1373
        %v1876 = vunpack.c.l.b16 %v1374
        %v1877 = vunpack.c.l.b16 %v1375
        %v1878 = vunpack.c.h.b16 %v1375
        %v1879 = vunpack.c.l.b16 %v1376
        %v1880 = vunpack.c.l.b16 %v1377
        %v1881 = vunpack.c.h.b16 %v1377
        %v1882 = vunpack.c.l.b16 %v1378
        %v1883 = vunpack.c.l.b16 %v1379
        %v1884 = vunpack.c.h.b16 %v1379
        %v1885 = vunpack.c.l.b16 %v1380
        %v1886 = vunpack.c.l.b16 %v1381
        %v1887 = vunpack.c.h.b16 %v1381
        %v1888 = vunpack.c.l.b16 %v1382
        %v1889 = vunpack.c.l.b16 %v1383
        %v1890 = vunpack.c.h.b16 %v1383
        %v1891 = vunpack.c.l.b16 %v1384
        %v1892 = vunpack.c.l.b16 %v1385
        %v1893 = vunpack.c.h.b16 %v1385
        %v1894 = vunpack.c.l.b16 %v1386
        %v1895 = vunpack.c.l.b16 %v1387
        %v1896 = vunpack.c.h.b16 %v1387
        %v1897 = vunpack.c.l.b16 %v1388
        %v1898 = vunpack.c.l.b16 %v1389
        %v1899 = vunpack.c.h.b16 %v1389
        %v1900 = vunpack.c.l.b16 %v1390
        %v1901 = vunpack.c.l.b16 %v1391
        %v1902 = vunpack.c.h.b16 %v1391
        %v1903 = vunpack.c.l.b16 %v1392
        %v1904 = vunpack.c.l.b16 %v1393
        %v1905 = vunpack.c.h.b16 %v1393
        %v1906 = vunpack.c.l.b16 %v1394
        %v1907 = vunpack.c.l.b16 %v1395
        %v1908 = vunpack.c.h.b16 %v1395
        %v1909 = vunpack.c.l.b16 %v1396
        %v1910 = vunpack.c.l.b16 %v1397
        %v1911 = vunpack.c.h.b16 %v1397
        %v1912 = vunpack.c.l.b16 %v1398
        %v1913 = vunpack.c.l.b16 %v1399
        %v1914 = vunpack.c.h.b16 %v1399
        %v1915 = vunpack.c.l.b16 %v1400
        %v1916 = vunpack.c.l.b16 %v1401
        %v1917 = vunpack.c.h.b16 %v1401
        %v1918 = vunpack.c.l.b16 %v1402
        %v1919 = vunpack.c.l.b16 %v1403
        %v1920 = vunpack.c.h.b16 %v1403
        %v1921 = vunpack.c.l.b16 %v1404
        %v1922 = vunpack.c.l.b16 %v1405
        %v1923 = vunpack.c.h.b16 %v1405
        %v1924 = vunpack.c.l.b16 %v1406
        %v1925 = vunpack.c.l.b16 %v1407
        %v1926 = vunpack.c.h.b16 %v1407
        %v1927 = vunpack.c.l.b16 %v1408
        %v1928 = vunpack.c.l.b16 %v1409
        %v1929 = vunpack.c.h.b16 %v1409
        %v1930 = vunpack.c.l.b16 %v1410
        %v1931 = vunpack.c.l.b16 %v1411
        %v1932 = vunpack.c.h.b16 %v1411
        %v1933 = vunpack.c.l.b16 %v1412
        %v1934 = vunpack.c.l.b16 %v1413
        %v1935 = vunpack.c.h.b16 %v1413
        %v1936 = vunpack.c.l.b16 %v1414
        %v1937 = vunpack.c.l.b16 %v1415
        %v1938 = vunpack.c.h.b16 %v1415
        %v1939 = vunpack.c.l.b16 %v1416
        %v1940 = vunpack.c.l.b16 %v1417
        %v1941 = vunpack.c.h.b16 %v1417
        %v1942 = vunpack.c.l.b16 %v1418
        %v1943 = vunpack.c.l.b16 %v1419
        %v1944 = vunpack.c.h.b16 %v1419
        %v1945 = vunpack.c.l.b16 %v1420
        %v1946 = vunpack.c.l.b16 %v1421
        %v1947 = vunpack.c.h.b16 %v1421
        %v1948 = vunpack.c.l.b16 %v1422
        %v1949 = vunpack.c.l.b16 %v1423
        %v1950 = vunpack.c.h.b16 %v1423
        %v1951 = vunpack.c.l.b16 %v1424
        %v1952 = vunpack.c.l.b16 %v1425
        %v1953 = vunpack.c.h.b16 %v1425
        %v1954 = vunpack.c.l.b16 %v1426
        %v1955 = vunpack.c.l.b16 %v1427
        %v1956 = vunpack.c.h.b16 %v1427
        %v1957 = vunpack.c.l.b16 %v1428
        %v1958 = vunpack.c.l.b16 %v1429
        %v1959 = vunpack.c.h.b16 %v1429
        %v1960 = vunpack.c.l.b16 %v1430
        %v1961 = vunpack.c.l.b16 %v1431
        %v1962 = vunpack.c.h.b16 %v1431
        %v1963 = vunpack.c.l.b16 %v1432
        %v1964 = vunpack.c.l.b16 %v1433
        %v1965 = vunpack.c.h.b16 %v1433
        %v1966 = vunpack.c.l.b16 %v1434
        %v1967 = vunpack.c.l.b16 %v1435
        %v1968 = vunpack.c.h.b16 %v1435
        %v1969 = vunpack.c.l.b16 %v1436
        %v1970 = vunpack.c.l.b16 %v1437
        %v1971 = vunpack.c.h.b16 %v1437
        %v1972 = vunpack.c.l.b16 %v1438
        %v1973 = vunpack.c.l.b16 %v1439
        %v1974 = vunpack.c.h.b16 %v1439
        %v1975 = vunpack.c.l.b16 %v1440
        %v1976 = vunpack.c.l.b16 %v1441
        %v1977 = vunpack.c.h.b16 %v1441
        %v1978 = vunpack.c.l.b16 %v1442
        %v1979 = vunpack.c.l.b16 %v1443
        %v1980 = vunpack.c.h.b16 %v1443
        %v1981 = vunpack.c.l.b16 %v1444
        %v1982 = vunpack.c.l.b16 %v1445
        %v1983 = vunpack.c.h.b16 %v1445
        %v1984 = vunpack.c.l.b16 %v1446
        %v1985 = vunpack.c.l.b16 %v1447
        %v1986 = vunpack.c.h.b16 %v1447
        %v1987 = vunpack.c.l.b16 %v1448
        %v1988 = vunpack.c.l.b16 %v1449
        %v1989 = vunpack.c.h.b16 %v1449
        %v1990 = vunpack.c.l.b16 %v1450
        %v1991 = vpack.c.b16 %v1670, %v1667
        %v1992 = vpack.c.b16 %v1671, %v1668
        %v1993 = vpack.c.b16 %v1672, %v1669
        %v1994 = vpack.c.b16 %v1676, %v1673
        %v1995 = vpack.c.b16 %v1677, %v1674
        %v1996 = vpack.c.b16 %v1678, %v1675
        %v1997 = vpack.c.b16 %v1682, %v1679
        %v1998 = vpack.c.b16 %v1683, %v1680
        %v1999 = vpack.c.b16 %v1684, %v1681
        %v2000 = vpack.c.b16 %v1688, %v1685
        %v2001 = vpack.c.b16 %v1689, %v1686
        %v2002 = vpack.c.b16 %v1690, %v1687
        %v2003 = vpack.c.b16 %v1694, %v1691
        %v2004 = vpack.c.b16 %v1695, %v1692
        %v2005 = vpack.c.b16 %v1696, %v1693
        %v2006 = vpack.c.b16 %v1700, %v1697
        %v2007 = vpack.c.b16 %v1701, %v1698
        %v2008 = vpack.c.b16 %v1702, %v1699
        %v2009 = vpack.c.b16 %v1706, %v1703
        %v2010 = vpack.c.b16 %v1707, %v1704
        %v2011 = vpack.c.b16 %v1708, %v1705
        %v2012 = vpack.c.b16 %v1712, %v1709
        %v2013 = vpack.c.b16 %v1713, %v1710
        %v2014 = vpack.c.b16 %v1714, %v1711
        %v2015 = vpack.c.b16 %v1718, %v1715
        %v2016 = vpack.c.b16 %v1719, %v1716
        %v2017 = vpack.c.b16 %v1720, %v1717
        %v2018 = vpack.c.b16 %v1724, %v1721
        %v2019 = vpack.c.b16 %v1725, %v1722
        %v2020 = vpack.c.b16 %v1726, %v1723
        %v2021 = vpack.c.b16 %v1730, %v1727
        %v2022 = vpack.c.b16 %v1731, %v1728
        %v2023 = vpack.c.b16 %v1732, %v1729
        %v2024 = vpack.c.b16 %v1736, %v1733
        %v2025 = vpack.c.b16 %v1737, %v1734
        %v2026 = vpack.c.b16 %v1738, %v1735
        %v2027 = vpack.c.b16 %v1742, %v1739
        %v2028 = vpack.c.b16 %v1743, %v1740
        %v2029 = vpack.c.b16 %v1744, %v1741
        %v2030 = vpack.c.b16 %v1748, %v1745
        %v2031 = vpack.c.b16 %v1749, %v1746
        %v2032 = vpack.c.b16 %v1750, %v1747
        %v2033 = vpack.c.b16 %v1754, %v1751
        %v2034 = vpack.c.b16 %v1755, %v1752
        %v2035 = vpack.c.b16 %v1756, %v1753
        %v2036 = vpack.c.b16 %v1760, %v1757
        %v2037 = vpack.c.b16 %v1761, %v1758
        %v2038 = vpack.c.b16 %v1762, %v1759
        %v2039 = vpack.c.b16 %v1766, %v1763
        %v2040 = vpack.c.b16 %v1767, %v1764
        %v2041 = vpack.c.b16 %v1768, %v1765
        %v2042 = vpack.c.b16 %v1772, %v1769
        %v2043 = vpack.c.b16 %v1773, %v1770
        %v2044 = vpack.c.b16 %v1774, %v1771
        %v2045 = vpack.c.b16 %v1778, %v1775
        %v2046 = vpack.c.b16 %v1779, %v1776
        %v2047 = vpack.c.b16 %v1780, %v1777
        %v2048 = vpack.c.b16 %v1784, %v1781
        %v2049 = vpack.c.b16 %v1785, %v1782
        %v2050 = vpack.c.b16 %v1786, %v1783
        %v2051 = vpack.c.b16 %v1790, %v1787
        %v2052 = vpack.c.b16 %v1791, %v1788
        %v2053 = vpack.c.b16 %v1792, %v1789
        %v2054 = vpack.c.b16 %v1796, %v1793
        %v2055 = vpack.c.b16 %v1797, %v1794
        %v2056 = vpack.c.b16 %v1798, %v1795
        %v2057 = vpack.c.b16 %v1802, %v1799
        %v2058 = vpack.c.b16 %v1803, %v1800
        %v2059 = vpack.c.b16 %v1804, %v1801
        %v2060 = vpack.c.b16 %v1808, %v1805
        %v2061 = vpack.c.b16 %v1809, %v1806
        %v2062 = vpack.c.b16 %v1810, %v1807
        %v2063 = vpack.c.b16 %v1814, %v1811
        %v2064 = vpack.c.b16 %v1815, %v1812
        %v2065 = vpack.c.b16 %v1816, %v1813
        %v2066 = vpack.c.b16 %v1820, %v1817
        %v2067 = vpack.c.b16 %v1821, %v1818
        %v2068 = vpack.c.b16 %v1822, %v1819
        %v2069 = vpack.c.b16 %v1826, %v1823
        %v2070 = vpack.c.b16 %v1827, %v1824
        %v2071 = vpack.c.b16 %v1828, %v1825
        %v2072 = vpack.c.b16 %v1832, %v1829
        %v2073 = vpack.c.b16 %v1833, %v1830
        %v2074 = vpack.c.b16 %v1834, %v1831
        %v2075 = vpack.c.b16 %v1838, %v1835
        %v2076 = vpack.c.b16 %v1839, %v1836
        %v2077 = vpack.c.b16 %v1840, %v1837
        %v2078 = vpack.c.b16 %v1844, %v1841
        %v2079 = vpack.c.b16 %v1845, %v1842
        %v2080 = vpack.c.b16 %v1846, %v1843
        %v2081 = vpack.c.b16 %v1850, %v1847
        %v2082 = vpack.c.b16 %v1851, %v1848
        %v2083 = vpack.c.b16 %v1852, %v1849
        %v2084 = vpack.c.b16 %v1856, %v1853
        %v2085 = vpack.c.b16 %v1857, %v1854
        %v2086 = vpack.c.b16 %v1858, %v1855
        %v2087 = vpack.c.b16 %v1862, %v1859
        %v2088 = vpack.c.b16 %v1863, %v1860
        %v2089 = vpack.c.b16 %v1864, %v1861
        %v2090 = vpack.c.b16 %v1868, %v1865
        %v2091 = vpack.c.b16 %v1869, %v1866
        %v2092 = vpack.c.b16 %v1870, %v1867
        %v2093 = vpack.c.b16 %v1874, %v1871
        %v2094 = vpack.c.b16 %v1875, %v1872
        %v2095 = vpack.c.b16 %v1876, %v1873
        %v2096 = vpack.c.b16 %v1880, %v1877
        %v2097 = vpack.c.b16 %v1881, %v1878
        %v2098 = vpack.c.b16 %v1882, %v1879
        %v2099 = vpack.c.b16 %v1886, %v1883
        %v2100 = vpack.c.b16 %v1887, %v1884
        %v2101 = vpack.c.b16 %v1888, %v1885
        %v2102 = vpack.c.b16 %v1892, %v1889
        %v2103 = vpack.c.b16 %v1893, %v1890
        %v2104 = vpack.c.b16 %v1894, %v1891
        %v2105 = vpack.c.b16 %v1898, %v1895
        %v2106 = vpack.c.b16 %v1899, %v1896
        %v2107 = vpack.c.b16 %v1900, %v1897
        %v2108 = vpack.c.b16 %v1904, %v1901
        %v2109 = vpack.c.b16 %v1905, %v1902
        %v2110 = vpack.c.b16 %v1906, %v1903
        %v2111 = vpack.c.b16 %v1910, %v1907
        %v2112 = vpack.c.b16 %v1911, %v1908
        %v2113 = vpack.c.b16 %v1912, %v1909
        %v2114 = vpack.c.b16 %v1916, %v1913
        %v2115 = vpack.c.b16 %v1917, %v1914
        %v2116 = vpack.c.b16 %v1918, %v1915
        %v2117 = vpack.c.b16 %v1922, %v1919
        %v2118 = vpack.c.b16 %v1923, %v1920
        %v2119 = vpack.c.b16 %v1924, %v1921
        %v2120 = vpack.c.b16 %v1928, %v1925
        %v2121 = vpack.c.b16 %v1929, %v1926
        %v2122 = vpack.c.b16 %v1930, %v1927
        %v2123 = vpack.c.b16 %v1934, %v1931
        %v2124 = vpack.c.b16 %v1935, %v1932
        %v2125 = vpack.c.b16 %v1936, %v1933
        %v2126 = vpack.c.b16 %v1940, %v1937
        %v2127 = vpack.c.b16 %v1941, %v1938
        %v2128 = vpack.c.b16 %v1942, %v1939
        %v2129 = vpack.c.b16 %v1946, %v1943
        %v2130 = vpack.c.b16 %v1947, %v1944
        %v2131 = vpack.c.b16 %v1948, %v1945
        %v2132 = vpack.c.b16 %v1952, %v1949
        %v2133 = vpack.c.b16 %v1953, %v1950
        %v2134 = vpack.c.b16 %v1954, %v1951
        %v2135 = vpack.c.b16 %v1958, %v1955
        %v2136 = vpack.c.b16 %v1959, %v1956
        %v2137 = vpack.c.b16 %v1960, %v1957
        %v2138 = vpack.c.b16 %v1964, %v1961
        %v2139 = vpack.c.b16 %v1965, %v1962
        %v2140 = vpack.c.b16 %v1966, %v1963
        %v2141 = vpack.c.b16 %v1970, %v1967
        %v2142 = vpack.c.b16 %v1971, %v1968
        %v2143 = vpack.c.b16 %v1972, %v1969
        %v2144 = vpack.c.b16 %v1976, %v1973
        %v2145 = vpack.c.b16 %v1977, %v1974
        %v2146 = vpack.c.b16 %v1978, %v1975
        %v2147 = vpack.c.b16 %v1982, %v1979
        %v2148 = vpack.c.b16 %v1983, %v1980
        %v2149 = vpack.c.b16 %v1984, %v1981
        %v2150 = vpack.c.b16 %v1988, %v1985
        %v2151 = vpack.c.b16 %v1989, %v1986
        %v2152 = vpack.c.b16 %v1990, %v1987
        %v2313 = vsel %vm597, %v1234, 0
        %vm2315 = vcmask 1046528
        %vm2316 = vcmask 1047552
        %v2317 = vsel %vm2315, 4294967295, 65535
        %v2318 = vsel %vm2316, %v2317, 0
        %v2320 = vand.u32 %v2150, %v2318
        %v2323 = vand.u32 %v2151, %v2318
        %v2326 = vand.u32 %v2152, %v2318
        %2328 = vmatprep.subr.bf16.mxu0 %v1992
        %2329 = vmatpush1.bf16.msra.mxu0 %v1991
        %2330 = vmatprep.subr.bf16.mxu0 %v1995
        %2331 = vmatpush1.bf16.msra.mxu0 %v1994
        %2332 = vmatprep.subr.bf16.mxu0 %v1998
        %2333 = vmatpush1.bf16.msra.mxu0 %v1997
        %2334 = vmatprep.subr.bf16.mxu0 %v2001
        %2335 = vmatpush1.bf16.msra.mxu0 %v2000
        %2336 = vmatprep.subr.bf16.mxu0 %v2004
        %2337 = vmatpush1.bf16.msra.mxu0 %v2003
        %2338 = vmatprep.subr.bf16.mxu0 %v2007
        %2339 = vmatpush1.bf16.msra.mxu0 %v2006
        %2340 = vmatprep.subr.bf16.mxu0 %v2010
        %2341 = vmatpush1.bf16.msra.mxu0 %v2009
        %2342 = vmatprep.subr.bf16.mxu0 %v2013
        %2343 = vmatpush1.bf16.msra.mxu0 %v2012
        %2344 = vmatprep.subr.bf16.mxu0 %v2016
        %2345 = vmatpush1.bf16.msra.mxu0 %v2015
        %2346 = vmatprep.subr.bf16.mxu0 %v2019
        %2347 = vmatpush1.bf16.msra.mxu0 %v2018
        %2348 = vmatprep.subr.bf16.mxu0 %v2022
        %2349 = vmatpush1.bf16.msra.mxu0 %v2021
        %2350 = vmatprep.subr.bf16.mxu0 %v2025
        %2351 = vmatpush1.bf16.msra.mxu0 %v2024
        %2352 = vmatprep.subr.bf16.mxu0 %v2028
        %2353 = vmatpush1.bf16.msra.mxu0 %v2027
        %2354 = vmatprep.subr.bf16.mxu0 %v2031
        %2355 = vmatpush1.bf16.msra.mxu0 %v2030
        %2356 = vmatprep.subr.bf16.mxu0 %v2034
        %2357 = vmatpush1.bf16.msra.mxu0 %v2033
        %2358 = vmatprep.subr.bf16.mxu0 %v2037
        %2359 = vmatpush1.bf16.msra.mxu0 %v2036
        %2360 = vmatprep.mubr.bf16.mxu0 %v1229
        %2361 = vmatmul.mubr.bf16.gmra.mrb[0].mxu0 %v1228
        %v2362 = vpop.f32.mrb[0].mxu0
        %v2363 = vadd.f32 0.0, %v2362
        %v2364 = vpop.f32.mrb[0].mxu0
        %v2365 = vadd.f32 0.0, %v2364
        %v2366 = vpop.f32.mrb[0].mxu0
        %v2367 = vadd.f32 0.0, %v2366
        %v2368 = vpop.f32.mrb[0].mxu0
        %v2369 = vadd.f32 0.0, %v2368
        %2370 = vdwg.mxu0
        %2371 = vmatprep.subr.bf16.mxu0 %v2040
        %2372 = vmatpush1.bf16.msra.mxu0 %v2039
        %2373 = vmatprep.subr.bf16.mxu0 %v2043
        %2374 = vmatpush1.bf16.msra.mxu0 %v2042
        %2375 = vmatprep.subr.bf16.mxu0 %v2046
        %2376 = vmatpush1.bf16.msra.mxu0 %v2045
        %2377 = vmatprep.subr.bf16.mxu0 %v2049
        %2378 = vmatpush1.bf16.msra.mxu0 %v2048
        %2379 = vmatprep.subr.bf16.mxu0 %v2052
        %2380 = vmatpush1.bf16.msra.mxu0 %v2051
        %2381 = vmatprep.subr.bf16.mxu0 %v2055
        %2382 = vmatpush1.bf16.msra.mxu0 %v2054
        %2383 = vmatprep.subr.bf16.mxu0 %v2058
        %2384 = vmatpush1.bf16.msra.mxu0 %v2057
        %2385 = vmatprep.subr.bf16.mxu0 %v2061
        %2386 = vmatpush1.bf16.msra.mxu0 %v2060
        %2387 = vmatprep.subr.bf16.mxu0 %v2064
        %2388 = vmatpush1.bf16.msra.mxu0 %v2063
        %2389 = vmatprep.subr.bf16.mxu0 %v2067
        %2390 = vmatpush1.bf16.msra.mxu0 %v2066
        %2391 = vmatprep.subr.bf16.mxu0 %v2070
        %2392 = vmatpush1.bf16.msra.mxu0 %v2069
        %2393 = vmatprep.subr.bf16.mxu0 %v2073
        %2394 = vmatpush1.bf16.msra.mxu0 %v2072
        %2395 = vmatprep.subr.bf16.mxu0 %v2076
        %2396 = vmatpush1.bf16.msra.mxu0 %v2075
        %2397 = vmatprep.subr.bf16.mxu0 %v2079
        %2398 = vmatpush1.bf16.msra.mxu0 %v2078
        %2399 = vmatprep.subr.bf16.mxu0 %v2082
        %2400 = vmatpush1.bf16.msra.mxu0 %v2081
        %2401 = vmatprep.subr.bf16.mxu0 %v2085
        %2402 = vmatpush1.bf16.msra.mxu0 %v2084
        %2403 = vmatprep.mubr.bf16.mxu0 %v1231
        %2404 = vmatmul.mubr.bf16.gmra.mrb[0].mxu0 %v1230
        %v2405 = vpop.f32.mrb[0].mxu0
        %v2406 = vadd.f32 %v2363, %v2405
        %v2407 = vpop.f32.mrb[0].mxu0
        %v2408 = vadd.f32 %v2365, %v2407
        %v2409 = vpop.f32.mrb[0].mxu0
        %v2410 = vadd.f32 %v2367, %v2409
        %v2411 = vpop.f32.mrb[0].mxu0
        %v2412 = vadd.f32 %v2369, %v2411
        %2413 = vdwg.mxu0
        %2414 = vmatprep.subr.bf16.mxu0 %v2088
        %2415 = vmatpush1.bf16.msra.mxu0 %v2087
        %2416 = vmatprep.subr.bf16.mxu0 %v2091
        %2417 = vmatpush1.bf16.msra.mxu0 %v2090
        %2418 = vmatprep.subr.bf16.mxu0 %v2094
        %2419 = vmatpush1.bf16.msra.mxu0 %v2093
        %2420 = vmatprep.subr.bf16.mxu0 %v2097
        %2421 = vmatpush1.bf16.msra.mxu0 %v2096
        %2422 = vmatprep.subr.bf16.mxu0 %v2100
        %2423 = vmatpush1.bf16.msra.mxu0 %v2099
        %2424 = vmatprep.subr.bf16.mxu0 %v2103
        %2425 = vmatpush1.bf16.msra.mxu0 %v2102
        %2426 = vmatprep.subr.bf16.mxu0 %v2106
        %2427 = vmatpush1.bf16.msra.mxu0 %v2105
        %2428 = vmatprep.subr.bf16.mxu0 %v2109
        %2429 = vmatpush1.bf16.msra.mxu0 %v2108
        %2430 = vmatprep.subr.bf16.mxu0 %v2112
        %2431 = vmatpush1.bf16.msra.mxu0 %v2111
        %2432 = vmatprep.subr.bf16.mxu0 %v2115
        %2433 = vmatpush1.bf16.msra.mxu0 %v2114
        %2434 = vmatprep.subr.bf16.mxu0 %v2118
        %2435 = vmatpush1.bf16.msra.mxu0 %v2117
        %2436 = vmatprep.subr.bf16.mxu0 %v2121
        %2437 = vmatpush1.bf16.msra.mxu0 %v2120
        %2438 = vmatprep.subr.bf16.mxu0 %v2124
        %2439 = vmatpush1.bf16.msra.mxu0 %v2123
        %2440 = vmatprep.subr.bf16.mxu0 %v2127
        %2441 = vmatpush1.bf16.msra.mxu0 %v2126
        %2442 = vmatprep.subr.bf16.mxu0 %v2130
        %2443 = vmatpush1.bf16.msra.mxu0 %v2129
        %2444 = vmatprep.subr.bf16.mxu0 %v2133
        %2445 = vmatpush1.bf16.msra.mxu0 %v2132
        %2446 = vmatprep.mubr.bf16.mxu0 %v1233
        %2447 = vmatmul.mubr.bf16.gmra.mrb[0].mxu0 %v1232
        %v2448 = vpop.f32.mrb[0].mxu0
        %v2449 = vadd.f32 %v2406, %v2448
        %v2450 = vpop.f32.mrb[0].mxu0
        %v2451 = vadd.f32 %v2408, %v2450
        %v2452 = vpop.f32.mrb[0].mxu0
        %v2453 = vadd.f32 %v2410, %v2452
        %v2454 = vpop.f32.mrb[0].mxu0
        %v2455 = vadd.f32 %v2412, %v2454
        %2456 = vdwg.mxu0
        %2457 = vmatprep.subr.bf16.mxu0 %v2136
        %2458 = vmatpush1.bf16.msra.mxu0 %v2135
        %2459 = vmatprep.subr.bf16.mxu0 %v2139
        %2460 = vmatpush1.bf16.msra.mxu0 %v2138
        %2461 = vmatprep.subr.bf16.mxu0 %v2142
        %2462 = vmatpush1.bf16.msra.mxu0 %v2141
        %2463 = vmatprep.subr.bf16.mxu0 %v2145
        %2464 = vmatpush1.bf16.msra.mxu0 %v2144
        %2465 = vmatprep.subr.bf16.mxu0 %v2148
        %2466 = vmatpush1.bf16.msra.mxu0 %v2147
        %2467 = vmatprep.subr.bf16.mxu0 %v2323
        %2468 = vmatpush1.bf16.msra.mxu0 %v2320
        %2469 = vmatprep.subr.bf16.mxu0 0
        %2470 = vmatpush1.bf16.msra.mxu0 0
        %2471 = vmatprep.subr.bf16.mxu0 0
        %2472 = vmatpush1.bf16.msra.mxu0 0
        %2473 = vmatprep.subr.bf16.mxu0 0
        %2474 = vmatpush1.bf16.msra.mxu0 0
        %2475 = vmatprep.subr.bf16.mxu0 0
        %2476 = vmatpush1.bf16.msra.mxu0 0
        %2477 = vmatprep.subr.bf16.mxu0 0
        %2478 = vmatpush1.bf16.msra.mxu0 0
        %2479 = vmatprep.subr.bf16.mxu0 0
        %2480 = vmatpush1.bf16.msra.mxu0 0
        %2481 = vmatprep.subr.bf16.mxu0 0
        %2482 = vmatpush1.bf16.msra.mxu0 0
        %2483 = vmatprep.subr.bf16.mxu0 0
        %2484 = vmatpush1.bf16.msra.mxu0 0
        %2485 = vmatprep.subr.bf16.mxu0 0
        %2486 = vmatpush1.bf16.msra.mxu0 0
        %2487 = vmatprep.subr.bf16.mxu0 0
        %2488 = vmatpush1.bf16.msra.mxu0 0
        %2489 = vmatprep.mubr.bf16.mxu0 0
        %2490 = vmatmul.mubr.bf16.gmra.mrb[0].mxu0 %v2313
        %v2491 = vpop.f32.mrb[0].mxu0
        %v2492 = vadd.f32 %v2449, %v2491
        %v2493 = vpop.f32.mrb[0].mxu0
        %v2494 = vadd.f32 %v2451, %v2493
        %v2495 = vpop.f32.mrb[0].mxu0
        %v2496 = vadd.f32 %v2453, %v2495
        %v2497 = vpop.f32.mrb[0].mxu0
        %v2498 = vadd.f32 %v2455, %v2497
        %2499 = vdwg.mxu0
        %2500 = vmatprep.subr.bf16.mxu0 0
        %2501 = vmatpush1.bf16.msra.mxu0 %v1993
        %2502 = vmatprep.subr.bf16.mxu0 0
        %2503 = vmatpush1.bf16.msra.mxu0 %v1996
        %2504 = vmatprep.subr.bf16.mxu0 0
        %2505 = vmatpush1.bf16.msra.mxu0 %v1999
        %2506 = vmatprep.subr.bf16.mxu0 0
        %2507 = vmatpush1.bf16.msra.mxu0 %v2002
        %2508 = vmatprep.subr.bf16.mxu0 0
        %2509 = vmatpush1.bf16.msra.mxu0 %v2005
        %2510 = vmatprep.subr.bf16.mxu0 0
        %2511 = vmatpush1.bf16.msra.mxu0 %v2008
        %2512 = vmatprep.subr.bf16.mxu0 0
        %2513 = vmatpush1.bf16.msra.mxu0 %v2011
        %2514 = vmatprep.subr.bf16.mxu0 0
        %2515 = vmatpush1.bf16.msra.mxu0 %v2014
        %2516 = vmatprep.subr.bf16.mxu0 0
        %2517 = vmatpush1.bf16.msra.mxu0 %v2017
        %2518 = vmatprep.subr.bf16.mxu0 0
        %2519 = vmatpush1.bf16.msra.mxu0 %v2020
        %2520 = vmatprep.subr.bf16.mxu0 0
        %2521 = vmatpush1.bf16.msra.mxu0 %v2023
        %2522 = vmatprep.subr.bf16.mxu0 0
        %2523 = vmatpush1.bf16.msra.mxu0 %v2026
        %2524 = vmatprep.subr.bf16.mxu0 0
        %2525 = vmatpush1.bf16.msra.mxu0 %v2029
        %2526 = vmatprep.subr.bf16.mxu0 0
        %2527 = vmatpush1.bf16.msra.mxu0 %v2032
        %2528 = vmatprep.subr.bf16.mxu0 0
        %2529 = vmatpush1.bf16.msra.mxu0 %v2035
        %2530 = vmatprep.subr.bf16.mxu0 0
        %2531 = vmatpush1.bf16.msra.mxu0 %v2038
        %2532 = vmatprep.mubr.bf16.mxu0 %v1229
        %2533 = vmatmul.mubr.bf16.gmra.mrb[0].mxu0 %v1228
        %v2534 = vpop.f32.mrb[0].mxu0
        %v2535 = vadd.f32 0.0, %v2534
        %v2536 = vpop.f32.mrb[0].mxu0
        %v2537 = vpop.f32.mrb[0].mxu0
        %v2538 = vadd.f32 0.0, %v2537
        %v2539 = vpop.f32.mrb[0].mxu0
        %2540 = vdwg.mxu0
        %2541 = vmatprep.subr.bf16.mxu0 0
        %2542 = vmatpush1.bf16.msra.mxu0 %v2041
        %2543 = vmatprep.subr.bf16.mxu0 0
        %2544 = vmatpush1.bf16.msra.mxu0 %v2044
        %2545 = vmatprep.subr.bf16.mxu0 0
        %2546 = vmatpush1.bf16.msra.mxu0 %v2047
        %2547 = vmatprep.subr.bf16.mxu0 0
        %2548 = vmatpush1.bf16.msra.mxu0 %v2050
        %2549 = vmatprep.subr.bf16.mxu0 0
        %2550 = vmatpush1.bf16.msra.mxu0 %v2053
        %2551 = vmatprep.subr.bf16.mxu0 0
        %2552 = vmatpush1.bf16.msra.mxu0 %v2056
        %2553 = vmatprep.subr.bf16.mxu0 0
        %2554 = vmatpush1.bf16.msra.mxu0 %v2059
        %2555 = vmatprep.subr.bf16.mxu0 0
        %2556 = vmatpush1.bf16.msra.mxu0 %v2062
        %2557 = vmatprep.subr.bf16.mxu0 0
        %2558 = vmatpush1.bf16.msra.mxu0 %v2065
        %2559 = vmatprep.subr.bf16.mxu0 0
        %2560 = vmatpush1.bf16.msra.mxu0 %v2068
        %2561 = vmatprep.subr.bf16.mxu0 0
        %2562 = vmatpush1.bf16.msra.mxu0 %v2071
        %2563 = vmatprep.subr.bf16.mxu0 0
        %2564 = vmatpush1.bf16.msra.mxu0 %v2074
        %2565 = vmatprep.subr.bf16.mxu0 0
        %2566 = vmatpush1.bf16.msra.mxu0 %v2077
        %2567 = vmatprep.subr.bf16.mxu0 0
        %2568 = vmatpush1.bf16.msra.mxu0 %v2080
        %2569 = vmatprep.subr.bf16.mxu0 0
        %2570 = vmatpush1.bf16.msra.mxu0 %v2083
        %2571 = vmatprep.subr.bf16.mxu0 0
        %2572 = vmatpush1.bf16.msra.mxu0 %v2086
        %2573 = vmatprep.mubr.bf16.mxu0 %v1231
        %2574 = vmatmul.mubr.bf16.gmra.mrb[0].mxu0 %v1230
        %v2575 = vpop.f32.mrb[0].mxu0
        %v2576 = vadd.f32 %v2535, %v2575
        %v2577 = vpop.f32.mrb[0].mxu0
        %v2578 = vpop.f32.mrb[0].mxu0
        %v2579 = vadd.f32 %v2538, %v2578
        %v2580 = vpop.f32.mrb[0].mxu0
        %2581 = vdwg.mxu0
        %2582 = vmatprep.subr.bf16.mxu0 0
        %2583 = vmatpush1.bf16.msra.mxu0 %v2089
        %2584 = vmatprep.subr.bf16.mxu0 0
        %2585 = vmatpush1.bf16.msra.mxu0 %v2092
        %2586 = vmatprep.subr.bf16.mxu0 0
        %2587 = vmatpush1.bf16.msra.mxu0 %v2095
        %2588 = vmatprep.subr.bf16.mxu0 0
        %2589 = vmatpush1.bf16.msra.mxu0 %v2098
        %2590 = vmatprep.subr.bf16.mxu0 0
        %2591 = vmatpush1.bf16.msra.mxu0 %v2101
        %2592 = vmatprep.subr.bf16.mxu0 0
        %2593 = vmatpush1.bf16.msra.mxu0 %v2104
        %2594 = vmatprep.subr.bf16.mxu0 0
        %2595 = vmatpush1.bf16.msra.mxu0 %v2107
        %2596 = vmatprep.subr.bf16.mxu0 0
        %2597 = vmatpush1.bf16.msra.mxu0 %v2110
        %2598 = vmatprep.subr.bf16.mxu0 0
        %2599 = vmatpush1.bf16.msra.mxu0 %v2113
        %2600 = vmatprep.subr.bf16.mxu0 0
        %2601 = vmatpush1.bf16.msra.mxu0 %v2116
        %2602 = vmatprep.subr.bf16.mxu0 0
        %2603 = vmatpush1.bf16.msra.mxu0 %v2119
        %2604 = vmatprep.subr.bf16.mxu0 0
        %2605 = vmatpush1.bf16.msra.mxu0 %v2122
        %2606 = vmatprep.subr.bf16.mxu0 0
        %2607 = vmatpush1.bf16.msra.mxu0 %v2125
        %2608 = vmatprep.subr.bf16.mxu0 0
        %2609 = vmatpush1.bf16.msra.mxu0 %v2128
        %2610 = vmatprep.subr.bf16.mxu0 0
        %2611 = vmatpush1.bf16.msra.mxu0 %v2131
        %2612 = vmatprep.subr.bf16.mxu0 0
        %2613 = vmatpush1.bf16.msra.mxu0 %v2134
        %2614 = vmatprep.mubr.bf16.mxu0 %v1233
        %2615 = vmatmul.mubr.bf16.gmra.mrb[0].mxu0 %v1232
        %v2616 = vpop.f32.mrb[0].mxu0
        %v2617 = vadd.f32 %v2576, %v2616
        %v2618 = vpop.f32.mrb[0].mxu0
        %v2619 = vpop.f32.mrb[0].mxu0
        %v2620 = vadd.f32 %v2579, %v2619
        %v2621 = vpop.f32.mrb[0].mxu0
        %2622 = vdwg.mxu0
        %2623 = vmatprep.subr.bf16.mxu0 0
        %2624 = vmatpush1.bf16.msra.mxu0 %v2137
        %2625 = vmatprep.subr.bf16.mxu0 0
        %2626 = vmatpush1.bf16.msra.mxu0 %v2140
        %2627 = vmatprep.subr.bf16.mxu0 0
        %2628 = vmatpush1.bf16.msra.mxu0 %v2143
        %2629 = vmatprep.subr.bf16.mxu0 0
        %2630 = vmatpush1.bf16.msra.mxu0 %v2146
        %2631 = vmatprep.subr.bf16.mxu0 0
        %2632 = vmatpush1.bf16.msra.mxu0 %v2149
        %2633 = vmatprep.subr.bf16.mxu0 0
        %2634 = vmatpush1.bf16.msra.mxu0 %v2326
        %2635 = vmatprep.subr.bf16.mxu0 0
        %2636 = vmatpush1.bf16.msra.mxu0 0
        %2637 = vmatprep.subr.bf16.mxu0 0
        %2638 = vmatpush1.bf16.msra.mxu0 0
        %2639 = vmatprep.subr.bf16.mxu0 0
        %2640 = vmatpush1.bf16.msra.mxu0 0
        %2641 = vmatprep.subr.bf16.mxu0 0
        %2642 = vmatpush1.bf16.msra.mxu0 0
        %2643 = vmatprep.subr.bf16.mxu0 0
        %2644 = vmatpush1.bf16.msra.mxu0 0
        %2645 = vmatprep.subr.bf16.mxu0 0
        %2646 = vmatpush1.bf16.msra.mxu0 0
        %2647 = vmatprep.subr.bf16.mxu0 0
        %2648 = vmatpush1.bf16.msra.mxu0 0
        %2649 = vmatprep.subr.bf16.mxu0 0
        %2650 = vmatpush1.bf16.msra.mxu0 0
        %2651 = vmatprep.subr.bf16.mxu0 0
        %2652 = vmatpush1.bf16.msra.mxu0 0
        %2653 = vmatprep.subr.bf16.mxu0 0
        %2654 = vmatpush1.bf16.msra.mxu0 0
        %2655 = vmatprep.mubr.bf16.mxu0 0
        %2656 = vmatmul.mubr.bf16.gmra.mrb[0].mxu0 %v2313
        %v2657 = vpop.f32.mrb[0].mxu0
        %v2658 = vadd.f32 %v2617, %v2657
        %v2659 = vpop.f32.mrb[0].mxu0
        %v2660 = vpop.f32.mrb[0].mxu0
        %v2661 = vadd.f32 %v2620, %v2660
        %v2662 = vpop.f32.mrb[0].mxu0
        %2663 = vdwg.mxu0
        %2664 = vst [vmem:[#allocation4] sm:$0xff] %v2492
        %2665 = vst [vmem:[#allocation4 + $0x8] sm:$0xff] %v2494
        %vm2666 = vcmask 703488
        %2667 = vst.msk [vmem:[#allocation4 + $0x10] sm:$0xff] %vm2666, %v2658
        %2668 = vst [vmem:[#allocation4 + $0x18] sm:$0xff] %v2496
        %2669 = vst [vmem:[#allocation4 + $0x20] sm:$0xff] %v2498
        %2670 = vst.msk [vmem:[#allocation4 + $0x28] sm:$0xff] %vm2666, %v2661
        %v2671 = vld [vmem:[#allocation4] sm:$0xff]
        %v2672 = vld [vmem:[#allocation4 + $0x8] sm:$0xff]
        %v2673 = vld [vmem:[#allocation4 + $0x18] sm:$0xff]
        %v2674 = vld [vmem:[#allocation4 + $0x20] sm:$0xff]
        %v2675 = vpack.c.bf16 %v2673, %v2671
        %v2676 = vpack.c.bf16 %v2674, %v2672
        %2677 = vst [vmem:[#allocation5] sm:$0xff] %v2675
        %2678 = vst.msk [vmem:[#allocation5 + $0x8] sm:$0xff] %vm575, %v2676
        %v2679 = vld [vmem:[#allocation4] sm:$0xff]
        %v2680 = vld [vmem:[#allocation4 + $0x8] sm:$0xff]
        %v2681 = vld [vmem:[#allocation4 + $0x18] sm:$0xff]
        %v2682 = vld [vmem:[#allocation4 + $0x20] sm:$0xff]
        %v2683 = vpack.c.bf16 %v2681, %v2679
        %v2684 = vpack.c.bf16 %v2682, %v2680
        %2687 = vrot.lane.b32.xlu0 %v2683, 127
        %v2688 = vpop.permute.xlu0 %2687
        %2689 = vrot.lane.b32.xlu0 %v2684, 127
        %v2690 = vpop.permute.xlu0 %2689
        %vm2691 = vcmask 1039360
        %v2692 = vsel %vm2691, %v2688, %v2690
        %2695 = vst [vmem:[#allocation5 + $0x10] sm:$0xff] %v2692
        %2696 = vst.msk [vmem:[#allocation5 + $0x18] sm:$0xff] %vm575, %v2690
        %v2697 = vld [vmem:[#allocation4] sm:$0xff]
        %v2698 = vld [vmem:[#allocation4 + $0x8] sm:$0xff]
        %v2699 = vld [vmem:[#allocation4 + $0x18] sm:$0xff]
        %v2700 = vld [vmem:[#allocation4 + $0x20] sm:$0xff]
        %v2701 = vpack.c.bf16 %v2699, %v2697
        %v2702 = vpack.c.bf16 %v2700, %v2698
        %2705 = vrot.lane.b32.xlu0 %v2701, 126
        %v2706 = vpop.permute.xlu0 %2705
        %2707 = vrot.lane.b32.xlu0 %v2702, 126
        %v2708 = vpop.permute.xlu0 %2707
        %vm2709 = vcmask 1031168
        %v2710 = vsel %vm2709, %v2706, %v2708
        %2713 = vst [vmem:[#allocation5 + $0x20] sm:$0xff] %v2710
        %2714 = vst.msk [vmem:[#allocation5 + $0x28] sm:$0xff] %vm575, %v2708
        %v2715 = vld [vmem:[#allocation4] sm:$0xff]
        %v2716 = vld [vmem:[#allocation4 + $0x8] sm:$0xff]
        %v2717 = vld [vmem:[#allocation4 + $0x18] sm:$0xff]
        %v2718 = vld [vmem:[#allocation4 + $0x20] sm:$0xff]
        %v2719 = vpack.c.bf16 %v2717, %v2715
        %v2720 = vpack.c.bf16 %v2718, %v2716
        %2723 = vrot.lane.b32.xlu0 %v2719, 125
        %v2724 = vpop.permute.xlu0 %2723
        %2725 = vrot.lane.b32.xlu0 %v2720, 125
        %v2726 = vpop.permute.xlu0 %2725
        %vm2727 = vcmask 1022976
        %v2728 = vsel %vm2727, %v2724, %v2726
        %2731 = vst [vmem:[#allocation5 + $0x30] sm:$0xff] %v2728
        %2732 = vst.msk [vmem:[#allocation5 + $0x38] sm:$0xff] %vm575, %v2726
        %v2733 = vld [vmem:[#allocation4] sm:$0xff]
        %v2734 = vld [vmem:[#allocation4 + $0x8] sm:$0xff]
        %v2735 = vld [vmem:[#allocation4 + $0x18] sm:$0xff]
        %v2736 = vld [vmem:[#allocation4 + $0x20] sm:$0xff]
        %v2737 = vpack.c.bf16 %v2735, %v2733
        %v2738 = vpack.c.bf16 %v2736, %v2734
        %2741 = vrot.lane.b32.xlu0 %v2737, 124
        %v2742 = vpop.permute.xlu0 %2741
        %2743 = vrot.lane.b32.xlu0 %v2738, 124
        %v2744 = vpop.permute.xlu0 %2743
        %vm2745 = vcmask 1014784
        %v2746 = vsel %vm2745, %v2742, %v2744
        %2749 = vst [vmem:[#allocation5 + $0x40] sm:$0xff] %v2746
        %2750 = vst.msk [vmem:[#allocation5 + $0x48] sm:$0xff] %vm575, %v2744
        %v2751 = vld [vmem:[#allocation4] sm:$0xff]
        %v2752 = vld [vmem:[#allocation4 + $0x8] sm:$0xff]
        %v2753 = vld [vmem:[#allocation4 + $0x10] sm:$0xff]
        %v2754 = vld [vmem:[#allocation4 + $0x18] sm:$0xff]
        %v2755 = vld [vmem:[#allocation4 + $0x20] sm:$0xff]
        %v2756 = vld [vmem:[#allocation4 + $0x28] sm:$0xff]
        %v2757 = vpack.c.bf16 %v2754, %v2751
        %v2758 = vpack.c.bf16 %v2755, %v2752
        %v2759 = vpack.c.bf16 %v2756, %v2753
        %2763 = vrot.lane.b32.xlu0 %v2757, 110
        %v2764 = vpop.permute.xlu0 %2763
        %2765 = vrot.lane.b32.xlu0 %v2758, 110
        %v2766 = vpop.permute.xlu0 %2765
        %2767 = vrot.lane.b32.xlu0 %v2759, 110
        %v2768 = vpop.permute.xlu0 %2767
        %vm2769 = vcmask 900096
        %v2770 = vsel %vm2769, %v2764, %v2766
        %v2771 = vsel %vm2769, %v2766, %v2768
        %2774 = vst [vmem:[#allocation5 + $0x50] sm:$0xff] %v2770
        %2775 = vst.msk [vmem:[#allocation5 + $0x58] sm:$0xff] %vm575, %v2771
        %v2776 = vld [vmem:[#allocation4] sm:$0xff]
        %v2777 = vld [vmem:[#allocation4 + $0x8] sm:$0xff]
        %v2778 = vld [vmem:[#allocation4 + $0x10] sm:$0xff]
        %v2779 = vld [vmem:[#allocation4 + $0x18] sm:$0xff]
        %v2780 = vld [vmem:[#allocation4 + $0x20] sm:$0xff]
        %v2781 = vld [vmem:[#allocation4 + $0x28] sm:$0xff]
        %v2782 = vpack.c.bf16 %v2779, %v2776
        %v2783 = vpack.c.bf16 %v2780, %v2777
        %v2784 = vpack.c.bf16 %v2781, %v2778
        %2788 = vrot.lane.b32.xlu0 %v2782, 109
        %v2789 = vpop.permute.xlu0 %2788
        %2790 = vrot.lane.b32.xlu0 %v2783, 109
        %v2791 = vpop.permute.xlu0 %2790
        %2792 = vrot.lane.b32.xlu0 %v2784, 109
        %v2793 = vpop.permute.xlu0 %2792
        %vm2794 = vcmask 891904
        %v2795 = vsel %vm2794, %v2789, %v2791
        %v2796 = vsel %vm2794, %v2791, %v2793
        %2799 = vst [vmem:[#allocation5 + $0x60] sm:$0xff] %v2795
        %2800 = vst.msk [vmem:[#allocation5 + $0x68] sm:$0xff] %vm575, %v2796
        %v2801 = vld [vmem:[#allocation4] sm:$0xff]
        %v2802 = vld [vmem:[#allocation4 + $0x8] sm:$0xff]
        %v2803 = vld [vmem:[#allocation4 + $0x10] sm:$0xff]
        %v2804 = vld [vmem:[#allocation4 + $0x18] sm:$0xff]
        %v2805 = vld [vmem:[#allocation4 + $0x20] sm:$0xff]
        %v2806 = vld [vmem:[#allocation4 + $0x28] sm:$0xff]
        %v2807 = vpack.c.bf16 %v2804, %v2801
        %v2808 = vpack.c.bf16 %v2805, %v2802
        %v2809 = vpack.c.bf16 %v2806, %v2803
        %2813 = vrot.lane.b32.xlu0 %v2807, 108
        %v2814 = vpop.permute.xlu0 %2813
        %2815 = vrot.lane.b32.xlu0 %v2808, 108
        %v2816 = vpop.permute.xlu0 %2815
        %2817 = vrot.lane.b32.xlu0 %v2809, 108
        %v2818 = vpop.permute.xlu0 %2817
        %vm2819 = vcmask 883712
        %v2820 = vsel %vm2819, %v2814, %v2816
        %v2821 = vsel %vm2819, %v2816, %v2818
        %2824 = vst [vmem:[#allocation5 + $0x70] sm:$0xff] %v2820
        %2825 = vst.msk [vmem:[#allocation5 + $0x78] sm:$0xff] %vm575, %v2821
        %v2826 = vld [vmem:[#allocation4] sm:$0xff]
        %v2827 = vld [vmem:[#allocation4 + $0x8] sm:$0xff]
        %v2828 = vld [vmem:[#allocation4 + $0x10] sm:$0xff]
        %v2829 = vld [vmem:[#allocation4 + $0x18] sm:$0xff]
        %v2830 = vld [vmem:[#allocation4 + $0x20] sm:$0xff]
        %v2831 = vld [vmem:[#allocation4 + $0x28] sm:$0xff]
        %v2832 = vpack.c.bf16 %v2829, %v2826
        %v2833 = vpack.c.bf16 %v2830, %v2827
        %v2834 = vpack.c.bf16 %v2831, %v2828
        %2838 = vrot.lane.b32.xlu0 %v2832, 107
        %v2839 = vpop.permute.xlu0 %2838
        %2840 = vrot.lane.b32.xlu0 %v2833, 107
        %v2841 = vpop.permute.xlu0 %2840
        %2842 = vrot.lane.b32.xlu0 %v2834, 107
        %v2843 = vpop.permute.xlu0 %2842
        %vm2844 = vcmask 875520
        %v2845 = vsel %vm2844, %v2839, %v2841
        %v2846 = vsel %vm2844, %v2841, %v2843
        %2849 = vst [vmem:[#allocation5 + $0x80] sm:$0xff] %v2845
        %2850 = vst.msk [vmem:[#allocation5 + $0x88] sm:$0xff] %vm575, %v2846
        %v2851 = vld [vmem:[#allocation4] sm:$0xff]
        %v2852 = vld [vmem:[#allocation4 + $0x8] sm:$0xff]
        %v2853 = vld [vmem:[#allocation4 + $0x10] sm:$0xff]
        %v2854 = vld [vmem:[#allocation4 + $0x18] sm:$0xff]
        %v2855 = vld [vmem:[#allocation4 + $0x20] sm:$0xff]
        %v2856 = vld [vmem:[#allocation4 + $0x28] sm:$0xff]
        %v2857 = vpack.c.bf16 %v2854, %v2851
        %v2858 = vpack.c.bf16 %v2855, %v2852
        %v2859 = vpack.c.bf16 %v2856, %v2853
        %2863 = vrot.lane.b32.xlu0 %v2857, 106
        %v2864 = vpop.permute.xlu0 %2863
        %2865 = vrot.lane.b32.xlu0 %v2858, 106
        %v2866 = vpop.permute.xlu0 %2865
        %2867 = vrot.lane.b32.xlu0 %v2859, 106
        %v2868 = vpop.permute.xlu0 %2867
        %vm2869 = vcmask 867328
        %v2870 = vsel %vm2869, %v2864, %v2866
        %v2871 = vsel %vm2869, %v2866, %v2868
        %2874 = vst [vmem:[#allocation5 + $0x90] sm:$0xff] %v2870
        %2875 = vst.msk [vmem:[#allocation5 + $0x98] sm:$0xff] %vm575, %v2871
        %v2876 = vld [vmem:[#allocation4] sm:$0xff]
        %v2877 = vld [vmem:[#allocation4 + $0x8] sm:$0xff]
        %v2878 = vld [vmem:[#allocation4 + $0x10] sm:$0xff]
        %v2879 = vld [vmem:[#allocation4 + $0x18] sm:$0xff]
        %v2880 = vld [vmem:[#allocation4 + $0x20] sm:$0xff]
        %v2881 = vld [vmem:[#allocation4 + $0x28] sm:$0xff]
        %v2882 = vpack.c.bf16 %v2879, %v2876
        %v2883 = vpack.c.bf16 %v2880, %v2877
        %v2884 = vpack.c.bf16 %v2881, %v2878
        %2888 = vrot.lane.b32.xlu0 %v2882, 92
        %v2889 = vpop.permute.xlu0 %2888
        %2890 = vrot.lane.b32.xlu0 %v2883, 92
        %v2891 = vpop.permute.xlu0 %2890
        %2892 = vrot.lane.b32.xlu0 %v2884, 92
        %v2893 = vpop.permute.xlu0 %2892
        %vm2894 = vcmask 752640
        %v2895 = vsel %vm2894, %v2889, %v2891
        %v2896 = vsel %vm2894, %v2891, %v2893
        %2899 = vst [vmem:[#allocation5 + $0xa0] sm:$0xff] %v2895
        %2900 = vst.msk [vmem:[#allocation5 + $0xa8] sm:$0xff] %vm575, %v2896
        %v2901 = vld [vmem:[#allocation4] sm:$0xff]
        %v2902 = vld [vmem:[#allocation4 + $0x8] sm:$0xff]
        %v2903 = vld [vmem:[#allocation4 + $0x10] sm:$0xff]
        %v2904 = vld [vmem:[#allocation4 + $0x18] sm:$0xff]
        %v2905 = vld [vmem:[#allocation4 + $0x20] sm:$0xff]
        %v2906 = vld [vmem:[#allocation4 + $0x28] sm:$0xff]
        %v2907 = vpack.c.bf16 %v2904, %v2901
        %v2908 = vpack.c.bf16 %v2905, %v2902
        %v2909 = vpack.c.bf16 %v2906, %v2903
        %2913 = vrot.lane.b32.xlu0 %v2907, 91
        %v2914 = vpop.permute.xlu0 %2913
        %2915 = vrot.lane.b32.xlu0 %v2908, 91
        %v2916 = vpop.permute.xlu0 %2915
        %2917 = vrot.lane.b32.xlu0 %v2909, 91
        %v2918 = vpop.permute.xlu0 %2917
        %vm2919 = vcmask 744448
        %v2920 = vsel %vm2919, %v2914, %v2916
        %v2921 = vsel %vm2919, %v2916, %v2918
        %2924 = vst [vmem:[#allocation5 + $0xb0] sm:$0xff] %v2920
        %2925 = vst.msk [vmem:[#allocation5 + $0xb8] sm:$0xff] %vm575, %v2921
        %v2926 = vld [vmem:[#allocation4] sm:$0xff]
        %v2927 = vld [vmem:[#allocation4 + $0x8] sm:$0xff]
        %v2928 = vld [vmem:[#allocation4 + $0x10] sm:$0xff]
        %v2929 = vld [vmem:[#allocation4 + $0x18] sm:$0xff]
        %v2930 = vld [vmem:[#allocation4 + $0x20] sm:$0xff]
        %v2931 = vld [vmem:[#allocation4 + $0x28] sm:$0xff]
        %v2932 = vpack.c.bf16 %v2929, %v2926
        %v2933 = vpack.c.bf16 %v2930, %v2927
        %v2934 = vpack.c.bf16 %v2931, %v2928
        %2938 = vrot.lane.b32.xlu0 %v2932, 90
        %v2939 = vpop.permute.xlu0 %2938
        %2940 = vrot.lane.b32.xlu0 %v2933, 90
        %v2941 = vpop.permute.xlu0 %2940
        %2942 = vrot.lane.b32.xlu0 %v2934, 90
        %v2943 = vpop.permute.xlu0 %2942
        %vm2944 = vcmask 736256
        %v2945 = vsel %vm2944, %v2939, %v2941
        %v2946 = vsel %vm2944, %v2941, %v2943
        %2949 = vst [vmem:[#allocation5 + $0xc0] sm:$0xff] %v2945
        %2950 = vst.msk [vmem:[#allocation5 + $0xc8] sm:$0xff] %vm575, %v2946
        %v2951 = vld [vmem:[#allocation4] sm:$0xff]
        %v2952 = vld [vmem:[#allocation4 + $0x8] sm:$0xff]
        %v2953 = vld [vmem:[#allocation4 + $0x10] sm:$0xff]
        %v2954 = vld [vmem:[#allocation4 + $0x18] sm:$0xff]
        %v2955 = vld [vmem:[#allocation4 + $0x20] sm:$0xff]
        %v2956 = vld [vmem:[#allocation4 + $0x28] sm:$0xff]
        %v2957 = vpack.c.bf16 %v2954, %v2951
        %v2958 = vpack.c.bf16 %v2955, %v2952
        %v2959 = vpack.c.bf16 %v2956, %v2953
        %2963 = vrot.lane.b32.xlu0 %v2957, 89
        %v2964 = vpop.permute.xlu0 %2963
        %2965 = vrot.lane.b32.xlu0 %v2958, 89
        %v2966 = vpop.permute.xlu0 %2965
        %2967 = vrot.lane.b32.xlu0 %v2959, 89
        %v2968 = vpop.permute.xlu0 %2967
        %vm2969 = vcmask 728064
        %v2970 = vsel %vm2969, %v2964, %v2966
        %v2971 = vsel %vm2969, %v2966, %v2968
        %2974 = vst [vmem:[#allocation5 + $0xd0] sm:$0xff] %v2970
        %2975 = vst.msk [vmem:[#allocation5 + $0xd8] sm:$0xff] %vm575, %v2971
        %v2976 = vld [vmem:[#allocation4] sm:$0xff]
        %v2977 = vld [vmem:[#allocation4 + $0x8] sm:$0xff]
        %v2978 = vld [vmem:[#allocation4 + $0x10] sm:$0xff]
        %v2979 = vld [vmem:[#allocation4 + $0x18] sm:$0xff]
        %v2980 = vld [vmem:[#allocation4 + $0x20] sm:$0xff]
        %v2981 = vld [vmem:[#allocation4 + $0x28] sm:$0xff]
        %v2982 = vpack.c.bf16 %v2979, %v2976
        %v2983 = vpack.c.bf16 %v2980, %v2977
        %v2984 = vpack.c.bf16 %v2981, %v2978
        %2988 = vrot.lane.b32.xlu0 %v2982, 88
        %v2989 = vpop.permute.xlu0 %2988
        %2990 = vrot.lane.b32.xlu0 %v2983, 88
        %v2991 = vpop.permute.xlu0 %2990
        %2992 = vrot.lane.b32.xlu0 %v2984, 88
        %v2993 = vpop.permute.xlu0 %2992
        %vm2994 = vcmask 719872
        %v2995 = vsel %vm2994, %v2989, %v2991
        %v2996 = vsel %vm2994, %v2991, %v2993
        %2999 = vst [vmem:[#allocation5 + $0xe0] sm:$0xff] %v2995
        %3000 = vst.msk [vmem:[#allocation5 + $0xe8] sm:$0xff] %vm575, %v2996
        %v3001 = vld [vmem:[#allocation4] sm:$0xff]
        %v3002 = vld [vmem:[#allocation4 + $0x8] sm:$0xff]
        %v3003 = vld [vmem:[#allocation4 + $0x10] sm:$0xff]
        %v3004 = vld [vmem:[#allocation4 + $0x18] sm:$0xff]
        %v3005 = vld [vmem:[#allocation4 + $0x20] sm:$0xff]
        %v3006 = vld [vmem:[#allocation4 + $0x28] sm:$0xff]
        %v3007 = vpack.c.bf16 %v3004, %v3001
        %v3008 = vpack.c.bf16 %v3005, %v3002
        %v3009 = vpack.c.bf16 %v3006, %v3003
        %3013 = vrot.lane.b32.xlu0 %v3007, 74
        %v3014 = vpop.permute.xlu0 %3013
        %3015 = vrot.lane.b32.xlu0 %v3008, 74
        %v3016 = vpop.permute.xlu0 %3015
        %3017 = vrot.lane.b32.xlu0 %v3009, 74
        %v3018 = vpop.permute.xlu0 %3017
        %vm3019 = vcmask 605184
        %v3020 = vsel %vm3019, %v3014, %v3016
        %v3021 = vsel %vm3019, %v3016, %v3018
        %3024 = vst [vmem:[#allocation5 + $0xf0] sm:$0xff] %v3020
        %3025 = vst.msk [vmem:[#allocation5 + $0xf8] sm:$0xff] %vm575, %v3021
        %v3026 = vld [vmem:[#allocation4] sm:$0xff]
        %v3027 = vld [vmem:[#allocation4 + $0x8] sm:$0xff]
        %v3028 = vld [vmem:[#allocation4 + $0x10] sm:$0xff]
        %v3029 = vld [vmem:[#allocation4 + $0x18] sm:$0xff]
        %v3030 = vld [vmem:[#allocation4 + $0x20] sm:$0xff]
        %v3031 = vld [vmem:[#allocation4 + $0x28] sm:$0xff]
        %v3032 = vpack.c.bf16 %v3029, %v3026
        %v3033 = vpack.c.bf16 %v3030, %v3027
        %v3034 = vpack.c.bf16 %v3031, %v3028
        %3038 = vrot.lane.b32.xlu0 %v3032, 73
        %v3039 = vpop.permute.xlu0 %3038
        %3040 = vrot.lane.b32.xlu0 %v3033, 73
        %v3041 = vpop.permute.xlu0 %3040
        %3042 = vrot.lane.b32.xlu0 %v3034, 73
        %v3043 = vpop.permute.xlu0 %3042
        %vm3044 = vcmask 596992
        %v3045 = vsel %vm3044, %v3039, %v3041
        %v3046 = vsel %vm3044, %v3041, %v3043
        %3049 = vst [vmem:[#allocation5 + $0x100] sm:$0xff] %v3045
        %3050 = vst.msk [vmem:[#allocation5 + $0x108] sm:$0xff] %vm575, %v3046
        %v3051 = vld [vmem:[#allocation4] sm:$0xff]
        %v3052 = vld [vmem:[#allocation4 + $0x8] sm:$0xff]
        %v3053 = vld [vmem:[#allocation4 + $0x10] sm:$0xff]
        %v3054 = vld [vmem:[#allocation4 + $0x18] sm:$0xff]
        %v3055 = vld [vmem:[#allocation4 + $0x20] sm:$0xff]
        %v3056 = vld [vmem:[#allocation4 + $0x28] sm:$0xff]
        %v3057 = vpack.c.bf16 %v3054, %v3051
        %v3058 = vpack.c.bf16 %v3055, %v3052
        %v3059 = vpack.c.bf16 %v3056, %v3053
        %3063 = vrot.lane.b32.xlu0 %v3057, 72
        %v3064 = vpop.permute.xlu0 %3063
        %3065 = vrot.lane.b32.xlu0 %v3058, 72
        %v3066 = vpop.permute.xlu0 %3065
        %3067 = vrot.lane.b32.xlu0 %v3059, 72
        %v3068 = vpop.permute.xlu0 %3067
        %vm3069 = vcmask 588800
        %v3070 = vsel %vm3069, %v3064, %v3066
        %v3071 = vsel %vm3069, %v3066, %v3068
        %3074 = vst [vmem:[#allocation5 + $0x110] sm:$0xff] %v3070
        %3075 = vst.msk [vmem:[#allocation5 + $0x118] sm:$0xff] %vm575, %v3071
        %v3076 = vld [vmem:[#allocation4] sm:$0xff]
        %v3077 = vld [vmem:[#allocation4 + $0x8] sm:$0xff]
        %v3078 = vld [vmem:[#allocation4 + $0x10] sm:$0xff]
        %v3079 = vld [vmem:[#allocation4 + $0x18] sm:$0xff]
        %v3080 = vld [vmem:[#allocation4 + $0x20] sm:$0xff]
        %v3081 = vld [vmem:[#allocation4 + $0x28] sm:$0xff]
        %v3082 = vpack.c.bf16 %v3079, %v3076
        %v3083 = vpack.c.bf16 %v3080, %v3077
        %v3084 = vpack.c.bf16 %v3081, %v3078
        %3088 = vrot.lane.b32.xlu0 %v3082, 71
        %v3089 = vpop.permute.xlu0 %3088
        %3090 = vrot.lane.b32.xlu0 %v3083, 71
        %v3091 = vpop.permute.xlu0 %3090
        %3092 = vrot.lane.b32.xlu0 %v3084, 71
        %v3093 = vpop.permute.xlu0 %3092
        %vm3094 = vcmask 580608
        %v3095 = vsel %vm3094, %v3089, %v3091
        %v3096 = vsel %vm3094, %v3091, %v3093
        %3099 = vst [vmem:[#allocation5 + $0x120] sm:$0xff] %v3095
        %3100 = vst.msk [vmem:[#allocation5 + $0x128] sm:$0xff] %vm575, %v3096
        %v3101 = vld [vmem:[#allocation4] sm:$0xff]
        %v3102 = vld [vmem:[#allocation4 + $0x8] sm:$0xff]
        %v3103 = vld [vmem:[#allocation4 + $0x10] sm:$0xff]
        %v3104 = vld [vmem:[#allocation4 + $0x18] sm:$0xff]
        %v3105 = vld [vmem:[#allocation4 + $0x20] sm:$0xff]
        %v3106 = vld [vmem:[#allocation4 + $0x28] sm:$0xff]
        %v3107 = vpack.c.bf16 %v3104, %v3101
        %v3108 = vpack.c.bf16 %v3105, %v3102
        %v3109 = vpack.c.bf16 %v3106, %v3103
        %3113 = vrot.lane.b32.xlu0 %v3107, 70
        %v3114 = vpop.permute.xlu0 %3113
        %3115 = vrot.lane.b32.xlu0 %v3108, 70
        %v3116 = vpop.permute.xlu0 %3115
        %3117 = vrot.lane.b32.xlu0 %v3109, 70
        %v3118 = vpop.permute.xlu0 %3117
        %vm3119 = vcmask 572416
        %v3120 = vsel %vm3119, %v3114, %v3116
        %v3121 = vsel %vm3119, %v3116, %v3118
        %3124 = vst [vmem:[#allocation5 + $0x130] sm:$0xff] %v3120
        %3125 = vst.msk [vmem:[#allocation5 + $0x138] sm:$0xff] %vm575, %v3121
        %v3126 = vld [vmem:[#allocation4] sm:$0xff]
        %v3127 = vld [vmem:[#allocation4 + $0x8] sm:$0xff]
        %v3128 = vld [vmem:[#allocation4 + $0x10] sm:$0xff]
        %v3129 = vld [vmem:[#allocation4 + $0x18] sm:$0xff]
        %v3130 = vld [vmem:[#allocation4 + $0x20] sm:$0xff]
        %v3131 = vld [vmem:[#allocation4 + $0x28] sm:$0xff]
        %v3132 = vpack.c.bf16 %v3129, %v3126
        %v3133 = vpack.c.bf16 %v3130, %v3127
        %v3134 = vpack.c.bf16 %v3131, %v3128
        %3138 = vrot.lane.b32.xlu0 %v3132, 56
        %v3139 = vpop.permute.xlu0 %3138
        %3140 = vrot.lane.b32.xlu0 %v3133, 56
        %v3141 = vpop.permute.xlu0 %3140
        %3142 = vrot.lane.b32.xlu0 %v3134, 56
        %v3143 = vpop.permute.xlu0 %3142
        %vm3144 = vcmask 457728
        %v3145 = vsel %vm3144, %v3139, %v3141
        %v3146 = vsel %vm3144, %v3141, %v3143
        %3149 = vst [vmem:[#allocation5 + $0x140] sm:$0xff] %v3145
        %3150 = vst.msk [vmem:[#allocation5 + $0x148] sm:$0xff] %vm575, %v3146
        %v3151 = vld [vmem:[#allocation4] sm:$0xff]
        %v3152 = vld [vmem:[#allocation4 + $0x8] sm:$0xff]
        %v3153 = vld [vmem:[#allocation4 + $0x10] sm:$0xff]
        %v3154 = vld [vmem:[#allocation4 + $0x18] sm:$0xff]
        %v3155 = vld [vmem:[#allocation4 + $0x20] sm:$0xff]
        %v3156 = vld [vmem:[#allocation4 + $0x28] sm:$0xff]
        %v3157 = vpack.c.bf16 %v3154, %v3151
        %v3158 = vpack.c.bf16 %v3155, %v3152
        %v3159 = vpack.c.bf16 %v3156, %v3153
        %3163 = vrot.lane.b32.xlu0 %v3157, 55
        %v3164 = vpop.permute.xlu0 %3163
        %3165 = vrot.lane.b32.xlu0 %v3158, 55
        %v3166 = vpop.permute.xlu0 %3165
        %3167 = vrot.lane.b32.xlu0 %v3159, 55
        %v3168 = vpop.permute.xlu0 %3167
        %vm3169 = vcmask 449536
        %v3170 = vsel %vm3169, %v3164, %v3166
        %v3171 = vsel %vm3169, %v3166, %v3168
        %3174 = vst [vmem:[#allocation5 + $0x150] sm:$0xff] %v3170
        %3175 = vst.msk [vmem:[#allocation5 + $0x158] sm:$0xff] %vm575, %v3171
        %v3176 = vld [vmem:[#allocation4] sm:$0xff]
        %v3177 = vld [vmem:[#allocation4 + $0x8] sm:$0xff]
        %v3178 = vld [vmem:[#allocation4 + $0x10] sm:$0xff]
        %v3179 = vld [vmem:[#allocation4 + $0x18] sm:$0xff]
        %v3180 = vld [vmem:[#allocation4 + $0x20] sm:$0xff]
        %v3181 = vld [vmem:[#allocation4 + $0x28] sm:$0xff]
        %v3182 = vpack.c.bf16 %v3179, %v3176
        %v3183 = vpack.c.bf16 %v3180, %v3177
        %v3184 = vpack.c.bf16 %v3181, %v3178
        %3188 = vrot.lane.b32.xlu0 %v3182, 54
        %v3189 = vpop.permute.xlu0 %3188
        %3190 = vrot.lane.b32.xlu0 %v3183, 54
        %v3191 = vpop.permute.xlu0 %3190
        %3192 = vrot.lane.b32.xlu0 %v3184, 54
        %v3193 = vpop.permute.xlu0 %3192
        %vm3194 = vcmask 441344
        %v3195 = vsel %vm3194, %v3189, %v3191
        %v3196 = vsel %vm3194, %v3191, %v3193
        %3199 = vst [vmem:[#allocation5 + $0x160] sm:$0xff] %v3195
        %3200 = vst.msk [vmem:[#allocation5 + $0x168] sm:$0xff] %vm575, %v3196
        %v3201 = vld [vmem:[#allocation4] sm:$0xff]
        %v3202 = vld [vmem:[#allocation4 + $0x8] sm:$0xff]
        %v3203 = vld [vmem:[#allocation4 + $0x10] sm:$0xff]
        %v3204 = vld [vmem:[#allocation4 + $0x18] sm:$0xff]
        %v3205 = vld [vmem:[#allocation4 + $0x20] sm:$0xff]
        %v3206 = vld [vmem:[#allocation4 + $0x28] sm:$0xff]
        %v3207 = vpack.c.bf16 %v3204, %v3201
        %v3208 = vpack.c.bf16 %v3205, %v3202
        %v3209 = vpack.c.bf16 %v3206, %v3203
        %3213 = vrot.lane.b32.xlu0 %v3207, 53
        %v3214 = vpop.permute.xlu0 %3213
        %3215 = vrot.lane.b32.xlu0 %v3208, 53
        %v3216 = vpop.permute.xlu0 %3215
        %3217 = vrot.lane.b32.xlu0 %v3209, 53
        %v3218 = vpop.permute.xlu0 %3217
        %vm3219 = vcmask 433152
        %v3220 = vsel %vm3219, %v3214, %v3216
        %v3221 = vsel %vm3219, %v3216, %v3218
        %3224 = vst [vmem:[#allocation5 + $0x170] sm:$0xff] %v3220
        %3225 = vst.msk [vmem:[#allocation5 + $0x178] sm:$0xff] %vm575, %v3221
        %v3226 = vld [vmem:[#allocation4] sm:$0xff]
        %v3227 = vld [vmem:[#allocation4 + $0x8] sm:$0xff]
        %v3228 = vld [vmem:[#allocation4 + $0x10] sm:$0xff]
        %v3229 = vld [vmem:[#allocation4 + $0x18] sm:$0xff]
        %v3230 = vld [vmem:[#allocation4 + $0x20] sm:$0xff]
        %v3231 = vld [vmem:[#allocation4 + $0x28] sm:$0xff]
        %v3232 = vpack.c.bf16 %v3229, %v3226
        %v3233 = vpack.c.bf16 %v3230, %v3227
        %v3234 = vpack.c.bf16 %v3231, %v3228
        %3238 = vrot.lane.b32.xlu0 %v3232, 52
        %v3239 = vpop.permute.xlu0 %3238
        %3240 = vrot.lane.b32.xlu0 %v3233, 52
        %v3241 = vpop.permute.xlu0 %3240
        %3242 = vrot.lane.b32.xlu0 %v3234, 52
        %v3243 = vpop.permute.xlu0 %3242
        %vm3244 = vcmask 424960
        %v3245 = vsel %vm3244, %v3239, %v3241
        %v3246 = vsel %vm3244, %v3241, %v3243
        %3249 = vst [vmem:[#allocation5 + $0x180] sm:$0xff] %v3245
        %3250 = vst.msk [vmem:[#allocation5 + $0x188] sm:$0xff] %vm575, %v3246
        %v3251 = vld [vmem:[%s3] sm:$0xff]
        %v3252 = vld [vmem:[%s3 + $0x8] sm:$0xff]
        %v3253 = vld [vmem:[%s3 + $0x10] sm:$0xff]
        %v3254 = vld [vmem:[%s3 + $0x18] sm:$0xff]
        %v3255 = vld [vmem:[%s3 + $0x20] sm:$0xff]
        %v3256 = vld [vmem:[%s3 + $0x28] sm:$0xff]
        %v3257 = vld [vmem:[%s3 + $0x30] sm:$0xff]
        %v3258 = vld [vmem:[%s3 + $0x38] sm:$0xff]
        %v3259 = vld [vmem:[#allocation5] sm:$0xff]
        %v3260 = vld [vmem:[#allocation5 + $0x8] sm:$0xff]
        %v3261 = vld [vmem:[#allocation5 + $0x10] sm:$0xff]
        %v3262 = vld [vmem:[#allocation5 + $0x18] sm:$0xff]
        %v3263 = vld [vmem:[#allocation5 + $0x20] sm:$0xff]
        %v3264 = vld [vmem:[#allocation5 + $0x28] sm:$0xff]
        %v3265 = vld [vmem:[#allocation5 + $0x30] sm:$0xff]
        %v3266 = vld [vmem:[#allocation5 + $0x38] sm:$0xff]
        %v3267 = vld [vmem:[#allocation5 + $0x40] sm:$0xff]
        %v3268 = vld [vmem:[#allocation5 + $0x48] sm:$0xff]
        %v3269 = vld [vmem:[#allocation5 + $0x50] sm:$0xff]
        %v3270 = vld [vmem:[#allocation5 + $0x58] sm:$0xff]
        %v3271 = vld [vmem:[#allocation5 + $0x60] sm:$0xff]
        %v3272 = vld [vmem:[#allocation5 + $0x68] sm:$0xff]
        %v3273 = vld [vmem:[#allocation5 + $0x70] sm:$0xff]
        %v3274 = vld [vmem:[#allocation5 + $0x78] sm:$0xff]
        %v3275 = vld [vmem:[#allocation5 + $0x80] sm:$0xff]
        %v3276 = vld [vmem:[#allocation5 + $0x88] sm:$0xff]
        %v3277 = vld [vmem:[#allocation5 + $0x90] sm:$0xff]
        %v3278 = vld [vmem:[#allocation5 + $0x98] sm:$0xff]
        %v3279 = vld [vmem:[#allocation5 + $0xa0] sm:$0xff]
        %v3280 = vld [vmem:[#allocation5 + $0xa8] sm:$0xff]
        %v3281 = vld [vmem:[#allocation5 + $0xb0] sm:$0xff]
        %v3282 = vld [vmem:[#allocation5 + $0xb8] sm:$0xff]
        %v3283 = vld [vmem:[#allocation5 + $0xc0] sm:$0xff]
        %v3284 = vld [vmem:[#allocation5 + $0xc8] sm:$0xff]
        %v3285 = vld [vmem:[#allocation5 + $0xd0] sm:$0xff]
        %v3286 = vld [vmem:[#allocation5 + $0xd8] sm:$0xff]
        %v3287 = vld [vmem:[#allocation5 + $0xe0] sm:$0xff]
        %v3288 = vld [vmem:[#allocation5 + $0xe8] sm:$0xff]
        %v3289 = vld [vmem:[#allocation5 + $0xf0] sm:$0xff]
        %v3290 = vld [vmem:[#allocation5 + $0xf8] sm:$0xff]
        %v3291 = vld [vmem:[#allocation5 + $0x100] sm:$0xff]
        %v3292 = vld [vmem:[#allocation5 + $0x108] sm:$0xff]
        %v3293 = vld [vmem:[#allocation5 + $0x110] sm:$0xff]
        %v3294 = vld [vmem:[#allocation5 + $0x118] sm:$0xff]
        %v3295 = vld [vmem:[#allocation5 + $0x120] sm:$0xff]
        %v3296 = vld [vmem:[#allocation5 + $0x128] sm:$0xff]
        %v3297 = vld [vmem:[#allocation5 + $0x130] sm:$0xff]
        %v3298 = vld [vmem:[#allocation5 + $0x138] sm:$0xff]
        %v3299 = vld [vmem:[#allocation5 + $0x140] sm:$0xff]
        %v3300 = vld [vmem:[#allocation5 + $0x148] sm:$0xff]
        %v3301 = vld [vmem:[#allocation5 + $0x150] sm:$0xff]
        %v3302 = vld [vmem:[#allocation5 + $0x158] sm:$0xff]
        %v3303 = vld [vmem:[#allocation5 + $0x160] sm:$0xff]
        %v3304 = vld [vmem:[#allocation5 + $0x168] sm:$0xff]
        %v3305 = vld [vmem:[#allocation5 + $0x170] sm:$0xff]
        %v3306 = vld [vmem:[#allocation5 + $0x178] sm:$0xff]
        %v3307 = vld [vmem:[#allocation5 + $0x180] sm:$0xff]
        %v3308 = vld [vmem:[#allocation5 + $0x188] sm:$0xff]
        %v3309 = vld [vmem:[%s4] sm:$0xff]
        %v3310 = vld [vmem:[%s4 + $0x8] sm:$0xff]
        %v3311 = vld [vmem:[%s4 + $0x10] sm:$0xff]
        %v3312 = vld [vmem:[%s4 + $0x18] sm:$0xff]
        %3314 = vset.pattern.permute.xlu0 0
        %3315 = vperm.xlu0 %3314, %v3309
        %v3316 = vpop.permute.xlu0 %3315
        %3319 = vset.pattern.permute.xlu0 0
        %3320 = vperm.xlu0 %3319, %v3310
        %v3321 = vpop.permute.xlu0 %3320
        %3324 = vset.pattern.permute.xlu0 0
        %3325 = vperm.xlu0 %3324, %v3311
        %v3326 = vpop.permute.xlu0 %3325
        %3329 = vset.pattern.permute.xlu0 0
        %3330 = vperm.xlu0 %3329, %v3312
        %v3331 = vpop.permute.xlu0 %3330
        %v3341 = vunpack.c.l.b16 %v3251
        %v3342 = vunpack.c.h.b16 %v3251
        %v3343 = vunpack.c.l.b16 %v3252
        %v3344 = vunpack.c.h.b16 %v3252
        %v3345 = vunpack.c.l.b16 %v3253
        %v3346 = vunpack.c.h.b16 %v3253
        %v3347 = vunpack.c.l.b16 %v3254
        %v3348 = vunpack.c.h.b16 %v3254
        %v3349 = vunpack.c.l.b16 %v3255
        %v3350 = vunpack.c.h.b16 %v3255
        %v3351 = vunpack.c.l.b16 %v3256
        %v3352 = vunpack.c.h.b16 %v3256
        %v3353 = vunpack.c.l.b16 %v3257
        %v3354 = vunpack.c.h.b16 %v3257
        %v3355 = vunpack.c.l.b16 %v3258
        %v3356 = vunpack.c.h.b16 %v3258
        %v3357 = vpack.c.b16 %v3345, %v3341
        %v3358 = vpack.c.b16 %v3346, %v3342
        %v3359 = vpack.c.b16 %v3347, %v3343
        %v3360 = vpack.c.b16 %v3348, %v3344
        %v3361 = vpack.c.b16 %v3353, %v3349
        %v3362 = vpack.c.b16 %v3354, %v3350
        %v3363 = vpack.c.b16 %v3355, %v3351
        %v3364 = vpack.c.b16 %v3356, %v3352
        %vm3371 = vcmask 130048
        %v3373 = vsel %vm3371, %v3360, 0
        %v3376 = vsel %vm3371, %v3364, 0
        %3378 = vmatprep.subr.bf16.mxu0 %v3260
        %3379 = vmatpush1.bf16.msra.mxu0 %v3259
        %3380 = vmatprep.subr.bf16.mxu0 %v3262
        %3381 = vmatpush1.bf16.msra.mxu0 %v3261
        %3382 = vmatprep.subr.bf16.mxu0 %v3264
        %3383 = vmatpush1.bf16.msra.mxu0 %v3263
        %3384 = vmatprep.subr.bf16.mxu0 %v3266
        %3385 = vmatpush1.bf16.msra.mxu0 %v3265
        %3386 = vmatprep.subr.bf16.mxu0 %v3268
        %3387 = vmatpush1.bf16.msra.mxu0 %v3267
        %3388 = vmatprep.subr.bf16.mxu0 %v3270
        %3389 = vmatpush1.bf16.msra.mxu0 %v3269
        %3390 = vmatprep.subr.bf16.mxu0 %v3272
        %3391 = vmatpush1.bf16.msra.mxu0 %v3271
        %3392 = vmatprep.subr.bf16.mxu0 %v3274
        %3393 = vmatpush1.bf16.msra.mxu0 %v3273
        %3394 = vmatprep.subr.bf16.mxu0 %v3276
        %3395 = vmatpush1.bf16.msra.mxu0 %v3275
        %3396 = vmatprep.subr.bf16.mxu0 %v3278
        %3397 = vmatpush1.bf16.msra.mxu0 %v3277
        %3398 = vmatprep.subr.bf16.mxu0 %v3280
        %3399 = vmatpush1.bf16.msra.mxu0 %v3279
        %3400 = vmatprep.subr.bf16.mxu0 %v3282
        %3401 = vmatpush1.bf16.msra.mxu0 %v3281
        %3402 = vmatprep.subr.bf16.mxu0 %v3284
        %3403 = vmatpush1.bf16.msra.mxu0 %v3283
        %3404 = vmatprep.subr.bf16.mxu0 %v3286
        %3405 = vmatpush1.bf16.msra.mxu0 %v3285
        %3406 = vmatprep.subr.bf16.mxu0 %v3288
        %3407 = vmatpush1.bf16.msra.mxu0 %v3287
        %3408 = vmatprep.subr.bf16.mxu0 %v3290
        %3409 = vmatpush1.bf16.msra.mxu0 %v3289
        %3410 = vmatprep.mubr.bf16.mxu0 %v3358
        %3411 = vmatmul.mubr.bf16.gmra.mrb[0].mxu0 %v3357
        %v3412 = vpop.f32.mrb[0].mxu0
        %v3413 = vadd.f32 %v3316, %v3412
        %v3414 = vpop.f32.mrb[0].mxu0
        %v3415 = vadd.f32 %v3316, %v3414
        %v3416 = vpop.f32.mrb[0].mxu0
        %v3417 = vadd.f32 %v3321, %v3416
        %v3418 = vpop.f32.mrb[0].mxu0
        %v3419 = vadd.f32 %v3321, %v3418
        %3420 = vmatprep.mubr.bf16.mxu0 %v3362
        %3421 = vmatmul.mubr.bf16.gmra.mrb[0].mxu0 %v3361
        %v3422 = vpop.f32.mrb[0].mxu0
        %v3423 = vadd.f32 %v3326, %v3422
        %v3424 = vpop.f32.mrb[0].mxu0
        %v3425 = vadd.f32 %v3326, %v3424
        %v3426 = vpop.f32.mrb[0].mxu0
        %v3427 = vadd.f32 %v3331, %v3426
        %v3428 = vpop.f32.mrb[0].mxu0
        %v3429 = vadd.f32 %v3331, %v3428
        %3430 = vdwg.mxu0
        %3431 = vmatprep.subr.bf16.mxu0 %v3292
        %3432 = vmatpush1.bf16.msra.mxu0 %v3291
        %3433 = vmatprep.subr.bf16.mxu0 %v3294
        %3434 = vmatpush1.bf16.msra.mxu0 %v3293
        %3435 = vmatprep.subr.bf16.mxu0 %v3296
        %3436 = vmatpush1.bf16.msra.mxu0 %v3295
        %3437 = vmatprep.subr.bf16.mxu0 %v3298
        %3438 = vmatpush1.bf16.msra.mxu0 %v3297
        %3439 = vmatprep.subr.bf16.mxu0 %v3300
        %3440 = vmatpush1.bf16.msra.mxu0 %v3299
        %3441 = vmatprep.subr.bf16.mxu0 %v3302
        %3442 = vmatpush1.bf16.msra.mxu0 %v3301
        %3443 = vmatprep.subr.bf16.mxu0 %v3304
        %3444 = vmatpush1.bf16.msra.mxu0 %v3303
        %3445 = vmatprep.subr.bf16.mxu0 %v3306
        %3446 = vmatpush1.bf16.msra.mxu0 %v3305
        %3447 = vmatprep.subr.bf16.mxu0 %v3308
        %3448 = vmatpush1.bf16.msra.mxu0 %v3307
        %3449 = vmatprep.subr.bf16.mxu0 0
        %3450 = vmatpush1.bf16.msra.mxu0 0
        %3451 = vmatprep.subr.bf16.mxu0 0
        %3452 = vmatpush1.bf16.msra.mxu0 0
        %3453 = vmatprep.subr.bf16.mxu0 0
        %3454 = vmatpush1.bf16.msra.mxu0 0
        %3455 = vmatprep.subr.bf16.mxu0 0
        %3456 = vmatpush1.bf16.msra.mxu0 0
        %3457 = vmatprep.subr.bf16.mxu0 0
        %3458 = vmatpush1.bf16.msra.mxu0 0
        %3459 = vmatprep.subr.bf16.mxu0 0
        %3460 = vmatpush1.bf16.msra.mxu0 0
        %3461 = vmatprep.subr.bf16.mxu0 0
        %3462 = vmatpush1.bf16.msra.mxu0 0
        %3463 = vmatprep.mubr.bf16.mxu0 %v3373
        %3464 = vmatmul.mubr.bf16.gmra.mrb[0].mxu0 %v3359
        %v3465 = vpop.f32.mrb[0].mxu0
        %v3466 = vadd.f32 %v3413, %v3465
        %v3467 = vpop.f32.mrb[0].mxu0
        %v3468 = vadd.f32 %v3415, %v3467
        %v3469 = vpop.f32.mrb[0].mxu0
        %v3470 = vadd.f32 %v3417, %v3469
        %v3471 = vpop.f32.mrb[0].mxu0
        %v3472 = vadd.f32 %v3419, %v3471
        %3473 = vmatprep.mubr.bf16.mxu0 %v3376
        %3474 = vmatmul.mubr.bf16.gmra.mrb[0].mxu0 %v3363
        %v3475 = vpop.f32.mrb[0].mxu0
        %v3476 = vadd.f32 %v3423, %v3475
        %v3477 = vpop.f32.mrb[0].mxu0
        %v3478 = vadd.f32 %v3425, %v3477
        %v3479 = vpop.f32.mrb[0].mxu0
        %v3480 = vadd.f32 %v3427, %v3479
        %v3481 = vpop.f32.mrb[0].mxu0
        %v3482 = vadd.f32 %v3429, %v3481
        %3483 = vdwg.mxu0
        %v3484 = vmax.f32 %v3466, 0.0
        %v3485 = vmax.f32 %v3468, 0.0
        %v3486 = vmax.f32 %v3470, 0.0
        %v3487 = vmax.f32 %v3472, 0.0
        %v3488 = vmax.f32 %v3476, 0.0
        %v3489 = vmax.f32 %v3478, 0.0
        %v3490 = vmax.f32 %v3480, 0.0
        %v3491 = vmax.f32 %v3482, 0.0
        %3500 = vrot.lane.b32.xlu0 %v3484, 110
        %v3501 = vpop.permute.xlu0 %3500
        %3502 = vrot.lane.b32.xlu0 %v3485, 110
        %v3503 = vpop.permute.xlu0 %3502
        %3504 = vrot.lane.b32.xlu0 %v3486, 110
        %v3505 = vpop.permute.xlu0 %3504
        %3506 = vrot.lane.b32.xlu0 %v3487, 110
        %v3507 = vpop.permute.xlu0 %3506
        %3508 = vrot.lane.b32.xlu0 %v3488, 110
        %v3509 = vpop.permute.xlu0 %3508
        %3510 = vrot.lane.b32.xlu0 %v3489, 110
        %v3511 = vpop.permute.xlu0 %3510
        %3512 = vrot.lane.b32.xlu0 %v3490, 110
        %v3513 = vpop.permute.xlu0 %3512
        %3514 = vrot.lane.b32.xlu0 %v3491, 110
        %v3515 = vpop.permute.xlu0 %3514
        %vm3516 = vcmask 900096
        %v3517 = vsel %vm3516, %v3501, %v3503
        %v3518 = vsel %vm3516, %v3505, %v3507
        %v3519 = vsel %vm3516, %v3509, %v3511
        %v3520 = vsel %vm3516, %v3513, %v3515
        %v3529 = vmax.f32 %v3484, %v3517
        %v3530 = vmax.f32 %v3485, %v3503
        %v3531 = vmax.f32 %v3486, %v3518
        %v3532 = vmax.f32 %v3487, %v3507
        %v3533 = vmax.f32 %v3488, %v3519
        %v3534 = vmax.f32 %v3489, %v3511
        %v3535 = vmax.f32 %v3490, %v3520
        %v3536 = vmax.f32 %v3491, %v3515
        %3545 = vrot.lane.b32.xlu0 %v3529, 127
        %v3546 = vpop.permute.xlu0 %3545
        %3547 = vrot.lane.b32.xlu0 %v3530, 127
        %v3548 = vpop.permute.xlu0 %3547
        %3549 = vrot.lane.b32.xlu0 %v3531, 127
        %v3550 = vpop.permute.xlu0 %3549
        %3551 = vrot.lane.b32.xlu0 %v3532, 127
        %v3552 = vpop.permute.xlu0 %3551
        %3553 = vrot.lane.b32.xlu0 %v3533, 127
        %v3554 = vpop.permute.xlu0 %3553
        %3555 = vrot.lane.b32.xlu0 %v3534, 127
        %v3556 = vpop.permute.xlu0 %3555
        %3557 = vrot.lane.b32.xlu0 %v3535, 127
        %v3558 = vpop.permute.xlu0 %3557
        %3559 = vrot.lane.b32.xlu0 %v3536, 127
        %v3560 = vpop.permute.xlu0 %3559
        %v3561 = vsel %vm542, %v3546, %v3548
        %v3562 = vsel %vm542, %v3550, %v3552
        %v3563 = vsel %vm542, %v3554, %v3556
        %v3564 = vsel %vm542, %v3558, %v3560
        %v3573 = vmax.f32 %v3529, %v3561
        %v3574 = vmax.f32 %v3530, %v3548
        %v3575 = vmax.f32 %v3531, %v3562
        %v3576 = vmax.f32 %v3532, %v3552
        %v3577 = vmax.f32 %v3533, %v3563
        %v3578 = vmax.f32 %v3534, %v3556
        %v3579 = vmax.f32 %v3535, %v3564
        %v3580 = vmax.f32 %v3536, %v3560
        %v3581 = vpack.c.bf16 %v3575, %v3573
        %v3582 = vpack.c.bf16 %v3576, %v3574
        %v3583 = vpack.c.bf16 %v3579, %v3577
        %v3584 = vpack.c.bf16 %v3580, %v3578
        %v3585 = vld [vmem:[%s6] sm:$0xf]
        %v3586 = vld [vmem:[%s6 + $0x4] sm:$0xf]
        %v3587 = vld [vmem:[%s6 + $0x8] sm:$0xf]
        %v3588 = vld [vmem:[%s6 + $0xc] sm:$0xf]
        %v3589 = vld [vmem:[%s6 + $0x10] sm:$0xf]
        %v3590 = vld [vmem:[%s6 + $0x14] sm:$0xf]
        %v3591 = vld [vmem:[%s6 + $0x18] sm:$0xf]
        %v3592 = vld [vmem:[%s6 + $0x1c] sm:$0xf]
        %v3593 = vld [vmem:[%s6 + $0x20] sm:$0xf]
        %v3594 = vld [vmem:[%s6 + $0x24] sm:$0xf]
        %v3595 = vld [vmem:[%s6 + $0x28] sm:$0xf]
        %v3596 = vld [vmem:[%s6 + $0x2c] sm:$0xf]
        %v3597 = vld [vmem:[%s6 + $0x30] sm:$0xf]
        %v3598 = vld [vmem:[%s6 + $0x34] sm:$0xf]
        %v3599 = vld [vmem:[%s6 + $0x38] sm:$0xf]
        %v3600 = vld [vmem:[%s6 + $0x3c] sm:$0xf]
        %v3601 = vld [vmem:[%s6 + $0x40] sm:$0xf]
        %v3602 = vld [vmem:[%s6 + $0x44] sm:$0xf]
        %v3603 = vld [vmem:[%s6 + $0x48] sm:$0xf]
        %v3604 = vld [vmem:[%s6 + $0x4c] sm:$0xf]
        %v3605 = vld [vmem:[%s6 + $0x50] sm:$0xf]
        %v3606 = vld [vmem:[%s6 + $0x54] sm:$0xf]
        %v3607 = vld [vmem:[%s6 + $0x58] sm:$0xf]
        %v3608 = vld [vmem:[%s6 + $0x5c] sm:$0xf]
        %v3609 = vld [vmem:[%s6 + $0x60] sm:$0xf]
        %v3610 = vld [vmem:[%s6 + $0x64] sm:$0xf]
        %v3611 = vld [vmem:[%s6 + $0x68] sm:$0xf]
        %v3612 = vld [vmem:[%s6 + $0x6c] sm:$0xf]
        %v3613 = vld [vmem:[%s6 + $0x70] sm:$0xf]
        %v3614 = vld [vmem:[%s6 + $0x74] sm:$0x1]
        %v3645 = vunpack.c.l.b16 %v3585
        %v3646 = vunpack.c.l.b16 %v3586
        %v3647 = vunpack.c.l.b16 %v3587
        %v3648 = vunpack.c.l.b16 %v3588
        %v3649 = vunpack.c.l.b16 %v3589
        %v3650 = vunpack.c.l.b16 %v3590
        %v3651 = vunpack.c.l.b16 %v3591
        %v3652 = vunpack.c.l.b16 %v3592
        %v3653 = vunpack.c.l.b16 %v3593
        %v3654 = vunpack.c.l.b16 %v3594
        %v3655 = vunpack.c.l.b16 %v3595
        %v3656 = vunpack.c.l.b16 %v3596
        %v3657 = vunpack.c.l.b16 %v3597
        %v3658 = vunpack.c.l.b16 %v3598
        %v3659 = vunpack.c.l.b16 %v3599
        %v3660 = vunpack.c.l.b16 %v3600
        %v3661 = vunpack.c.l.b16 %v3601
        %v3662 = vunpack.c.l.b16 %v3602
        %v3663 = vunpack.c.l.b16 %v3603
        %v3664 = vunpack.c.l.b16 %v3604
        %v3665 = vunpack.c.l.b16 %v3605
        %v3666 = vunpack.c.l.b16 %v3606
        %v3667 = vunpack.c.l.b16 %v3607
        %v3668 = vunpack.c.l.b16 %v3608
        %v3669 = vunpack.c.l.b16 %v3609
        %v3670 = vunpack.c.l.b16 %v3610
        %v3671 = vunpack.c.l.b16 %v3611
        %v3672 = vunpack.c.l.b16 %v3612
        %v3673 = vunpack.c.l.b16 %v3613
        %v3674 = vunpack.c.l.b16 %v3614
        %v3675 = vpack.c.b16 %v3646, %v3645
        %v3676 = vpack.c.b16 %v3648, %v3647
        %v3677 = vpack.c.b16 %v3650, %v3649
        %v3678 = vpack.c.b16 %v3652, %v3651
        %v3679 = vpack.c.b16 %v3654, %v3653
        %v3680 = vpack.c.b16 %v3656, %v3655
        %v3681 = vpack.c.b16 %v3658, %v3657
        %v3682 = vpack.c.b16 %v3660, %v3659
        %v3683 = vpack.c.b16 %v3662, %v3661
        %v3684 = vpack.c.b16 %v3664, %v3663
        %v3685 = vpack.c.b16 %v3666, %v3665
        %v3686 = vpack.c.b16 %v3668, %v3667
        %v3687 = vpack.c.b16 %v3670, %v3669
        %v3688 = vpack.c.b16 %v3672, %v3671
        %v3689 = vpack.c.b16 %v3674, %v3673
        %vm3704 = vcmask 859136
        %v3706 = vsel %vm3704, %v3582, 0
        %v3709 = vsel %vm3704, %v3584, 0
        %v3712 = vand.u32 %v3689, %v858
        %3714 = vmatprep.subr.bf16.mxu0 0
        %3715 = vmatpush1.bf16.msra.mxu0 %v3675
        %3716 = vmatprep.subr.bf16.mxu0 0
        %3717 = vmatpush1.bf16.msra.mxu0 %v3676
        %3718 = vmatprep.subr.bf16.mxu0 0
        %3719 = vmatpush1.bf16.msra.mxu0 %v3677
        %3720 = vmatprep.subr.bf16.mxu0 0
        %3721 = vmatpush1.bf16.msra.mxu0 %v3678
        %3722 = vmatprep.subr.bf16.mxu0 0
        %3723 = vmatpush1.bf16.msra.mxu0 %v3679
        %3724 = vmatprep.subr.bf16.mxu0 0
        %3725 = vmatpush1.bf16.msra.mxu0 %v3680
        %3726 = vmatprep.subr.bf16.mxu0 0
        %3727 = vmatpush1.bf16.msra.mxu0 %v3681
        %3728 = vmatprep.subr.bf16.mxu0 0
        %3729 = vmatpush1.bf16.msra.mxu0 %v3682
        %3730 = vmatprep.subr.bf16.mxu0 0
        %3731 = vmatpush1.bf16.msra.mxu0 %v3683
        %3732 = vmatprep.subr.bf16.mxu0 0
        %3733 = vmatpush1.bf16.msra.mxu0 %v3684
        %3734 = vmatprep.subr.bf16.mxu0 0
        %3735 = vmatpush1.bf16.msra.mxu0 %v3685
        %3736 = vmatprep.subr.bf16.mxu0 0
        %3737 = vmatpush1.bf16.msra.mxu0 %v3686
        %3738 = vmatprep.subr.bf16.mxu0 0
        %3739 = vmatpush1.bf16.msra.mxu0 %v3687
        %3740 = vmatprep.subr.bf16.mxu0 0
        %3741 = vmatpush1.bf16.msra.mxu0 %v3688
        %3742 = vmatprep.subr.bf16.mxu0 0
        %3743 = vmatpush1.bf16.msra.mxu0 %v3712
        %3744 = vmatprep.subr.bf16.mxu0 0
        %3745 = vmatpush1.bf16.msra.mxu0 0
        %3746 = vmatprep.mubr.bf16.mxu0 %v3706
        %3747 = vmatmul.mubr.bf16.gmra.mrb[0].mxu0 %v3581
        %v3748 = vpop.f32.mrb[0].mxu0
        %v3749 = vadd.f32 0.0, %v3748
        %v3750 = vpop.f32.mrb[0].mxu0
        %v3751 = vpop.f32.mrb[0].mxu0
        %v3752 = vadd.f32 0.0, %v3751
        %v3753 = vpop.f32.mrb[0].mxu0
        %3754 = vmatprep.mubr.bf16.mxu0 %v3709
        %3755 = vmatmul.mubr.bf16.gmra.mrb[0].mxu0 %v3583
        %v3756 = vpop.f32.mrb[0].mxu0
        %v3757 = vadd.f32 0.0, %v3756
        %v3758 = vpop.f32.mrb[0].mxu0
        %v3759 = vpop.f32.mrb[0].mxu0
        %v3760 = vadd.f32 0.0, %v3759
        %v3761 = vpop.f32.mrb[0].mxu0
        %3762 = vdwg.mxu0
        %3763 = vst.msk [vmem:[#allocation6] sm:$0xff] %vm641, %v3749
        %3764 = vst.msk [vmem:[#allocation6 + $0x8] sm:$0xff] %vm641, %v3752
        %3765 = vst.msk [vmem:[#allocation6 + $0x10] sm:$0xff] %vm641, %v3757
        %3766 = vst.msk [vmem:[#allocation6 + $0x18] sm:$0xff] %vm641, %v3760
        %v3767 = vld [vmem:[#allocation6] sm:$0x1]
        %vm3768 = vcmp.lt.s32.totalorder %v329, 64
        %vm3769 = vmand %vm330, %vm3768
        %3770 = vst.msk [vmem:[#allocation7] sm:$0x1] %vm3769, %v3767
        %v3771 = vld [vmem:[#allocation6 + $0x1] sm:$0x1]
        %v3774 = vunpack.c.l.s4 1966171168
        %v3775 = vunpack.c.0.s8 %v3774
        %v3776 = vlaneseq
        %v3777 = vshrl.u32 %v3776, 7
        %v3778 = vsub.s32 %v3775, %v3777
        %v3779 = vrot.slane %v3771, %v3778
        %v3781 = vunpack.c.l.s4 1966171168
        %v3782 = vunpack.c.0.s8 %v3781
        %v3783 = vlaneseq
        %v3784 = vshrl.u32 %v3783, 7
        %v3785 = vsub.s32 %v3782, %v3784
        %v3786 = vrot.slane %v3779, %v3785
        %3787 = vrot.lane.b32.xlu0 %v3786, 64
        %v3788 = vpop.permute.xlu0 %3787
        %vm3790 = vcmp.ge.s32.totalorder %v329, 64
        %vm3791 = vcmp.lt.s32.totalorder %v329, 128
        %vm3792 = vmand %vm3790, %vm3791
        %3793 = vst.msk [vmem:[#allocation7] sm:$0x1] %vm3792, %v3788
        %v3794 = vld [vmem:[#allocation6 + $0x2] sm:$0x1]
        %3795 = vst.msk [vmem:[#allocation7 + $0x1] sm:$0x1] %vm3769, %v3794
        %v3796 = vld [vmem:[#allocation6 + $0x3] sm:$0x1]
        %v3799 = vunpack.c.l.s4 1966171168
        %v3800 = vunpack.c.0.s8 %v3799
        %v3801 = vlaneseq
        %v3802 = vshrl.u32 %v3801, 7
        %v3803 = vsub.s32 %v3800, %v3802
        %v3804 = vrot.slane %v3796, %v3803
        %v3806 = vunpack.c.l.s4 1966171168
        %v3807 = vunpack.c.0.s8 %v3806
        %v3808 = vlaneseq
        %v3809 = vshrl.u32 %v3808, 7
        %v3810 = vsub.s32 %v3807, %v3809
        %v3811 = vrot.slane %v3804, %v3810
        %3812 = vrot.lane.b32.xlu0 %v3811, 64
        %v3813 = vpop.permute.xlu0 %3812
        %3815 = vst.msk [vmem:[#allocation7 + $0x1] sm:$0x1] %vm3792, %v3813
        %v3816 = vld [vmem:[#allocation6 + $0x4] sm:$0x1]
        %3817 = vst.msk [vmem:[#allocation7 + $0x2] sm:$0x1] %vm3769, %v3816
        %v3818 = vld [vmem:[#allocation6 + $0x5] sm:$0x1]
        %v3821 = vunpack.c.l.s4 1966171168
        %v3822 = vunpack.c.0.s8 %v3821
        %v3823 = vlaneseq
        %v3824 = vshrl.u32 %v3823, 7
        %v3825 = vsub.s32 %v3822, %v3824
        %v3826 = vrot.slane %v3818, %v3825
        %v3828 = vunpack.c.l.s4 1966171168
        %v3829 = vunpack.c.0.s8 %v3828
        %v3830 = vlaneseq
        %v3831 = vshrl.u32 %v3830, 7
        %v3832 = vsub.s32 %v3829, %v3831
        %v3833 = vrot.slane %v3826, %v3832
        %3834 = vrot.lane.b32.xlu0 %v3833, 64
        %v3835 = vpop.permute.xlu0 %3834
        %3837 = vst.msk [vmem:[#allocation7 + $0x2] sm:$0x1] %vm3792, %v3835
        %v3838 = vld [vmem:[#allocation6 + $0x6] sm:$0x1]
        %3839 = vst.msk [vmem:[#allocation7 + $0x3] sm:$0x1] %vm3769, %v3838
        %v3840 = vld [vmem:[#allocation6 + $0x7] sm:$0x1]
        %v3843 = vunpack.c.l.s4 1966171168
        %v3844 = vunpack.c.0.s8 %v3843
        %v3845 = vlaneseq
        %v3846 = vshrl.u32 %v3845, 7
        %v3847 = vsub.s32 %v3844, %v3846
        %v3848 = vrot.slane %v3840, %v3847
        %v3850 = vunpack.c.l.s4 1966171168
        %v3851 = vunpack.c.0.s8 %v3850
        %v3852 = vlaneseq
        %v3853 = vshrl.u32 %v3852, 7
        %v3854 = vsub.s32 %v3851, %v3853
        %v3855 = vrot.slane %v3848, %v3854
        %3856 = vrot.lane.b32.xlu0 %v3855, 64
        %v3857 = vpop.permute.xlu0 %3856
        %3859 = vst.msk [vmem:[#allocation7 + $0x3] sm:$0x1] %vm3792, %v3857
        %v3860 = vld [vmem:[#allocation6 + $0x8] sm:$0x1]
        %3861 = vst.msk [vmem:[#allocation7 + $0x4] sm:$0x1] %vm3769, %v3860
        %v3862 = vld [vmem:[#allocation6 + $0x9] sm:$0x1]
        %v3865 = vunpack.c.l.s4 1966171168
        %v3866 = vunpack.c.0.s8 %v3865
        %v3867 = vlaneseq
        %v3868 = vshrl.u32 %v3867, 7
        %v3869 = vsub.s32 %v3866, %v3868
        %v3870 = vrot.slane %v3862, %v3869
        %v3872 = vunpack.c.l.s4 1966171168
        %v3873 = vunpack.c.0.s8 %v3872
        %v3874 = vlaneseq
        %v3875 = vshrl.u32 %v3874, 7
        %v3876 = vsub.s32 %v3873, %v3875
        %v3877 = vrot.slane %v3870, %v3876
        %3878 = vrot.lane.b32.xlu0 %v3877, 64
        %v3879 = vpop.permute.xlu0 %3878
        %3881 = vst.msk [vmem:[#allocation7 + $0x4] sm:$0x1] %vm3792, %v3879
        %v3882 = vld [vmem:[#allocation6 + $0xa] sm:$0x1]
        %3883 = vst.msk [vmem:[#allocation7 + $0x5] sm:$0x1] %vm3769, %v3882
        %v3884 = vld [vmem:[#allocation6 + $0xb] sm:$0x1]
        %v3887 = vunpack.c.l.s4 1966171168
        %v3888 = vunpack.c.0.s8 %v3887
        %v3889 = vlaneseq
        %v3890 = vshrl.u32 %v3889, 7
        %v3891 = vsub.s32 %v3888, %v3890
        %v3892 = vrot.slane %v3884, %v3891
        %v3894 = vunpack.c.l.s4 1966171168
        %v3895 = vunpack.c.0.s8 %v3894
        %v3896 = vlaneseq
        %v3897 = vshrl.u32 %v3896, 7
        %v3898 = vsub.s32 %v3895, %v3897
        %v3899 = vrot.slane %v3892, %v3898
        %3900 = vrot.lane.b32.xlu0 %v3899, 64
        %v3901 = vpop.permute.xlu0 %3900
        %3903 = vst.msk [vmem:[#allocation7 + $0x5] sm:$0x1] %vm3792, %v3901
        %v3904 = vld [vmem:[#allocation6 + $0xc] sm:$0x1]
        %3905 = vst.msk [vmem:[#allocation7 + $0x6] sm:$0x1] %vm3769, %v3904
        %v3906 = vld [vmem:[#allocation6 + $0xd] sm:$0x1]
        %v3909 = vunpack.c.l.s4 1966171168
        %v3910 = vunpack.c.0.s8 %v3909
        %v3911 = vlaneseq
        %v3912 = vshrl.u32 %v3911, 7
        %v3913 = vsub.s32 %v3910, %v3912
        %v3914 = vrot.slane %v3906, %v3913
        %v3916 = vunpack.c.l.s4 1966171168
        %v3917 = vunpack.c.0.s8 %v3916
        %v3918 = vlaneseq
        %v3919 = vshrl.u32 %v3918, 7
        %v3920 = vsub.s32 %v3917, %v3919
        %v3921 = vrot.slane %v3914, %v3920
        %3922 = vrot.lane.b32.xlu0 %v3921, 64
        %v3923 = vpop.permute.xlu0 %3922
        %3925 = vst.msk [vmem:[#allocation7 + $0x6] sm:$0x1] %vm3792, %v3923
        %v3926 = vld [vmem:[#allocation6 + $0xe] sm:$0x1]
        %3927 = vst.msk [vmem:[#allocation7 + $0x7] sm:$0x1] %vm3769, %v3926
        %v3928 = vld [vmem:[#allocation6 + $0xf] sm:$0x1]
        %v3931 = vunpack.c.l.s4 1966171168
        %v3932 = vunpack.c.0.s8 %v3931
        %v3933 = vlaneseq
        %v3934 = vshrl.u32 %v3933, 7
        %v3935 = vsub.s32 %v3932, %v3934
        %v3936 = vrot.slane %v3928, %v3935
        %v3938 = vunpack.c.l.s4 1966171168
        %v3939 = vunpack.c.0.s8 %v3938
        %v3940 = vlaneseq
        %v3941 = vshrl.u32 %v3940, 7
        %v3942 = vsub.s32 %v3939, %v3941
        %v3943 = vrot.slane %v3936, %v3942
        %3944 = vrot.lane.b32.xlu0 %v3943, 64
        %v3945 = vpop.permute.xlu0 %3944
        %3947 = vst.msk [vmem:[#allocation7 + $0x7] sm:$0x1] %vm3792, %v3945
        %v3948 = vld [vmem:[#allocation6 + $0x10] sm:$0x1]
        %3949 = vst.msk [vmem:[#allocation7 + $0x8] sm:$0x1] %vm3769, %v3948
        %v3950 = vld [vmem:[#allocation6 + $0x11] sm:$0x1]
        %v3953 = vunpack.c.l.s4 1966171168
        %v3954 = vunpack.c.0.s8 %v3953
        %v3955 = vlaneseq
        %v3956 = vshrl.u32 %v3955, 7
        %v3957 = vsub.s32 %v3954, %v3956
        %v3958 = vrot.slane %v3950, %v3957
        %v3960 = vunpack.c.l.s4 1966171168
        %v3961 = vunpack.c.0.s8 %v3960
        %v3962 = vlaneseq
        %v3963 = vshrl.u32 %v3962, 7
        %v3964 = vsub.s32 %v3961, %v3963
        %v3965 = vrot.slane %v3958, %v3964
        %3966 = vrot.lane.b32.xlu0 %v3965, 64
        %v3967 = vpop.permute.xlu0 %3966
        %3969 = vst.msk [vmem:[#allocation7 + $0x8] sm:$0x1] %vm3792, %v3967
        %v3970 = vld [vmem:[#allocation6 + $0x12] sm:$0x1]
        %3971 = vst.msk [vmem:[#allocation7 + $0x9] sm:$0x1] %vm3769, %v3970
        %v3972 = vld [vmem:[#allocation6 + $0x13] sm:$0x1]
        %v3975 = vunpack.c.l.s4 1966171168
        %v3976 = vunpack.c.0.s8 %v3975
        %v3977 = vlaneseq
        %v3978 = vshrl.u32 %v3977, 7
        %v3979 = vsub.s32 %v3976, %v3978
        %v3980 = vrot.slane %v3972, %v3979
        %v3982 = vunpack.c.l.s4 1966171168
        %v3983 = vunpack.c.0.s8 %v3982
        %v3984 = vlaneseq
        %v3985 = vshrl.u32 %v3984, 7
        %v3986 = vsub.s32 %v3983, %v3985
        %v3987 = vrot.slane %v3980, %v3986
        %3988 = vrot.lane.b32.xlu0 %v3987, 64
        %v3989 = vpop.permute.xlu0 %3988
        %3991 = vst.msk [vmem:[#allocation7 + $0x9] sm:$0x1] %vm3792, %v3989
        %v3992 = vld [vmem:[#allocation6 + $0x14] sm:$0x1]
        %3993 = vst.msk [vmem:[#allocation7 + $0xa] sm:$0x1] %vm3769, %v3992
        %v3994 = vld [vmem:[#allocation6 + $0x15] sm:$0x1]
        %v3997 = vunpack.c.l.s4 1966171168
        %v3998 = vunpack.c.0.s8 %v3997
        %v3999 = vlaneseq
        %v4000 = vshrl.u32 %v3999, 7
        %v4001 = vsub.s32 %v3998, %v4000
        %v4002 = vrot.slane %v3994, %v4001
        %v4004 = vunpack.c.l.s4 1966171168
        %v4005 = vunpack.c.0.s8 %v4004
        %v4006 = vlaneseq
        %v4007 = vshrl.u32 %v4006, 7
        %v4008 = vsub.s32 %v4005, %v4007
        %v4009 = vrot.slane %v4002, %v4008
        %4010 = vrot.lane.b32.xlu0 %v4009, 64
        %v4011 = vpop.permute.xlu0 %4010
        %4013 = vst.msk [vmem:[#allocation7 + $0xa] sm:$0x1] %vm3792, %v4011
        %v4014 = vld [vmem:[#allocation6 + $0x16] sm:$0x1]
        %4015 = vst.msk [vmem:[#allocation7 + $0xb] sm:$0x1] %vm3769, %v4014
        %v4016 = vld [vmem:[#allocation6 + $0x17] sm:$0x1]
        %v4019 = vunpack.c.l.s4 1966171168
        %v4020 = vunpack.c.0.s8 %v4019
        %v4021 = vlaneseq
        %v4022 = vshrl.u32 %v4021, 7
        %v4023 = vsub.s32 %v4020, %v4022
        %v4024 = vrot.slane %v4016, %v4023
        %v4026 = vunpack.c.l.s4 1966171168
        %v4027 = vunpack.c.0.s8 %v4026
        %v4028 = vlaneseq
        %v4029 = vshrl.u32 %v4028, 7
        %v4030 = vsub.s32 %v4027, %v4029
        %v4031 = vrot.slane %v4024, %v4030
        %4032 = vrot.lane.b32.xlu0 %v4031, 64
        %v4033 = vpop.permute.xlu0 %4032
        %4035 = vst.msk [vmem:[#allocation7 + $0xb] sm:$0x1] %vm3792, %v4033
        %v4036 = vld [vmem:[#allocation6 + $0x18] sm:$0x1]
        %4037 = vst.msk [vmem:[#allocation7 + $0xc] sm:$0x1] %vm3769, %v4036
        %v4038 = vld [vmem:[#allocation6 + $0x19] sm:$0x1]
        %v4041 = vunpack.c.l.s4 1966171168
        %v4042 = vunpack.c.0.s8 %v4041
        %v4043 = vlaneseq
        %v4044 = vshrl.u32 %v4043, 7
        %v4045 = vsub.s32 %v4042, %v4044
        %v4046 = vrot.slane %v4038, %v4045
        %v4048 = vunpack.c.l.s4 1966171168
        %v4049 = vunpack.c.0.s8 %v4048
        %v4050 = vlaneseq
        %v4051 = vshrl.u32 %v4050, 7
        %v4052 = vsub.s32 %v4049, %v4051
        %v4053 = vrot.slane %v4046, %v4052
        %4054 = vrot.lane.b32.xlu0 %v4053, 64
        %v4055 = vpop.permute.xlu0 %4054
        %4057 = vst.msk [vmem:[#allocation7 + $0xc] sm:$0x1] %vm3792, %v4055
        %v4058 = vld [vmem:[#allocation6 + $0x1a] sm:$0x1]
        %4059 = vst.msk [vmem:[#allocation7 + $0xd] sm:$0x1] %vm3769, %v4058
        %v4060 = vld [vmem:[#allocation6 + $0x1b] sm:$0x1]
        %v4063 = vunpack.c.l.s4 1966171168
        %v4064 = vunpack.c.0.s8 %v4063
        %v4065 = vlaneseq
        %v4066 = vshrl.u32 %v4065, 7
        %v4067 = vsub.s32 %v4064, %v4066
        %v4068 = vrot.slane %v4060, %v4067
        %v4070 = vunpack.c.l.s4 1966171168
        %v4071 = vunpack.c.0.s8 %v4070
        %v4072 = vlaneseq
        %v4073 = vshrl.u32 %v4072, 7
        %v4074 = vsub.s32 %v4071, %v4073
        %v4075 = vrot.slane %v4068, %v4074
        %4076 = vrot.lane.b32.xlu0 %v4075, 64
        %v4077 = vpop.permute.xlu0 %4076
        %4079 = vst.msk [vmem:[#allocation7 + $0xd] sm:$0x1] %vm3792, %v4077
        %v4080 = vld [vmem:[#allocation6 + $0x1c] sm:$0x1]
        %4081 = vst.msk [vmem:[#allocation7 + $0xe] sm:$0x1] %vm3769, %v4080
        %v4082 = vld [vmem:[#allocation6 + $0x1d] sm:$0x1]
        %v4085 = vunpack.c.l.s4 1966171168
        %v4086 = vunpack.c.0.s8 %v4085
        %v4087 = vlaneseq
        %v4088 = vshrl.u32 %v4087, 7
        %v4089 = vsub.s32 %v4086, %v4088
        %v4090 = vrot.slane %v4082, %v4089
        %v4092 = vunpack.c.l.s4 1966171168
        %v4093 = vunpack.c.0.s8 %v4092
        %v4094 = vlaneseq
        %v4095 = vshrl.u32 %v4094, 7
        %v4096 = vsub.s32 %v4093, %v4095
        %v4097 = vrot.slane %v4090, %v4096
        %4098 = vrot.lane.b32.xlu0 %v4097, 64
        %v4099 = vpop.permute.xlu0 %4098
        %4101 = vst.msk [vmem:[#allocation7 + $0xe] sm:$0x1] %vm3792, %v4099
        %v4102 = vld [vmem:[#allocation6 + $0x1e] sm:$0x1]
        %4103 = vst.msk [vmem:[#allocation7 + $0xf] sm:$0x1] %vm3769, %v4102
        %v4104 = vld [vmem:[#allocation6 + $0x1f] sm:$0x1]
        %v4107 = vunpack.c.l.s4 1966171168
        %v4108 = vunpack.c.0.s8 %v4107
        %v4109 = vlaneseq
        %v4110 = vshrl.u32 %v4109, 7
        %v4111 = vsub.s32 %v4108, %v4110
        %v4112 = vrot.slane %v4104, %v4111
        %v4114 = vunpack.c.l.s4 1966171168
        %v4115 = vunpack.c.0.s8 %v4114
        %v4116 = vlaneseq
        %v4117 = vshrl.u32 %v4116, 7
        %v4118 = vsub.s32 %v4115, %v4117
        %v4119 = vrot.slane %v4112, %v4118
        %4120 = vrot.lane.b32.xlu0 %v4119, 64
        %v4121 = vpop.permute.xlu0 %4120
        %4123 = vst.msk [vmem:[#allocation7 + $0xf] sm:$0x1] %vm3792, %v4121
        %v4124 = vld [vmem:[#allocation7] sm:$0xff]
        %v4125 = vld [vmem:[#allocation7 + $0x8] sm:$0xff]
        %v4128 = vlaneseq
        %v4129 = vshrl.u32 %v4128, 7
        %v4130 = vsub.s32 0, %v4129
        %v4131 = vrot.slane %v4124, %v4130
        %v4132 = vlaneseq
        %v4133 = vshrl.u32 %v4132, 7
        %v4134 = vsub.s32 1, %v4133
        %v4135 = vrot.slane %v4124, %v4134
        %v4136 = vlaneseq
        %v4137 = vshrl.u32 %v4136, 7
        %v4138 = vsub.s32 2, %v4137
        %v4139 = vrot.slane %v4124, %v4138
        %v4140 = vlaneseq
        %v4141 = vshrl.u32 %v4140, 7
        %v4142 = vsub.s32 3, %v4141
        %v4143 = vrot.slane %v4124, %v4142
        %v4144 = vlaneseq
        %v4145 = vshrl.u32 %v4144, 7
        %v4146 = vsub.s32 4, %v4145
        %v4147 = vrot.slane %v4124, %v4146
        %v4148 = vlaneseq
        %v4149 = vshrl.u32 %v4148, 7
        %v4150 = vsub.s32 5, %v4149
        %v4151 = vrot.slane %v4124, %v4150
        %v4152 = vlaneseq
        %v4153 = vshrl.u32 %v4152, 7
        %v4154 = vsub.s32 6, %v4153
        %v4155 = vrot.slane %v4124, %v4154
        %v4156 = vlaneseq
        %v4157 = vshrl.u32 %v4156, 7
        %v4158 = vsub.s32 7, %v4157
        %v4159 = vrot.slane %v4124, %v4158
        %v4160 = vlaneseq
        %v4161 = vshrl.u32 %v4160, 7
        %v4162 = vsub.s32 0, %v4161
        %v4163 = vrot.slane %v4125, %v4162
        %v4164 = vlaneseq
        %v4165 = vshrl.u32 %v4164, 7
        %v4166 = vsub.s32 1, %v4165
        %v4167 = vrot.slane %v4125, %v4166
        %v4168 = vlaneseq
        %v4169 = vshrl.u32 %v4168, 7
        %v4170 = vsub.s32 2, %v4169
        %v4171 = vrot.slane %v4125, %v4170
        %v4172 = vlaneseq
        %v4173 = vshrl.u32 %v4172, 7
        %v4174 = vsub.s32 3, %v4173
        %v4175 = vrot.slane %v4125, %v4174
        %v4176 = vlaneseq
        %v4177 = vshrl.u32 %v4176, 7
        %v4178 = vsub.s32 4, %v4177
        %v4179 = vrot.slane %v4125, %v4178
        %v4180 = vlaneseq
        %v4181 = vshrl.u32 %v4180, 7
        %v4182 = vsub.s32 5, %v4181
        %v4183 = vrot.slane %v4125, %v4182
        %v4184 = vlaneseq
        %v4185 = vshrl.u32 %v4184, 7
        %v4186 = vsub.s32 6, %v4185
        %v4187 = vrot.slane %v4125, %v4186
        %v4188 = vlaneseq
        %v4189 = vshrl.u32 %v4188, 7
        %v4190 = vsub.s32 7, %v4189
        %v4191 = vrot.slane %v4125, %v4190
        %v4208 = vpack.c.bf16 %v4131, %v4131
        %v4209 = vpack.c.bf16 %v4135, %v4135
        %v4210 = vpack.c.bf16 %v4139, %v4139
        %v4211 = vpack.c.bf16 %v4143, %v4143
        %v4212 = vpack.c.bf16 %v4147, %v4147
        %v4213 = vpack.c.bf16 %v4151, %v4151
        %v4214 = vpack.c.bf16 %v4155, %v4155
        %v4215 = vpack.c.bf16 %v4159, %v4159
        %v4216 = vpack.c.bf16 %v4163, %v4163
        %v4217 = vpack.c.bf16 %v4167, %v4167
        %v4218 = vpack.c.bf16 %v4171, %v4171
        %v4219 = vpack.c.bf16 %v4175, %v4175
        %v4220 = vpack.c.bf16 %v4179, %v4179
        %v4221 = vpack.c.bf16 %v4183, %v4183
        %v4222 = vpack.c.bf16 %v4187, %v4187
        %v4223 = vpack.c.bf16 %v4191, %v4191
        %v4224 = vld [vmem:[%s7] sm:$0xf]
        %v4225 = vld [vmem:[%s7 + $0x4] sm:$0xf]
        %v4226 = vld [vmem:[%s7 + $0x8] sm:$0xf]
        %v4227 = vld [vmem:[%s7 + $0xc] sm:$0xf]
        %v4228 = vld [vmem:[%s7 + $0x10] sm:$0xf]
        %v4229 = vld [vmem:[%s7 + $0x14] sm:$0xf]
        %v4230 = vld [vmem:[%s7 + $0x18] sm:$0xf]
        %v4231 = vld [vmem:[%s7 + $0x1c] sm:$0xf]
        %v4232 = vld [vmem:[%s7 + $0x20] sm:$0xf]
        %v4233 = vld [vmem:[%s7 + $0x24] sm:$0xf]
        %v4234 = vld [vmem:[%s7 + $0x28] sm:$0xf]
        %v4235 = vld [vmem:[%s7 + $0x2c] sm:$0xf]
        %v4236 = vld [vmem:[%s7 + $0x30] sm:$0xf]
        %v4237 = vld [vmem:[%s7 + $0x34] sm:$0xf]
        %v4238 = vld [vmem:[%s7 + $0x38] sm:$0xf]
        %v4239 = vld [vmem:[%s7 + $0x3c] sm:$0xf]
        %v4240 = vld [vmem:[%s7 + $0x40] sm:$0xf]
        %v4241 = vld [vmem:[%s7 + $0x44] sm:$0xf]
        %v4242 = vld [vmem:[%s7 + $0x48] sm:$0xf]
        %v4243 = vld [vmem:[%s7 + $0x4c] sm:$0xf]
        %v4244 = vld [vmem:[%s7 + $0x50] sm:$0xf]
        %v4245 = vld [vmem:[%s7 + $0x54] sm:$0xf]
        %v4246 = vld [vmem:[%s7 + $0x58] sm:$0xf]
        %v4247 = vld [vmem:[%s7 + $0x5c] sm:$0xf]
        %v4248 = vld [vmem:[%s7 + $0x60] sm:$0xf]
        %v4249 = vld [vmem:[%s7 + $0x64] sm:$0xf]
        %v4250 = vld [vmem:[%s7 + $0x68] sm:$0xf]
        %v4251 = vld [vmem:[%s7 + $0x6c] sm:$0xf]
        %v4252 = vld [vmem:[%s7 + $0x70] sm:$0xf]
        %v4253 = vld [vmem:[%s7 + $0x74] sm:$0xf]
        %v4254 = vld [vmem:[%s7 + $0x78] sm:$0xf]
        %v4255 = vld [vmem:[%s7 + $0x7c] sm:$0xf]
        %v4256 = vld [vmem:[%s7 + $0x80] sm:$0xf]
        %v4257 = vld [vmem:[%s7 + $0x84] sm:$0xf]
        %v4258 = vld [vmem:[%s7 + $0x88] sm:$0xf]
        %v4259 = vld [vmem:[%s7 + $0x8c] sm:$0xf]
        %v4260 = vld [vmem:[%s7 + $0x90] sm:$0xf]
        %v4261 = vld [vmem:[%s7 + $0x94] sm:$0xf]
        %v4262 = vld [vmem:[%s7 + $0x98] sm:$0xf]
        %v4263 = vld [vmem:[%s7 + $0x9c] sm:$0xf]
        %v4264 = vld [vmem:[%s7 + $0xa0] sm:$0xf]
        %v4265 = vld [vmem:[%s7 + $0xa4] sm:$0xf]
        %v4266 = vld [vmem:[%s7 + $0xa8] sm:$0xf]
        %v4267 = vld [vmem:[%s7 + $0xac] sm:$0xf]
        %v4268 = vld [vmem:[%s7 + $0xb0] sm:$0xf]
        %v4269 = vld [vmem:[%s7 + $0xb4] sm:$0xf]
        %v4270 = vld [vmem:[%s7 + $0xb8] sm:$0xf]
        %v4271 = vld [vmem:[%s7 + $0xbc] sm:$0xf]
        %v4272 = vld [vmem:[%s7 + $0xc0] sm:$0xf]
        %v4273 = vld [vmem:[%s7 + $0xc4] sm:$0xf]
        %v4274 = vld [vmem:[%s7 + $0xc8] sm:$0xf]
        %v4275 = vld [vmem:[%s7 + $0xcc] sm:$0xf]
        %v4276 = vld [vmem:[%s7 + $0xd0] sm:$0xf]
        %v4277 = vld [vmem:[%s7 + $0xd4] sm:$0xf]
        %v4278 = vld [vmem:[%s7 + $0xd8] sm:$0xf]
        %v4279 = vld [vmem:[%s7 + $0xdc] sm:$0xf]
        %v4280 = vld [vmem:[%s7 + $0xe0] sm:$0xf]
        %v4281 = vld [vmem:[%s7 + $0xe4] sm:$0xf]
        %v4282 = vld [vmem:[%s7 + $0xe8] sm:$0xf]
        %v4283 = vld [vmem:[%s7 + $0xec] sm:$0xf]
        %v4284 = vld [vmem:[%s7 + $0xf0] sm:$0xf]
        %v4285 = vld [vmem:[%s7 + $0xf4] sm:$0xf]
        %v4286 = vld [vmem:[%s7 + $0xf8] sm:$0xf]
        %v4287 = vld [vmem:[%s7 + $0xfc] sm:$0xf]
        %v4288 = vld [vmem:[%s7 + $0x100] sm:$0xf]
        %v4289 = vld [vmem:[%s7 + $0x104] sm:$0xf]
        %v4290 = vld [vmem:[%s7 + $0x108] sm:$0xf]
        %v4291 = vld [vmem:[%s7 + $0x10c] sm:$0xf]
        %v4292 = vld [vmem:[%s7 + $0x110] sm:$0xf]
        %v4293 = vld [vmem:[%s7 + $0x114] sm:$0xf]
        %v4294 = vld [vmem:[%s7 + $0x118] sm:$0xf]
        %v4295 = vld [vmem:[%s7 + $0x11c] sm:$0xf]
        %v4296 = vld [vmem:[%s7 + $0x120] sm:$0xf]
        %v4297 = vld [vmem:[%s7 + $0x124] sm:$0xf]
        %v4298 = vld [vmem:[%s7 + $0x128] sm:$0xf]
        %v4299 = vld [vmem:[%s7 + $0x12c] sm:$0xf]
        %v4300 = vld [vmem:[%s7 + $0x130] sm:$0xf]
        %v4301 = vld [vmem:[%s7 + $0x134] sm:$0xf]
        %v4302 = vld [vmem:[%s7 + $0x138] sm:$0xf]
        %v4303 = vld [vmem:[%s7 + $0x13c] sm:$0xf]
        %v4304 = vld [vmem:[%s7 + $0x140] sm:$0xf]
        %v4305 = vld [vmem:[%s7 + $0x144] sm:$0xf]
        %v4306 = vld [vmem:[%s7 + $0x148] sm:$0xf]
        %v4307 = vld [vmem:[%s7 + $0x14c] sm:$0xf]
        %v4308 = vld [vmem:[%s7 + $0x150] sm:$0xf]
        %v4309 = vld [vmem:[%s7 + $0x154] sm:$0xf]
        %v4310 = vld [vmem:[%s7 + $0x158] sm:$0xf]
        %v4311 = vld [vmem:[%s7 + $0x15c] sm:$0xf]
        %v4312 = vld [vmem:[%s7 + $0x160] sm:$0xf]
        %v4313 = vld [vmem:[%s7 + $0x164] sm:$0xf]
        %v4314 = vld [vmem:[%s7 + $0x168] sm:$0xf]
        %v4315 = vld [vmem:[%s7 + $0x16c] sm:$0xf]
        %v4316 = vld [vmem:[%s7 + $0x170] sm:$0xf]
        %v4317 = vld [vmem:[%s7 + $0x174] sm:$0xf]
        %v4318 = vld [vmem:[%s7 + $0x178] sm:$0xf]
        %v4319 = vld [vmem:[%s7 + $0x17c] sm:$0xf]
        %v4320 = vld [vmem:[%s7 + $0x180] sm:$0xf]
        %v4321 = vld [vmem:[%s7 + $0x184] sm:$0xf]
        %v4322 = vld [vmem:[%s7 + $0x188] sm:$0xf]
        %v4323 = vld [vmem:[%s7 + $0x18c] sm:$0xf]
        %v4324 = vld [vmem:[%s7 + $0x190] sm:$0xf]
        %v4325 = vld [vmem:[%s7 + $0x194] sm:$0xf]
        %v4326 = vld [vmem:[%s7 + $0x198] sm:$0xf]
        %v4327 = vld [vmem:[%s7 + $0x19c] sm:$0xf]
        %v4328 = vld [vmem:[%s7 + $0x1a0] sm:$0xf]
        %v4329 = vld [vmem:[%s7 + $0x1a4] sm:$0xf]
        %v4330 = vld [vmem:[%s7 + $0x1a8] sm:$0xf]
        %v4331 = vld [vmem:[%s7 + $0x1ac] sm:$0xf]
        %v4332 = vld [vmem:[%s7 + $0x1b0] sm:$0xf]
        %v4333 = vld [vmem:[%s7 + $0x1b4] sm:$0xf]
        %v4334 = vld [vmem:[%s7 + $0x1b8] sm:$0xf]
        %v4335 = vld [vmem:[%s7 + $0x1bc] sm:$0xf]
        %v4336 = vld [vmem:[%s7 + $0x1c0] sm:$0xf]
        %v4337 = vld [vmem:[%s7 + $0x1c4] sm:$0xf]
        %v4338 = vld [vmem:[%s7 + $0x1c8] sm:$0xf]
        %v4339 = vld [vmem:[%s7 + $0x1cc] sm:$0xf]
        %v4340 = vld [vmem:[%s7 + $0x1d0] sm:$0xf]
        %v4341 = vld [vmem:[%s7 + $0x1d4] sm:$0xf]
        %v4342 = vld [vmem:[%s7 + $0x1d8] sm:$0xf]
        %v4343 = vld [vmem:[%s7 + $0x1dc] sm:$0xf]
        %v4344 = vld [vmem:[%s7 + $0x1e0] sm:$0xf]
        %v4345 = vld [vmem:[%s7 + $0x1e4] sm:$0xf]
        %v4346 = vld [vmem:[%s7 + $0x1e8] sm:$0xf]
        %v4347 = vld [vmem:[%s7 + $0x1ec] sm:$0xf]
        %v4348 = vld [vmem:[%s7 + $0x1f0] sm:$0xf]
        %v4349 = vld [vmem:[%s7 + $0x1f4] sm:$0xf]
        %v4350 = vld [vmem:[%s7 + $0x1f8] sm:$0xf]
        %v4351 = vld [vmem:[%s7 + $0x1fc] sm:$0xf]
        %v4352 = vld [vmem:[%s7 + $0x200] sm:$0xf]
        %v4353 = vld [vmem:[%s7 + $0x204] sm:$0xf]
        %v4354 = vld [vmem:[%s7 + $0x208] sm:$0xf]
        %v4355 = vld [vmem:[%s7 + $0x20c] sm:$0xf]
        %v4356 = vld [vmem:[%s7 + $0x210] sm:$0xf]
        %v4357 = vld [vmem:[%s7 + $0x214] sm:$0xf]
        %v4358 = vld [vmem:[%s7 + $0x218] sm:$0xf]
        %v4359 = vld [vmem:[%s7 + $0x21c] sm:$0xf]
        %v4360 = vld [vmem:[%s7 + $0x220] sm:$0xf]
        %v4361 = vld [vmem:[%s7 + $0x224] sm:$0xf]
        %v4362 = vld [vmem:[%s7 + $0x228] sm:$0xf]
        %v4363 = vld [vmem:[%s7 + $0x22c] sm:$0xf]
        %v4364 = vld [vmem:[%s7 + $0x230] sm:$0xf]
        %v4365 = vld [vmem:[%s7 + $0x234] sm:$0xf]
        %v4366 = vld [vmem:[%s7 + $0x238] sm:$0xf]
        %v4367 = vld [vmem:[%s7 + $0x23c] sm:$0xf]
        %v4368 = vld [vmem:[%s7 + $0x240] sm:$0xf]
        %v4369 = vld [vmem:[%s7 + $0x244] sm:$0xf]
        %v4370 = vld [vmem:[%s7 + $0x248] sm:$0xf]
        %v4371 = vld [vmem:[%s7 + $0x24c] sm:$0xf]
        %v4372 = vld [vmem:[%s7 + $0x250] sm:$0xf]
        %v4373 = vld [vmem:[%s7 + $0x254] sm:$0xf]
        %v4374 = vld [vmem:[%s7 + $0x258] sm:$0xf]
        %v4375 = vld [vmem:[%s7 + $0x25c] sm:$0xf]
        %v4376 = vld [vmem:[%s7 + $0x260] sm:$0xf]
        %v4377 = vld [vmem:[%s7 + $0x264] sm:$0xf]
        %v4378 = vld [vmem:[%s7 + $0x268] sm:$0xf]
        %v4379 = vld [vmem:[%s7 + $0x26c] sm:$0xf]
        %v4380 = vld [vmem:[%s7 + $0x270] sm:$0xf]
        %v4381 = vld [vmem:[%s7 + $0x274] sm:$0xf]
        %v4382 = vld [vmem:[%s7 + $0x278] sm:$0xf]
        %v4383 = vld [vmem:[%s7 + $0x27c] sm:$0xf]
        %v4384 = vld [vmem:[%s7 + $0x280] sm:$0xf]
        %v4385 = vld [vmem:[%s7 + $0x284] sm:$0xf]
        %v4386 = vld [vmem:[%s7 + $0x288] sm:$0xf]
        %v4387 = vld [vmem:[%s7 + $0x28c] sm:$0xf]
        %v4388 = vld [vmem:[%s7 + $0x290] sm:$0xf]
        %v4389 = vld [vmem:[%s7 + $0x294] sm:$0xf]
        %v4390 = vld [vmem:[%s7 + $0x298] sm:$0xf]
        %v4391 = vld [vmem:[%s7 + $0x29c] sm:$0xf]
        %v4392 = vld [vmem:[%s7 + $0x2a0] sm:$0xf]
        %v4393 = vld [vmem:[%s7 + $0x2a4] sm:$0xf]
        %v4394 = vld [vmem:[%s7 + $0x2a8] sm:$0xf]
        %v4395 = vld [vmem:[%s7 + $0x2ac] sm:$0xf]
        %v4396 = vld [vmem:[%s7 + $0x2b0] sm:$0xf]
        %v4397 = vld [vmem:[%s7 + $0x2b4] sm:$0xf]
        %v4398 = vld [vmem:[%s7 + $0x2b8] sm:$0xf]
        %v4399 = vld [vmem:[%s7 + $0x2bc] sm:$0xf]
        %v4400 = vld [vmem:[%s7 + $0x2c0] sm:$0xf]
        %v4401 = vld [vmem:[%s7 + $0x2c4] sm:$0xf]
        %v4402 = vld [vmem:[%s7 + $0x2c8] sm:$0xf]
        %v4403 = vld [vmem:[%s7 + $0x2cc] sm:$0xf]
        %v4404 = vld [vmem:[%s7 + $0x2d0] sm:$0xf]
        %v4405 = vld [vmem:[%s7 + $0x2d4] sm:$0xf]
        %v4406 = vld [vmem:[%s7 + $0x2d8] sm:$0xf]
        %v4407 = vld [vmem:[%s7 + $0x2dc] sm:$0xf]
        %v4408 = vld [vmem:[%s7 + $0x2e0] sm:$0xf]
        %v4409 = vld [vmem:[%s7 + $0x2e4] sm:$0xf]
        %v4410 = vld [vmem:[%s7 + $0x2e8] sm:$0xf]
        %v4411 = vld [vmem:[%s7 + $0x2ec] sm:$0xf]
        %v4412 = vld [vmem:[%s7 + $0x2f0] sm:$0xf]
        %v4413 = vld [vmem:[%s7 + $0x2f4] sm:$0xf]
        %v4414 = vld [vmem:[%s7 + $0x2f8] sm:$0xf]
        %v4415 = vld [vmem:[%s7 + $0x2fc] sm:$0xf]
        %v4416 = vld [vmem:[%s7 + $0x300] sm:$0xf]
        %v4417 = vld [vmem:[%s7 + $0x304] sm:$0xf]
        %v4418 = vld [vmem:[%s7 + $0x308] sm:$0xf]
        %v4419 = vld [vmem:[%s7 + $0x30c] sm:$0xf]
        %v4420 = vld [vmem:[%s7 + $0x310] sm:$0xf]
        %v4421 = vld [vmem:[%s7 + $0x314] sm:$0xf]
        %v4422 = vld [vmem:[%s7 + $0x318] sm:$0xf]
        %v4423 = vld [vmem:[%s7 + $0x31c] sm:$0xf]
        %v4424 = vld [vmem:[%s7 + $0x320] sm:$0xf]
        %v4425 = vld [vmem:[%s7 + $0x324] sm:$0xf]
        %v4426 = vld [vmem:[%s7 + $0x328] sm:$0xf]
        %v4427 = vld [vmem:[%s7 + $0x32c] sm:$0xf]
        %v4428 = vld [vmem:[%s7 + $0x330] sm:$0xf]
        %v4429 = vld [vmem:[%s7 + $0x334] sm:$0xf]
        %v4430 = vld [vmem:[%s7 + $0x338] sm:$0xf]
        %v4431 = vld [vmem:[%s7 + $0x33c] sm:$0xf]
        %v4432 = vld [vmem:[%s7 + $0x340] sm:$0xf]
        %v4433 = vld [vmem:[%s7 + $0x344] sm:$0xf]
        %v4434 = vld [vmem:[%s7 + $0x348] sm:$0xf]
        %v4435 = vld [vmem:[%s7 + $0x34c] sm:$0xf]
        %v4436 = vld [vmem:[%s7 + $0x350] sm:$0xf]
        %v4437 = vld [vmem:[%s7 + $0x354] sm:$0xf]
        %v4438 = vld [vmem:[%s7 + $0x358] sm:$0xf]
        %v4439 = vld [vmem:[%s7 + $0x35c] sm:$0xf]
        %v4440 = vld [vmem:[%s7 + $0x360] sm:$0xf]
        %v4441 = vld [vmem:[%s7 + $0x364] sm:$0xf]
        %v4442 = vld [vmem:[%s7 + $0x368] sm:$0xf]
        %v4443 = vld [vmem:[%s7 + $0x36c] sm:$0xf]
        %v4444 = vld [vmem:[%s7 + $0x370] sm:$0xf]
        %v4445 = vld [vmem:[%s7 + $0x374] sm:$0xf]
        %v4446 = vld [vmem:[%s7 + $0x378] sm:$0xf]
        %v4447 = vld [vmem:[%s7 + $0x37c] sm:$0xf]
        %v4448 = vld [vmem:[%s7 + $0x380] sm:$0xf]
        %v4449 = vld [vmem:[%s7 + $0x384] sm:$0xf]
        %v4450 = vld [vmem:[%s7 + $0x388] sm:$0xf]
        %v4451 = vld [vmem:[%s7 + $0x38c] sm:$0xf]
        %v4452 = vld [vmem:[%s7 + $0x390] sm:$0xf]
        %v4453 = vld [vmem:[%s7 + $0x394] sm:$0xf]
        %v4454 = vld [vmem:[%s7 + $0x398] sm:$0xf]
        %v4455 = vld [vmem:[%s7 + $0x39c] sm:$0xf]
        %v4456 = vld [vmem:[%s7 + $0x3a0] sm:$0xf]
        %v4457 = vld [vmem:[%s7 + $0x3a4] sm:$0xf]
        %v4458 = vld [vmem:[%s7 + $0x3a8] sm:$0xf]
        %v4459 = vld [vmem:[%s7 + $0x3ac] sm:$0xf]
        %v4460 = vld [vmem:[%s7 + $0x3b0] sm:$0xf]
        %v4461 = vld [vmem:[%s7 + $0x3b4] sm:$0xf]
        %v4462 = vld [vmem:[%s7 + $0x3b8] sm:$0xf]
        %v4463 = vld [vmem:[%s7 + $0x3bc] sm:$0xf]
        %v4464 = vld [vmem:[%s7 + $0x3c0] sm:$0xf]
        %v4465 = vld [vmem:[%s7 + $0x3c4] sm:$0xf]
        %v4466 = vld [vmem:[%s7 + $0x3c8] sm:$0xf]
        %v4467 = vld [vmem:[%s7 + $0x3cc] sm:$0xf]
        %v4468 = vld [vmem:[%s7 + $0x3d0] sm:$0xf]
        %v4469 = vld [vmem:[%s7 + $0x3d4] sm:$0xf]
        %v4470 = vld [vmem:[%s7 + $0x3d8] sm:$0xf]
        %v4471 = vld [vmem:[%s7 + $0x3dc] sm:$0xf]
        %v4472 = vld [vmem:[%s7 + $0x3e0] sm:$0xf]
        %v4473 = vld [vmem:[%s7 + $0x3e4] sm:$0xf]
        %v4474 = vld [vmem:[%s7 + $0x3e8] sm:$0xf]
        %v4475 = vld [vmem:[%s7 + $0x3ec] sm:$0xf]
        %v4476 = vld [vmem:[%s7 + $0x3f0] sm:$0xf]
        %v4477 = vld [vmem:[%s7 + $0x3f4] sm:$0xf]
        %v4478 = vld [vmem:[%s7 + $0x3f8] sm:$0xf]
        %v4479 = vld [vmem:[%s7 + $0x3fc] sm:$0xf]
        %v4480 = vld [vmem:[%s8] sm:$0x1]
        %v4737 = vunpack.c.l.b16 %v4224
        %v4738 = vunpack.c.l.b16 %v4225
        %v4739 = vunpack.c.l.b16 %v4226
        %v4740 = vunpack.c.l.b16 %v4227
        %v4741 = vunpack.c.l.b16 %v4228
        %v4742 = vunpack.c.l.b16 %v4229
        %v4743 = vunpack.c.l.b16 %v4230
        %v4744 = vunpack.c.l.b16 %v4231
        %v4745 = vunpack.c.l.b16 %v4232
        %v4746 = vunpack.c.l.b16 %v4233
        %v4747 = vunpack.c.l.b16 %v4234
        %v4748 = vunpack.c.l.b16 %v4235
        %v4749 = vunpack.c.l.b16 %v4236
        %v4750 = vunpack.c.l.b16 %v4237
        %v4751 = vunpack.c.l.b16 %v4238
        %v4752 = vunpack.c.l.b16 %v4239
        %v4753 = vunpack.c.l.b16 %v4240
        %v4754 = vunpack.c.l.b16 %v4241
        %v4755 = vunpack.c.l.b16 %v4242
        %v4756 = vunpack.c.l.b16 %v4243
        %v4757 = vunpack.c.l.b16 %v4244
        %v4758 = vunpack.c.l.b16 %v4245
        %v4759 = vunpack.c.l.b16 %v4246
        %v4760 = vunpack.c.l.b16 %v4247
        %v4761 = vunpack.c.l.b16 %v4248
        %v4762 = vunpack.c.l.b16 %v4249
        %v4763 = vunpack.c.l.b16 %v4250
        %v4764 = vunpack.c.l.b16 %v4251
        %v4765 = vunpack.c.l.b16 %v4252
        %v4766 = vunpack.c.l.b16 %v4253
        %v4767 = vunpack.c.l.b16 %v4254
        %v4768 = vunpack.c.l.b16 %v4255
        %v4769 = vunpack.c.l.b16 %v4256
        %v4770 = vunpack.c.l.b16 %v4257
        %v4771 = vunpack.c.l.b16 %v4258
        %v4772 = vunpack.c.l.b16 %v4259
        %v4773 = vunpack.c.l.b16 %v4260
        %v4774 = vunpack.c.l.b16 %v4261
        %v4775 = vunpack.c.l.b16 %v4262
        %v4776 = vunpack.c.l.b16 %v4263
        %v4777 = vunpack.c.l.b16 %v4264
        %v4778 = vunpack.c.l.b16 %v4265
        %v4779 = vunpack.c.l.b16 %v4266
        %v4780 = vunpack.c.l.b16 %v4267
        %v4781 = vunpack.c.l.b16 %v4268
        %v4782 = vunpack.c.l.b16 %v4269
        %v4783 = vunpack.c.l.b16 %v4270
        %v4784 = vunpack.c.l.b16 %v4271
        %v4785 = vunpack.c.l.b16 %v4272
        %v4786 = vunpack.c.l.b16 %v4273
        %v4787 = vunpack.c.l.b16 %v4274
        %v4788 = vunpack.c.l.b16 %v4275
        %v4789 = vunpack.c.l.b16 %v4276
        %v4790 = vunpack.c.l.b16 %v4277
        %v4791 = vunpack.c.l.b16 %v4278
        %v4792 = vunpack.c.l.b16 %v4279
        %v4793 = vunpack.c.l.b16 %v4280
        %v4794 = vunpack.c.l.b16 %v4281
        %v4795 = vunpack.c.l.b16 %v4282
        %v4796 = vunpack.c.l.b16 %v4283
        %v4797 = vunpack.c.l.b16 %v4284
        %v4798 = vunpack.c.l.b16 %v4285
        %v4799 = vunpack.c.l.b16 %v4286
        %v4800 = vunpack.c.l.b16 %v4287
        %v4801 = vunpack.c.l.b16 %v4288
        %v4802 = vunpack.c.l.b16 %v4289
        %v4803 = vunpack.c.l.b16 %v4290
        %v4804 = vunpack.c.l.b16 %v4291
        %v4805 = vunpack.c.l.b16 %v4292
        %v4806 = vunpack.c.l.b16 %v4293
        %v4807 = vunpack.c.l.b16 %v4294
        %v4808 = vunpack.c.l.b16 %v4295
        %v4809 = vunpack.c.l.b16 %v4296
        %v4810 = vunpack.c.l.b16 %v4297
        %v4811 = vunpack.c.l.b16 %v4298
        %v4812 = vunpack.c.l.b16 %v4299
        %v4813 = vunpack.c.l.b16 %v4300
        %v4814 = vunpack.c.l.b16 %v4301
        %v4815 = vunpack.c.l.b16 %v4302
        %v4816 = vunpack.c.l.b16 %v4303
        %v4817 = vunpack.c.l.b16 %v4304
        %v4818 = vunpack.c.l.b16 %v4305
        %v4819 = vunpack.c.l.b16 %v4306
        %v4820 = vunpack.c.l.b16 %v4307
        %v4821 = vunpack.c.l.b16 %v4308
        %v4822 = vunpack.c.l.b16 %v4309
        %v4823 = vunpack.c.l.b16 %v4310
        %v4824 = vunpack.c.l.b16 %v4311
        %v4825 = vunpack.c.l.b16 %v4312
        %v4826 = vunpack.c.l.b16 %v4313
        %v4827 = vunpack.c.l.b16 %v4314
        %v4828 = vunpack.c.l.b16 %v4315
        %v4829 = vunpack.c.l.b16 %v4316
        %v4830 = vunpack.c.l.b16 %v4317
        %v4831 = vunpack.c.l.b16 %v4318
        %v4832 = vunpack.c.l.b16 %v4319
        %v4833 = vunpack.c.l.b16 %v4320
        %v4834 = vunpack.c.l.b16 %v4321
        %v4835 = vunpack.c.l.b16 %v4322
        %v4836 = vunpack.c.l.b16 %v4323
        %v4837 = vunpack.c.l.b16 %v4324
        %v4838 = vunpack.c.l.b16 %v4325
        %v4839 = vunpack.c.l.b16 %v4326
        %v4840 = vunpack.c.l.b16 %v4327
        %v4841 = vunpack.c.l.b16 %v4328
        %v4842 = vunpack.c.l.b16 %v4329
        %v4843 = vunpack.c.l.b16 %v4330
        %v4844 = vunpack.c.l.b16 %v4331
        %v4845 = vunpack.c.l.b16 %v4332
        %v4846 = vunpack.c.l.b16 %v4333
        %v4847 = vunpack.c.l.b16 %v4334
        %v4848 = vunpack.c.l.b16 %v4335
        %v4849 = vunpack.c.l.b16 %v4336
        %v4850 = vunpack.c.l.b16 %v4337
        %v4851 = vunpack.c.l.b16 %v4338
        %v4852 = vunpack.c.l.b16 %v4339
        %v4853 = vunpack.c.l.b16 %v4340
        %v4854 = vunpack.c.l.b16 %v4341
        %v4855 = vunpack.c.l.b16 %v4342
        %v4856 = vunpack.c.l.b16 %v4343
        %v4857 = vunpack.c.l.b16 %v4344
        %v4858 = vunpack.c.l.b16 %v4345
        %v4859 = vunpack.c.l.b16 %v4346
        %v4860 = vunpack.c.l.b16 %v4347
        %v4861 = vunpack.c.l.b16 %v4348
        %v4862 = vunpack.c.l.b16 %v4349
        %v4863 = vunpack.c.l.b16 %v4350
        %v4864 = vunpack.c.l.b16 %v4351
        %v4865 = vunpack.c.l.b16 %v4352
        %v4866 = vunpack.c.l.b16 %v4353
        %v4867 = vunpack.c.l.b16 %v4354
        %v4868 = vunpack.c.l.b16 %v4355
        %v4869 = vunpack.c.l.b16 %v4356
        %v4870 = vunpack.c.l.b16 %v4357
        %v4871 = vunpack.c.l.b16 %v4358
        %v4872 = vunpack.c.l.b16 %v4359
        %v4873 = vunpack.c.l.b16 %v4360
        %v4874 = vunpack.c.l.b16 %v4361
        %v4875 = vunpack.c.l.b16 %v4362
        %v4876 = vunpack.c.l.b16 %v4363
        %v4877 = vunpack.c.l.b16 %v4364
        %v4878 = vunpack.c.l.b16 %v4365
        %v4879 = vunpack.c.l.b16 %v4366
        %v4880 = vunpack.c.l.b16 %v4367
        %v4881 = vunpack.c.l.b16 %v4368
        %v4882 = vunpack.c.l.b16 %v4369
        %v4883 = vunpack.c.l.b16 %v4370
        %v4884 = vunpack.c.l.b16 %v4371
        %v4885 = vunpack.c.l.b16 %v4372
        %v4886 = vunpack.c.l.b16 %v4373
        %v4887 = vunpack.c.l.b16 %v4374
        %v4888 = vunpack.c.l.b16 %v4375
        %v4889 = vunpack.c.l.b16 %v4376
        %v4890 = vunpack.c.l.b16 %v4377
        %v4891 = vunpack.c.l.b16 %v4378
        %v4892 = vunpack.c.l.b16 %v4379
        %v4893 = vunpack.c.l.b16 %v4380
        %v4894 = vunpack.c.l.b16 %v4381
        %v4895 = vunpack.c.l.b16 %v4382
        %v4896 = vunpack.c.l.b16 %v4383
        %v4897 = vunpack.c.l.b16 %v4384
        %v4898 = vunpack.c.l.b16 %v4385
        %v4899 = vunpack.c.l.b16 %v4386
        %v4900 = vunpack.c.l.b16 %v4387
        %v4901 = vunpack.c.l.b16 %v4388
        %v4902 = vunpack.c.l.b16 %v4389
        %v4903 = vunpack.c.l.b16 %v4390
        %v4904 = vunpack.c.l.b16 %v4391
        %v4905 = vunpack.c.l.b16 %v4392
        %v4906 = vunpack.c.l.b16 %v4393
        %v4907 = vunpack.c.l.b16 %v4394
        %v4908 = vunpack.c.l.b16 %v4395
        %v4909 = vunpack.c.l.b16 %v4396
        %v4910 = vunpack.c.l.b16 %v4397
        %v4911 = vunpack.c.l.b16 %v4398
        %v4912 = vunpack.c.l.b16 %v4399
        %v4913 = vunpack.c.l.b16 %v4400
        %v4914 = vunpack.c.l.b16 %v4401
        %v4915 = vunpack.c.l.b16 %v4402
        %v4916 = vunpack.c.l.b16 %v4403
        %v4917 = vunpack.c.l.b16 %v4404
        %v4918 = vunpack.c.l.b16 %v4405
        %v4919 = vunpack.c.l.b16 %v4406
        %v4920 = vunpack.c.l.b16 %v4407
        %v4921 = vunpack.c.l.b16 %v4408
        %v4922 = vunpack.c.l.b16 %v4409
        %v4923 = vunpack.c.l.b16 %v4410
        %v4924 = vunpack.c.l.b16 %v4411
        %v4925 = vunpack.c.l.b16 %v4412
        %v4926 = vunpack.c.l.b16 %v4413
        %v4927 = vunpack.c.l.b16 %v4414
        %v4928 = vunpack.c.l.b16 %v4415
        %v4929 = vunpack.c.l.b16 %v4416
        %v4930 = vunpack.c.l.b16 %v4417
        %v4931 = vunpack.c.l.b16 %v4418
        %v4932 = vunpack.c.l.b16 %v4419
        %v4933 = vunpack.c.l.b16 %v4420
        %v4934 = vunpack.c.l.b16 %v4421
        %v4935 = vunpack.c.l.b16 %v4422
        %v4936 = vunpack.c.l.b16 %v4423
        %v4937 = vunpack.c.l.b16 %v4424
        %v4938 = vunpack.c.l.b16 %v4425
        %v4939 = vunpack.c.l.b16 %v4426
        %v4940 = vunpack.c.l.b16 %v4427
        %v4941 = vunpack.c.l.b16 %v4428
        %v4942 = vunpack.c.l.b16 %v4429
        %v4943 = vunpack.c.l.b16 %v4430
        %v4944 = vunpack.c.l.b16 %v4431
        %v4945 = vunpack.c.l.b16 %v4432
        %v4946 = vunpack.c.l.b16 %v4433
        %v4947 = vunpack.c.l.b16 %v4434
        %v4948 = vunpack.c.l.b16 %v4435
        %v4949 = vunpack.c.l.b16 %v4436
        %v4950 = vunpack.c.l.b16 %v4437
        %v4951 = vunpack.c.l.b16 %v4438
        %v4952 = vunpack.c.l.b16 %v4439
        %v4953 = vunpack.c.l.b16 %v4440
        %v4954 = vunpack.c.l.b16 %v4441
        %v4955 = vunpack.c.l.b16 %v4442
        %v4956 = vunpack.c.l.b16 %v4443
        %v4957 = vunpack.c.l.b16 %v4444
        %v4958 = vunpack.c.l.b16 %v4445
        %v4959 = vunpack.c.l.b16 %v4446
        %v4960 = vunpack.c.l.b16 %v4447
        %v4961 = vunpack.c.l.b16 %v4448
        %v4962 = vunpack.c.l.b16 %v4449
        %v4963 = vunpack.c.l.b16 %v4450
        %v4964 = vunpack.c.l.b16 %v4451
        %v4965 = vunpack.c.l.b16 %v4452
        %v4966 = vunpack.c.l.b16 %v4453
        %v4967 = vunpack.c.l.b16 %v4454
        %v4968 = vunpack.c.l.b16 %v4455
        %v4969 = vunpack.c.l.b16 %v4456
        %v4970 = vunpack.c.l.b16 %v4457
        %v4971 = vunpack.c.l.b16 %v4458
        %v4972 = vunpack.c.l.b16 %v4459
        %v4973 = vunpack.c.l.b16 %v4460
        %v4974 = vunpack.c.l.b16 %v4461
        %v4975 = vunpack.c.l.b16 %v4462
        %v4976 = vunpack.c.l.b16 %v4463
        %v4977 = vunpack.c.l.b16 %v4464
        %v4978 = vunpack.c.l.b16 %v4465
        %v4979 = vunpack.c.l.b16 %v4466
        %v4980 = vunpack.c.l.b16 %v4467
        %v4981 = vunpack.c.l.b16 %v4468
        %v4982 = vunpack.c.l.b16 %v4469
        %v4983 = vunpack.c.l.b16 %v4470
        %v4984 = vunpack.c.l.b16 %v4471
        %v4985 = vunpack.c.l.b16 %v4472
        %v4986 = vunpack.c.l.b16 %v4473
        %v4987 = vunpack.c.l.b16 %v4474
        %v4988 = vunpack.c.l.b16 %v4475
        %v4989 = vunpack.c.l.b16 %v4476
        %v4990 = vunpack.c.l.b16 %v4477
        %v4991 = vunpack.c.l.b16 %v4478
        %v4992 = vunpack.c.l.b16 %v4479
        %v4993 = vpack.c.b16 %v4738, %v4737
        %v4994 = vpack.c.b16 %v4740, %v4739
        %v4995 = vpack.c.b16 %v4742, %v4741
        %v4996 = vpack.c.b16 %v4744, %v4743
        %v4997 = vpack.c.b16 %v4746, %v4745
        %v4998 = vpack.c.b16 %v4748, %v4747
        %v4999 = vpack.c.b16 %v4750, %v4749
        %v5000 = vpack.c.b16 %v4752, %v4751
        %v5001 = vpack.c.b16 %v4754, %v4753
        %v5002 = vpack.c.b16 %v4756, %v4755
        %v5003 = vpack.c.b16 %v4758, %v4757
        %v5004 = vpack.c.b16 %v4760, %v4759
        %v5005 = vpack.c.b16 %v4762, %v4761
        %v5006 = vpack.c.b16 %v4764, %v4763
        %v5007 = vpack.c.b16 %v4766, %v4765
        %v5008 = vpack.c.b16 %v4768, %v4767
        %v5009 = vpack.c.b16 %v4770, %v4769
        %v5010 = vpack.c.b16 %v4772, %v4771
        %v5011 = vpack.c.b16 %v4774, %v4773
        %v5012 = vpack.c.b16 %v4776, %v4775
        %v5013 = vpack.c.b16 %v4778, %v4777
        %v5014 = vpack.c.b16 %v4780, %v4779
        %v5015 = vpack.c.b16 %v4782, %v4781
        %v5016 = vpack.c.b16 %v4784, %v4783
        %v5017 = vpack.c.b16 %v4786, %v4785
        %v5018 = vpack.c.b16 %v4788, %v4787
        %v5019 = vpack.c.b16 %v4790, %v4789
        %v5020 = vpack.c.b16 %v4792, %v4791
        %v5021 = vpack.c.b16 %v4794, %v4793
        %v5022 = vpack.c.b16 %v4796, %v4795
        %v5023 = vpack.c.b16 %v4798, %v4797
        %v5024 = vpack.c.b16 %v4800, %v4799
        %v5025 = vpack.c.b16 %v4802, %v4801
        %v5026 = vpack.c.b16 %v4804, %v4803
        %v5027 = vpack.c.b16 %v4806, %v4805
        %v5028 = vpack.c.b16 %v4808, %v4807
        %v5029 = vpack.c.b16 %v4810, %v4809
        %v5030 = vpack.c.b16 %v4812, %v4811
        %v5031 = vpack.c.b16 %v4814, %v4813
        %v5032 = vpack.c.b16 %v4816, %v4815
        %v5033 = vpack.c.b16 %v4818, %v4817
        %v5034 = vpack.c.b16 %v4820, %v4819
        %v5035 = vpack.c.b16 %v4822, %v4821
        %v5036 = vpack.c.b16 %v4824, %v4823
        %v5037 = vpack.c.b16 %v4826, %v4825
        %v5038 = vpack.c.b16 %v4828, %v4827
        %v5039 = vpack.c.b16 %v4830, %v4829
        %v5040 = vpack.c.b16 %v4832, %v4831
        %v5041 = vpack.c.b16 %v4834, %v4833
        %v5042 = vpack.c.b16 %v4836, %v4835
        %v5043 = vpack.c.b16 %v4838, %v4837
        %v5044 = vpack.c.b16 %v4840, %v4839
        %v5045 = vpack.c.b16 %v4842, %v4841
        %v5046 = vpack.c.b16 %v4844, %v4843
        %v5047 = vpack.c.b16 %v4846, %v4845
        %v5048 = vpack.c.b16 %v4848, %v4847
        %v5049 = vpack.c.b16 %v4850, %v4849
        %v5050 = vpack.c.b16 %v4852, %v4851
        %v5051 = vpack.c.b16 %v4854, %v4853
        %v5052 = vpack.c.b16 %v4856, %v4855
        %v5053 = vpack.c.b16 %v4858, %v4857
        %v5054 = vpack.c.b16 %v4860, %v4859
        %v5055 = vpack.c.b16 %v4862, %v4861
        %v5056 = vpack.c.b16 %v4864, %v4863
        %v5057 = vpack.c.b16 %v4866, %v4865
        %v5058 = vpack.c.b16 %v4868, %v4867
        %v5059 = vpack.c.b16 %v4870, %v4869
        %v5060 = vpack.c.b16 %v4872, %v4871
        %v5061 = vpack.c.b16 %v4874, %v4873
        %v5062 = vpack.c.b16 %v4876, %v4875
        %v5063 = vpack.c.b16 %v4878, %v4877
        %v5064 = vpack.c.b16 %v4880, %v4879
        %v5065 = vpack.c.b16 %v4882, %v4881
        %v5066 = vpack.c.b16 %v4884, %v4883
        %v5067 = vpack.c.b16 %v4886, %v4885
        %v5068 = vpack.c.b16 %v4888, %v4887
        %v5069 = vpack.c.b16 %v4890, %v4889
        %v5070 = vpack.c.b16 %v4892, %v4891
        %v5071 = vpack.c.b16 %v4894, %v4893
        %v5072 = vpack.c.b16 %v4896, %v4895
        %v5073 = vpack.c.b16 %v4898, %v4897
        %v5074 = vpack.c.b16 %v4900, %v4899
        %v5075 = vpack.c.b16 %v4902, %v4901
        %v5076 = vpack.c.b16 %v4904, %v4903
        %v5077 = vpack.c.b16 %v4906, %v4905
        %v5078 = vpack.c.b16 %v4908, %v4907
        %v5079 = vpack.c.b16 %v4910, %v4909
        %v5080 = vpack.c.b16 %v4912, %v4911
        %v5081 = vpack.c.b16 %v4914, %v4913
        %v5082 = vpack.c.b16 %v4916, %v4915
        %v5083 = vpack.c.b16 %v4918, %v4917
        %v5084 = vpack.c.b16 %v4920, %v4919
        %v5085 = vpack.c.b16 %v4922, %v4921
        %v5086 = vpack.c.b16 %v4924, %v4923
        %v5087 = vpack.c.b16 %v4926, %v4925
        %v5088 = vpack.c.b16 %v4928, %v4927
        %v5089 = vpack.c.b16 %v4930, %v4929
        %v5090 = vpack.c.b16 %v4932, %v4931
        %v5091 = vpack.c.b16 %v4934, %v4933
        %v5092 = vpack.c.b16 %v4936, %v4935
        %v5093 = vpack.c.b16 %v4938, %v4937
        %v5094 = vpack.c.b16 %v4940, %v4939
        %v5095 = vpack.c.b16 %v4942, %v4941
        %v5096 = vpack.c.b16 %v4944, %v4943
        %v5097 = vpack.c.b16 %v4946, %v4945
        %v5098 = vpack.c.b16 %v4948, %v4947
        %v5099 = vpack.c.b16 %v4950, %v4949
        %v5100 = vpack.c.b16 %v4952, %v4951
        %v5101 = vpack.c.b16 %v4954, %v4953
        %v5102 = vpack.c.b16 %v4956, %v4955
        %v5103 = vpack.c.b16 %v4958, %v4957
        %v5104 = vpack.c.b16 %v4960, %v4959
        %v5105 = vpack.c.b16 %v4962, %v4961
        %v5106 = vpack.c.b16 %v4964, %v4963
        %v5107 = vpack.c.b16 %v4966, %v4965
        %v5108 = vpack.c.b16 %v4968, %v4967
        %v5109 = vpack.c.b16 %v4970, %v4969
        %v5110 = vpack.c.b16 %v4972, %v4971
        %v5111 = vpack.c.b16 %v4974, %v4973
        %v5112 = vpack.c.b16 %v4976, %v4975
        %v5113 = vpack.c.b16 %v4978, %v4977
        %v5114 = vpack.c.b16 %v4980, %v4979
        %v5115 = vpack.c.b16 %v4982, %v4981
        %v5116 = vpack.c.b16 %v4984, %v4983
        %v5117 = vpack.c.b16 %v4986, %v4985
        %v5118 = vpack.c.b16 %v4988, %v4987
        %v5119 = vpack.c.b16 %v4990, %v4989
        %v5120 = vpack.c.b16 %v4992, %v4991
        %5249 = vmatprep.subr.bf16.mxu0 0
        %5250 = vmatpush1.bf16.msra.mxu0 %v4993
        %5251 = vmatprep.subr.bf16.mxu0 0
        %5252 = vmatpush1.bf16.msra.mxu0 %v4994
        %5253 = vmatprep.subr.bf16.mxu0 0
        %5254 = vmatpush1.bf16.msra.mxu0 %v4995
        %5255 = vmatprep.subr.bf16.mxu0 0
        %5256 = vmatpush1.bf16.msra.mxu0 %v4996
        %5257 = vmatprep.subr.bf16.mxu0 0
        %5258 = vmatpush1.bf16.msra.mxu0 %v4997
        %5259 = vmatprep.subr.bf16.mxu0 0
        %5260 = vmatpush1.bf16.msra.mxu0 %v4998
        %5261 = vmatprep.subr.bf16.mxu0 0
        %5262 = vmatpush1.bf16.msra.mxu0 %v4999
        %5263 = vmatprep.subr.bf16.mxu0 0
        %5264 = vmatpush1.bf16.msra.mxu0 %v5000
        %5265 = vmatprep.subr.bf16.mxu0 0
        %5266 = vmatpush1.bf16.msra.mxu0 %v5001
        %5267 = vmatprep.subr.bf16.mxu0 0
        %5268 = vmatpush1.bf16.msra.mxu0 %v5002
        %5269 = vmatprep.subr.bf16.mxu0 0
        %5270 = vmatpush1.bf16.msra.mxu0 %v5003
        %5271 = vmatprep.subr.bf16.mxu0 0
        %5272 = vmatpush1.bf16.msra.mxu0 %v5004
        %5273 = vmatprep.subr.bf16.mxu0 0
        %5274 = vmatpush1.bf16.msra.mxu0 %v5005
        %5275 = vmatprep.subr.bf16.mxu0 0
        %5276 = vmatpush1.bf16.msra.mxu0 %v5006
        %5277 = vmatprep.subr.bf16.mxu0 0
        %5278 = vmatpush1.bf16.msra.mxu0 %v5007
        %5279 = vmatprep.subr.bf16.mxu0 0
        %5280 = vmatpush1.bf16.msra.mxu0 %v5008
        %5281 = vmatprep.mubr.bf16.mxu0 %v4209
        %5282 = vmatmul.mubr.bf16.gmra.mrb[0].mxu0 %v4208
        %v5283 = vpop.f32.mrb[0].mxu0
        %v5284 = vadd.f32 %v4480, %v5283
        %v5285 = vpop.f32.mrb[0].mxu0
        %v5286 = vpop.f32.mrb[0].mxu0
        %v5287 = vpop.f32.mrb[0].mxu0
        %5288 = vdwg.mxu0
        %5289 = vmatprep.subr.bf16.mxu0 0
        %5290 = vmatpush1.bf16.msra.mxu0 %v5009
        %5291 = vmatprep.subr.bf16.mxu0 0
        %5292 = vmatpush1.bf16.msra.mxu0 %v5010
        %5293 = vmatprep.subr.bf16.mxu0 0
        %5294 = vmatpush1.bf16.msra.mxu0 %v5011
        %5295 = vmatprep.subr.bf16.mxu0 0
        %5296 = vmatpush1.bf16.msra.mxu0 %v5012
        %5297 = vmatprep.subr.bf16.mxu0 0
        %5298 = vmatpush1.bf16.msra.mxu0 %v5013
        %5299 = vmatprep.subr.bf16.mxu0 0
        %5300 = vmatpush1.bf16.msra.mxu0 %v5014
        %5301 = vmatprep.subr.bf16.mxu0 0
        %5302 = vmatpush1.bf16.msra.mxu0 %v5015
        %5303 = vmatprep.subr.bf16.mxu0 0
        %5304 = vmatpush1.bf16.msra.mxu0 %v5016
        %5305 = vmatprep.subr.bf16.mxu0 0
        %5306 = vmatpush1.bf16.msra.mxu0 %v5017
        %5307 = vmatprep.subr.bf16.mxu0 0
        %5308 = vmatpush1.bf16.msra.mxu0 %v5018
        %5309 = vmatprep.subr.bf16.mxu0 0
        %5310 = vmatpush1.bf16.msra.mxu0 %v5019
        %5311 = vmatprep.subr.bf16.mxu0 0
        %5312 = vmatpush1.bf16.msra.mxu0 %v5020
        %5313 = vmatprep.subr.bf16.mxu0 0
        %5314 = vmatpush1.bf16.msra.mxu0 %v5021
        %5315 = vmatprep.subr.bf16.mxu0 0
        %5316 = vmatpush1.bf16.msra.mxu0 %v5022
        %5317 = vmatprep.subr.bf16.mxu0 0
        %5318 = vmatpush1.bf16.msra.mxu0 %v5023
        %5319 = vmatprep.subr.bf16.mxu0 0
        %5320 = vmatpush1.bf16.msra.mxu0 %v5024
        %5321 = vmatprep.mubr.bf16.mxu0 %v4211
        %5322 = vmatmul.mubr.bf16.gmra.mrb[0].mxu0 %v4210
        %v5323 = vpop.f32.mrb[0].mxu0
        %v5324 = vadd.f32 %v5284, %v5323
        %v5325 = vpop.f32.mrb[0].mxu0
        %v5326 = vpop.f32.mrb[0].mxu0
        %v5327 = vpop.f32.mrb[0].mxu0
        %5328 = vdwg.mxu0
        %5329 = vmatprep.subr.bf16.mxu0 0
        %5330 = vmatpush1.bf16.msra.mxu0 %v5025
        %5331 = vmatprep.subr.bf16.mxu0 0
        %5332 = vmatpush1.bf16.msra.mxu0 %v5026
        %5333 = vmatprep.subr.bf16.mxu0 0
        %5334 = vmatpush1.bf16.msra.mxu0 %v5027
        %5335 = vmatprep.subr.bf16.mxu0 0
        %5336 = vmatpush1.bf16.msra.mxu0 %v5028
        %5337 = vmatprep.subr.bf16.mxu0 0
        %5338 = vmatpush1.bf16.msra.mxu0 %v5029
        %5339 = vmatprep.subr.bf16.mxu0 0
        %5340 = vmatpush1.bf16.msra.mxu0 %v5030
        %5341 = vmatprep.subr.bf16.mxu0 0
        %5342 = vmatpush1.bf16.msra.mxu0 %v5031
        %5343 = vmatprep.subr.bf16.mxu0 0
        %5344 = vmatpush1.bf16.msra.mxu0 %v5032
        %5345 = vmatprep.subr.bf16.mxu0 0
        %5346 = vmatpush1.bf16.msra.mxu0 %v5033
        %5347 = vmatprep.subr.bf16.mxu0 0
        %5348 = vmatpush1.bf16.msra.mxu0 %v5034
        %5349 = vmatprep.subr.bf16.mxu0 0
        %5350 = vmatpush1.bf16.msra.mxu0 %v5035
        %5351 = vmatprep.subr.bf16.mxu0 0
        %5352 = vmatpush1.bf16.msra.mxu0 %v5036
        %5353 = vmatprep.subr.bf16.mxu0 0
        %5354 = vmatpush1.bf16.msra.mxu0 %v5037
        %5355 = vmatprep.subr.bf16.mxu0 0
        %5356 = vmatpush1.bf16.msra.mxu0 %v5038
        %5357 = vmatprep.subr.bf16.mxu0 0
        %5358 = vmatpush1.bf16.msra.mxu0 %v5039
        %5359 = vmatprep.subr.bf16.mxu0 0
        %5360 = vmatpush1.bf16.msra.mxu0 %v5040
        %5361 = vmatprep.mubr.bf16.mxu0 %v4213
        %5362 = vmatmul.mubr.bf16.gmra.mrb[0].mxu0 %v4212
        %v5363 = vpop.f32.mrb[0].mxu0
        %v5364 = vadd.f32 %v5324, %v5363
        %v5365 = vpop.f32.mrb[0].mxu0
        %v5366 = vpop.f32.mrb[0].mxu0
        %v5367 = vpop.f32.mrb[0].mxu0
        %5368 = vdwg.mxu0
        %5369 = vmatprep.subr.bf16.mxu0 0
        %5370 = vmatpush1.bf16.msra.mxu0 %v5041
        %5371 = vmatprep.subr.bf16.mxu0 0
        %5372 = vmatpush1.bf16.msra.mxu0 %v5042
        %5373 = vmatprep.subr.bf16.mxu0 0
        %5374 = vmatpush1.bf16.msra.mxu0 %v5043
        %5375 = vmatprep.subr.bf16.mxu0 0
        %5376 = vmatpush1.bf16.msra.mxu0 %v5044
        %5377 = vmatprep.subr.bf16.mxu0 0
        %5378 = vmatpush1.bf16.msra.mxu0 %v5045
        %5379 = vmatprep.subr.bf16.mxu0 0
        %5380 = vmatpush1.bf16.msra.mxu0 %v5046
        %5381 = vmatprep.subr.bf16.mxu0 0
        %5382 = vmatpush1.bf16.msra.mxu0 %v5047
        %5383 = vmatprep.subr.bf16.mxu0 0
        %5384 = vmatpush1.bf16.msra.mxu0 %v5048
        %5385 = vmatprep.subr.bf16.mxu0 0
        %5386 = vmatpush1.bf16.msra.mxu0 %v5049
        %5387 = vmatprep.subr.bf16.mxu0 0
        %5388 = vmatpush1.bf16.msra.mxu0 %v5050
        %5389 = vmatprep.subr.bf16.mxu0 0
        %5390 = vmatpush1.bf16.msra.mxu0 %v5051
        %5391 = vmatprep.subr.bf16.mxu0 0
        %5392 = vmatpush1.bf16.msra.mxu0 %v5052
        %5393 = vmatprep.subr.bf16.mxu0 0
        %5394 = vmatpush1.bf16.msra.mxu0 %v5053
        %5395 = vmatprep.subr.bf16.mxu0 0
        %5396 = vmatpush1.bf16.msra.mxu0 %v5054
        %5397 = vmatprep.subr.bf16.mxu0 0
        %5398 = vmatpush1.bf16.msra.mxu0 %v5055
        %5399 = vmatprep.subr.bf16.mxu0 0
        %5400 = vmatpush1.bf16.msra.mxu0 %v5056
        %5401 = vmatprep.mubr.bf16.mxu0 %v4215
        %5402 = vmatmul.mubr.bf16.gmra.mrb[0].mxu0 %v4214
        %v5403 = vpop.f32.mrb[0].mxu0
        %v5404 = vadd.f32 %v5364, %v5403
        %v5405 = vpop.f32.mrb[0].mxu0
        %v5406 = vpop.f32.mrb[0].mxu0
        %v5407 = vpop.f32.mrb[0].mxu0
        %5408 = vdwg.mxu0
        %5409 = vmatprep.subr.bf16.mxu0 0
        %5410 = vmatpush1.bf16.msra.mxu0 %v5057
        %5411 = vmatprep.subr.bf16.mxu0 0
        %5412 = vmatpush1.bf16.msra.mxu0 %v5058
        %5413 = vmatprep.subr.bf16.mxu0 0
        %5414 = vmatpush1.bf16.msra.mxu0 %v5059
        %5415 = vmatprep.subr.bf16.mxu0 0
        %5416 = vmatpush1.bf16.msra.mxu0 %v5060
        %5417 = vmatprep.subr.bf16.mxu0 0
        %5418 = vmatpush1.bf16.msra.mxu0 %v5061
        %5419 = vmatprep.subr.bf16.mxu0 0
        %5420 = vmatpush1.bf16.msra.mxu0 %v5062
        %5421 = vmatprep.subr.bf16.mxu0 0
        %5422 = vmatpush1.bf16.msra.mxu0 %v5063
        %5423 = vmatprep.subr.bf16.mxu0 0
        %5424 = vmatpush1.bf16.msra.mxu0 %v5064
        %5425 = vmatprep.subr.bf16.mxu0 0
        %5426 = vmatpush1.bf16.msra.mxu0 %v5065
        %5427 = vmatprep.subr.bf16.mxu0 0
        %5428 = vmatpush1.bf16.msra.mxu0 %v5066
        %5429 = vmatprep.subr.bf16.mxu0 0
        %5430 = vmatpush1.bf16.msra.mxu0 %v5067
        %5431 = vmatprep.subr.bf16.mxu0 0
        %5432 = vmatpush1.bf16.msra.mxu0 %v5068
        %5433 = vmatprep.subr.bf16.mxu0 0
        %5434 = vmatpush1.bf16.msra.mxu0 %v5069
        %5435 = vmatprep.subr.bf16.mxu0 0
        %5436 = vmatpush1.bf16.msra.mxu0 %v5070
        %5437 = vmatprep.subr.bf16.mxu0 0
        %5438 = vmatpush1.bf16.msra.mxu0 %v5071
        %5439 = vmatprep.subr.bf16.mxu0 0
        %5440 = vmatpush1.bf16.msra.mxu0 %v5072
        %5441 = vmatprep.mubr.bf16.mxu0 %v4217
        %5442 = vmatmul.mubr.bf16.gmra.mrb[0].mxu0 %v4216
        %v5443 = vpop.f32.mrb[0].mxu0
        %v5444 = vadd.f32 %v5404, %v5443
        %v5445 = vpop.f32.mrb[0].mxu0
        %v5446 = vpop.f32.mrb[0].mxu0
        %v5447 = vpop.f32.mrb[0].mxu0
        %5448 = vdwg.mxu0
        %5449 = vmatprep.subr.bf16.mxu0 0
        %5450 = vmatpush1.bf16.msra.mxu0 %v5073
        %5451 = vmatprep.subr.bf16.mxu0 0
        %5452 = vmatpush1.bf16.msra.mxu0 %v5074
        %5453 = vmatprep.subr.bf16.mxu0 0
        %5454 = vmatpush1.bf16.msra.mxu0 %v5075
        %5455 = vmatprep.subr.bf16.mxu0 0
        %5456 = vmatpush1.bf16.msra.mxu0 %v5076
        %5457 = vmatprep.subr.bf16.mxu0 0
        %5458 = vmatpush1.bf16.msra.mxu0 %v5077
        %5459 = vmatprep.subr.bf16.mxu0 0
        %5460 = vmatpush1.bf16.msra.mxu0 %v5078
        %5461 = vmatprep.subr.bf16.mxu0 0
        %5462 = vmatpush1.bf16.msra.mxu0 %v5079
        %5463 = vmatprep.subr.bf16.mxu0 0
        %5464 = vmatpush1.bf16.msra.mxu0 %v5080
        %5465 = vmatprep.subr.bf16.mxu0 0
        %5466 = vmatpush1.bf16.msra.mxu0 %v5081
        %5467 = vmatprep.subr.bf16.mxu0 0
        %5468 = vmatpush1.bf16.msra.mxu0 %v5082
        %5469 = vmatprep.subr.bf16.mxu0 0
        %5470 = vmatpush1.bf16.msra.mxu0 %v5083
        %5471 = vmatprep.subr.bf16.mxu0 0
        %5472 = vmatpush1.bf16.msra.mxu0 %v5084
        %5473 = vmatprep.subr.bf16.mxu0 0
        %5474 = vmatpush1.bf16.msra.mxu0 %v5085
        %5475 = vmatprep.subr.bf16.mxu0 0
        %5476 = vmatpush1.bf16.msra.mxu0 %v5086
        %5477 = vmatprep.subr.bf16.mxu0 0
        %5478 = vmatpush1.bf16.msra.mxu0 %v5087
        %5479 = vmatprep.subr.bf16.mxu0 0
        %5480 = vmatpush1.bf16.msra.mxu0 %v5088
        %5481 = vmatprep.mubr.bf16.mxu0 %v4219
        %5482 = vmatmul.mubr.bf16.gmra.mrb[0].mxu0 %v4218
        %v5483 = vpop.f32.mrb[0].mxu0
        %v5484 = vadd.f32 %v5444, %v5483
        %v5485 = vpop.f32.mrb[0].mxu0
        %v5486 = vpop.f32.mrb[0].mxu0
        %v5487 = vpop.f32.mrb[0].mxu0
        %5488 = vdwg.mxu0
        %5489 = vmatprep.subr.bf16.mxu0 0
        %5490 = vmatpush1.bf16.msra.mxu0 %v5089
        %5491 = vmatprep.subr.bf16.mxu0 0
        %5492 = vmatpush1.bf16.msra.mxu0 %v5090
        %5493 = vmatprep.subr.bf16.mxu0 0
        %5494 = vmatpush1.bf16.msra.mxu0 %v5091
        %5495 = vmatprep.subr.bf16.mxu0 0
        %5496 = vmatpush1.bf16.msra.mxu0 %v5092
        %5497 = vmatprep.subr.bf16.mxu0 0
        %5498 = vmatpush1.bf16.msra.mxu0 %v5093
        %5499 = vmatprep.subr.bf16.mxu0 0
        %5500 = vmatpush1.bf16.msra.mxu0 %v5094
        %5501 = vmatprep.subr.bf16.mxu0 0
        %5502 = vmatpush1.bf16.msra.mxu0 %v5095
        %5503 = vmatprep.subr.bf16.mxu0 0
        %5504 = vmatpush1.bf16.msra.mxu0 %v5096
        %5505 = vmatprep.subr.bf16.mxu0 0
        %5506 = vmatpush1.bf16.msra.mxu0 %v5097
        %5507 = vmatprep.subr.bf16.mxu0 0
        %5508 = vmatpush1.bf16.msra.mxu0 %v5098
        %5509 = vmatprep.subr.bf16.mxu0 0
        %5510 = vmatpush1.bf16.msra.mxu0 %v5099
        %5511 = vmatprep.subr.bf16.mxu0 0
        %5512 = vmatpush1.bf16.msra.mxu0 %v5100
        %5513 = vmatprep.subr.bf16.mxu0 0
        %5514 = vmatpush1.bf16.msra.mxu0 %v5101
        %5515 = vmatprep.subr.bf16.mxu0 0
        %5516 = vmatpush1.bf16.msra.mxu0 %v5102
        %5517 = vmatprep.subr.bf16.mxu0 0
        %5518 = vmatpush1.bf16.msra.mxu0 %v5103
        %5519 = vmatprep.subr.bf16.mxu0 0
        %5520 = vmatpush1.bf16.msra.mxu0 %v5104
        %5521 = vmatprep.mubr.bf16.mxu0 %v4221
        %5522 = vmatmul.mubr.bf16.gmra.mrb[0].mxu0 %v4220
        %v5523 = vpop.f32.mrb[0].mxu0
        %v5524 = vadd.f32 %v5484, %v5523
        %v5525 = vpop.f32.mrb[0].mxu0
        %v5526 = vpop.f32.mrb[0].mxu0
        %v5527 = vpop.f32.mrb[0].mxu0
        %5528 = vdwg.mxu0
        %5529 = vmatprep.subr.bf16.mxu0 0
        %5530 = vmatpush1.bf16.msra.mxu0 %v5105
        %5531 = vmatprep.subr.bf16.mxu0 0
        %5532 = vmatpush1.bf16.msra.mxu0 %v5106
        %5533 = vmatprep.subr.bf16.mxu0 0
        %5534 = vmatpush1.bf16.msra.mxu0 %v5107
        %5535 = vmatprep.subr.bf16.mxu0 0
        %5536 = vmatpush1.bf16.msra.mxu0 %v5108
        %5537 = vmatprep.subr.bf16.mxu0 0
        %5538 = vmatpush1.bf16.msra.mxu0 %v5109
        %5539 = vmatprep.subr.bf16.mxu0 0
        %5540 = vmatpush1.bf16.msra.mxu0 %v5110
        %5541 = vmatprep.subr.bf16.mxu0 0
        %5542 = vmatpush1.bf16.msra.mxu0 %v5111
        %5543 = vmatprep.subr.bf16.mxu0 0
        %5544 = vmatpush1.bf16.msra.mxu0 %v5112
        %5545 = vmatprep.subr.bf16.mxu0 0
        %5546 = vmatpush1.bf16.msra.mxu0 %v5113
        %5547 = vmatprep.subr.bf16.mxu0 0
        %5548 = vmatpush1.bf16.msra.mxu0 %v5114
        %5549 = vmatprep.subr.bf16.mxu0 0
        %5550 = vmatpush1.bf16.msra.mxu0 %v5115
        %5551 = vmatprep.subr.bf16.mxu0 0
        %5552 = vmatpush1.bf16.msra.mxu0 %v5116
        %5553 = vmatprep.subr.bf16.mxu0 0
        %5554 = vmatpush1.bf16.msra.mxu0 %v5117
        %5555 = vmatprep.subr.bf16.mxu0 0
        %5556 = vmatpush1.bf16.msra.mxu0 %v5118
        %5557 = vmatprep.subr.bf16.mxu0 0
        %5558 = vmatpush1.bf16.msra.mxu0 %v5119
        %5559 = vmatprep.subr.bf16.mxu0 0
        %5560 = vmatpush1.bf16.msra.mxu0 %v5120
        %5561 = vmatprep.mubr.bf16.mxu0 %v4223
        %5562 = vmatmul.mubr.bf16.gmra.mrb[0].mxu0 %v4222
        %v5563 = vpop.f32.mrb[0].mxu0
        %v5564 = vadd.f32 %v5524, %v5563
        %v5565 = vpop.f32.mrb[0].mxu0
        %v5566 = vpop.f32.mrb[0].mxu0
        %v5567 = vpop.f32.mrb[0].mxu0
        %5568 = vdwg.mxu0
        %5569 = vst [vmem:[%s322] sm:$0x1] %v5564
        %s5570 = sand.u32 %s225, 1
        %s5571 = scalar_lea.sflag [#allocation9], %s5570
        %s5572 = sand.u32 %s225, 1
        %s5573 = scalar_lea.vmem [#allocation8], %s5572
        // Predicated region
        $region57: #{cnn_forward.1} parent=55 // pred_check
          %p5574 = pneg %p235
        $region58: #{cnn_forward.1} parent=55 // pred_check_branch
          %5576 = sbr.rel (%p5574) target = $region60
        $region59: #{cnn_forward.1} parent=55 // pred_region
          %s5578 = ssub.s32 16, 16
          %5579 = vsyncadd %s5571, %s5578
          %s5580 = smul.addr %s23, 16
          %s5581 = scalar_lea.hbm %s9, %s5580
          %s5583 = sshll.u32 %s5573, 4
          %s5584 = int_to_ptr.vmem [resolvable:$true] %s5583
          %5586 = dma.vmem_to_hbm [thread:$0]  %s5584, 16, %s5581, %s5571
        $region60: #{cnn_forward.1} parent=55 // pred_fallthru
          _
      $region56: #{cnn_forward.1} parent=5 // pred_fallthru
        _
      %p5587 = scmp.le.s32.totalorder 2, %s18
      // Predicated region
      $region61: #{cnn_forward.1} parent=5 // pred_check
        %p5588 = pneg %p5587
      $region62: #{cnn_forward.1} parent=5 // pred_check_branch
        %5590 = sbr.rel (%p5588) target = $region64
      $region63: #{cnn_forward.1} parent=5 // pred_region
        %s5591 = ssub.s32 %s18, 2
        // Predicated region
        $region65: #{cnn_forward.1} parent=63 // pred_check
          %p5592 = pneg %p241
        $region66: #{cnn_forward.1} parent=63 // pred_check_branch
          %5594 = sbr.rel (%p5592) target = $region68
        $region67: #{cnn_forward.1} parent=63 // pred_region
          %s5595 = sand.u32 %s226, 1
          %s5596 = scalar_lea.sflag [#allocation9], %s5595
          %s5597 = sand.u32 %s226, 1
          %s5598 = scalar_lea.vmem [#allocation8], %s5597
          %5599 = dma.done %s5596, 16
        $region68: #{cnn_forward.1} parent=63 // pred_fallthru
          _
      $region64: #{cnn_forward.1} parent=5 // pred_fallthru
        _
    $region6: #{cnn_forward.1} parent=1 // loop_footer
      %s22 = sadd.s32 1, %s18
    $region7: #{cnn_forward.1} parent=1 // loop_footer_branch
      %17 = sbr.rel target = $region3
    $region8: #{cnn_forward.1} parent=1 // loop_exit
      _
    %5600 = vsyncpa [#allocation9], 1
    %s5601 = scalar_lea.sflag [#allocation9], 1
    %5602 = vsyncpa %s5601, 1

</llo_original>
